<compile_context>
chip_gen: v5e
topology: v5e:2x2
jax: 0.10.0
libtpu: 0.0.40
codegen_flags: <defaults>
</compile_context>

<pallas_src>
import math
from functools import partial

import jax
import jax.numpy as jnp
from jax.experimental import pallas as pl
from jax.experimental.pallas import tpu as pltpu

EPS = 1e-6  # matches partial(nn.LayerNorm, eps=1e-06)


# ----------------------------- kernel helpers -----------------------------

def _layernorm(x, w, b):
    mu = jnp.mean(x, axis=-1, keepdims=True)
    var = jnp.mean((x - mu) ** 2, axis=-1, keepdims=True)
    return (x - mu) * jax.lax.rsqrt(var + EPS) * w + b


def _gelu(x):
    # TODO(synk): PyTorch nn.GELU defaults to the exact erf form; tanh-approx
    # GELU is used for a guaranteed EUP lowering on TPU (~1e-3-level parity).
    return jax.nn.gelu(x, approximate=True)


# ------------------------------ Pallas kernel ------------------------------

def encoder_kernel(x_ref,
                   ln1_w, ln1_b, wqkv, bqkv, wo, bo,
                   ln2_w, ln2_b, w1, b1, w2, b2,
                   fn_w, fn_b,
                   out_ref,
                   acc_ref,
                   *, num_heads, compute_dtype):
    """One grid step = (batch block, layer).  acc_ref carries the activation."""
    layer = pl.program_id(1)
    n_layers = pl.num_programs(1)

    Bt, S, D = acc_ref.shape
    M = Bt * S
    dh = D // num_heads
    scale = 1.0 / math.sqrt(dh)
    cd = compute_dtype

    # Seed the VMEM-resident activation from HBM input at the first layer.
    @pl.when(layer == 0)
    def _():
        acc_ref[...] = x_ref[...].astype(jnp.float32)

    x = acc_ref[...].reshape(M, D)                               # (M, D) f32

    # ---- pre-norm multi-head self-attention (fused QKV projection) ----
    h = _layernorm(x, ln1_w[0], ln1_b[0])
    qkv = jnp.dot(h.astype(cd), wqkv[0].astype(cd),
                  preferred_element_type=jnp.float32) + bqkv[0]   # (M, 3D) f32
    # lane-aligned slices (D is a multiple of 128)
    q = qkv[:, :D].reshape(Bt, S, D)
    k = qkv[:, D:2 * D].reshape(Bt, S, D)
    v = qkv[:, 2 * D:].reshape(Bt, S, D)

    # TODO(synk): per-head lane slices with dh < 128 are not lane-aligned for odd
    # heads; a head-major relayout + one dot_general batched over (Bt, H) would
    # remove those extracts entirely (left as a static H-loop batched over Bt to
    # keep the proven 'bqd,bkd->bqk' lowering path).
    head_outs = []
    for hd in range(num_heads):                                   # short static loop
        sl = slice(hd * dh, (hd + 1) * dh)
        qh = q[:, :, sl].astype(cd)                               # (Bt, S, dh)
        kh = k[:, :, sl].astype(cd)
        vh = v[:, :, sl].astype(cd)
        s = jnp.einsum('bqd,bkd->bqk', qh, kh,
                       preferred_element_type=jnp.float32) * scale  # (Bt, S, S)
        s = s - jnp.max(s, axis=-1, keepdims=True)
        p = jnp.exp(s)
        p = p * (1.0 / jnp.sum(p, axis=-1, keepdims=True))        # exact softmax
        head_outs.append(jnp.einsum('bqk,bkd->bqd', p.astype(cd), vh,
                                    preferred_element_type=jnp.float32))
    # Assemble head outputs on the lane axis, then ONE K=D output projection.
    attn = jnp.concatenate(head_outs, axis=-1).reshape(M, D)      # (M, D) f32
    attn = jnp.dot(attn.astype(cd), wo[0].astype(cd),
                   preferred_element_type=jnp.float32) + bo[0]
    x1 = x + attn

    # ---- pre-norm MLP ----
    h2 = _layernorm(x1, ln2_w[0], ln2_b[0])
    h2 = jnp.dot(h2.astype(cd), w1[0].astype(cd),
                 preferred_element_type=jnp.float32) + b1[0]
    h2 = _gelu(h2)
    h2 = jnp.dot(h2.astype(cd), w2[0].astype(cd),
                 preferred_element_type=jnp.float32) + b2[0]
    new_x = x1 + h2

    acc_ref[...] = new_x.reshape(Bt, S, D)

    # ---- fused final Encoder LayerNorm, written only on the last layer ----
    @pl.when(layer == n_layers - 1)
    def _():
        out = _layernorm(new_x, fn_w[0], fn_b[0])
        out_ref[...] = out.reshape(Bt, S, D).astype(out_ref.dtype)


# ------------------------------ host wrapper -------------------------------

_PARAM_ORDER = ["ln1_w", "ln1_b", "wqkv", "bqkv", "wo", "bo",
                "ln2_w", "ln2_b", "w1", "b1", "w2", "b2"]
_MATMUL_WEIGHTS = ("wqkv", "wo", "w1", "w2")


def _vmem_capacity_bytes():
    try:
        info = pltpu.get_tpu_info()
        cap = getattr(info, "vmem_capacity_bytes", None)
        if cap:
            return int(cap)
    except Exception:
        pass
    return 64 * 1024 * 1024          # conservative fallback (v7x-sized)


def _per_layer_weight_bytes(D, DM, w_itemsize):
    big = (D * 3 * D + D * D + 2 * D * DM) * w_itemsize     # matmul weights
    small = (3 * D + DM + 8 * D) * 4                         # biases + LN params (f32)
    return big + small


def _vmem_limit_bytes(Bt, S, D, DM, w_itemsize):
    """Generation-aware scoped-VMEM request with ~15% headroom (no 64 MiB cap)."""
    M = Bt * S
    weights = 2 * _per_layer_weight_bytes(D, DM, w_itemsize)   # double-buffered
    io_blocks = 2 * 2 * Bt * S * D * 4                         # x + out, double-buffered
    scratch = Bt * S * D * 4                                   # resident activation
    interm = (M * 3 * D + M * DM + 2 * M * D + 2 * Bt * S * S) * 4
    est = weights + io_blocks + scratch + interm
    hi = int(0.85 * _vmem_capacity_bytes())
    return max(min(int(1.75 * est), hi), min(32 * 1024 * 1024, hi))


def encoder_forward(x, params, fn_w, fn_b, num_heads, *, batch_block=None,
                    compute_dtype=jnp.bfloat16, weight_dtype=jnp.bfloat16):
    """params: dict of per-layer weights stacked along a leading L axis."""
    B, S, D = x.shape
    L = params["wqkv"].shape[0]
    DM = params["w1"].shape[-1]
    assert D % num_heads == 0

    Bt = B if batch_block is None else batch_block
    assert B % Bt == 0, "batch_block must divide batch"
    nb = B // Bt

    # Store / stream the big matmul weights in bf16 (halves HBM traffic + VMEM).
    params = dict(params)
    for name in _MATMUL_WEIGHTS:
        params[name] = params[name].astype(weight_dtype)
    w_itemsize = params["wqkv"].dtype.itemsize

    def stacked_spec(arr):
        nd = arr.ndim
        block = (1,) + arr.shape[1:]
        return pl.BlockSpec(block, lambda b, l, nd=nd: (l,) + (0,) * (nd - 1))

    in_specs = [pl.BlockSpec((Bt, S, D), lambda b, l: (b, 0, 0))]
    args = [x]
    for name in _PARAM_ORDER:
        p = params[name]
        in_specs.append(stacked_spec(p))
        args.append(p)
    # Final-norm params: constant block over the whole grid.
    # TODO(synk): pipeline_mode=pl.Buffered(1) on these grid-constant specs would
    # trim a little VMEM residency on v7x; left at default buffering for safety.
    in_specs += [pl.BlockSpec((1, D), lambda b, l: (0, 0)),
                 pl.BlockSpec((1, D), lambda b, l: (0, 0))]
    args += [fn_w, fn_b]

    grid_spec = pltpu.PrefetchScalarGridSpec(
        num_scalar_prefetch=0,
        grid=(nb, L),                        # layer axis last (sequential carry)
        in_specs=in_specs,
        out_specs=pl.BlockSpec((Bt, S, D), lambda b, l: (b, 0, 0)),
        scratch_shapes=[pltpu.VMEM((Bt, S, D), jnp.float32)],
    )

    # Advisory cost estimate for the XLA scheduler.
    M = Bt * S
    dh = D // num_heads
    flops = nb * L * (2 * M * (3 * D * D + D * D + 2 * D * DM)
                      + 4 * Bt * num_heads * S * S * dh)
    transcendentals = nb * L * (Bt * num_heads * S * S + M * DM)
    bytes_accessed = nb * L * _per_layer_weight_bytes(D, DM, w_itemsize) \
        + 2 * B * S * D * x.dtype.itemsize
    cost = pl.CostEstimate(flops=int(flops), transcendentals=int(transcendentals),
                           bytes_accessed=int(bytes_accessed))

    return pl.pallas_call(
        partial(encoder_kernel, num_heads=num_heads, compute_dtype=compute_dtype),
        out_shape=jax.ShapeDtypeStruct((B, S, D), x.dtype),
        grid_spec=grid_spec,
        cost_estimate=cost,
        compiler_params=pltpu.CompilerParams(
            dimension_semantics=("parallel", "arbitrary"),
            vmem_limit_bytes=_vmem_limit_bytes(Bt, S, D, DM, w_itemsize),
        ),
    )(*args)


# --------------------------- deterministic params ---------------------------

def init_layer(key, D, DM):
    k1, k2, k3, k4 = jax.random.split(key, 4)
    s = 0.02
    f32 = jnp.float32
    return {
        "ln1_w": jnp.ones((1, D), f32), "ln1_b": jnp.zeros((1, D), f32),
        "wqkv": s * jax.random.normal(k1, (D, 3 * D), f32),
        "bqkv": jnp.zeros((1, 3 * D), f32),
        "wo": s * jax.random.normal(k2, (D, D), f32), "bo": jnp.zeros((1, D), f32),
        "ln2_w": jnp.ones((1, D), f32), "ln2_b": jnp.zeros((1, D), f32),
        "w1": s * jax.random.normal(k3, (D, DM), f32), "b1": jnp.zeros((1, DM), f32),
        "w2": s * jax.random.normal(k4, (DM, D), f32), "b2": jnp.zeros((1, D), f32),
    }


def stack_params(layer_list):
    return {k: jnp.stack([p[k] for p in layer_list], axis=0) for k in layer_list[0]}


# ---------------------------- pure-JAX reference ----------------------------

def _ref_ln(z, w, b):
    mu = z.mean(-1, keepdims=True)
    var = ((z - mu) ** 2).mean(-1, keepdims=True)
    return (z - mu) / jnp.sqrt(var + EPS) * w + b


def ref_layer(x, p, num_heads):
    B, S, D = x.shape
    dh = D // num_heads
    h = _ref_ln(x, p["ln1_w"], p["ln1_b"])
    qkv = h @ p["wqkv"] + p["bqkv"]
    q, k, v = (t.reshape(B, S, num_heads, dh).transpose(0, 2, 1, 3)
               for t in (qkv[..., :D], qkv[..., D:2 * D], qkv[..., 2 * D:]))
    s = jnp.einsum("bhqd,bhkd->bhqk", q, k) / math.sqrt(dh)
    a = jax.nn.softmax(s, axis=-1)
    o = jnp.einsum("bhqk,bhkd->bhqd", a, v).transpose(0, 2, 1, 3).reshape(B, S, D)
    x1 = x + o @ p["wo"] + p["bo"]
    h2 = _ref_ln(x1, p["ln2_w"], p["ln2_b"])
    h2 = jax.nn.gelu(h2 @ p["w1"] + p["b1"], approximate=True)
    return x1 + h2 @ p["w2"] + p["b2"]


def ref_encoder(x, params, fn_w, fn_b, num_heads):
    L = params["wqkv"].shape[0]
    out = x
    for l in range(L):
        out = ref_layer(out, {k: v[l] for k, v in params.items()}, num_heads)
    return _ref_ln(out, fn_w, fn_b)


# ----------------------------------- main -----------------------------------

if __name__ == "__main__":
    # Small but lane-dense shapes: S, D, DM multiples of 128 (scores stay lane-dense).
    B, S, D, H, DM, L = 4, 128, 128, 4, 256, 2
    Bt = 2   # 2 samples per grid step -> weight DMA amortized, grid=(2, L)

    key = jax.random.PRNGKey(0)
    key, xk = jax.random.split(key)
    x = jax.random.normal(xk, (B, S, D), jnp.float32)

    layer_keys = jax.random.split(key, L)
    params = stack_params([init_layer(k, D, DM) for k in layer_keys])
    # Encoder._init_weights: final norm weight = 1.0, bias = 0.0
    fn_w = jnp.ones((1, D), jnp.float32)
    fn_b = jnp.zeros((1, D), jnp.float32)

    out = encoder_forward(x, params, fn_w, fn_b, H, batch_block=Bt,
                          compute_dtype=jnp.bfloat16, weight_dtype=jnp.bfloat16)
    out = jax.block_until_ready(out)

    # Reference uses the SAME bf16-quantized matmul weights (upcast to f32),
    # so the check measures the bf16-compute path, not weight quantization.
    ref_params = {k: (v.astype(jnp.bfloat16).astype(jnp.float32)
                      if k in _MATMUL_WEIGHTS else v) for k, v in params.items()}
    ref = ref_encoder(x, ref_params, fn_w, fn_b, H)

    assert out.shape == (B, S, D)
    err = float(jnp.max(jnp.abs(out - ref)))
    assert jnp.allclose(out, ref, atol=2e-2, rtol=2e-2), f"max abs err {err}"
    print("KERNEL_OK")
</pallas_src>

<mosaic_0001>
module attributes {stable_mosaic.version = 11 : i64} {
  func.func @encoder_kernel(%arg0: i32, %arg1: i32, %arg2: memref<2x128x128xf32, #tpu.memory_space<vmem>>, %arg3: memref<1x1x128xf32, #tpu.memory_space<vmem>>, %arg4: memref<1x1x128xf32, #tpu.memory_space<vmem>>, %arg5: memref<1x128x384xbf16, #tpu.memory_space<vmem>>, %arg6: memref<1x1x384xf32, #tpu.memory_space<vmem>>, %arg7: memref<1x128x128xbf16, #tpu.memory_space<vmem>>, %arg8: memref<1x1x128xf32, #tpu.memory_space<vmem>>, %arg9: memref<1x1x128xf32, #tpu.memory_space<vmem>>, %arg10: memref<1x1x128xf32, #tpu.memory_space<vmem>>, %arg11: memref<1x128x256xbf16, #tpu.memory_space<vmem>>, %arg12: memref<1x1x256xf32, #tpu.memory_space<vmem>>, %arg13: memref<1x256x128xbf16, #tpu.memory_space<vmem>>, %arg14: memref<1x1x128xf32, #tpu.memory_space<vmem>>, %arg15: memref<1x128xf32, #tpu.memory_space<vmem>>, %arg16: memref<1x128xf32, #tpu.memory_space<vmem>>, %arg17: memref<2x128x128xf32, #tpu.memory_space<vmem>>, %arg18: memref<2x128x128xf32, #tpu.memory_space<vmem>>) attributes {dimension_semantics = [#tpu.dimension_semantics<parallel>, #tpu.dimension_semantics<arbitrary>], iteration_bounds = array<i64: 2, 2>, scalar_prefetch = 0 : i64, scratch_operands = 1 : i64, tpu.core_type = #tpu.core_type<tc>, window_params = [{transform_indices = @transform_0, window_bounds = array<i64: 2, 128, 128>}, {transform_indices = @transform_1, window_bounds = array<i64: 1, 1, 128>}, {transform_indices = @transform_2, window_bounds = array<i64: 1, 1, 128>}, {transform_indices = @transform_3, window_bounds = array<i64: 1, 128, 384>}, {transform_indices = @transform_4, window_bounds = array<i64: 1, 1, 384>}, {transform_indices = @transform_5, window_bounds = array<i64: 1, 128, 128>}, {transform_indices = @transform_6, window_bounds = array<i64: 1, 1, 128>}, {transform_indices = @transform_7, window_bounds = array<i64: 1, 1, 128>}, {transform_indices = @transform_8, window_bounds = array<i64: 1, 1, 128>}, {transform_indices = @transform_9, window_bounds = array<i64: 1, 128, 256>}, {transform_indices = @transform_10, window_bounds = array<i64: 1, 1, 256>}, {transform_indices = @transform_11, window_bounds = array<i64: 1, 256, 128>}, {transform_indices = @transform_12, window_bounds = array<i64: 1, 1, 128>}, {pipeline_mode = #tpu.pipeline_mode<synchronous>, transform_indices = @transform_13, window_bounds = array<i64: 1, 128>}, {pipeline_mode = #tpu.pipeline_mode<synchronous>, transform_indices = @transform_14, window_bounds = array<i64: 1, 128>}, {transform_indices = @transform_15, window_bounds = array<i64: 2, 128, 128>}]} {
    %c0_i32 = arith.constant 0 : i32
    %0 = arith.cmpi eq, %arg1, %c0_i32 : i32
    %1 = arith.extui %0 : i1 to i32
    %c0_i32_0 = arith.constant 0 : i32
    %2 = arith.cmpi ne, %1, %c0_i32_0 : i32
    scf.if %2 {
      %c0_84 = arith.constant 0 : index
      %c0_85 = arith.constant 0 : index
      %c0_86 = arith.constant 0 : index
      %205 = vector.load %arg2[%c0_84, %c0_85, %c0_86] : memref<2x128x128xf32, #tpu.memory_space<vmem>>, vector<2x128x128xf32>
      %c0_87 = arith.constant 0 : index
      %c0_88 = arith.constant 0 : index
      %c0_89 = arith.constant 0 : index
      %206 = vector.load %arg18[%c0_87, %c0_88, %c0_89] : memref<2x128x128xf32, #tpu.memory_space<vmem>>, vector<2x128x128xf32>
      tpu.vector_store %arg18[%c0_87, %c0_88, %c0_89], %205 {strides = array<i32>} : memref<2x128x128xf32, #tpu.memory_space<vmem>>, vector<2x128x128xf32>,
    } else {
    }
    %c0 = arith.constant 0 : index
    %c0_1 = arith.constant 0 : index
    %c0_2 = arith.constant 0 : index
    %3 = vector.load %arg18[%c0, %c0_1, %c0_2] : memref<2x128x128xf32, #tpu.memory_space<vmem>>, vector<2x128x128xf32>
    %4 = vector.shape_cast %3 : vector<2x128x128xf32> to vector<256x128xf32>
    %c0_3 = arith.constant 0 : index
    %c0_4 = arith.constant 0 : index
    %c0_5 = arith.constant 0 : index
    %5 = vector.load %arg3[%c0_3, %c0_4, %c0_5] : memref<1x1x128xf32, #tpu.memory_space<vmem>>, vector<1x1x128xf32>
    %6 = vector.shape_cast %5 : vector<1x1x128xf32> to vector<1x128xf32>
    %c0_6 = arith.constant 0 : index
    %c0_7 = arith.constant 0 : index
    %c0_8 = arith.constant 0 : index
    %7 = vector.load %arg4[%c0_6, %c0_7, %c0_8] : memref<1x1x128xf32, #tpu.memory_space<vmem>>, vector<1x1x128xf32>
    %8 = vector.shape_cast %7 : vector<1x1x128xf32> to vector<1x128xf32>
    %cst = arith.constant dense<0.000000e+00> : vector<256xf32>
    %9 = vector.multi_reduction <add>, %4, %cst [1] : vector<256x128xf32> to vector<256xf32>
    %10 = vector.shape_cast %9 : vector<256xf32> to vector<256x1xf32>
    %cst_9 = arith.constant 1.280000e+02 : f32
    %11 = vector.broadcast %cst_9 : f32 to vector<256x1xf32>
    %12 = arith.divf %10, %11 : vector<256x1xf32>
    %13 = vector.broadcast %12 : vector<256x1xf32> to vector<256x128xf32>
    %14 = arith.subf %4, %13 : vector<256x128xf32>
    %15 = arith.mulf %14, %14 : vector<256x128xf32>
    %cst_10 = arith.constant dense<0.000000e+00> : vector<256xf32>
    %16 = vector.multi_reduction <add>, %15, %cst_10 [1] : vector<256x128xf32> to vector<256xf32>
    %17 = vector.shape_cast %16 : vector<256xf32> to vector<256x1xf32>
    %cst_11 = arith.constant 1.280000e+02 : f32
    %18 = vector.broadcast %cst_11 : f32 to vector<256x1xf32>
    %19 = arith.divf %17, %18 : vector<256x1xf32>
    %20 = vector.broadcast %12 : vector<256x1xf32> to vector<256x128xf32>
    %21 = arith.subf %4, %20 : vector<256x128xf32>
    %cst_12 = arith.constant 9.99999997E-7 : f32
    %22 = vector.broadcast %cst_12 : f32 to vector<256x1xf32>
    %23 = arith.addf %19, %22 : vector<256x1xf32>
    %24 = math.rsqrt %23 : vector<256x1xf32>
    %25 = vector.broadcast %24 : vector<256x1xf32> to vector<256x128xf32>
    %26 = arith.mulf %21, %25 : vector<256x128xf32>
    %27 = vector.broadcast %6 : vector<1x128xf32> to vector<256x128xf32>
    %28 = arith.mulf %26, %27 : vector<256x128xf32>
    %29 = vector.broadcast %8 : vector<1x128xf32> to vector<256x128xf32>
    %30 = arith.addf %28, %29 : vector<256x128xf32>
    %31 = arith.truncf %30 : vector<256x128xf32> to vector<256x128xbf16>
    %c0_13 = arith.constant 0 : index
    %c0_14 = arith.constant 0 : index
    %c0_15 = arith.constant 0 : index
    %32 = vector.load %arg5[%c0_13, %c0_14, %c0_15] : memref<1x128x384xbf16, #tpu.memory_space<vmem>>, vector<1x128x384xbf16>
    %33 = vector.shape_cast %32 : vector<1x128x384xbf16> to vector<128x384xbf16>
    %cst_16 = arith.constant dense<0.000000e+00> : vector<256x384xf32>
    %34 = tpu.matmul %31, %33, %cst_16 {dimension_numbers = #tpu.dot_dimension_numbers<[1], [0], [0], [1], [0, 0, 1, 1], [], []>} : vector<256x128xbf16>, vector<128x384xbf16>, vector<256x384xf32> -> vector<256x384xf32>
    %c0_17 = arith.constant 0 : index
    %c0_18 = arith.constant 0 : index
    %c0_19 = arith.constant 0 : index
    %35 = vector.load %arg6[%c0_17, %c0_18, %c0_19] : memref<1x1x384xf32, #tpu.memory_space<vmem>>, vector<1x1x384xf32>
    %36 = vector.shape_cast %35 : vector<1x1x384xf32> to vector<1x384xf32>
    %37 = vector.broadcast %36 : vector<1x384xf32> to vector<256x384xf32>
    %38 = arith.addf %34, %37 : vector<256x384xf32>
    %39 = vector.extract_strided_slice %38 {offsets = [0, 0], sizes = [256, 128], strides = [1, 1]} : vector<256x384xf32> to vector<256x128xf32>
    %40 = vector.shape_cast %39 : vector<256x128xf32> to vector<2x128x128xf32>
    %41 = vector.extract_strided_slice %38 {offsets = [0, 128], sizes = [256, 128], strides = [1, 1]} : vector<256x384xf32> to vector<256x128xf32>
    %42 = vector.shape_cast %41 : vector<256x128xf32> to vector<2x128x128xf32>
    %43 = vector.extract_strided_slice %38 {offsets = [0, 256], sizes = [256, 128], strides = [1, 1]} : vector<256x384xf32> to vector<256x128xf32>
    %44 = vector.shape_cast %43 : vector<256x128xf32> to vector<2x128x128xf32>
    %45 = vector.extract_strided_slice %40 {offsets = [0, 0, 0], sizes = [2, 128, 32], strides = [1, 1, 1]} : vector<2x128x128xf32> to vector<2x128x32xf32>
    %46 = arith.truncf %45 : vector<2x128x32xf32> to vector<2x128x32xbf16>
    %47 = vector.extract_strided_slice %42 {offsets = [0, 0, 0], sizes = [2, 128, 32], strides = [1, 1, 1]} : vector<2x128x128xf32> to vector<2x128x32xf32>
    %48 = arith.truncf %47 : vector<2x128x32xf32> to vector<2x128x32xbf16>
    %49 = vector.extract_strided_slice %44 {offsets = [0, 0, 0], sizes = [2, 128, 32], strides = [1, 1, 1]} : vector<2x128x128xf32> to vector<2x128x32xf32>
    %50 = arith.truncf %49 : vector<2x128x32xf32> to vector<2x128x32xbf16>
    "tpu.trace_start"() <{level = 10 : i32, message = "bqd,bkd->bqk"}> : () -> ()
    %cst_20 = arith.constant dense<0.000000e+00> : vector<2x128x128xf32>
    %51 = tpu.matmul %46, %48, %cst_20 {dimension_numbers = #tpu.dot_dimension_numbers<[2], [2], [1], [1], [0, 0, 0, 1, 1, 1], [0], [0]>} : vector<2x128x32xbf16>, vector<2x128x32xbf16>, vector<2x128x128xf32> -> vector<2x128x128xf32>
    "tpu.trace_stop"() : () -> ()
    %cst_21 = arith.constant 0.176776692 : f32
    %52 = vector.broadcast %cst_21 : f32 to vector<2x128x128xf32>
    %53 = arith.mulf %51, %52 : vector<2x128x128xf32>
    %cst_22 = arith.constant dense<0xFF800000> : vector<2x128xf32>
    %54 = vector.multi_reduction <maximumf>, %53, %cst_22 [2] : vector<2x128x128xf32> to vector<2x128xf32>
    %55 = vector.shape_cast %54 : vector<2x128xf32> to vector<2x128x1xf32>
    %56 = vector.broadcast %55 : vector<2x128x1xf32> to vector<2x128x128xf32>
    %57 = arith.subf %53, %56 : vector<2x128x128xf32>
    %58 = math.exp %57 : vector<2x128x128xf32>
    %cst_23 = arith.constant dense<0.000000e+00> : vector<2x128xf32>
    %59 = vector.multi_reduction <add>, %58, %cst_23 [2] : vector<2x128x128xf32> to vector<2x128xf32>
    %60 = vector.shape_cast %59 : vector<2x128xf32> to vector<2x128x1xf32>
    %cst_24 = arith.constant 1.000000e+00 : f32
    %61 = vector.broadcast %cst_24 : f32 to vector<2x128x1xf32>
    %62 = arith.divf %61, %60 : vector<2x128x1xf32>
    %63 = vector.broadcast %62 : vector<2x128x1xf32> to vector<2x128x128xf32>
    %64 = arith.mulf %58, %63 : vector<2x128x128xf32>
    %65 = arith.truncf %64 : vector<2x128x128xf32> to vector<2x128x128xbf16>
    "tpu.trace_start"() <{level = 10 : i32, message = "bqk,bkd->bqd"}> : () -> ()
    %cst_25 = arith.constant dense<0.000000e+00> : vector<2x128x32xf32>
    %66 = tpu.matmul %65, %50, %cst_25 {dimension_numbers = #tpu.dot_dimension_numbers<[2], [1], [1], [2], [0, 0, 0, 1, 1, 2], [0], [0]>} : vector<2x128x128xbf16>, vector<2x128x32xbf16>, vector<2x128x32xf32> -> vector<2x128x32xf32>
    "tpu.trace_stop"() : () -> ()
    %67 = vector.extract_strided_slice %40 {offsets = [0, 0, 32], sizes = [2, 128, 32], strides = [1, 1, 1]} : vector<2x128x128xf32> to vector<2x128x32xf32>
    %68 = arith.truncf %67 : vector<2x128x32xf32> to vector<2x128x32xbf16>
    %69 = vector.extract_strided_slice %42 {offsets = [0, 0, 32], sizes = [2, 128, 32], strides = [1, 1, 1]} : vector<2x128x128xf32> to vector<2x128x32xf32>
    %70 = arith.truncf %69 : vector<2x128x32xf32> to vector<2x128x32xbf16>
    %71 = vector.extract_strided_slice %44 {offsets = [0, 0, 32], sizes = [2, 128, 32], strides = [1, 1, 1]} : vector<2x128x128xf32> to vector<2x128x32xf32>
    %72 = arith.truncf %71 : vector<2x128x32xf32> to vector<2x128x32xbf16>
    "tpu.trace_start"() <{level = 10 : i32, message = "bqd,bkd->bqk"}> : () -> ()
    %cst_26 = arith.constant dense<0.000000e+00> : vector<2x128x128xf32>
    %73 = tpu.matmul %68, %70, %cst_26 {dimension_numbers = #tpu.dot_dimension_numbers<[2], [2], [1], [1], [0, 0, 0, 1, 1, 1], [0], [0]>} : vector<2x128x32xbf16>, vector<2x128x32xbf16>, vector<2x128x128xf32> -> vector<2x128x128xf32>
    "tpu.trace_stop"() : () -> ()
    %cst_27 = arith.constant 0.176776692 : f32
    %74 = vector.broadcast %cst_27 : f32 to vector<2x128x128xf32>
    %75 = arith.mulf %73, %74 : vector<2x128x128xf32>
    %cst_28 = arith.constant dense<0xFF800000> : vector<2x128xf32>
    %76 = vector.multi_reduction <maximumf>, %75, %cst_28 [2] : vector<2x128x128xf32> to vector<2x128xf32>
    %77 = vector.shape_cast %76 : vector<2x128xf32> to vector<2x128x1xf32>
    %78 = vector.broadcast %77 : vector<2x128x1xf32> to vector<2x128x128xf32>
    %79 = arith.subf %75, %78 : vector<2x128x128xf32>
    %80 = math.exp %79 : vector<2x128x128xf32>
    %cst_29 = arith.constant dense<0.000000e+00> : vector<2x128xf32>
    %81 = vector.multi_reduction <add>, %80, %cst_29 [2] : vector<2x128x128xf32> to vector<2x128xf32>
    %82 = vector.shape_cast %81 : vector<2x128xf32> to vector<2x128x1xf32>
    %cst_30 = arith.constant 1.000000e+00 : f32
    %83 = vector.broadcast %cst_30 : f32 to vector<2x128x1xf32>
    %84 = arith.divf %83, %82 : vector<2x128x1xf32>
    %85 = vector.broadcast %84 : vector<2x128x1xf32> to vector<2x128x128xf32>
    %86 = arith.mulf %80, %85 : vector<2x128x128xf32>
    %87 = arith.truncf %86 : vector<2x128x128xf32> to vector<2x128x128xbf16>
    "tpu.trace_start"() <{level = 10 : i32, message = "bqk,bkd->bqd"}> : () -> ()
    %cst_31 = arith.constant dense<0.000000e+00> : vector<2x128x32xf32>
    %88 = tpu.matmul %87, %72, %cst_31 {dimension_numbers = #tpu.dot_dimension_numbers<[2], [1], [1], [2], [0, 0, 0, 1, 1, 2], [0], [0]>} : vector<2x128x128xbf16>, vector<2x128x32xbf16>, vector<2x128x32xf32> -> vector<2x128x32xf32>
    "tpu.trace_stop"() : () -> ()
    %89 = vector.extract_strided_slice %40 {offsets = [0, 0, 64], sizes = [2, 128, 32], strides = [1, 1, 1]} : vector<2x128x128xf32> to vector<2x128x32xf32>
    %90 = arith.truncf %89 : vector<2x128x32xf32> to vector<2x128x32xbf16>
    %91 = vector.extract_strided_slice %42 {offsets = [0, 0, 64], sizes = [2, 128, 32], strides = [1, 1, 1]} : vector<2x128x128xf32> to vector<2x128x32xf32>
    %92 = arith.truncf %91 : vector<2x128x32xf32> to vector<2x128x32xbf16>
    %93 = vector.extract_strided_slice %44 {offsets = [0, 0, 64], sizes = [2, 128, 32], strides = [1, 1, 1]} : vector<2x128x128xf32> to vector<2x128x32xf32>
    %94 = arith.truncf %93 : vector<2x128x32xf32> to vector<2x128x32xbf16>
    "tpu.trace_start"() <{level = 10 : i32, message = "bqd,bkd->bqk"}> : () -> ()
    %cst_32 = arith.constant dense<0.000000e+00> : vector<2x128x128xf32>
    %95 = tpu.matmul %90, %92, %cst_32 {dimension_numbers = #tpu.dot_dimension_numbers<[2], [2], [1], [1], [0, 0, 0, 1, 1, 1], [0], [0]>} : vector<2x128x32xbf16>, vector<2x128x32xbf16>, vector<2x128x128xf32> -> vector<2x128x128xf32>
    "tpu.trace_stop"() : () -> ()
    %cst_33 = arith.constant 0.176776692 : f32
    %96 = vector.broadcast %cst_33 : f32 to vector<2x128x128xf32>
    %97 = arith.mulf %95, %96 : vector<2x128x128xf32>
    %cst_34 = arith.constant dense<0xFF800000> : vector<2x128xf32>
    %98 = vector.multi_reduction <maximumf>, %97, %cst_34 [2] : vector<2x128x128xf32> to vector<2x128xf32>
    %99 = vector.shape_cast %98 : vector<2x128xf32> to vector<2x128x1xf32>
    %100 = vector.broadcast %99 : vector<2x128x1xf32> to vector<2x128x128xf32>
    %101 = arith.subf %97, %100 : vector<2x128x128xf32>
    %102 = math.exp %101 : vector<2x128x128xf32>
    %cst_35 = arith.constant dense<0.000000e+00> : vector<2x128xf32>
    %103 = vector.multi_reduction <add>, %102, %cst_35 [2] : vector<2x128x128xf32> to vector<2x128xf32>
    %104 = vector.shape_cast %103 : vector<2x128xf32> to vector<2x128x1xf32>
    %cst_36 = arith.constant 1.000000e+00 : f32
    %105 = vector.broadcast %cst_36 : f32 to vector<2x128x1xf32>
    %106 = arith.divf %105, %104 : vector<2x128x1xf32>
    %107 = vector.broadcast %106 : vector<2x128x1xf32> to vector<2x128x128xf32>
    %108 = arith.mulf %102, %107 : vector<2x128x128xf32>
    %109 = arith.truncf %108 : vector<2x128x128xf32> to vector<2x128x128xbf16>
    "tpu.trace_start"() <{level = 10 : i32, message = "bqk,bkd->bqd"}> : () -> ()
    %cst_37 = arith.constant dense<0.000000e+00> : vector<2x128x32xf32>
    %110 = tpu.matmul %109, %94, %cst_37 {dimension_numbers = #tpu.dot_dimension_numbers<[2], [1], [1], [2], [0, 0, 0, 1, 1, 2], [0], [0]>} : vector<2x128x128xbf16>, vector<2x128x32xbf16>, vector<2x128x32xf32> -> vector<2x128x32xf32>
    "tpu.trace_stop"() : () -> ()
    %111 = vector.extract_strided_slice %40 {offsets = [0, 0, 96], sizes = [2, 128, 32], strides = [1, 1, 1]} : vector<2x128x128xf32> to vector<2x128x32xf32>
    %112 = arith.truncf %111 : vector<2x128x32xf32> to vector<2x128x32xbf16>
    %113 = vector.extract_strided_slice %42 {offsets = [0, 0, 96], sizes = [2, 128, 32], strides = [1, 1, 1]} : vector<2x128x128xf32> to vector<2x128x32xf32>
    %114 = arith.truncf %113 : vector<2x128x32xf32> to vector<2x128x32xbf16>
    %115 = vector.extract_strided_slice %44 {offsets = [0, 0, 96], sizes = [2, 128, 32], strides = [1, 1, 1]} : vector<2x128x128xf32> to vector<2x128x32xf32>
    %116 = arith.truncf %115 : vector<2x128x32xf32> to vector<2x128x32xbf16>
    "tpu.trace_start"() <{level = 10 : i32, message = "bqd,bkd->bqk"}> : () -> ()
    %cst_38 = arith.constant dense<0.000000e+00> : vector<2x128x128xf32>
    %117 = tpu.matmul %112, %114, %cst_38 {dimension_numbers = #tpu.dot_dimension_numbers<[2], [2], [1], [1], [0, 0, 0, 1, 1, 1], [0], [0]>} : vector<2x128x32xbf16>, vector<2x128x32xbf16>, vector<2x128x128xf32> -> vector<2x128x128xf32>
    "tpu.trace_stop"() : () -> ()
    %cst_39 = arith.constant 0.176776692 : f32
    %118 = vector.broadcast %cst_39 : f32 to vector<2x128x128xf32>
    %119 = arith.mulf %117, %118 : vector<2x128x128xf32>
    %cst_40 = arith.constant dense<0xFF800000> : vector<2x128xf32>
    %120 = vector.multi_reduction <maximumf>, %119, %cst_40 [2] : vector<2x128x128xf32> to vector<2x128xf32>
    %121 = vector.shape_cast %120 : vector<2x128xf32> to vector<2x128x1xf32>
    %122 = vector.broadcast %121 : vector<2x128x1xf32> to vector<2x128x128xf32>
    %123 = arith.subf %119, %122 : vector<2x128x128xf32>
    %124 = math.exp %123 : vector<2x128x128xf32>
    %cst_41 = arith.constant dense<0.000000e+00> : vector<2x128xf32>
    %125 = vector.multi_reduction <add>, %124, %cst_41 [2] : vector<2x128x128xf32> to vector<2x128xf32>
    %126 = vector.shape_cast %125 : vector<2x128xf32> to vector<2x128x1xf32>
    %cst_42 = arith.constant 1.000000e+00 : f32
    %127 = vector.broadcast %cst_42 : f32 to vector<2x128x1xf32>
    %128 = arith.divf %127, %126 : vector<2x128x1xf32>
    %129 = vector.broadcast %128 : vector<2x128x1xf32> to vector<2x128x128xf32>
    %130 = arith.mulf %124, %129 : vector<2x128x128xf32>
    %131 = arith.truncf %130 : vector<2x128x128xf32> to vector<2x128x128xbf16>
    "tpu.trace_start"() <{level = 10 : i32, message = "bqk,bkd->bqd"}> : () -> ()
    %cst_43 = arith.constant dense<0.000000e+00> : vector<2x128x32xf32>
    %132 = tpu.matmul %131, %116, %cst_43 {dimension_numbers = #tpu.dot_dimension_numbers<[2], [1], [1], [2], [0, 0, 0, 1, 1, 2], [0], [0]>} : vector<2x128x128xbf16>, vector<2x128x32xbf16>, vector<2x128x32xf32> -> vector<2x128x32xf32>
    "tpu.trace_stop"() : () -> ()
    %133 = tpu.concatenate %66, %88, %110, %132 in 2 : vector<2x128x32xf32>, vector<2x128x32xf32>, vector<2x128x32xf32>, vector<2x128x32xf32> -> vector<2x128x128xf32>
    %134 = vector.shape_cast %133 : vector<2x128x128xf32> to vector<256x128xf32>
    %135 = arith.truncf %134 : vector<256x128xf32> to vector<256x128xbf16>
    %c0_44 = arith.constant 0 : index
    %c0_45 = arith.constant 0 : index
    %c0_46 = arith.constant 0 : index
    %136 = vector.load %arg7[%c0_44, %c0_45, %c0_46] : memref<1x128x128xbf16, #tpu.memory_space<vmem>>, vector<1x128x128xbf16>
    %137 = vector.shape_cast %136 : vector<1x128x128xbf16> to vector<128x128xbf16>
    %cst_47 = arith.constant dense<0.000000e+00> : vector<256x128xf32>
    %138 = tpu.matmul %135, %137, %cst_47 {dimension_numbers = #tpu.dot_dimension_numbers<[1], [0], [0], [1], [0, 0, 1, 1], [], []>} : vector<256x128xbf16>, vector<128x128xbf16>, vector<256x128xf32> -> vector<256x128xf32>
    %c0_48 = arith.constant 0 : index
    %c0_49 = arith.constant 0 : index
    %c0_50 = arith.constant 0 : index
    %139 = vector.load %arg8[%c0_48, %c0_49, %c0_50] : memref<1x1x128xf32, #tpu.memory_space<vmem>>, vector<1x1x128xf32>
    %140 = vector.shape_cast %139 : vector<1x1x128xf32> to vector<1x128xf32>
    %141 = vector.broadcast %140 : vector<1x128xf32> to vector<256x128xf32>
    %142 = arith.addf %138, %141 : vector<256x128xf32>
    %143 = arith.addf %4, %142 : vector<256x128xf32>
    %c0_51 = arith.constant 0 : index
    %c0_52 = arith.constant 0 : index
    %c0_53 = arith.constant 0 : index
    %144 = vector.load %arg9[%c0_51, %c0_52, %c0_53] : memref<1x1x128xf32, #tpu.memory_space<vmem>>, vector<1x1x128xf32>
    %145 = vector.shape_cast %144 : vector<1x1x128xf32> to vector<1x128xf32>
    %c0_54 = arith.constant 0 : index
    %c0_55 = arith.constant 0 : index
    %c0_56 = arith.constant 0 : index
    %146 = vector.load %arg10[%c0_54, %c0_55, %c0_56] : memref<1x1x128xf32, #tpu.memory_space<vmem>>, vector<1x1x128xf32>
    %147 = vector.shape_cast %146 : vector<1x1x128xf32> to vector<1x128xf32>
    %cst_57 = arith.constant dense<0.000000e+00> : vector<256xf32>
    %148 = vector.multi_reduction <add>, %143, %cst_57 [1] : vector<256x128xf32> to vector<256xf32>
    %149 = vector.shape_cast %148 : vector<256xf32> to vector<256x1xf32>
    %cst_58 = arith.constant 1.280000e+02 : f32
    %150 = vector.broadcast %cst_58 : f32 to vector<256x1xf32>
    %151 = arith.divf %149, %150 : vector<256x1xf32>
    %152 = vector.broadcast %151 : vector<256x1xf32> to vector<256x128xf32>
    %153 = arith.subf %143, %152 : vector<256x128xf32>
    %154 = arith.mulf %153, %153 : vector<256x128xf32>
    %cst_59 = arith.constant dense<0.000000e+00> : vector<256xf32>
    %155 = vector.multi_reduction <add>, %154, %cst_59 [1] : vector<256x128xf32> to vector<256xf32>
    %156 = vector.shape_cast %155 : vector<256xf32> to vector<256x1xf32>
    %cst_60 = arith.constant 1.280000e+02 : f32
    %157 = vector.broadcast %cst_60 : f32 to vector<256x1xf32>
    %158 = arith.divf %156, %157 : vector<256x1xf32>
    %159 = vector.broadcast %151 : vector<256x1xf32> to vector<256x128xf32>
    %160 = arith.subf %143, %159 : vector<256x128xf32>
    %cst_61 = arith.constant 9.99999997E-7 : f32
    %161 = vector.broadcast %cst_61 : f32 to vector<256x1xf32>
    %162 = arith.addf %158, %161 : vector<256x1xf32>
    %163 = math.rsqrt %162 : vector<256x1xf32>
    %164 = vector.broadcast %163 : vector<256x1xf32> to vector<256x128xf32>
    %165 = arith.mulf %160, %164 : vector<256x128xf32>
    %166 = vector.broadcast %145 : vector<1x128xf32> to vector<256x128xf32>
    %167 = arith.mulf %165, %166 : vector<256x128xf32>
    %168 = vector.broadcast %147 : vector<1x128xf32> to vector<256x128xf32>
    %169 = arith.addf %167, %168 : vector<256x128xf32>
    %170 = arith.truncf %169 : vector<256x128xf32> to vector<256x128xbf16>
    %c0_62 = arith.constant 0 : index
    %c0_63 = arith.constant 0 : index
    %c0_64 = arith.constant 0 : index
    %171 = vector.load %arg11[%c0_62, %c0_63, %c0_64] : memref<1x128x256xbf16, #tpu.memory_space<vmem>>, vector<1x128x256xbf16>
    %172 = vector.shape_cast %171 : vector<1x128x256xbf16> to vector<128x256xbf16>
    %cst_65 = arith.constant dense<0.000000e+00> : vector<256x256xf32>
    %173 = tpu.matmul %170, %172, %cst_65 {dimension_numbers = #tpu.dot_dimension_numbers<[1], [0], [0], [1], [0, 0, 1, 1], [], []>} : vector<256x128xbf16>, vector<128x256xbf16>, vector<256x256xf32> -> vector<256x256xf32>
    %c0_66 = arith.constant 0 : index
    %c0_67 = arith.constant 0 : index
    %c0_68 = arith.constant 0 : index
    %174 = vector.load %arg12[%c0_66, %c0_67, %c0_68] : memref<1x1x256xf32, #tpu.memory_space<vmem>>, vector<1x1x256xf32>
    %175 = vector.shape_cast %174 : vector<1x1x256xf32> to vector<1x256xf32>
    %176 = vector.broadcast %175 : vector<1x256xf32> to vector<256x256xf32>
    %177 = arith.addf %173, %176 : vector<256x256xf32>
    %178 = arith.mulf %177, %177 : vector<256x256xf32>
    %179 = arith.mulf %177, %178 : vector<256x256xf32>
    %cst_69 = arith.constant 4.471500e-02 : f32
    %180 = vector.broadcast %cst_69 : f32 to vector<256x256xf32>
    %181 = arith.mulf %180, %179 : vector<256x256xf32>
    %182 = arith.addf %177, %181 : vector<256x256xf32>
    %cst_70 = arith.constant 0.797884583 : f32
    %183 = vector.broadcast %cst_70 : f32 to vector<256x256xf32>
    %184 = arith.mulf %183, %182 : vector<256x256xf32>
    %185 = math.tanh %184 : vector<256x256xf32>
    %cst_71 = arith.constant 1.000000e+00 : f32
    %186 = vector.broadcast %cst_71 : f32 to vector<256x256xf32>
    %187 = arith.addf %186, %185 : vector<256x256xf32>
    %cst_72 = arith.constant 5.000000e-01 : f32
    %188 = vector.broadcast %cst_72 : f32 to vector<256x256xf32>
    %189 = arith.mulf %188, %187 : vector<256x256xf32>
    %190 = arith.mulf %177, %189 : vector<256x256xf32>
    %191 = arith.truncf %190 : vector<256x256xf32> to vector<256x256xbf16>
    %c0_73 = arith.constant 0 : index
    %c0_74 = arith.constant 0 : index
    %c0_75 = arith.constant 0 : index
    %192 = vector.load %arg13[%c0_73, %c0_74, %c0_75] : memref<1x256x128xbf16, #tpu.memory_space<vmem>>, vector<1x256x128xbf16>
    %193 = vector.shape_cast %192 : vector<1x256x128xbf16> to vector<256x128xbf16>
    %cst_76 = arith.constant dense<0.000000e+00> : vector<256x128xf32>
    %194 = tpu.matmul %191, %193, %cst_76 {dimension_numbers = #tpu.dot_dimension_numbers<[1], [0], [0], [1], [0, 0, 1, 1], [], []>} : vector<256x256xbf16>, vector<256x128xbf16>, vector<256x128xf32> -> vector<256x128xf32>
    %c0_77 = arith.constant 0 : index
    %c0_78 = arith.constant 0 : index
    %c0_79 = arith.constant 0 : index
    %195 = vector.load %arg14[%c0_77, %c0_78, %c0_79] : memref<1x1x128xf32, #tpu.memory_space<vmem>>, vector<1x1x128xf32>
    %196 = vector.shape_cast %195 : vector<1x1x128xf32> to vector<1x128xf32>
    %197 = vector.broadcast %196 : vector<1x128xf32> to vector<256x128xf32>
    %198 = arith.addf %194, %197 : vector<256x128xf32>
    %199 = arith.addf %143, %198 : vector<256x128xf32>
    %200 = vector.shape_cast %199 : vector<256x128xf32> to vector<2x128x128xf32>
    %c0_80 = arith.constant 0 : index
    %c0_81 = arith.constant 0 : index
    %c0_82 = arith.constant 0 : index
    %201 = vector.load %arg18[%c0_80, %c0_81, %c0_82] : memref<2x128x128xf32, #tpu.memory_space<vmem>>, vector<2x128x128xf32>
    tpu.vector_store %arg18[%c0_80, %c0_81, %c0_82], %200 {strides = array<i32>} : memref<2x128x128xf32, #tpu.memory_space<vmem>>, vector<2x128x128xf32>,
    %c1_i32 = arith.constant 1 : i32
    %202 = arith.cmpi eq, %arg1, %c1_i32 : i32
    %203 = arith.extui %202 : i1 to i32
    %c0_i32_83 = arith.constant 0 : i32
    %204 = arith.cmpi ne, %203, %c0_i32_83 : i32
    scf.if %204 {
      %c0_84 = arith.constant 0 : index
      %c0_85 = arith.constant 0 : index
      %205 = vector.load %arg15[%c0_84, %c0_85] : memref<1x128xf32, #tpu.memory_space<vmem>>, vector<1x128xf32>
      %206 = vector.shape_cast %205 : vector<1x128xf32> to vector<128xf32>
      %c0_86 = arith.constant 0 : index
      %c0_87 = arith.constant 0 : index
      %207 = vector.load %arg16[%c0_86, %c0_87] : memref<1x128xf32, #tpu.memory_space<vmem>>, vector<1x128xf32>
      %208 = vector.shape_cast %207 : vector<1x128xf32> to vector<128xf32>
      %cst_88 = arith.constant dense<0.000000e+00> : vector<256xf32>
      %209 = vector.multi_reduction <add>, %199, %cst_88 [1] : vector<256x128xf32> to vector<256xf32>
      %210 = vector.shape_cast %209 : vector<256xf32> to vector<256x1xf32>
      %cst_89 = arith.constant 1.280000e+02 : f32
      %211 = vector.broadcast %cst_89 : f32 to vector<256x1xf32>
      %212 = arith.divf %210, %211 : vector<256x1xf32>
      %213 = vector.broadcast %212 : vector<256x1xf32> to vector<256x128xf32>
      %214 = arith.subf %199, %213 : vector<256x128xf32>
      %215 = arith.mulf %214, %214 : vector<256x128xf32>
      %cst_90 = arith.constant dense<0.000000e+00> : vector<256xf32>
      %216 = vector.multi_reduction <add>, %215, %cst_90 [1] : vector<256x128xf32> to vector<256xf32>
      %217 = vector.shape_cast %216 : vector<256xf32> to vector<256x1xf32>
      %cst_91 = arith.constant 1.280000e+02 : f32
      %218 = vector.broadcast %cst_91 : f32 to vector<256x1xf32>
      %219 = arith.divf %217, %218 : vector<256x1xf32>
      %220 = vector.broadcast %212 : vector<256x1xf32> to vector<256x128xf32>
      %221 = arith.subf %199, %220 : vector<256x128xf32>
      %cst_92 = arith.constant 9.99999997E-7 : f32
      %222 = vector.broadcast %cst_92 : f32 to vector<256x1xf32>
      %223 = arith.addf %219, %222 : vector<256x1xf32>
      %224 = math.rsqrt %223 : vector<256x1xf32>
      %225 = vector.broadcast %224 : vector<256x1xf32> to vector<256x128xf32>
      %226 = arith.mulf %221, %225 : vector<256x128xf32>
      %227 = vector.shape_cast %206 : vector<128xf32> to vector<1x128xf32>
      %228 = vector.broadcast %227 : vector<1x128xf32> to vector<256x128xf32>
      %229 = arith.mulf %226, %228 : vector<256x128xf32>
      %230 = vector.shape_cast %208 : vector<128xf32> to vector<1x128xf32>
      %231 = vector.broadcast %230 : vector<1x128xf32> to vector<256x128xf32>
      %232 = arith.addf %229, %231 : vector<256x128xf32>
      %233 = vector.shape_cast %232 : vector<256x128xf32> to vector<2x128x128xf32>
      %c0_93 = arith.constant 0 : index
      %c0_94 = arith.constant 0 : index
      %c0_95 = arith.constant 0 : index
      %234 = vector.load %arg17[%c0_93, %c0_94, %c0_95] : memref<2x128x128xf32, #tpu.memory_space<vmem>>, vector<2x128x128xf32>
      tpu.vector_store %arg17[%c0_93, %c0_94, %c0_95], %233 {strides = array<i32>} : memref<2x128x128xf32, #tpu.memory_space<vmem>>, vector<2x128x128xf32>,
    } else {
    }
    return
  }
  func.func @transform_0(%arg0: i32, %arg1: i32) -> (i32, i32, i32) {
    %c0_i32 = arith.constant 0 : i32
    %c0_i32_0 = arith.constant 0 : i32
    %c0_i32_1 = arith.constant 0 : i32
    return %arg0, %c0_i32, %c0_i32_0 : i32, i32, i32
  }
  func.func @transform_1(%arg0: i32, %arg1: i32) -> (i32, i32, i32) {
    %c0_i32 = arith.constant 0 : i32
    %c0_i32_0 = arith.constant 0 : i32
    %c0_i32_1 = arith.constant 0 : i32
    return %arg1, %c0_i32, %c0_i32_0 : i32, i32, i32
  }
  func.func @transform_2(%arg0: i32, %arg1: i32) -> (i32, i32, i32) {
    %c0_i32 = arith.constant 0 : i32
    %c0_i32_0 = arith.constant 0 : i32
    %c0_i32_1 = arith.constant 0 : i32
    return %arg1, %c0_i32, %c0_i32_0 : i32, i32, i32
  }
  func.func @transform_3(%arg0: i32, %arg1: i32) -> (i32, i32, i32) {
    %c0_i32 = arith.constant 0 : i32
    %c0_i32_0 = arith.constant 0 : i32
    %c0_i32_1 = arith.constant 0 : i32
    return %arg1, %c0_i32, %c0_i32_0 : i32, i32, i32
  }
  func.func @transform_4(%arg0: i32, %arg1: i32) -> (i32, i32, i32) {
    %c0_i32 = arith.constant 0 : i32
    %c0_i32_0 = arith.constant 0 : i32
    %c0_i32_1 = arith.constant 0 : i32
    return %arg1, %c0_i32, %c0_i32_0 : i32, i32, i32
  }
  func.func @transform_5(%arg0: i32, %arg1: i32) -> (i32, i32, i32) {
    %c0_i32 = arith.constant 0 : i32
    %c0_i32_0 = arith.constant 0 : i32
    %c0_i32_1 = arith.constant 0 : i32
    return %arg1, %c0_i32, %c0_i32_0 : i32, i32, i32
  }
  func.func @transform_6(%arg0: i32, %arg1: i32) -> (i32, i32, i32) {
    %c0_i32 = arith.constant 0 : i32
    %c0_i32_0 = arith.constant 0 : i32
    %c0_i32_1 = arith.constant 0 : i32
    return %arg1, %c0_i32, %c0_i32_0 : i32, i32, i32
  }
  func.func @transform_7(%arg0: i32, %arg1: i32) -> (i32, i32, i32) {
    %c0_i32 = arith.constant 0 : i32
    %c0_i32_0 = arith.constant 0 : i32
    %c0_i32_1 = arith.constant 0 : i32
    return %arg1, %c0_i32, %c0_i32_0 : i32, i32, i32
  }
  func.func @transform_8(%arg0: i32, %arg1: i32) -> (i32, i32, i32) {
    %c0_i32 = arith.constant 0 : i32
    %c0_i32_0 = arith.constant 0 : i32
    %c0_i32_1 = arith.constant 0 : i32
    return %arg1, %c0_i32, %c0_i32_0 : i32, i32, i32
  }
  func.func @transform_9(%arg0: i32, %arg1: i32) -> (i32, i32, i32) {
    %c0_i32 = arith.constant 0 : i32
    %c0_i32_0 = arith.constant 0 : i32
    %c0_i32_1 = arith.constant 0 : i32
    return %arg1, %c0_i32, %c0_i32_0 : i32, i32, i32
  }
  func.func @transform_10(%arg0: i32, %arg1: i32) -> (i32, i32, i32) {
    %c0_i32 = arith.constant 0 : i32
    %c0_i32_0 = arith.constant 0 : i32
    %c0_i32_1 = arith.constant 0 : i32
    return %arg1, %c0_i32, %c0_i32_0 : i32, i32, i32
  }
  func.func @transform_11(%arg0: i32, %arg1: i32) -> (i32, i32, i32) {
    %c0_i32 = arith.constant 0 : i32
    %c0_i32_0 = arith.constant 0 : i32
    %c0_i32_1 = arith.constant 0 : i32
    return %arg1, %c0_i32, %c0_i32_0 : i32, i32, i32
  }
  func.func @transform_12(%arg0: i32, %arg1: i32) -> (i32, i32, i32) {
    %c0_i32 = arith.constant 0 : i32
    %c0_i32_0 = arith.constant 0 : i32
    %c0_i32_1 = arith.constant 0 : i32
    return %arg1, %c0_i32, %c0_i32_0 : i32, i32, i32
  }
  func.func @transform_13(%arg0: i32, %arg1: i32) -> (i32, i32) {
    %c0_i32 = arith.constant 0 : i32
    %c0_i32_0 = arith.constant 0 : i32
    %c0_i32_1 = arith.constant 0 : i32
    return %c0_i32, %c0_i32_0 : i32, i32
  }
  func.func @transform_14(%arg0: i32, %arg1: i32) -> (i32, i32) {
    %c0_i32 = arith.constant 0 : i32
    %c0_i32_0 = arith.constant 0 : i32
    %c0_i32_1 = arith.constant 0 : i32
    return %c0_i32, %c0_i32_0 : i32, i32
  }
  func.func @transform_15(%arg0: i32, %arg1: i32) -> (i32, i32, i32) {
    %c0_i32 = arith.constant 0 : i32
    %c0_i32_0 = arith.constant 0 : i32
    %c0_i32_1 = arith.constant 0 : i32
    return %arg0, %c0_i32, %c0_i32_0 : i32, i32, i32
  }
}

</mosaic_0001>

<llo_original>
// kernel: tpu_custom_call.1
$region0: #{tpu_custom_call.1}
  #allocation0 [shape = 'u32[]', space=smem, size = 0x4, offset = 0x4, fixed_abs, tag = 'smem constant byte address 0x4 - core index']
  #allocation1 [shape = 'u32[72,128]{1,0:T(1,128)}', space=vmem, size = 0x9000, scoped, tag = 'internal scratch']
  #allocation2 [shape = 'f32[2,128,128]{2,1,0:T(8,128)}', space=vmem, size = 0x20000, scoped, tag = 'scratch operand']
  %s0 = inlined_call_operand.hbm [shape: f32[4,128,128], index: 0, kind: input, shape index: {}]
  %s1 = inlined_call_operand.hbm [shape: f32[2,1,128], index: 1, kind: input, shape index: {}]
  %s2 = inlined_call_operand.hbm [shape: f32[2,1,128], index: 2, kind: input, shape index: {}]
  %s3 = inlined_call_operand.hbm [shape: bf16[2,128,384], index: 3, kind: input, shape index: {}]
  %s4 = inlined_call_operand.hbm [shape: f32[2,1,384], index: 4, kind: input, shape index: {}]
  %s5 = inlined_call_operand.hbm [shape: bf16[2,128,128], index: 5, kind: input, shape index: {}]
  %s6 = inlined_call_operand.vmem [shape: f32[2,1,128], index: 6, kind: input, shape index: {}]
  %s7 = inlined_call_operand.hbm [shape: f32[2,1,128], index: 7, kind: input, shape index: {}]
  %s8 = inlined_call_operand.hbm [shape: f32[2,1,128], index: 8, kind: input, shape index: {}]
  %s9 = inlined_call_operand.hbm [shape: bf16[2,128,256], index: 9, kind: input, shape index: {}]
  %s10 = inlined_call_operand.vmem [shape: f32[2,1,256], index: 10, kind: input, shape index: {}]
  %s11 = inlined_call_operand.hbm [shape: bf16[2,256,128], index: 11, kind: input, shape index: {}]
  %s12 = inlined_call_operand.vmem [shape: f32[2,1,128], index: 12, kind: input, shape index: {}]
  %s13 = inlined_call_operand.vmem [shape: f32[1,128], index: 13, kind: input, shape index: {}]
  %s14 = inlined_call_operand.vmem [shape: f32[1,128], index: 14, kind: input, shape index: {}]
  %s15 = inlined_call_operand.hbm [shape: f32[4,128,128], index: 15, kind: output, shape index: {}]
  %s16 = sld [smem:[#allocation0]]
  $region141: #{tpu_custom_call.1} parent=0
    _
  %s18 = ssub.s32 1, %s16
  %s19 = scalar_select 0, %s18, %s16
  $region1: #{tpu_custom_call.1} parent=0
    #allocation3 [shape = 'u8[262144]{0}', space=vmem, size = 0x40000, scoped, tag = 'input window, operand 0']
    #allocation4 [shape = 's32[2]{0}', space=sflag, size = 0x8, scoped, tag = 'scoped memory for tpu_custom_call.1']
    #allocation5 [shape = 's32[2]{0}', space=sflag, size = 0x8, scoped, tag = 'scoped memory for tpu_custom_call.1']
    #allocation6 [shape = 'u8[1024]{0}', space=vmem, size = 0x400, scoped, tag = 'input window, operand 1']
    #allocation7 [shape = 's32[2]{0}', space=sflag, size = 0x8, scoped, tag = 'scoped memory for tpu_custom_call.1']
    #allocation8 [shape = 'u8[1024]{0}', space=vmem, size = 0x400, scoped, tag = 'input window, operand 2']
    #allocation9 [shape = 'u8[196608]{0}', space=vmem, size = 0x30000, scoped, tag = 'input window, operand 3']
    #allocation10 [shape = 's32[2]{0}', space=sflag, size = 0x8, scoped, tag = 'scoped memory for tpu_custom_call.1']
    #allocation11 [shape = 'u8[3072]{0}', space=vmem, size = 0xc00, scoped, tag = 'input window, operand 4']
    #allocation12 [shape = 'u8[65536]{0}', space=vmem, size = 0x10000, scoped, tag = 'input window, operand 5']
    #allocation13 [shape = 's32[2]{0}', space=sflag, size = 0x8, scoped, tag = 'scoped memory for tpu_custom_call.1']
    #allocation14 [shape = 'u8[1024]{0}', space=vmem, size = 0x400, scoped, tag = 'input window, operand 7']
    #allocation15 [shape = 'u8[1024]{0}', space=vmem, size = 0x400, scoped, tag = 'input window, operand 8']
    #allocation16 [shape = 's32[2]{0}', space=sflag, size = 0x8, scoped, tag = 'scoped memory for tpu_custom_call.1']
    #allocation17 [shape = 'u8[131072]{0}', space=vmem, size = 0x20000, scoped, tag = 'input window, operand 9']
    #allocation18 [shape = 'u8[131072]{0}', space=vmem, size = 0x20000, scoped, tag = 'input window, operand 11']
    #allocation19 [shape = 's32[2]{0}', space=sflag, size = 0x8, scoped, tag = 'scoped memory for tpu_custom_call.1']
    #allocation20 [shape = 'u8[262144]{0}', space=vmem, size = 0x40000, scoped, tag = 'output window, operand 0']
    %20 = vsyncpa [#allocation4], 0
    %s21 = scalar_lea.sflag [#allocation4], 1
    %22 = vsyncpa %s21, 0
    %23 = vsyncpa [#allocation7], 0
    %s24 = scalar_lea.sflag [#allocation7], 1
    %25 = vsyncpa %s24, 0
    %26 = vsyncpa [#allocation10], 0
    %s27 = scalar_lea.sflag [#allocation10], 1
    %28 = vsyncpa %s27, 0
    %29 = vsyncpa [#allocation13], 0
    %s30 = scalar_lea.sflag [#allocation13], 1
    %31 = vsyncpa %s30, 0
    %32 = vsyncpa [#allocation16], 0
    %s33 = scalar_lea.sflag [#allocation16], 1
    %34 = vsyncpa %s33, 0
    %35 = vsyncpa [#allocation19], 0
    %s36 = scalar_lea.sflag [#allocation19], 1
    %37 = vsyncpa %s36, 0
    %38 = vsyncpa [#allocation5], 0
    %s39 = scalar_lea.sflag [#allocation5], 1
    %40 = vsyncpa %s39, 0
    loop: start=0, step=1, limit=6
    $region2: #{tpu_custom_call.1} parent=1 // loop_pre_header
      _
    $region3: #{tpu_custom_call.1} parent=1 // loop_header
      %s42 = sphi 0, %s46
      %p43 = scmp.ge.s32.totalorder %s42, 6
      %s49 = sphi 0, %s61
      %s50 = sphi 0, %s57
      %s51 = sphi 0, %s49
      %s52 = sphi 0, %s50
      %s53 = sphi 0, %s51
      %s54 = sphi 0, %s52
      %s64 = sphi 0, %s66
      %s67 = sphi 0, %s64
      %s68 = sphi 0, %s67
      %s84 = sphi 0, %s68
      %s90 = sphi 0, %s92
      %s93 = sphi 0, %s90
      %s94 = sphi 0, %s93
      %s110 = sphi 0, %s94
      %s116 = sphi 0, %s118
      %s119 = sphi 0, %s116
      %s120 = sphi 0, %s119
      %s136 = sphi 0, %s120
      %s142 = sphi 0, %s144
      %s145 = sphi 0, %s142
      %s146 = sphi 0, %s145
      %s162 = sphi 0, %s146
      %s168 = sphi 0, %s170
      %s171 = sphi 0, %s168
      %s172 = sphi 0, %s171
      %s188 = sphi 0, %s172
      %s194 = sphi 0, %s196
      %s197 = sphi 0, %s194
      %s198 = sphi 0, %s197
      %s214 = sphi 0, %s198
      %s220 = sphi 0, %s222
      %s223 = sphi 0, %s220
      %s224 = sphi 0, %s223
      %s240 = sphi 0, %s224
      %s246 = sphi 0, %s248
      %s249 = sphi 0, %s246
      %s250 = sphi 0, %s249
      %s266 = sphi 0, %s250
      %s272 = sphi 0, %s274
      %s275 = sphi 0, %s272
      %s276 = sphi 0, %s275
      %s292 = sphi 0, %s276
      %s298 = sphi 0, %s300
      %s301 = sphi 0, %s298
      %s302 = sphi 0, %s301
      %s318 = sphi 0, %s302
      %s324 = sphi 0, %s326
      %s327 = sphi 0, %s324
      %s328 = sphi 0, %s327
      %s344 = sphi 0, %s328
      %s350 = sphi 0, %s352
      %s353 = sphi 0, %s350
      %s354 = sphi 0, %s353
      %s370 = sphi 0, %s354
      %s376 = sphi 0, %s378
      %s379 = sphi 0, %s376
      %s380 = sphi 0, %s379
      %s396 = sphi 0, %s380
      %s400 = sphi 0, %s400
      %s402 = sphi 0, %s400
      %s403 = sphi 0, %s402
      %s417 = sphi 0, %s403
      %s421 = sphi 0, %s421
      %s423 = sphi 0, %s421
      %s424 = sphi 0, %s423
      %s438 = sphi 0, %s424
      %s444 = sphi 0, %s446
      %s447 = sphi 0, %s444
      %s448 = sphi 0, %s447
      %s464 = sphi 0, %s448
    $region4: #{tpu_custom_call.1} parent=1 // loop_header_branch
      %45 = sbr.rel (%p43) target = $region8
    $region5: #{tpu_custom_call.1} parent=1 // loop_body
      %s47 = ssub.s32 %s42, 1
      %s48 = ssub.s32 %s42, 2
      %s55 = sadd.s32 1, %s50
      %p56 = scmp.ge.s32.totalorder %s55, 2
      %s57 = scalar_select %p56, 0, %s55
      %s58 = sadd.s32 1, %s49
      %s59 = scalar_select %p56, %s58, %s49
      %p60 = scmp.ge.s32.totalorder %s59, 2
      %s61 = scalar_select %p60, 0, %s59
      %s62 = ssub.s32 %s49, %s61
      %p63 = scmp.eq.s32.totalorder %s62, 0
      %s65 = sadd.s32 %s64, 1
      %s66 = scalar_select %p63, %s64, %s65
      %p69 = pneg %p63
      %p70 = scmp.eq.s32.totalorder %s42, 3
      %p71 = por %p69, %p70
      %p72 = scmp.ne.s32.totalorder %s64, %s67
      %p73 = scmp.eq.s32.totalorder %s42, 0
      %p74 = por %p72, %p73
      %p75 = scmp.ne.s32.totalorder %s64, %s67
      %p76 = scmp.eq.s32.totalorder %s47, 3
      %p77 = por %p75, %p76
      %p78 = scmp.ne.s32.totalorder %s67, %s68
      %p79 = scmp.eq.s32.totalorder %s47, 0
      %p80 = por %p78, %p79
      %p81 = scmp.ne.s32.totalorder %s67, %s68
      %p82 = scmp.eq.s32.totalorder %s48, 3
      %p83 = por %p81, %p82
      %p85 = scmp.ne.s32.totalorder %s68, %s84
      %p86 = scmp.eq.s32.totalorder %s48, 0
      %p87 = por %p85, %p86
      %s88 = ssub.s32 %s50, %s57
      %p89 = scmp.eq.s32.totalorder %s88, 0
      %s91 = sadd.s32 %s90, 1
      %s92 = scalar_select %p89, %s90, %s91
      %p95 = pneg %p89
      %p96 = scmp.eq.s32.totalorder %s42, 3
      %p97 = por %p95, %p96
      %p98 = scmp.ne.s32.totalorder %s90, %s93
      %p99 = scmp.eq.s32.totalorder %s42, 0
      %p100 = por %p98, %p99
      %p101 = scmp.ne.s32.totalorder %s90, %s93
      %p102 = scmp.eq.s32.totalorder %s47, 3
      %p103 = por %p101, %p102
      %p104 = scmp.ne.s32.totalorder %s93, %s94
      %p105 = scmp.eq.s32.totalorder %s47, 0
      %p106 = por %p104, %p105
      %p107 = scmp.ne.s32.totalorder %s93, %s94
      %p108 = scmp.eq.s32.totalorder %s48, 3
      %p109 = por %p107, %p108
      %p111 = scmp.ne.s32.totalorder %s94, %s110
      %p112 = scmp.eq.s32.totalorder %s48, 0
      %p113 = por %p111, %p112
      %s114 = ssub.s32 %s50, %s57
      %p115 = scmp.eq.s32.totalorder %s114, 0
      %s117 = sadd.s32 %s116, 1
      %s118 = scalar_select %p115, %s116, %s117
      %p121 = pneg %p115
      %p122 = scmp.eq.s32.totalorder %s42, 3
      %p123 = por %p121, %p122
      %p124 = scmp.ne.s32.totalorder %s116, %s119
      %p125 = scmp.eq.s32.totalorder %s42, 0
      %p126 = por %p124, %p125
      %p127 = scmp.ne.s32.totalorder %s116, %s119
      %p128 = scmp.eq.s32.totalorder %s47, 3
      %p129 = por %p127, %p128
      %p130 = scmp.ne.s32.totalorder %s119, %s120
      %p131 = scmp.eq.s32.totalorder %s47, 0
      %p132 = por %p130, %p131
      %p133 = scmp.ne.s32.totalorder %s119, %s120
      %p134 = scmp.eq.s32.totalorder %s48, 3
      %p135 = por %p133, %p134
      %p137 = scmp.ne.s32.totalorder %s120, %s136
      %p138 = scmp.eq.s32.totalorder %s48, 0
      %p139 = por %p137, %p138
      %s140 = ssub.s32 %s50, %s57
      %p141 = scmp.eq.s32.totalorder %s140, 0
      %s143 = sadd.s32 %s142, 1
      %s144 = scalar_select %p141, %s142, %s143
      %p147 = pneg %p141
      %p148 = scmp.eq.s32.totalorder %s42, 3
      %p149 = por %p147, %p148
      %p150 = scmp.ne.s32.totalorder %s142, %s145
      %p151 = scmp.eq.s32.totalorder %s42, 0
      %p152 = por %p150, %p151
      %p153 = scmp.ne.s32.totalorder %s142, %s145
      %p154 = scmp.eq.s32.totalorder %s47, 3
      %p155 = por %p153, %p154
      %p156 = scmp.ne.s32.totalorder %s145, %s146
      %p157 = scmp.eq.s32.totalorder %s47, 0
      %p158 = por %p156, %p157
      %p159 = scmp.ne.s32.totalorder %s145, %s146
      %p160 = scmp.eq.s32.totalorder %s48, 3
      %p161 = por %p159, %p160
      %p163 = scmp.ne.s32.totalorder %s146, %s162
      %p164 = scmp.eq.s32.totalorder %s48, 0
      %p165 = por %p163, %p164
      %s166 = ssub.s32 %s50, %s57
      %p167 = scmp.eq.s32.totalorder %s166, 0
      %s169 = sadd.s32 %s168, 1
      %s170 = scalar_select %p167, %s168, %s169
      %p173 = pneg %p167
      %p174 = scmp.eq.s32.totalorder %s42, 3
      %p175 = por %p173, %p174
      %p176 = scmp.ne.s32.totalorder %s168, %s171
      %p177 = scmp.eq.s32.totalorder %s42, 0
      %p178 = por %p176, %p177
      %p179 = scmp.ne.s32.totalorder %s168, %s171
      %p180 = scmp.eq.s32.totalorder %s47, 3
      %p181 = por %p179, %p180
      %p182 = scmp.ne.s32.totalorder %s171, %s172
      %p183 = scmp.eq.s32.totalorder %s47, 0
      %p184 = por %p182, %p183
      %p185 = scmp.ne.s32.totalorder %s171, %s172
      %p186 = scmp.eq.s32.totalorder %s48, 3
      %p187 = por %p185, %p186
      %p189 = scmp.ne.s32.totalorder %s172, %s188
      %p190 = scmp.eq.s32.totalorder %s48, 0
      %p191 = por %p189, %p190
      %s192 = ssub.s32 %s50, %s57
      %p193 = scmp.eq.s32.totalorder %s192, 0
      %s195 = sadd.s32 %s194, 1
      %s196 = scalar_select %p193, %s194, %s195
      %p199 = pneg %p193
      %p200 = scmp.eq.s32.totalorder %s42, 3
      %p201 = por %p199, %p200
      %p202 = scmp.ne.s32.totalorder %s194, %s197
      %p203 = scmp.eq.s32.totalorder %s42, 0
      %p204 = por %p202, %p203
      %p205 = scmp.ne.s32.totalorder %s194, %s197
      %p206 = scmp.eq.s32.totalorder %s47, 3
      %p207 = por %p205, %p206
      %p208 = scmp.ne.s32.totalorder %s197, %s198
      %p209 = scmp.eq.s32.totalorder %s47, 0
      %p210 = por %p208, %p209
      %p211 = scmp.ne.s32.totalorder %s197, %s198
      %p212 = scmp.eq.s32.totalorder %s48, 3
      %p213 = por %p211, %p212
      %p215 = scmp.ne.s32.totalorder %s198, %s214
      %p216 = scmp.eq.s32.totalorder %s48, 0
      %p217 = por %p215, %p216
      %s218 = ssub.s32 %s50, %s57
      %p219 = scmp.eq.s32.totalorder %s218, 0
      %s221 = sadd.s32 %s220, 1
      %s222 = scalar_select %p219, %s220, %s221
      %p225 = pneg %p219
      %p226 = scmp.eq.s32.totalorder %s42, 3
      %p227 = por %p225, %p226
      %p228 = scmp.ne.s32.totalorder %s220, %s223
      %p229 = scmp.eq.s32.totalorder %s42, 0
      %p230 = por %p228, %p229
      %p231 = scmp.ne.s32.totalorder %s220, %s223
      %p232 = scmp.eq.s32.totalorder %s47, 3
      %p233 = por %p231, %p232
      %p234 = scmp.ne.s32.totalorder %s223, %s224
      %p235 = scmp.eq.s32.totalorder %s47, 0
      %p236 = por %p234, %p235
      %p237 = scmp.ne.s32.totalorder %s223, %s224
      %p238 = scmp.eq.s32.totalorder %s48, 3
      %p239 = por %p237, %p238
      %p241 = scmp.ne.s32.totalorder %s224, %s240
      %p242 = scmp.eq.s32.totalorder %s48, 0
      %p243 = por %p241, %p242
      %s244 = ssub.s32 %s50, %s57
      %p245 = scmp.eq.s32.totalorder %s244, 0
      %s247 = sadd.s32 %s246, 1
      %s248 = scalar_select %p245, %s246, %s247
      %p251 = pneg %p245
      %p252 = scmp.eq.s32.totalorder %s42, 3
      %p253 = por %p251, %p252
      %p254 = scmp.ne.s32.totalorder %s246, %s249
      %p255 = scmp.eq.s32.totalorder %s42, 0
      %p256 = por %p254, %p255
      %p257 = scmp.ne.s32.totalorder %s246, %s249
      %p258 = scmp.eq.s32.totalorder %s47, 3
      %p259 = por %p257, %p258
      %p260 = scmp.ne.s32.totalorder %s249, %s250
      %p261 = scmp.eq.s32.totalorder %s47, 0
      %p262 = por %p260, %p261
      %p263 = scmp.ne.s32.totalorder %s249, %s250
      %p264 = scmp.eq.s32.totalorder %s48, 3
      %p265 = por %p263, %p264
      %p267 = scmp.ne.s32.totalorder %s250, %s266
      %p268 = scmp.eq.s32.totalorder %s48, 0
      %p269 = por %p267, %p268
      %s270 = ssub.s32 %s50, %s57
      %p271 = scmp.eq.s32.totalorder %s270, 0
      %s273 = sadd.s32 %s272, 1
      %s274 = scalar_select %p271, %s272, %s273
      %p277 = pneg %p271
      %p278 = scmp.eq.s32.totalorder %s42, 3
      %p279 = por %p277, %p278
      %p280 = scmp.ne.s32.totalorder %s272, %s275
      %p281 = scmp.eq.s32.totalorder %s42, 0
      %p282 = por %p280, %p281
      %p283 = scmp.ne.s32.totalorder %s272, %s275
      %p284 = scmp.eq.s32.totalorder %s47, 3
      %p285 = por %p283, %p284
      %p286 = scmp.ne.s32.totalorder %s275, %s276
      %p287 = scmp.eq.s32.totalorder %s47, 0
      %p288 = por %p286, %p287
      %p289 = scmp.ne.s32.totalorder %s275, %s276
      %p290 = scmp.eq.s32.totalorder %s48, 3
      %p291 = por %p289, %p290
      %p293 = scmp.ne.s32.totalorder %s276, %s292
      %p294 = scmp.eq.s32.totalorder %s48, 0
      %p295 = por %p293, %p294
      %s296 = ssub.s32 %s50, %s57
      %p297 = scmp.eq.s32.totalorder %s296, 0
      %s299 = sadd.s32 %s298, 1
      %s300 = scalar_select %p297, %s298, %s299
      %p303 = pneg %p297
      %p304 = scmp.eq.s32.totalorder %s42, 3
      %p305 = por %p303, %p304
      %p306 = scmp.ne.s32.totalorder %s298, %s301
      %p307 = scmp.eq.s32.totalorder %s42, 0
      %p308 = por %p306, %p307
      %p309 = scmp.ne.s32.totalorder %s298, %s301
      %p310 = scmp.eq.s32.totalorder %s47, 3
      %p311 = por %p309, %p310
      %p312 = scmp.ne.s32.totalorder %s301, %s302
      %p313 = scmp.eq.s32.totalorder %s47, 0
      %p314 = por %p312, %p313
      %p315 = scmp.ne.s32.totalorder %s301, %s302
      %p316 = scmp.eq.s32.totalorder %s48, 3
      %p317 = por %p315, %p316
      %p319 = scmp.ne.s32.totalorder %s302, %s318
      %p320 = scmp.eq.s32.totalorder %s48, 0
      %p321 = por %p319, %p320
      %s322 = ssub.s32 %s50, %s57
      %p323 = scmp.eq.s32.totalorder %s322, 0
      %s325 = sadd.s32 %s324, 1
      %s326 = scalar_select %p323, %s324, %s325
      %p329 = pneg %p323
      %p330 = scmp.eq.s32.totalorder %s42, 3
      %p331 = por %p329, %p330
      %p332 = scmp.ne.s32.totalorder %s324, %s327
      %p333 = scmp.eq.s32.totalorder %s42, 0
      %p334 = por %p332, %p333
      %p335 = scmp.ne.s32.totalorder %s324, %s327
      %p336 = scmp.eq.s32.totalorder %s47, 3
      %p337 = por %p335, %p336
      %p338 = scmp.ne.s32.totalorder %s327, %s328
      %p339 = scmp.eq.s32.totalorder %s47, 0
      %p340 = por %p338, %p339
      %p341 = scmp.ne.s32.totalorder %s327, %s328
      %p342 = scmp.eq.s32.totalorder %s48, 3
      %p343 = por %p341, %p342
      %p345 = scmp.ne.s32.totalorder %s328, %s344
      %p346 = scmp.eq.s32.totalorder %s48, 0
      %p347 = por %p345, %p346
      %s348 = ssub.s32 %s50, %s57
      %p349 = scmp.eq.s32.totalorder %s348, 0
      %s351 = sadd.s32 %s350, 1
      %s352 = scalar_select %p349, %s350, %s351
      %p355 = pneg %p349
      %p356 = scmp.eq.s32.totalorder %s42, 3
      %p357 = por %p355, %p356
      %p358 = scmp.ne.s32.totalorder %s350, %s353
      %p359 = scmp.eq.s32.totalorder %s42, 0
      %p360 = por %p358, %p359
      %p361 = scmp.ne.s32.totalorder %s350, %s353
      %p362 = scmp.eq.s32.totalorder %s47, 3
      %p363 = por %p361, %p362
      %p364 = scmp.ne.s32.totalorder %s353, %s354
      %p365 = scmp.eq.s32.totalorder %s47, 0
      %p366 = por %p364, %p365
      %p367 = scmp.ne.s32.totalorder %s353, %s354
      %p368 = scmp.eq.s32.totalorder %s48, 3
      %p369 = por %p367, %p368
      %p371 = scmp.ne.s32.totalorder %s354, %s370
      %p372 = scmp.eq.s32.totalorder %s48, 0
      %p373 = por %p371, %p372
      %s374 = ssub.s32 %s50, %s57
      %p375 = scmp.eq.s32.totalorder %s374, 0
      %s377 = sadd.s32 %s376, 1
      %s378 = scalar_select %p375, %s376, %s377
      %p381 = pneg %p375
      %p382 = scmp.eq.s32.totalorder %s42, 3
      %p383 = por %p381, %p382
      %p384 = scmp.ne.s32.totalorder %s376, %s379
      %p385 = scmp.eq.s32.totalorder %s42, 0
      %p386 = por %p384, %p385
      %p387 = scmp.ne.s32.totalorder %s376, %s379
      %p388 = scmp.eq.s32.totalorder %s47, 3
      %p389 = por %p387, %p388
      %p390 = scmp.ne.s32.totalorder %s379, %s380
      %p391 = scmp.eq.s32.totalorder %s47, 0
      %p392 = por %p390, %p391
      %p393 = scmp.ne.s32.totalorder %s379, %s380
      %p394 = scmp.eq.s32.totalorder %s48, 3
      %p395 = por %p393, %p394
      %p397 = scmp.ne.s32.totalorder %s380, %s396
      %p398 = scmp.eq.s32.totalorder %s48, 0
      %p399 = por %p397, %p398
      %s401 = sadd.s32 %s400, 1
      %p404 = scmp.eq.s32.totalorder %s42, 3
      %p405 = scmp.ne.s32.totalorder %s400, %s402
      %p406 = scmp.eq.s32.totalorder %s42, 0
      %p407 = por %p405, %p406
      %p408 = scmp.ne.s32.totalorder %s400, %s402
      %p409 = scmp.eq.s32.totalorder %s47, 3
      %p410 = por %p408, %p409
      %p411 = scmp.ne.s32.totalorder %s402, %s403
      %p412 = scmp.eq.s32.totalorder %s47, 0
      %p413 = por %p411, %p412
      %p414 = scmp.ne.s32.totalorder %s402, %s403
      %p415 = scmp.eq.s32.totalorder %s48, 3
      %p416 = por %p414, %p415
      %p418 = scmp.ne.s32.totalorder %s403, %s417
      %p419 = scmp.eq.s32.totalorder %s48, 0
      %p420 = por %p418, %p419
      %s422 = sadd.s32 %s421, 1
      %p425 = scmp.eq.s32.totalorder %s42, 3
      %p426 = scmp.ne.s32.totalorder %s421, %s423
      %p427 = scmp.eq.s32.totalorder %s42, 0
      %p428 = por %p426, %p427
      %p429 = scmp.ne.s32.totalorder %s421, %s423
      %p430 = scmp.eq.s32.totalorder %s47, 3
      %p431 = por %p429, %p430
      %p432 = scmp.ne.s32.totalorder %s423, %s424
      %p433 = scmp.eq.s32.totalorder %s47, 0
      %p434 = por %p432, %p433
      %p435 = scmp.ne.s32.totalorder %s423, %s424
      %p436 = scmp.eq.s32.totalorder %s48, 3
      %p437 = por %p435, %p436
      %p439 = scmp.ne.s32.totalorder %s424, %s438
      %p440 = scmp.eq.s32.totalorder %s48, 0
      %p441 = por %p439, %p440
      %s442 = ssub.s32 %s49, %s61
      %p443 = scmp.eq.s32.totalorder %s442, 0
      %s445 = sadd.s32 %s444, 1
      %s446 = scalar_select %p443, %s444, %s445
      %p449 = pneg %p443
      %p450 = scmp.eq.s32.totalorder %s42, 3
      %p451 = por %p449, %p450
      %p452 = scmp.ne.s32.totalorder %s444, %s447
      %p453 = scmp.eq.s32.totalorder %s42, 0
      %p454 = por %p452, %p453
      %p455 = scmp.ne.s32.totalorder %s444, %s447
      %p456 = scmp.eq.s32.totalorder %s47, 3
      %p457 = por %p455, %p456
      %p458 = scmp.ne.s32.totalorder %s447, %s448
      %p459 = scmp.eq.s32.totalorder %s47, 0
      %p460 = por %p458, %p459
      %p461 = scmp.ne.s32.totalorder %s447, %s448
      %p462 = scmp.eq.s32.totalorder %s48, 3
      %p463 = por %p461, %p462
      %p465 = scmp.ne.s32.totalorder %s448, %s464
      %p466 = scmp.eq.s32.totalorder %s48, 0
      %p467 = por %p465, %p466
      %p468 = scmp.le.s32.totalorder 1, %s42
      %p469 = scmp.lt.s32.totalorder %s42, 5
      %p470 = pnand %p468, %p469
      %p471 = pneg %p470
      // Predicated region
      $region9: #{tpu_custom_call.1} parent=5 // pred_check
        _
      $region10: #{tpu_custom_call.1} parent=5 // pred_check_branch
        %473 = sbr.rel (%p470) target = $region12
      $region11: #{tpu_custom_call.1} parent=5 // pred_region
        %s474 = ssub.s32 %s42, 1
        // Predicated region
        $region13: #{tpu_custom_call.1} parent=11 // pred_check
          %p475 = pneg %p413
        $region14: #{tpu_custom_call.1} parent=11 // pred_check_branch
          %477 = sbr.rel (%p475) target = $region16
        $region15: #{tpu_custom_call.1} parent=11 // pred_region
          _
        $region16: #{tpu_custom_call.1} parent=11 // pred_fallthru
          _
        // Predicated region
        $region17: #{tpu_custom_call.1} parent=11 // pred_check
          %p478 = pneg %p434
        $region18: #{tpu_custom_call.1} parent=11 // pred_check_branch
          %480 = sbr.rel (%p478) target = $region20
        $region19: #{tpu_custom_call.1} parent=11 // pred_region
          _
        $region20: #{tpu_custom_call.1} parent=11 // pred_fallthru
          _
      $region12: #{tpu_custom_call.1} parent=5 // pred_fallthru
        _
      %p481 = scmp.lt.s32.totalorder %s42, 4
      // Predicated region
      $region21: #{tpu_custom_call.1} parent=5 // pred_check
        %p482 = pneg %p481
      $region22: #{tpu_custom_call.1} parent=5 // pred_check_branch
        %484 = sbr.rel (%p482) target = $region24
      $region23: #{tpu_custom_call.1} parent=5 // pred_region
        // Predicated region
        $region25: #{tpu_custom_call.1} parent=23 // pred_check
          %p485 = pneg %p74
        $region26: #{tpu_custom_call.1} parent=23 // pred_check_branch
          %487 = sbr.rel (%p485) target = $region28
        $region27: #{tpu_custom_call.1} parent=23 // pred_region
          %s488 = sand.u32 %s64, 1
          %s489 = scalar_lea.sflag [#allocation4], %s488
          %s490 = sand.u32 %s64, 1
          %s491 = smul.addr %s490, 256
          %s492 = scalar_lea.vmem [#allocation3], %s491
          %s493 = smul.u32 2, %s49
          %495 = vsyncadd %s489, 0
          %s496 = smul.addr %s493, 16
          %s497 = smul.addr %s496, 8
          %s498 = scalar_lea.hbm %s0, %s497
          %s499 = sshll.u32 %s498, 4
          %s500 = int_to_ptr.hbm [resolvable:$true] %s499
          %s501 = sshll.u32 %s492, 4
          %s502 = int_to_ptr.vmem [resolvable:$true] %s501
          %507 = dma.hbm_to_vmem [thread:$0]  %s500, 4096, %s502, %s489, 128, 128, 8
        $region28: #{tpu_custom_call.1} parent=23 // pred_fallthru
          _
        // Predicated region
        $region29: #{tpu_custom_call.1} parent=23 // pred_check
          %p508 = pneg %p100
        $region30: #{tpu_custom_call.1} parent=23 // pred_check_branch
          %510 = sbr.rel (%p508) target = $region32
        $region31: #{tpu_custom_call.1} parent=23 // pred_region
          %s511 = sand.u32 %s42, 1
          %s512 = scalar_lea.sflag [#allocation7], %s511
          %s513 = sand.u32 %s90, 1
          %s514 = scalar_lea.vmem [#allocation6], %s513
          %516 = vsyncadd %s512, 0
          %s517 = scalar_lea.hbm %s1, %s50
          %s519 = sshll.u32 %s517, 4
          %s520 = int_to_ptr.hbm [resolvable:$true] %s519
          %s521 = sshll.u32 %s514, 4
          %s522 = int_to_ptr.vmem [resolvable:$true] %s521
          %524 = dma.hbm_to_vmem [thread:$0]  %s520, 16, %s522, %s512
        $region32: #{tpu_custom_call.1} parent=23 // pred_fallthru
          _
        // Predicated region
        $region33: #{tpu_custom_call.1} parent=23 // pred_check
          %p525 = pneg %p126
        $region34: #{tpu_custom_call.1} parent=23 // pred_check_branch
          %527 = sbr.rel (%p525) target = $region36
        $region35: #{tpu_custom_call.1} parent=23 // pred_region
          %s528 = sand.u32 %s42, 1
          %s529 = scalar_lea.sflag [#allocation7], %s528
          %s530 = sand.u32 %s116, 1
          %s531 = scalar_lea.vmem [#allocation8], %s530
          %533 = vsyncadd %s529, 0
          %s534 = scalar_lea.hbm %s2, %s50
          %s536 = sshll.u32 %s534, 4
          %s537 = int_to_ptr.hbm [resolvable:$true] %s536
          %s538 = sshll.u32 %s531, 4
          %s539 = int_to_ptr.vmem [resolvable:$true] %s538
          %541 = dma.hbm_to_vmem [thread:$0]  %s537, 16, %s539, %s529
        $region36: #{tpu_custom_call.1} parent=23 // pred_fallthru
          _
        // Predicated region
        $region37: #{tpu_custom_call.1} parent=23 // pred_check
          %p542 = pneg %p152
        $region38: #{tpu_custom_call.1} parent=23 // pred_check_branch
          %544 = sbr.rel (%p542) target = $region40
        $region39: #{tpu_custom_call.1} parent=23 // pred_region
          %s545 = sand.u32 %s42, 1
          %s546 = scalar_lea.sflag [#allocation10], %s545
          %s547 = sand.u32 %s142, 1
          %s548 = smul.addr %s547, 192
          %s549 = scalar_lea.vmem [#allocation9], %s548
          %551 = vsyncadd %s546, 0
          %s552 = smul.addr %s50, 48
          %s553 = smul.addr %s552, 4
          %s554 = scalar_lea.hbm %s3, %s553
          %s555 = sshll.u32 %s554, 4
          %s556 = int_to_ptr.hbm [resolvable:$true] %s555
          %s557 = sshll.u32 %s549, 4
          %s558 = int_to_ptr.vmem [resolvable:$true] %s557
          %563 = dma.hbm_to_vmem [thread:$0]  %s556, 3072, %s558, %s546, 192, 192, 12
        $region40: #{tpu_custom_call.1} parent=23 // pred_fallthru
          _
        // Predicated region
        $region41: #{tpu_custom_call.1} parent=23 // pred_check
          %p564 = pneg %p178
        $region42: #{tpu_custom_call.1} parent=23 // pred_check_branch
          %566 = sbr.rel (%p564) target = $region44
        $region43: #{tpu_custom_call.1} parent=23 // pred_region
          %s567 = sand.u32 %s42, 1
          %s568 = scalar_lea.sflag [#allocation10], %s567
          %s569 = sand.u32 %s168, 1
          %s570 = smul.addr %s569, 3
          %s571 = scalar_lea.vmem [#allocation11], %s570
          %573 = vsyncadd %s568, 0
          %s574 = smul.addr %s50, 3
          %s575 = scalar_lea.hbm %s4, %s574
          %s577 = sshll.u32 %s575, 4
          %s578 = int_to_ptr.hbm [resolvable:$true] %s577
          %s579 = sshll.u32 %s571, 4
          %s580 = int_to_ptr.vmem [resolvable:$true] %s579
          %582 = dma.hbm_to_vmem [thread:$0]  %s578, 48, %s580, %s568
        $region44: #{tpu_custom_call.1} parent=23 // pred_fallthru
          _
        // Predicated region
        $region45: #{tpu_custom_call.1} parent=23 // pred_check
          %p583 = pneg %p204
        $region46: #{tpu_custom_call.1} parent=23 // pred_check_branch
          %585 = sbr.rel (%p583) target = $region48
        $region47: #{tpu_custom_call.1} parent=23 // pred_region
          %s586 = sand.u32 %s42, 1
          %s587 = scalar_lea.sflag [#allocation13], %s586
          %s588 = sand.u32 %s194, 1
          %s589 = smul.addr %s588, 64
          %s590 = scalar_lea.vmem [#allocation12], %s589
          %592 = vsyncadd %s587, 0
          %s593 = smul.addr %s50, 16
          %s594 = smul.addr %s593, 4
          %s595 = scalar_lea.hbm %s5, %s594
          %s596 = sshll.u32 %s595, 4
          %s597 = int_to_ptr.hbm [resolvable:$true] %s596
          %s598 = sshll.u32 %s590, 4
          %s599 = int_to_ptr.vmem [resolvable:$true] %s598
          %604 = dma.hbm_to_vmem [thread:$0]  %s597, 1024, %s599, %s587, 64, 64, 4
        $region48: #{tpu_custom_call.1} parent=23 // pred_fallthru
          _
        // Predicated region
        $region49: #{tpu_custom_call.1} parent=23 // pred_check
          %p605 = pneg %p230
        $region50: #{tpu_custom_call.1} parent=23 // pred_check_branch
          %607 = sbr.rel (%p605) target = $region52
        $region51: #{tpu_custom_call.1} parent=23 // pred_region
          %p608 = scmp.lt.s32.totalorder %s50, 1
          %s609 = scalar_select %p608, %s50, 1
          %s610 = scalar_lea.vmem %s6, %s609
        $region52: #{tpu_custom_call.1} parent=23 // pred_fallthru
          _
        // Predicated region
        $region53: #{tpu_custom_call.1} parent=23 // pred_check
          %p611 = pneg %p256
        $region54: #{tpu_custom_call.1} parent=23 // pred_check_branch
          %613 = sbr.rel (%p611) target = $region56
        $region55: #{tpu_custom_call.1} parent=23 // pred_region
          %s614 = sand.u32 %s42, 1
          %s615 = scalar_lea.sflag [#allocation13], %s614
          %s616 = sand.u32 %s246, 1
          %s617 = scalar_lea.vmem [#allocation14], %s616
          %619 = vsyncadd %s615, 0
          %s620 = scalar_lea.hbm %s7, %s50
          %s622 = sshll.u32 %s620, 4
          %s623 = int_to_ptr.hbm [resolvable:$true] %s622
          %s624 = sshll.u32 %s617, 4
          %s625 = int_to_ptr.vmem [resolvable:$true] %s624
          %627 = dma.hbm_to_vmem [thread:$0]  %s623, 16, %s625, %s615
        $region56: #{tpu_custom_call.1} parent=23 // pred_fallthru
          _
        // Predicated region
        $region57: #{tpu_custom_call.1} parent=23 // pred_check
          %p628 = pneg %p282
        $region58: #{tpu_custom_call.1} parent=23 // pred_check_branch
          %630 = sbr.rel (%p628) target = $region60
        $region59: #{tpu_custom_call.1} parent=23 // pred_region
          %s631 = sand.u32 %s42, 1
          %s632 = scalar_lea.sflag [#allocation16], %s631
          %s633 = sand.u32 %s272, 1
          %s634 = scalar_lea.vmem [#allocation15], %s633
          %636 = vsyncadd %s632, 0
          %s637 = scalar_lea.hbm %s8, %s50
          %s639 = sshll.u32 %s637, 4
          %s640 = int_to_ptr.hbm [resolvable:$true] %s639
          %s641 = sshll.u32 %s634, 4
          %s642 = int_to_ptr.vmem [resolvable:$true] %s641
          %644 = dma.hbm_to_vmem [thread:$0]  %s640, 16, %s642, %s632
        $region60: #{tpu_custom_call.1} parent=23 // pred_fallthru
          _
        // Predicated region
        $region61: #{tpu_custom_call.1} parent=23 // pred_check
          %p645 = pneg %p308
        $region62: #{tpu_custom_call.1} parent=23 // pred_check_branch
          %647 = sbr.rel (%p645) target = $region64
        $region63: #{tpu_custom_call.1} parent=23 // pred_region
          %s648 = sand.u32 %s42, 1
          %s649 = scalar_lea.sflag [#allocation16], %s648
          %s650 = sand.u32 %s298, 1
          %s651 = smul.addr %s650, 128
          %s652 = scalar_lea.vmem [#allocation17], %s651
          %654 = vsyncadd %s649, 0
          %s655 = smul.addr %s50, 32
          %s656 = smul.addr %s655, 4
          %s657 = scalar_lea.hbm %s9, %s656
          %s658 = sshll.u32 %s657, 4
          %s659 = int_to_ptr.hbm [resolvable:$true] %s658
          %s660 = sshll.u32 %s652, 4
          %s661 = int_to_ptr.vmem [resolvable:$true] %s660
          %666 = dma.hbm_to_vmem [thread:$0]  %s659, 2048, %s661, %s649, 128, 128, 8
        $region64: #{tpu_custom_call.1} parent=23 // pred_fallthru
          _
        // Predicated region
        $region65: #{tpu_custom_call.1} parent=23 // pred_check
          %p667 = pneg %p334
        $region66: #{tpu_custom_call.1} parent=23 // pred_check_branch
          %669 = sbr.rel (%p667) target = $region68
        $region67: #{tpu_custom_call.1} parent=23 // pred_region
          %p670 = scmp.lt.s32.totalorder %s50, 1
          %s671 = scalar_select %p670, %s50, 1
          %s672 = smul.addr %s671, 2
          %s673 = scalar_lea.vmem %s10, %s672
        $region68: #{tpu_custom_call.1} parent=23 // pred_fallthru
          _
        // Predicated region
        $region69: #{tpu_custom_call.1} parent=23 // pred_check
          %p674 = pneg %p360
        $region70: #{tpu_custom_call.1} parent=23 // pred_check_branch
          %676 = sbr.rel (%p674) target = $region72
        $region71: #{tpu_custom_call.1} parent=23 // pred_region
          %s677 = sand.u32 %s350, 1
          %s678 = scalar_lea.sflag [#allocation19], %s677
          %s679 = sand.u32 %s350, 1
          %s680 = smul.addr %s679, 128
          %s681 = scalar_lea.vmem [#allocation18], %s680
          %683 = vsyncadd %s678, 0
          %s684 = smul.addr %s50, 32
          %s685 = smul.addr %s684, 4
          %s686 = scalar_lea.hbm %s11, %s685
          %s687 = sshll.u32 %s686, 4
          %s688 = int_to_ptr.hbm [resolvable:$true] %s687
          %s689 = sshll.u32 %s681, 4
          %s690 = int_to_ptr.vmem [resolvable:$true] %s689
          %695 = dma.hbm_to_vmem [thread:$0]  %s688, 2048, %s690, %s678, 64, 64, 4
        $region72: #{tpu_custom_call.1} parent=23 // pred_fallthru
          _
        // Predicated region
        $region73: #{tpu_custom_call.1} parent=23 // pred_check
          %p696 = pneg %p386
        $region74: #{tpu_custom_call.1} parent=23 // pred_check_branch
          %698 = sbr.rel (%p696) target = $region76
        $region75: #{tpu_custom_call.1} parent=23 // pred_region
          %p699 = scmp.lt.s32.totalorder %s50, 1
          %s700 = scalar_select %p699, %s50, 1
          %s701 = scalar_lea.vmem %s12, %s700
        $region76: #{tpu_custom_call.1} parent=23 // pred_fallthru
          _
      $region24: #{tpu_custom_call.1} parent=5 // pred_fallthru
        _
      %p702 = scmp.le.s32.totalorder 1, %s42
      %p703 = scmp.lt.s32.totalorder %s42, 5
      %p704 = pnand %p702, %p703
      %p705 = pneg %p704
      // Predicated region
      $region77: #{tpu_custom_call.1} parent=5 // pred_check
        _
      $region78: #{tpu_custom_call.1} parent=5 // pred_check_branch
        %707 = sbr.rel (%p704) target = $region80
      $region79: #{tpu_custom_call.1} parent=5 // pred_region
        %s708 = ssub.s32 %s42, 1
        %s709 = sand.u32 %s67, 1
        %s710 = scalar_lea.sflag [#allocation4], %s709
        %s711 = sand.u32 %s67, 1
        %s712 = smul.addr %s711, 256
        %s713 = scalar_lea.vmem [#allocation3], %s712
        // Predicated region
        $region81: #{tpu_custom_call.1} parent=79 // pred_check
          %p714 = pneg %p80
        $region82: #{tpu_custom_call.1} parent=79 // pred_check_branch
          %716 = sbr.rel (%p714) target = $region84
        $region83: #{tpu_custom_call.1} parent=79 // pred_region
          %718 = dma.done %s710, 4096
        $region84: #{tpu_custom_call.1} parent=79 // pred_fallthru
          _
        %s719 = sand.u32 %s47, 1
        %s720 = scalar_lea.sflag [#allocation7], %s719
        %s721 = sand.u32 %s93, 1
        %s722 = scalar_lea.vmem [#allocation6], %s721
        // Predicated region
        $region85: #{tpu_custom_call.1} parent=79 // pred_check
          %p723 = pneg %p106
        $region86: #{tpu_custom_call.1} parent=79 // pred_check_branch
          %725 = sbr.rel (%p723) target = $region88
        $region87: #{tpu_custom_call.1} parent=79 // pred_region
          %727 = dma.done %s720, 16
        $region88: #{tpu_custom_call.1} parent=79 // pred_fallthru
          _
        %s728 = sand.u32 %s47, 1
        %s729 = scalar_lea.sflag [#allocation7], %s728
        %s730 = sand.u32 %s119, 1
        %s731 = scalar_lea.vmem [#allocation8], %s730
        // Predicated region
        $region89: #{tpu_custom_call.1} parent=79 // pred_check
          %p732 = pneg %p132
        $region90: #{tpu_custom_call.1} parent=79 // pred_check_branch
          %734 = sbr.rel (%p732) target = $region92
        $region91: #{tpu_custom_call.1} parent=79 // pred_region
          %736 = dma.done %s729, 16
        $region92: #{tpu_custom_call.1} parent=79 // pred_fallthru
          _
        %s737 = sand.u32 %s47, 1
        %s738 = scalar_lea.sflag [#allocation10], %s737
        %s739 = sand.u32 %s145, 1
        %s740 = smul.addr %s739, 192
        %s741 = scalar_lea.vmem [#allocation9], %s740
        // Predicated region
        $region93: #{tpu_custom_call.1} parent=79 // pred_check
          %p742 = pneg %p158
        $region94: #{tpu_custom_call.1} parent=79 // pred_check_branch
          %744 = sbr.rel (%p742) target = $region96
        $region95: #{tpu_custom_call.1} parent=79 // pred_region
          %746 = dma.done %s738, 3072
        $region96: #{tpu_custom_call.1} parent=79 // pred_fallthru
          _
        %s747 = sand.u32 %s47, 1
        %s748 = scalar_lea.sflag [#allocation10], %s747
        %s749 = sand.u32 %s171, 1
        %s750 = smul.addr %s749, 3
        %s751 = scalar_lea.vmem [#allocation11], %s750
        // Predicated region
        $region97: #{tpu_custom_call.1} parent=79 // pred_check
          %p752 = pneg %p184
        $region98: #{tpu_custom_call.1} parent=79 // pred_check_branch
          %754 = sbr.rel (%p752) target = $region100
        $region99: #{tpu_custom_call.1} parent=79 // pred_region
          %756 = dma.done %s748, 48
        $region100: #{tpu_custom_call.1} parent=79 // pred_fallthru
          _
        %s757 = sand.u32 %s47, 1
        %s758 = scalar_lea.sflag [#allocation13], %s757
        %s759 = sand.u32 %s197, 1
        %s760 = smul.addr %s759, 64
        %s761 = scalar_lea.vmem [#allocation12], %s760
        // Predicated region
        $region101: #{tpu_custom_call.1} parent=79 // pred_check
          %p762 = pneg %p210
        $region102: #{tpu_custom_call.1} parent=79 // pred_check_branch
          %764 = sbr.rel (%p762) target = $region104
        $region103: #{tpu_custom_call.1} parent=79 // pred_region
          %766 = dma.done %s758, 1024
        $region104: #{tpu_custom_call.1} parent=79 // pred_fallthru
          _
        %s767 = sand.u32 %s47, 1
        %s768 = scalar_lea.sflag [#allocation13], %s767
        %s769 = sand.u32 %s249, 1
        %s770 = scalar_lea.vmem [#allocation14], %s769
        // Predicated region
        $region105: #{tpu_custom_call.1} parent=79 // pred_check
          %p771 = pneg %p262
        $region106: #{tpu_custom_call.1} parent=79 // pred_check_branch
          %773 = sbr.rel (%p771) target = $region108
        $region107: #{tpu_custom_call.1} parent=79 // pred_region
          %775 = dma.done %s768, 16
        $region108: #{tpu_custom_call.1} parent=79 // pred_fallthru
          _
        %s776 = sand.u32 %s47, 1
        %s777 = scalar_lea.sflag [#allocation16], %s776
        %s778 = sand.u32 %s275, 1
        %s779 = scalar_lea.vmem [#allocation15], %s778
        // Predicated region
        $region109: #{tpu_custom_call.1} parent=79 // pred_check
          %p780 = pneg %p288
        $region110: #{tpu_custom_call.1} parent=79 // pred_check_branch
          %782 = sbr.rel (%p780) target = $region112
        $region111: #{tpu_custom_call.1} parent=79 // pred_region
          %784 = dma.done %s777, 16
        $region112: #{tpu_custom_call.1} parent=79 // pred_fallthru
          _
        %s785 = sand.u32 %s47, 1
        %s786 = scalar_lea.sflag [#allocation16], %s785
        %s787 = sand.u32 %s301, 1
        %s788 = smul.addr %s787, 128
        %s789 = scalar_lea.vmem [#allocation17], %s788
        // Predicated region
        $region113: #{tpu_custom_call.1} parent=79 // pred_check
          %p790 = pneg %p314
        $region114: #{tpu_custom_call.1} parent=79 // pred_check_branch
          %792 = sbr.rel (%p790) target = $region116
        $region115: #{tpu_custom_call.1} parent=79 // pred_region
          %794 = dma.done %s786, 2048
        $region116: #{tpu_custom_call.1} parent=79 // pred_fallthru
          _
        %s795 = sand.u32 %s353, 1
        %s796 = scalar_lea.sflag [#allocation19], %s795
        %s797 = sand.u32 %s353, 1
        %s798 = smul.addr %s797, 128
        %s799 = scalar_lea.vmem [#allocation18], %s798
        // Predicated region
        $region117: #{tpu_custom_call.1} parent=79 // pred_check
          %p800 = pneg %p366
        $region118: #{tpu_custom_call.1} parent=79 // pred_check_branch
          %802 = sbr.rel (%p800) target = $region120
        $region119: #{tpu_custom_call.1} parent=79 // pred_region
          %804 = dma.done %s796, 2048
        $region120: #{tpu_custom_call.1} parent=79 // pred_fallthru
          _
        %s805 = sand.u32 %s67, 1
        %s806 = scalar_lea.sflag [#allocation4], %s805
        %s807 = sand.u32 %s67, 1
        %s808 = smul.addr %s807, 256
        %s809 = scalar_lea.vmem [#allocation3], %s808
        %p810 = pneg %p80
        %p811 = pneg %p77
        %s812 = sand.u32 %s47, 1
        %s813 = scalar_lea.sflag [#allocation7], %s812
        %s814 = sand.u32 %s93, 1
        %s815 = scalar_lea.vmem [#allocation6], %s814
        %p816 = pneg %p106
        %p817 = pneg %p103
        %s818 = sand.u32 %s47, 1
        %s819 = scalar_lea.sflag [#allocation7], %s818
        %s820 = sand.u32 %s119, 1
        %s821 = scalar_lea.vmem [#allocation8], %s820
        %p822 = pneg %p132
        %p823 = pneg %p129
        %s824 = sand.u32 %s47, 1
        %s825 = scalar_lea.sflag [#allocation10], %s824
        %s826 = sand.u32 %s145, 1
        %s827 = smul.addr %s826, 192
        %s828 = scalar_lea.vmem [#allocation9], %s827
        %p829 = pneg %p158
        %p830 = pneg %p155
        %s831 = sand.u32 %s47, 1
        %s832 = scalar_lea.sflag [#allocation10], %s831
        %s833 = sand.u32 %s171, 1
        %s834 = smul.addr %s833, 3
        %s835 = scalar_lea.vmem [#allocation11], %s834
        %p836 = pneg %p184
        %p837 = pneg %p181
        %s838 = sand.u32 %s47, 1
        %s839 = scalar_lea.sflag [#allocation13], %s838
        %s840 = sand.u32 %s197, 1
        %s841 = smul.addr %s840, 64
        %s842 = scalar_lea.vmem [#allocation12], %s841
        %p843 = pneg %p210
        %p844 = pneg %p207
        %p845 = scmp.lt.s32.totalorder %s52, 1
        %s846 = scalar_select %p845, %s52, 1
        %s847 = scalar_lea.vmem %s6, %s846
        %p848 = pneg %p236
        %p849 = pneg %p233
        %s850 = sand.u32 %s47, 1
        %s851 = scalar_lea.sflag [#allocation13], %s850
        %s852 = sand.u32 %s249, 1
        %s853 = scalar_lea.vmem [#allocation14], %s852
        %p854 = pneg %p262
        %p855 = pneg %p259
        %s856 = sand.u32 %s47, 1
        %s857 = scalar_lea.sflag [#allocation16], %s856
        %s858 = sand.u32 %s275, 1
        %s859 = scalar_lea.vmem [#allocation15], %s858
        %p860 = pneg %p288
        %p861 = pneg %p285
        %s862 = sand.u32 %s47, 1
        %s863 = scalar_lea.sflag [#allocation16], %s862
        %s864 = sand.u32 %s301, 1
        %s865 = smul.addr %s864, 128
        %s866 = scalar_lea.vmem [#allocation17], %s865
        %p867 = pneg %p314
        %p868 = pneg %p311
        %p869 = scmp.lt.s32.totalorder %s52, 1
        %s870 = scalar_select %p869, %s52, 1
        %s871 = smul.addr %s870, 2
        %s872 = scalar_lea.vmem %s10, %s871
        %p873 = pneg %p340
        %p874 = pneg %p337
        %s875 = sand.u32 %s353, 1
        %s876 = scalar_lea.sflag [#allocation19], %s875
        %s877 = sand.u32 %s353, 1
        %s878 = smul.addr %s877, 128
        %s879 = scalar_lea.vmem [#allocation18], %s878
        %p880 = pneg %p366
        %p881 = pneg %p363
        %p882 = scmp.lt.s32.totalorder %s52, 1
        %s883 = scalar_select %p882, %s52, 1
        %s884 = scalar_lea.vmem %s12, %s883
        %p885 = pneg %p392
        %p886 = pneg %p389
        %p887 = pneg %p413
        %p888 = pneg %p410
        %p889 = pneg %p434
        %p890 = pneg %p431
        %p891 = pneg %p460
        %p892 = pneg %p457
        %s893 = sand.u32 %s447, 1
        %s894 = scalar_lea.sflag [#allocation5], %s893
        %s895 = sand.u32 %s447, 1
        %s896 = smul.addr %s895, 256
        %s897 = scalar_lea.vmem [#allocation20], %s896
        %s898 = smul.u32 2, %s51
        %p899 = scmp.lt.s32.totalorder %s52, 1
        %s900 = scalar_select %p899, %s52, 1
        %s901 = scalar_lea.vmem %s6, %s900
        %p902 = scmp.lt.s32.totalorder %s52, 1
        %s903 = scalar_select %p902, %s52, 1
        %s904 = smul.addr %s903, 2
        %s905 = scalar_lea.vmem %s10, %s904
        %p906 = scmp.lt.s32.totalorder %s52, 1
        %s907 = scalar_select %p906, %s52, 1
        %s908 = scalar_lea.vmem %s12, %s907
        %s909 = smul.u32 2, %s51
        %p910 = scmp.eq.s32.totalorder %s52, 0
        // Predicated region
        $region121: #{tpu_custom_call.1} parent=79 // pred_check
          %p911 = pneg %p910
        $region122: #{tpu_custom_call.1} parent=79 // pred_check_branch
          %913 = sbr.rel (%p911) target = $region124
        $region123: #{tpu_custom_call.1} parent=79 // pred_region
          %v914 = vld [vmem:[%s713] sm:$0xff]
          %v915 = vld [vmem:[%s713 + $0x8] sm:$0xff]
          %v916 = vld [vmem:[%s713 + $0x10] sm:$0xff]
          %v917 = vld [vmem:[%s713 + $0x18] sm:$0xff]
          %v918 = vld [vmem:[%s713 + $0x20] sm:$0xff]
          %v919 = vld [vmem:[%s713 + $0x28] sm:$0xff]
          %v920 = vld [vmem:[%s713 + $0x30] sm:$0xff]
          %v921 = vld [vmem:[%s713 + $0x38] sm:$0xff]
          %v922 = vld [vmem:[%s713 + $0x40] sm:$0xff]
          %v923 = vld [vmem:[%s713 + $0x48] sm:$0xff]
          %v924 = vld [vmem:[%s713 + $0x50] sm:$0xff]
          %v925 = vld [vmem:[%s713 + $0x58] sm:$0xff]
          %v926 = vld [vmem:[%s713 + $0x60] sm:$0xff]
          %v927 = vld [vmem:[%s713 + $0x68] sm:$0xff]
          %v928 = vld [vmem:[%s713 + $0x70] sm:$0xff]
          %v929 = vld [vmem:[%s713 + $0x78] sm:$0xff]
          %v930 = vld [vmem:[%s713 + $0x80] sm:$0xff]
          %v931 = vld [vmem:[%s713 + $0x88] sm:$0xff]
          %v932 = vld [vmem:[%s713 + $0x90] sm:$0xff]
          %v933 = vld [vmem:[%s713 + $0x98] sm:$0xff]
          %v934 = vld [vmem:[%s713 + $0xa0] sm:$0xff]
          %v935 = vld [vmem:[%s713 + $0xa8] sm:$0xff]
          %v936 = vld [vmem:[%s713 + $0xb0] sm:$0xff]
          %v937 = vld [vmem:[%s713 + $0xb8] sm:$0xff]
          %v938 = vld [vmem:[%s713 + $0xc0] sm:$0xff]
          %v939 = vld [vmem:[%s713 + $0xc8] sm:$0xff]
          %v940 = vld [vmem:[%s713 + $0xd0] sm:$0xff]
          %v941 = vld [vmem:[%s713 + $0xd8] sm:$0xff]
          %v942 = vld [vmem:[%s713 + $0xe0] sm:$0xff]
          %v943 = vld [vmem:[%s713 + $0xe8] sm:$0xff]
          %v944 = vld [vmem:[%s713 + $0xf0] sm:$0xff]
          %v945 = vld [vmem:[%s713 + $0xf8] sm:$0xff]
          %946 = vst [vmem:[#allocation2] sm:$0xff] %v914
          %947 = vst [vmem:[#allocation2 + $0x8] sm:$0xff] %v915
          %948 = vst [vmem:[#allocation2 + $0x10] sm:$0xff] %v916
          %949 = vst [vmem:[#allocation2 + $0x18] sm:$0xff] %v917
          %950 = vst [vmem:[#allocation2 + $0x20] sm:$0xff] %v918
          %951 = vst [vmem:[#allocation2 + $0x28] sm:$0xff] %v919
          %952 = vst [vmem:[#allocation2 + $0x30] sm:$0xff] %v920
          %953 = vst [vmem:[#allocation2 + $0x38] sm:$0xff] %v921
          %954 = vst [vmem:[#allocation2 + $0x40] sm:$0xff] %v922
          %955 = vst [vmem:[#allocation2 + $0x48] sm:$0xff] %v923
          %956 = vst [vmem:[#allocation2 + $0x50] sm:$0xff] %v924
          %957 = vst [vmem:[#allocation2 + $0x58] sm:$0xff] %v925
          %958 = vst [vmem:[#allocation2 + $0x60] sm:$0xff] %v926
          %959 = vst [vmem:[#allocation2 + $0x68] sm:$0xff] %v927
          %960 = vst [vmem:[#allocation2 + $0x70] sm:$0xff] %v928
          %961 = vst [vmem:[#allocation2 + $0x78] sm:$0xff] %v929
          %962 = vst [vmem:[#allocation2 + $0x80] sm:$0xff] %v930
          %963 = vst [vmem:[#allocation2 + $0x88] sm:$0xff] %v931
          %964 = vst [vmem:[#allocation2 + $0x90] sm:$0xff] %v932
          %965 = vst [vmem:[#allocation2 + $0x98] sm:$0xff] %v933
          %966 = vst [vmem:[#allocation2 + $0xa0] sm:$0xff] %v934
          %967 = vst [vmem:[#allocation2 + $0xa8] sm:$0xff] %v935
          %968 = vst [vmem:[#allocation2 + $0xb0] sm:$0xff] %v936
          %969 = vst [vmem:[#allocation2 + $0xb8] sm:$0xff] %v937
          %970 = vst [vmem:[#allocation2 + $0xc0] sm:$0xff] %v938
          %971 = vst [vmem:[#allocation2 + $0xc8] sm:$0xff] %v939
          %972 = vst [vmem:[#allocation2 + $0xd0] sm:$0xff] %v940
          %973 = vst [vmem:[#allocation2 + $0xd8] sm:$0xff] %v941
          %974 = vst [vmem:[#allocation2 + $0xe0] sm:$0xff] %v942
          %975 = vst [vmem:[#allocation2 + $0xe8] sm:$0xff] %v943
          %976 = vst [vmem:[#allocation2 + $0xf0] sm:$0xff] %v944
          %977 = vst [vmem:[#allocation2 + $0xf8] sm:$0xff] %v945
        $region124: #{tpu_custom_call.1} parent=79 // pred_fallthru
          _
        %v978 = vld [vmem:[#allocation2] sm:$0xff]
        %v979 = vld [vmem:[#allocation2 + $0x8] sm:$0xff]
        %v980 = vld [vmem:[#allocation2 + $0x10] sm:$0xff]
        %v981 = vld [vmem:[#allocation2 + $0x18] sm:$0xff]
        %v982 = vld [vmem:[#allocation2 + $0x20] sm:$0xff]
        %v983 = vld [vmem:[#allocation2 + $0x28] sm:$0xff]
        %v984 = vld [vmem:[#allocation2 + $0x30] sm:$0xff]
        %v985 = vld [vmem:[#allocation2 + $0x38] sm:$0xff]
        %v986 = vld [vmem:[#allocation2 + $0x40] sm:$0xff]
        %v987 = vld [vmem:[#allocation2 + $0x48] sm:$0xff]
        %v988 = vld [vmem:[#allocation2 + $0x50] sm:$0xff]
        %v989 = vld [vmem:[#allocation2 + $0x58] sm:$0xff]
        %v990 = vld [vmem:[#allocation2 + $0x60] sm:$0xff]
        %v991 = vld [vmem:[#allocation2 + $0x68] sm:$0xff]
        %v992 = vld [vmem:[#allocation2 + $0x70] sm:$0xff]
        %v993 = vld [vmem:[#allocation2 + $0x78] sm:$0xff]
        %v994 = vld [vmem:[#allocation2 + $0x80] sm:$0xff]
        %v995 = vld [vmem:[#allocation2 + $0x88] sm:$0xff]
        %v996 = vld [vmem:[#allocation2 + $0x90] sm:$0xff]
        %v997 = vld [vmem:[#allocation2 + $0x98] sm:$0xff]
        %v998 = vld [vmem:[#allocation2 + $0xa0] sm:$0xff]
        %v999 = vld [vmem:[#allocation2 + $0xa8] sm:$0xff]
        %v1000 = vld [vmem:[#allocation2 + $0xb0] sm:$0xff]
        %v1001 = vld [vmem:[#allocation2 + $0xb8] sm:$0xff]
        %v1002 = vld [vmem:[#allocation2 + $0xc0] sm:$0xff]
        %v1003 = vld [vmem:[#allocation2 + $0xc8] sm:$0xff]
        %v1004 = vld [vmem:[#allocation2 + $0xd0] sm:$0xff]
        %v1005 = vld [vmem:[#allocation2 + $0xd8] sm:$0xff]
        %v1006 = vld [vmem:[#allocation2 + $0xe0] sm:$0xff]
        %v1007 = vld [vmem:[#allocation2 + $0xe8] sm:$0xff]
        %v1008 = vld [vmem:[#allocation2 + $0xf0] sm:$0xff]
        %v1009 = vld [vmem:[#allocation2 + $0xf8] sm:$0xff]
        %v1010 = vld [vmem:[%s722] sm:$0x1]
        %v1011 = vld [vmem:[%s731] sm:$0x1]
        %1012 = vadd.xlane.f32.xlu0 %v978
        %v1013 = vpop.xlane.xlu0 %1012
        %1014 = vadd.xlane.f32.xlu0 %v979
        %v1015 = vpop.xlane.xlu0 %1014
        %1016 = vadd.xlane.f32.xlu0 %v980
        %v1017 = vpop.xlane.xlu0 %1016
        %1018 = vadd.xlane.f32.xlu0 %v981
        %v1019 = vpop.xlane.xlu0 %1018
        %1020 = vadd.xlane.f32.xlu0 %v982
        %v1021 = vpop.xlane.xlu0 %1020
        %1022 = vadd.xlane.f32.xlu0 %v983
        %v1023 = vpop.xlane.xlu0 %1022
        %1024 = vadd.xlane.f32.xlu0 %v984
        %v1025 = vpop.xlane.xlu0 %1024
        %1026 = vadd.xlane.f32.xlu0 %v985
        %v1027 = vpop.xlane.xlu0 %1026
        %1028 = vadd.xlane.f32.xlu0 %v986
        %v1029 = vpop.xlane.xlu0 %1028
        %1030 = vadd.xlane.f32.xlu0 %v987
        %v1031 = vpop.xlane.xlu0 %1030
        %1032 = vadd.xlane.f32.xlu0 %v988
        %v1033 = vpop.xlane.xlu0 %1032
        %1034 = vadd.xlane.f32.xlu0 %v989
        %v1035 = vpop.xlane.xlu0 %1034
        %1036 = vadd.xlane.f32.xlu0 %v990
        %v1037 = vpop.xlane.xlu0 %1036
        %1038 = vadd.xlane.f32.xlu0 %v991
        %v1039 = vpop.xlane.xlu0 %1038
        %1040 = vadd.xlane.f32.xlu0 %v992
        %v1041 = vpop.xlane.xlu0 %1040
        %1042 = vadd.xlane.f32.xlu0 %v993
        %v1043 = vpop.xlane.xlu0 %1042
        %1044 = vadd.xlane.f32.xlu0 %v994
        %v1045 = vpop.xlane.xlu0 %1044
        %1046 = vadd.xlane.f32.xlu0 %v995
        %v1047 = vpop.xlane.xlu0 %1046
        %1048 = vadd.xlane.f32.xlu0 %v996
        %v1049 = vpop.xlane.xlu0 %1048
        %1050 = vadd.xlane.f32.xlu0 %v997
        %v1051 = vpop.xlane.xlu0 %1050
        %1052 = vadd.xlane.f32.xlu0 %v998
        %v1053 = vpop.xlane.xlu0 %1052
        %1054 = vadd.xlane.f32.xlu0 %v999
        %v1055 = vpop.xlane.xlu0 %1054
        %1056 = vadd.xlane.f32.xlu0 %v1000
        %v1057 = vpop.xlane.xlu0 %1056
        %1058 = vadd.xlane.f32.xlu0 %v1001
        %v1059 = vpop.xlane.xlu0 %1058
        %1060 = vadd.xlane.f32.xlu0 %v1002
        %v1061 = vpop.xlane.xlu0 %1060
        %1062 = vadd.xlane.f32.xlu0 %v1003
        %v1063 = vpop.xlane.xlu0 %1062
        %1064 = vadd.xlane.f32.xlu0 %v1004
        %v1065 = vpop.xlane.xlu0 %1064
        %1066 = vadd.xlane.f32.xlu0 %v1005
        %v1067 = vpop.xlane.xlu0 %1066
        %1068 = vadd.xlane.f32.xlu0 %v1006
        %v1069 = vpop.xlane.xlu0 %1068
        %1070 = vadd.xlane.f32.xlu0 %v1007
        %v1071 = vpop.xlane.xlu0 %1070
        %1072 = vadd.xlane.f32.xlu0 %v1008
        %v1073 = vpop.xlane.xlu0 %1072
        %1074 = vadd.xlane.f32.xlu0 %v1009
        %v1075 = vpop.xlane.xlu0 %1074
        %v1076 = vrcp.pop 128.0
        %v1077 = vmul.f32 128.0, %v1076
        %v1078 = vsub.f32 1.0, %v1077
        %v1079 = vmul.f32 %v1076, %v1078
        %v1080 = vadd.f32 %v1076, %v1079
        %vm1081 = vweird.f32 %v1076
        %v1082 = vsel %vm1081, %v1076, %v1080
        %v1083 = vmul.f32 %v1013, %v1082
        %v1084 = vmul.f32 %v1015, %v1082
        %v1085 = vmul.f32 %v1017, %v1082
        %v1086 = vmul.f32 %v1019, %v1082
        %v1087 = vmul.f32 %v1021, %v1082
        %v1088 = vmul.f32 %v1023, %v1082
        %v1089 = vmul.f32 %v1025, %v1082
        %v1090 = vmul.f32 %v1027, %v1082
        %v1091 = vmul.f32 %v1029, %v1082
        %v1092 = vmul.f32 %v1031, %v1082
        %v1093 = vmul.f32 %v1033, %v1082
        %v1094 = vmul.f32 %v1035, %v1082
        %v1095 = vmul.f32 %v1037, %v1082
        %v1096 = vmul.f32 %v1039, %v1082
        %v1097 = vmul.f32 %v1041, %v1082
        %v1098 = vmul.f32 %v1043, %v1082
        %v1099 = vmul.f32 %v1045, %v1082
        %v1100 = vmul.f32 %v1047, %v1082
        %v1101 = vmul.f32 %v1049, %v1082
        %v1102 = vmul.f32 %v1051, %v1082
        %v1103 = vmul.f32 %v1053, %v1082
        %v1104 = vmul.f32 %v1055, %v1082
        %v1105 = vmul.f32 %v1057, %v1082
        %v1106 = vmul.f32 %v1059, %v1082
        %v1107 = vmul.f32 %v1061, %v1082
        %v1108 = vmul.f32 %v1063, %v1082
        %v1109 = vmul.f32 %v1065, %v1082
        %v1110 = vmul.f32 %v1067, %v1082
        %v1111 = vmul.f32 %v1069, %v1082
        %v1112 = vmul.f32 %v1071, %v1082
        %v1113 = vmul.f32 %v1073, %v1082
        %v1114 = vmul.f32 %v1075, %v1082
        %v1115 = vsub.f32 %v978, %v1083
        %v1116 = vsub.f32 %v979, %v1084
        %v1117 = vsub.f32 %v980, %v1085
        %v1118 = vsub.f32 %v981, %v1086
        %v1119 = vsub.f32 %v982, %v1087
        %v1120 = vsub.f32 %v983, %v1088
        %v1121 = vsub.f32 %v984, %v1089
        %v1122 = vsub.f32 %v985, %v1090
        %v1123 = vsub.f32 %v986, %v1091
        %v1124 = vsub.f32 %v987, %v1092
        %v1125 = vsub.f32 %v988, %v1093
        %v1126 = vsub.f32 %v989, %v1094
        %v1127 = vsub.f32 %v990, %v1095
        %v1128 = vsub.f32 %v991, %v1096
        %v1129 = vsub.f32 %v992, %v1097
        %v1130 = vsub.f32 %v993, %v1098
        %v1131 = vsub.f32 %v994, %v1099
        %v1132 = vsub.f32 %v995, %v1100
        %v1133 = vsub.f32 %v996, %v1101
        %v1134 = vsub.f32 %v997, %v1102
        %v1135 = vsub.f32 %v998, %v1103
        %v1136 = vsub.f32 %v999, %v1104
        %v1137 = vsub.f32 %v1000, %v1105
        %v1138 = vsub.f32 %v1001, %v1106
        %v1139 = vsub.f32 %v1002, %v1107
        %v1140 = vsub.f32 %v1003, %v1108
        %v1141 = vsub.f32 %v1004, %v1109
        %v1142 = vsub.f32 %v1005, %v1110
        %v1143 = vsub.f32 %v1006, %v1111
        %v1144 = vsub.f32 %v1007, %v1112
        %v1145 = vsub.f32 %v1008, %v1113
        %v1146 = vsub.f32 %v1009, %v1114
        %v1147 = vmul.f32 %v1115, %v1115
        %v1148 = vmul.f32 %v1116, %v1116
        %v1149 = vmul.f32 %v1117, %v1117
        %v1150 = vmul.f32 %v1118, %v1118
        %v1151 = vmul.f32 %v1119, %v1119
        %v1152 = vmul.f32 %v1120, %v1120
        %v1153 = vmul.f32 %v1121, %v1121
        %v1154 = vmul.f32 %v1122, %v1122
        %v1155 = vmul.f32 %v1123, %v1123
        %v1156 = vmul.f32 %v1124, %v1124
        %v1157 = vmul.f32 %v1125, %v1125
        %v1158 = vmul.f32 %v1126, %v1126
        %v1159 = vmul.f32 %v1127, %v1127
        %v1160 = vmul.f32 %v1128, %v1128
        %v1161 = vmul.f32 %v1129, %v1129
        %v1162 = vmul.f32 %v1130, %v1130
        %v1163 = vmul.f32 %v1131, %v1131
        %v1164 = vmul.f32 %v1132, %v1132
        %v1165 = vmul.f32 %v1133, %v1133
        %v1166 = vmul.f32 %v1134, %v1134
        %v1167 = vmul.f32 %v1135, %v1135
        %v1168 = vmul.f32 %v1136, %v1136
        %v1169 = vmul.f32 %v1137, %v1137
        %v1170 = vmul.f32 %v1138, %v1138
        %v1171 = vmul.f32 %v1139, %v1139
        %v1172 = vmul.f32 %v1140, %v1140
        %v1173 = vmul.f32 %v1141, %v1141
        %v1174 = vmul.f32 %v1142, %v1142
        %v1175 = vmul.f32 %v1143, %v1143
        %v1176 = vmul.f32 %v1144, %v1144
        %v1177 = vmul.f32 %v1145, %v1145
        %v1178 = vmul.f32 %v1146, %v1146
        %1179 = vadd.xlane.f32.xlu0 %v1147
        %v1180 = vpop.xlane.xlu0 %1179
        %1181 = vadd.xlane.f32.xlu0 %v1148
        %v1182 = vpop.xlane.xlu0 %1181
        %1183 = vadd.xlane.f32.xlu0 %v1149
        %v1184 = vpop.xlane.xlu0 %1183
        %1185 = vadd.xlane.f32.xlu0 %v1150
        %v1186 = vpop.xlane.xlu0 %1185
        %1187 = vadd.xlane.f32.xlu0 %v1151
        %v1188 = vpop.xlane.xlu0 %1187
        %1189 = vadd.xlane.f32.xlu0 %v1152
        %v1190 = vpop.xlane.xlu0 %1189
        %1191 = vadd.xlane.f32.xlu0 %v1153
        %v1192 = vpop.xlane.xlu0 %1191
        %1193 = vadd.xlane.f32.xlu0 %v1154
        %v1194 = vpop.xlane.xlu0 %1193
        %1195 = vadd.xlane.f32.xlu0 %v1155
        %v1196 = vpop.xlane.xlu0 %1195
        %1197 = vadd.xlane.f32.xlu0 %v1156
        %v1198 = vpop.xlane.xlu0 %1197
        %1199 = vadd.xlane.f32.xlu0 %v1157
        %v1200 = vpop.xlane.xlu0 %1199
        %1201 = vadd.xlane.f32.xlu0 %v1158
        %v1202 = vpop.xlane.xlu0 %1201
        %1203 = vadd.xlane.f32.xlu0 %v1159
        %v1204 = vpop.xlane.xlu0 %1203
        %1205 = vadd.xlane.f32.xlu0 %v1160
        %v1206 = vpop.xlane.xlu0 %1205
        %1207 = vadd.xlane.f32.xlu0 %v1161
        %v1208 = vpop.xlane.xlu0 %1207
        %1209 = vadd.xlane.f32.xlu0 %v1162
        %v1210 = vpop.xlane.xlu0 %1209
        %1211 = vadd.xlane.f32.xlu0 %v1163
        %v1212 = vpop.xlane.xlu0 %1211
        %1213 = vadd.xlane.f32.xlu0 %v1164
        %v1214 = vpop.xlane.xlu0 %1213
        %1215 = vadd.xlane.f32.xlu0 %v1165
        %v1216 = vpop.xlane.xlu0 %1215
        %1217 = vadd.xlane.f32.xlu0 %v1166
        %v1218 = vpop.xlane.xlu0 %1217
        %1219 = vadd.xlane.f32.xlu0 %v1167
        %v1220 = vpop.xlane.xlu0 %1219
        %1221 = vadd.xlane.f32.xlu0 %v1168
        %v1222 = vpop.xlane.xlu0 %1221
        %1223 = vadd.xlane.f32.xlu0 %v1169
        %v1224 = vpop.xlane.xlu0 %1223
        %1225 = vadd.xlane.f32.xlu0 %v1170
        %v1226 = vpop.xlane.xlu0 %1225
        %1227 = vadd.xlane.f32.xlu0 %v1171
        %v1228 = vpop.xlane.xlu0 %1227
        %1229 = vadd.xlane.f32.xlu0 %v1172
        %v1230 = vpop.xlane.xlu0 %1229
        %1231 = vadd.xlane.f32.xlu0 %v1173
        %v1232 = vpop.xlane.xlu0 %1231
        %1233 = vadd.xlane.f32.xlu0 %v1174
        %v1234 = vpop.xlane.xlu0 %1233
        %1235 = vadd.xlane.f32.xlu0 %v1175
        %v1236 = vpop.xlane.xlu0 %1235
        %1237 = vadd.xlane.f32.xlu0 %v1176
        %v1238 = vpop.xlane.xlu0 %1237
        %1239 = vadd.xlane.f32.xlu0 %v1177
        %v1240 = vpop.xlane.xlu0 %1239
        %1241 = vadd.xlane.f32.xlu0 %v1178
        %v1242 = vpop.xlane.xlu0 %1241
        %v1243 = vmul.f32 %v1180, %v1082
        %v1244 = vmul.f32 %v1182, %v1082
        %v1245 = vmul.f32 %v1184, %v1082
        %v1246 = vmul.f32 %v1186, %v1082
        %v1247 = vmul.f32 %v1188, %v1082
        %v1248 = vmul.f32 %v1190, %v1082
        %v1249 = vmul.f32 %v1192, %v1082
        %v1250 = vmul.f32 %v1194, %v1082
        %v1251 = vmul.f32 %v1196, %v1082
        %v1252 = vmul.f32 %v1198, %v1082
        %v1253 = vmul.f32 %v1200, %v1082
        %v1254 = vmul.f32 %v1202, %v1082
        %v1255 = vmul.f32 %v1204, %v1082
        %v1256 = vmul.f32 %v1206, %v1082
        %v1257 = vmul.f32 %v1208, %v1082
        %v1258 = vmul.f32 %v1210, %v1082
        %v1259 = vmul.f32 %v1212, %v1082
        %v1260 = vmul.f32 %v1214, %v1082
        %v1261 = vmul.f32 %v1216, %v1082
        %v1262 = vmul.f32 %v1218, %v1082
        %v1263 = vmul.f32 %v1220, %v1082
        %v1264 = vmul.f32 %v1222, %v1082
        %v1265 = vmul.f32 %v1224, %v1082
        %v1266 = vmul.f32 %v1226, %v1082
        %v1267 = vmul.f32 %v1228, %v1082
        %v1268 = vmul.f32 %v1230, %v1082
        %v1269 = vmul.f32 %v1232, %v1082
        %v1270 = vmul.f32 %v1234, %v1082
        %v1271 = vmul.f32 %v1236, %v1082
        %v1272 = vmul.f32 %v1238, %v1082
        %v1273 = vmul.f32 %v1240, %v1082
        %v1274 = vmul.f32 %v1242, %v1082
        %v1275 = vadd.f32 %v1243, 1e-06
        %v1276 = vadd.f32 %v1244, 1e-06
        %v1277 = vadd.f32 %v1245, 1e-06
        %v1278 = vadd.f32 %v1246, 1e-06
        %v1279 = vadd.f32 %v1247, 1e-06
        %v1280 = vadd.f32 %v1248, 1e-06
        %v1281 = vadd.f32 %v1249, 1e-06
        %v1282 = vadd.f32 %v1250, 1e-06
        %v1283 = vadd.f32 %v1251, 1e-06
        %v1284 = vadd.f32 %v1252, 1e-06
        %v1285 = vadd.f32 %v1253, 1e-06
        %v1286 = vadd.f32 %v1254, 1e-06
        %v1287 = vadd.f32 %v1255, 1e-06
        %v1288 = vadd.f32 %v1256, 1e-06
        %v1289 = vadd.f32 %v1257, 1e-06
        %v1290 = vadd.f32 %v1258, 1e-06
        %v1291 = vadd.f32 %v1259, 1e-06
        %v1292 = vadd.f32 %v1260, 1e-06
        %v1293 = vadd.f32 %v1261, 1e-06
        %v1294 = vadd.f32 %v1262, 1e-06
        %v1295 = vadd.f32 %v1263, 1e-06
        %v1296 = vadd.f32 %v1264, 1e-06
        %v1297 = vadd.f32 %v1265, 1e-06
        %v1298 = vadd.f32 %v1266, 1e-06
        %v1299 = vadd.f32 %v1267, 1e-06
        %v1300 = vadd.f32 %v1268, 1e-06
        %v1301 = vadd.f32 %v1269, 1e-06
        %v1302 = vadd.f32 %v1270, 1e-06
        %v1303 = vadd.f32 %v1271, 1e-06
        %v1304 = vadd.f32 %v1272, 1e-06
        %v1305 = vadd.f32 %v1273, 1e-06
        %v1306 = vadd.f32 %v1274, 1e-06
        %v1307 = vrsqrt.pop %v1275
        %v1308 = vmul.f32 %v1307, %v1275
        %v1309 = vmul.f32 %v1308, %v1307
        %v1310 = vmul.f32 0.5, %v1309
        %v1311 = vsub.f32 1.5, %v1310
        %v1312 = vmul.f32 %v1307, %v1311
        %vm1313 = vweird.f32 %v1275
        %vm1314 = vweird.f32 %v1307
        %vm1315 = vmor %vm1313, %vm1314
        %v1316 = vsel %vm1315, %v1307, %v1312
        %v1317 = vrsqrt.pop %v1276
        %v1318 = vmul.f32 %v1317, %v1276
        %v1319 = vmul.f32 %v1318, %v1317
        %v1320 = vmul.f32 0.5, %v1319
        %v1321 = vsub.f32 1.5, %v1320
        %v1322 = vmul.f32 %v1317, %v1321
        %vm1323 = vweird.f32 %v1276
        %vm1324 = vweird.f32 %v1317
        %vm1325 = vmor %vm1323, %vm1324
        %v1326 = vsel %vm1325, %v1317, %v1322
        %v1327 = vrsqrt.pop %v1277
        %v1328 = vmul.f32 %v1327, %v1277
        %v1329 = vmul.f32 %v1328, %v1327
        %v1330 = vmul.f32 0.5, %v1329
        %v1331 = vsub.f32 1.5, %v1330
        %v1332 = vmul.f32 %v1327, %v1331
        %vm1333 = vweird.f32 %v1277
        %vm1334 = vweird.f32 %v1327
        %vm1335 = vmor %vm1333, %vm1334
        %v1336 = vsel %vm1335, %v1327, %v1332
        %v1337 = vrsqrt.pop %v1278
        %v1338 = vmul.f32 %v1337, %v1278
        %v1339 = vmul.f32 %v1338, %v1337
        %v1340 = vmul.f32 0.5, %v1339
        %v1341 = vsub.f32 1.5, %v1340
        %v1342 = vmul.f32 %v1337, %v1341
        %vm1343 = vweird.f32 %v1278
        %vm1344 = vweird.f32 %v1337
        %vm1345 = vmor %vm1343, %vm1344
        %v1346 = vsel %vm1345, %v1337, %v1342
        %v1347 = vrsqrt.pop %v1279
        %v1348 = vmul.f32 %v1347, %v1279
        %v1349 = vmul.f32 %v1348, %v1347
        %v1350 = vmul.f32 0.5, %v1349
        %v1351 = vsub.f32 1.5, %v1350
        %v1352 = vmul.f32 %v1347, %v1351
        %vm1353 = vweird.f32 %v1279
        %vm1354 = vweird.f32 %v1347
        %vm1355 = vmor %vm1353, %vm1354
        %v1356 = vsel %vm1355, %v1347, %v1352
        %v1357 = vrsqrt.pop %v1280
        %v1358 = vmul.f32 %v1357, %v1280
        %v1359 = vmul.f32 %v1358, %v1357
        %v1360 = vmul.f32 0.5, %v1359
        %v1361 = vsub.f32 1.5, %v1360
        %v1362 = vmul.f32 %v1357, %v1361
        %vm1363 = vweird.f32 %v1280
        %vm1364 = vweird.f32 %v1357
        %vm1365 = vmor %vm1363, %vm1364
        %v1366 = vsel %vm1365, %v1357, %v1362
        %v1367 = vrsqrt.pop %v1281
        %v1368 = vmul.f32 %v1367, %v1281
        %v1369 = vmul.f32 %v1368, %v1367
        %v1370 = vmul.f32 0.5, %v1369
        %v1371 = vsub.f32 1.5, %v1370
        %v1372 = vmul.f32 %v1367, %v1371
        %vm1373 = vweird.f32 %v1281
        %vm1374 = vweird.f32 %v1367
        %vm1375 = vmor %vm1373, %vm1374
        %v1376 = vsel %vm1375, %v1367, %v1372
        %v1377 = vrsqrt.pop %v1282
        %v1378 = vmul.f32 %v1377, %v1282
        %v1379 = vmul.f32 %v1378, %v1377
        %v1380 = vmul.f32 0.5, %v1379
        %v1381 = vsub.f32 1.5, %v1380
        %v1382 = vmul.f32 %v1377, %v1381
        %vm1383 = vweird.f32 %v1282
        %vm1384 = vweird.f32 %v1377
        %vm1385 = vmor %vm1383, %vm1384
        %v1386 = vsel %vm1385, %v1377, %v1382
        %v1387 = vrsqrt.pop %v1283
        %v1388 = vmul.f32 %v1387, %v1283
        %v1389 = vmul.f32 %v1388, %v1387
        %v1390 = vmul.f32 0.5, %v1389
        %v1391 = vsub.f32 1.5, %v1390
        %v1392 = vmul.f32 %v1387, %v1391
        %vm1393 = vweird.f32 %v1283
        %vm1394 = vweird.f32 %v1387
        %vm1395 = vmor %vm1393, %vm1394
        %v1396 = vsel %vm1395, %v1387, %v1392
        %v1397 = vrsqrt.pop %v1284
        %v1398 = vmul.f32 %v1397, %v1284
        %v1399 = vmul.f32 %v1398, %v1397
        %v1400 = vmul.f32 0.5, %v1399
        %v1401 = vsub.f32 1.5, %v1400
        %v1402 = vmul.f32 %v1397, %v1401
        %vm1403 = vweird.f32 %v1284
        %vm1404 = vweird.f32 %v1397
        %vm1405 = vmor %vm1403, %vm1404
        %v1406 = vsel %vm1405, %v1397, %v1402
        %v1407 = vrsqrt.pop %v1285
        %v1408 = vmul.f32 %v1407, %v1285
        %v1409 = vmul.f32 %v1408, %v1407
        %v1410 = vmul.f32 0.5, %v1409
        %v1411 = vsub.f32 1.5, %v1410
        %v1412 = vmul.f32 %v1407, %v1411
        %vm1413 = vweird.f32 %v1285
        %vm1414 = vweird.f32 %v1407
        %vm1415 = vmor %vm1413, %vm1414
        %v1416 = vsel %vm1415, %v1407, %v1412
        %v1417 = vrsqrt.pop %v1286
        %v1418 = vmul.f32 %v1417, %v1286
        %v1419 = vmul.f32 %v1418, %v1417
        %v1420 = vmul.f32 0.5, %v1419
        %v1421 = vsub.f32 1.5, %v1420
        %v1422 = vmul.f32 %v1417, %v1421
        %vm1423 = vweird.f32 %v1286
        %vm1424 = vweird.f32 %v1417
        %vm1425 = vmor %vm1423, %vm1424
        %v1426 = vsel %vm1425, %v1417, %v1422
        %v1427 = vrsqrt.pop %v1287
        %v1428 = vmul.f32 %v1427, %v1287
        %v1429 = vmul.f32 %v1428, %v1427
        %v1430 = vmul.f32 0.5, %v1429
        %v1431 = vsub.f32 1.5, %v1430
        %v1432 = vmul.f32 %v1427, %v1431
        %vm1433 = vweird.f32 %v1287
        %vm1434 = vweird.f32 %v1427
        %vm1435 = vmor %vm1433, %vm1434
        %v1436 = vsel %vm1435, %v1427, %v1432
        %v1437 = vrsqrt.pop %v1288
        %v1438 = vmul.f32 %v1437, %v1288
        %v1439 = vmul.f32 %v1438, %v1437
        %v1440 = vmul.f32 0.5, %v1439
        %v1441 = vsub.f32 1.5, %v1440
        %v1442 = vmul.f32 %v1437, %v1441
        %vm1443 = vweird.f32 %v1288
        %vm1444 = vweird.f32 %v1437
        %vm1445 = vmor %vm1443, %vm1444
        %v1446 = vsel %vm1445, %v1437, %v1442
        %v1447 = vrsqrt.pop %v1289
        %v1448 = vmul.f32 %v1447, %v1289
        %v1449 = vmul.f32 %v1448, %v1447
        %v1450 = vmul.f32 0.5, %v1449
        %v1451 = vsub.f32 1.5, %v1450
        %v1452 = vmul.f32 %v1447, %v1451
        %vm1453 = vweird.f32 %v1289
        %vm1454 = vweird.f32 %v1447
        %vm1455 = vmor %vm1453, %vm1454
        %v1456 = vsel %vm1455, %v1447, %v1452
        %v1457 = vrsqrt.pop %v1290
        %v1458 = vmul.f32 %v1457, %v1290
        %v1459 = vmul.f32 %v1458, %v1457
        %v1460 = vmul.f32 0.5, %v1459
        %v1461 = vsub.f32 1.5, %v1460
        %v1462 = vmul.f32 %v1457, %v1461
        %vm1463 = vweird.f32 %v1290
        %vm1464 = vweird.f32 %v1457
        %vm1465 = vmor %vm1463, %vm1464
        %v1466 = vsel %vm1465, %v1457, %v1462
        %v1467 = vrsqrt.pop %v1291
        %v1468 = vmul.f32 %v1467, %v1291
        %v1469 = vmul.f32 %v1468, %v1467
        %v1470 = vmul.f32 0.5, %v1469
        %v1471 = vsub.f32 1.5, %v1470
        %v1472 = vmul.f32 %v1467, %v1471
        %vm1473 = vweird.f32 %v1291
        %vm1474 = vweird.f32 %v1467
        %vm1475 = vmor %vm1473, %vm1474
        %v1476 = vsel %vm1475, %v1467, %v1472
        %v1477 = vrsqrt.pop %v1292
        %v1478 = vmul.f32 %v1477, %v1292
        %v1479 = vmul.f32 %v1478, %v1477
        %v1480 = vmul.f32 0.5, %v1479
        %v1481 = vsub.f32 1.5, %v1480
        %v1482 = vmul.f32 %v1477, %v1481
        %vm1483 = vweird.f32 %v1292
        %vm1484 = vweird.f32 %v1477
        %vm1485 = vmor %vm1483, %vm1484
        %v1486 = vsel %vm1485, %v1477, %v1482
        %v1487 = vrsqrt.pop %v1293
        %v1488 = vmul.f32 %v1487, %v1293
        %v1489 = vmul.f32 %v1488, %v1487
        %v1490 = vmul.f32 0.5, %v1489
        %v1491 = vsub.f32 1.5, %v1490
        %v1492 = vmul.f32 %v1487, %v1491
        %vm1493 = vweird.f32 %v1293
        %vm1494 = vweird.f32 %v1487
        %vm1495 = vmor %vm1493, %vm1494
        %v1496 = vsel %vm1495, %v1487, %v1492
        %v1497 = vrsqrt.pop %v1294
        %v1498 = vmul.f32 %v1497, %v1294
        %v1499 = vmul.f32 %v1498, %v1497
        %v1500 = vmul.f32 0.5, %v1499
        %v1501 = vsub.f32 1.5, %v1500
        %v1502 = vmul.f32 %v1497, %v1501
        %vm1503 = vweird.f32 %v1294
        %vm1504 = vweird.f32 %v1497
        %vm1505 = vmor %vm1503, %vm1504
        %v1506 = vsel %vm1505, %v1497, %v1502
        %v1507 = vrsqrt.pop %v1295
        %v1508 = vmul.f32 %v1507, %v1295
        %v1509 = vmul.f32 %v1508, %v1507
        %v1510 = vmul.f32 0.5, %v1509
        %v1511 = vsub.f32 1.5, %v1510
        %v1512 = vmul.f32 %v1507, %v1511
        %vm1513 = vweird.f32 %v1295
        %vm1514 = vweird.f32 %v1507
        %vm1515 = vmor %vm1513, %vm1514
        %v1516 = vsel %vm1515, %v1507, %v1512
        %v1517 = vrsqrt.pop %v1296
        %v1518 = vmul.f32 %v1517, %v1296
        %v1519 = vmul.f32 %v1518, %v1517
        %v1520 = vmul.f32 0.5, %v1519
        %v1521 = vsub.f32 1.5, %v1520
        %v1522 = vmul.f32 %v1517, %v1521
        %vm1523 = vweird.f32 %v1296
        %vm1524 = vweird.f32 %v1517
        %vm1525 = vmor %vm1523, %vm1524
        %v1526 = vsel %vm1525, %v1517, %v1522
        %v1527 = vrsqrt.pop %v1297
        %v1528 = vmul.f32 %v1527, %v1297
        %v1529 = vmul.f32 %v1528, %v1527
        %v1530 = vmul.f32 0.5, %v1529
        %v1531 = vsub.f32 1.5, %v1530
        %v1532 = vmul.f32 %v1527, %v1531
        %vm1533 = vweird.f32 %v1297
        %vm1534 = vweird.f32 %v1527
        %vm1535 = vmor %vm1533, %vm1534
        %v1536 = vsel %vm1535, %v1527, %v1532
        %v1537 = vrsqrt.pop %v1298
        %v1538 = vmul.f32 %v1537, %v1298
        %v1539 = vmul.f32 %v1538, %v1537
        %v1540 = vmul.f32 0.5, %v1539
        %v1541 = vsub.f32 1.5, %v1540
        %v1542 = vmul.f32 %v1537, %v1541
        %vm1543 = vweird.f32 %v1298
        %vm1544 = vweird.f32 %v1537
        %vm1545 = vmor %vm1543, %vm1544
        %v1546 = vsel %vm1545, %v1537, %v1542
        %v1547 = vrsqrt.pop %v1299
        %v1548 = vmul.f32 %v1547, %v1299
        %v1549 = vmul.f32 %v1548, %v1547
        %v1550 = vmul.f32 0.5, %v1549
        %v1551 = vsub.f32 1.5, %v1550
        %v1552 = vmul.f32 %v1547, %v1551
        %vm1553 = vweird.f32 %v1299
        %vm1554 = vweird.f32 %v1547
        %vm1555 = vmor %vm1553, %vm1554
        %v1556 = vsel %vm1555, %v1547, %v1552
        %v1557 = vrsqrt.pop %v1300
        %v1558 = vmul.f32 %v1557, %v1300
        %v1559 = vmul.f32 %v1558, %v1557
        %v1560 = vmul.f32 0.5, %v1559
        %v1561 = vsub.f32 1.5, %v1560
        %v1562 = vmul.f32 %v1557, %v1561
        %vm1563 = vweird.f32 %v1300
        %vm1564 = vweird.f32 %v1557
        %vm1565 = vmor %vm1563, %vm1564
        %v1566 = vsel %vm1565, %v1557, %v1562
        %v1567 = vrsqrt.pop %v1301
        %v1568 = vmul.f32 %v1567, %v1301
        %v1569 = vmul.f32 %v1568, %v1567
        %v1570 = vmul.f32 0.5, %v1569
        %v1571 = vsub.f32 1.5, %v1570
        %v1572 = vmul.f32 %v1567, %v1571
        %vm1573 = vweird.f32 %v1301
        %vm1574 = vweird.f32 %v1567
        %vm1575 = vmor %vm1573, %vm1574
        %v1576 = vsel %vm1575, %v1567, %v1572
        %v1577 = vrsqrt.pop %v1302
        %v1578 = vmul.f32 %v1577, %v1302
        %v1579 = vmul.f32 %v1578, %v1577
        %v1580 = vmul.f32 0.5, %v1579
        %v1581 = vsub.f32 1.5, %v1580
        %v1582 = vmul.f32 %v1577, %v1581
        %vm1583 = vweird.f32 %v1302
        %vm1584 = vweird.f32 %v1577
        %vm1585 = vmor %vm1583, %vm1584
        %v1586 = vsel %vm1585, %v1577, %v1582
        %v1587 = vrsqrt.pop %v1303
        %v1588 = vmul.f32 %v1587, %v1303
        %v1589 = vmul.f32 %v1588, %v1587
        %v1590 = vmul.f32 0.5, %v1589
        %v1591 = vsub.f32 1.5, %v1590
        %v1592 = vmul.f32 %v1587, %v1591
        %vm1593 = vweird.f32 %v1303
        %vm1594 = vweird.f32 %v1587
        %vm1595 = vmor %vm1593, %vm1594
        %v1596 = vsel %vm1595, %v1587, %v1592
        %v1597 = vrsqrt.pop %v1304
        %v1598 = vmul.f32 %v1597, %v1304
        %v1599 = vmul.f32 %v1598, %v1597
        %v1600 = vmul.f32 0.5, %v1599
        %v1601 = vsub.f32 1.5, %v1600
        %v1602 = vmul.f32 %v1597, %v1601
        %vm1603 = vweird.f32 %v1304
        %vm1604 = vweird.f32 %v1597
        %vm1605 = vmor %vm1603, %vm1604
        %v1606 = vsel %vm1605, %v1597, %v1602
        %v1607 = vrsqrt.pop %v1305
        %v1608 = vmul.f32 %v1607, %v1305
        %v1609 = vmul.f32 %v1608, %v1607
        %v1610 = vmul.f32 0.5, %v1609
        %v1611 = vsub.f32 1.5, %v1610
        %v1612 = vmul.f32 %v1607, %v1611
        %vm1613 = vweird.f32 %v1305
        %vm1614 = vweird.f32 %v1607
        %vm1615 = vmor %vm1613, %vm1614
        %v1616 = vsel %vm1615, %v1607, %v1612
        %v1617 = vrsqrt.pop %v1306
        %v1618 = vmul.f32 %v1617, %v1306
        %v1619 = vmul.f32 %v1618, %v1617
        %v1620 = vmul.f32 0.5, %v1619
        %v1621 = vsub.f32 1.5, %v1620
        %v1622 = vmul.f32 %v1617, %v1621
        %vm1623 = vweird.f32 %v1306
        %vm1624 = vweird.f32 %v1617
        %vm1625 = vmor %vm1623, %vm1624
        %v1626 = vsel %vm1625, %v1617, %v1622
        %v1627 = vmul.f32 %v1115, %v1316
        %v1628 = vmul.f32 %v1116, %v1326
        %v1629 = vmul.f32 %v1117, %v1336
        %v1630 = vmul.f32 %v1118, %v1346
        %v1631 = vmul.f32 %v1119, %v1356
        %v1632 = vmul.f32 %v1120, %v1366
        %v1633 = vmul.f32 %v1121, %v1376
        %v1634 = vmul.f32 %v1122, %v1386
        %v1635 = vmul.f32 %v1123, %v1396
        %v1636 = vmul.f32 %v1124, %v1406
        %v1637 = vmul.f32 %v1125, %v1416
        %v1638 = vmul.f32 %v1126, %v1426
        %v1639 = vmul.f32 %v1127, %v1436
        %v1640 = vmul.f32 %v1128, %v1446
        %v1641 = vmul.f32 %v1129, %v1456
        %v1642 = vmul.f32 %v1130, %v1466
        %v1643 = vmul.f32 %v1131, %v1476
        %v1644 = vmul.f32 %v1132, %v1486
        %v1645 = vmul.f32 %v1133, %v1496
        %v1646 = vmul.f32 %v1134, %v1506
        %v1647 = vmul.f32 %v1135, %v1516
        %v1648 = vmul.f32 %v1136, %v1526
        %v1649 = vmul.f32 %v1137, %v1536
        %v1650 = vmul.f32 %v1138, %v1546
        %v1651 = vmul.f32 %v1139, %v1556
        %v1652 = vmul.f32 %v1140, %v1566
        %v1653 = vmul.f32 %v1141, %v1576
        %v1654 = vmul.f32 %v1142, %v1586
        %v1655 = vmul.f32 %v1143, %v1596
        %v1656 = vmul.f32 %v1144, %v1606
        %v1657 = vmul.f32 %v1145, %v1616
        %v1658 = vmul.f32 %v1146, %v1626
        %v1660 = vperm.slane %v1010, 0
        %v1662 = vmul.f32 %v1627, %v1660
        %v1663 = vmul.f32 %v1628, %v1660
        %v1664 = vmul.f32 %v1629, %v1660
        %v1665 = vmul.f32 %v1630, %v1660
        %v1666 = vmul.f32 %v1631, %v1660
        %v1667 = vmul.f32 %v1632, %v1660
        %v1668 = vmul.f32 %v1633, %v1660
        %v1669 = vmul.f32 %v1634, %v1660
        %v1670 = vmul.f32 %v1635, %v1660
        %v1671 = vmul.f32 %v1636, %v1660
        %v1672 = vmul.f32 %v1637, %v1660
        %v1673 = vmul.f32 %v1638, %v1660
        %v1674 = vmul.f32 %v1639, %v1660
        %v1675 = vmul.f32 %v1640, %v1660
        %v1676 = vmul.f32 %v1641, %v1660
        %v1677 = vmul.f32 %v1642, %v1660
        %v1678 = vmul.f32 %v1643, %v1660
        %v1679 = vmul.f32 %v1644, %v1660
        %v1680 = vmul.f32 %v1645, %v1660
        %v1681 = vmul.f32 %v1646, %v1660
        %v1682 = vmul.f32 %v1647, %v1660
        %v1683 = vmul.f32 %v1648, %v1660
        %v1684 = vmul.f32 %v1649, %v1660
        %v1685 = vmul.f32 %v1650, %v1660
        %v1686 = vmul.f32 %v1651, %v1660
        %v1687 = vmul.f32 %v1652, %v1660
        %v1688 = vmul.f32 %v1653, %v1660
        %v1689 = vmul.f32 %v1654, %v1660
        %v1690 = vmul.f32 %v1655, %v1660
        %v1691 = vmul.f32 %v1656, %v1660
        %v1692 = vmul.f32 %v1657, %v1660
        %v1693 = vmul.f32 %v1658, %v1660
        %v1695 = vperm.slane %v1011, 0
        %v1697 = vadd.f32 %v1662, %v1695
        %v1698 = vadd.f32 %v1663, %v1695
        %v1699 = vadd.f32 %v1664, %v1695
        %v1700 = vadd.f32 %v1665, %v1695
        %v1701 = vadd.f32 %v1666, %v1695
        %v1702 = vadd.f32 %v1667, %v1695
        %v1703 = vadd.f32 %v1668, %v1695
        %v1704 = vadd.f32 %v1669, %v1695
        %v1705 = vadd.f32 %v1670, %v1695
        %v1706 = vadd.f32 %v1671, %v1695
        %v1707 = vadd.f32 %v1672, %v1695
        %v1708 = vadd.f32 %v1673, %v1695
        %v1709 = vadd.f32 %v1674, %v1695
        %v1710 = vadd.f32 %v1675, %v1695
        %v1711 = vadd.f32 %v1676, %v1695
        %v1712 = vadd.f32 %v1677, %v1695
        %v1713 = vadd.f32 %v1678, %v1695
        %v1714 = vadd.f32 %v1679, %v1695
        %v1715 = vadd.f32 %v1680, %v1695
        %v1716 = vadd.f32 %v1681, %v1695
        %v1717 = vadd.f32 %v1682, %v1695
        %v1718 = vadd.f32 %v1683, %v1695
        %v1719 = vadd.f32 %v1684, %v1695
        %v1720 = vadd.f32 %v1685, %v1695
        %v1721 = vadd.f32 %v1686, %v1695
        %v1722 = vadd.f32 %v1687, %v1695
        %v1723 = vadd.f32 %v1688, %v1695
        %v1724 = vadd.f32 %v1689, %v1695
        %v1725 = vadd.f32 %v1690, %v1695
        %v1726 = vadd.f32 %v1691, %v1695
        %v1727 = vadd.f32 %v1692, %v1695
        %v1728 = vadd.f32 %v1693, %v1695
        %v1729 = vpack.c.bf16 %v1698, %v1697
        %v1730 = vpack.c.bf16 %v1700, %v1699
        %v1731 = vpack.c.bf16 %v1702, %v1701
        %v1732 = vpack.c.bf16 %v1704, %v1703
        %v1733 = vpack.c.bf16 %v1706, %v1705
        %v1734 = vpack.c.bf16 %v1708, %v1707
        %v1735 = vpack.c.bf16 %v1710, %v1709
        %v1736 = vpack.c.bf16 %v1712, %v1711
        %v1737 = vpack.c.bf16 %v1714, %v1713
        %v1738 = vpack.c.bf16 %v1716, %v1715
        %v1739 = vpack.c.bf16 %v1718, %v1717
        %v1740 = vpack.c.bf16 %v1720, %v1719
        %v1741 = vpack.c.bf16 %v1722, %v1721
        %v1742 = vpack.c.bf16 %v1724, %v1723
        %v1743 = vpack.c.bf16 %v1726, %v1725
        %v1744 = vpack.c.bf16 %v1728, %v1727
        %v1745 = vld [vmem:[%s741] sm:$0xff]
        %v1746 = vld [vmem:[%s741 + $0x8] sm:$0xf]
        %v1747 = vld [vmem:[%s741 + $0xc] sm:$0xff]
        %v1748 = vld [vmem:[%s741 + $0x14] sm:$0xf]
        %v1749 = vld [vmem:[%s741 + $0x18] sm:$0xff]
        %v1750 = vld [vmem:[%s741 + $0x20] sm:$0xf]
        %v1751 = vld [vmem:[%s741 + $0x24] sm:$0xff]
        %v1752 = vld [vmem:[%s741 + $0x2c] sm:$0xf]
        %v1753 = vld [vmem:[%s741 + $0x30] sm:$0xff]
        %v1754 = vld [vmem:[%s741 + $0x38] sm:$0xf]
        %v1755 = vld [vmem:[%s741 + $0x3c] sm:$0xff]
        %v1756 = vld [vmem:[%s741 + $0x44] sm:$0xf]
        %v1757 = vld [vmem:[%s741 + $0x48] sm:$0xff]
        %v1758 = vld [vmem:[%s741 + $0x50] sm:$0xf]
        %v1759 = vld [vmem:[%s741 + $0x54] sm:$0xff]
        %v1760 = vld [vmem:[%s741 + $0x5c] sm:$0xf]
        %v1761 = vld [vmem:[%s741 + $0x60] sm:$0xff]
        %v1762 = vld [vmem:[%s741 + $0x68] sm:$0xf]
        %v1763 = vld [vmem:[%s741 + $0x6c] sm:$0xff]
        %v1764 = vld [vmem:[%s741 + $0x74] sm:$0xf]
        %v1765 = vld [vmem:[%s741 + $0x78] sm:$0xff]
        %v1766 = vld [vmem:[%s741 + $0x80] sm:$0xf]
        %v1767 = vld [vmem:[%s741 + $0x84] sm:$0xff]
        %v1768 = vld [vmem:[%s741 + $0x8c] sm:$0xf]
        %v1769 = vld [vmem:[%s741 + $0x90] sm:$0xff]
        %v1770 = vld [vmem:[%s741 + $0x98] sm:$0xf]
        %v1771 = vld [vmem:[%s741 + $0x9c] sm:$0xff]
        %v1772 = vld [vmem:[%s741 + $0xa4] sm:$0xf]
        %v1773 = vld [vmem:[%s741 + $0xa8] sm:$0xff]
        %v1774 = vld [vmem:[%s741 + $0xb0] sm:$0xf]
        %v1775 = vld [vmem:[%s741 + $0xb4] sm:$0xff]
        %v1776 = vld [vmem:[%s741 + $0xbc] sm:$0xf]
        %v1777 = vld [vmem:[%s751] sm:$0x7]
        %v1779 = vperm.slane %v1777, 0
        %v1780 = vperm.slane %v1777, 1
        %v1781 = vperm.slane %v1777, 2
        %v1817 = vunpack.c.l.b16 %v1745
        %v1818 = vunpack.c.h.b16 %v1745
        %v1819 = vunpack.c.l.b16 %v1746
        %v1820 = vunpack.c.l.b16 %v1747
        %v1821 = vunpack.c.h.b16 %v1747
        %v1822 = vunpack.c.l.b16 %v1748
        %v1823 = vunpack.c.l.b16 %v1749
        %v1824 = vunpack.c.h.b16 %v1749
        %v1825 = vunpack.c.l.b16 %v1750
        %v1826 = vunpack.c.l.b16 %v1751
        %v1827 = vunpack.c.h.b16 %v1751
        %v1828 = vunpack.c.l.b16 %v1752
        %v1829 = vunpack.c.l.b16 %v1753
        %v1830 = vunpack.c.h.b16 %v1753
        %v1831 = vunpack.c.l.b16 %v1754
        %v1832 = vunpack.c.l.b16 %v1755
        %v1833 = vunpack.c.h.b16 %v1755
        %v1834 = vunpack.c.l.b16 %v1756
        %v1835 = vunpack.c.l.b16 %v1757
        %v1836 = vunpack.c.h.b16 %v1757
        %v1837 = vunpack.c.l.b16 %v1758
        %v1838 = vunpack.c.l.b16 %v1759
        %v1839 = vunpack.c.h.b16 %v1759
        %v1840 = vunpack.c.l.b16 %v1760
        %v1841 = vunpack.c.l.b16 %v1761
        %v1842 = vunpack.c.h.b16 %v1761
        %v1843 = vunpack.c.l.b16 %v1762
        %v1844 = vunpack.c.l.b16 %v1763
        %v1845 = vunpack.c.h.b16 %v1763
        %v1846 = vunpack.c.l.b16 %v1764
        %v1847 = vunpack.c.l.b16 %v1765
        %v1848 = vunpack.c.h.b16 %v1765
        %v1849 = vunpack.c.l.b16 %v1766
        %v1850 = vunpack.c.l.b16 %v1767
        %v1851 = vunpack.c.h.b16 %v1767
        %v1852 = vunpack.c.l.b16 %v1768
        %v1853 = vunpack.c.l.b16 %v1769
        %v1854 = vunpack.c.h.b16 %v1769
        %v1855 = vunpack.c.l.b16 %v1770
        %v1856 = vunpack.c.l.b16 %v1771
        %v1857 = vunpack.c.h.b16 %v1771
        %v1858 = vunpack.c.l.b16 %v1772
        %v1859 = vunpack.c.l.b16 %v1773
        %v1860 = vunpack.c.h.b16 %v1773
        %v1861 = vunpack.c.l.b16 %v1774
        %v1862 = vunpack.c.l.b16 %v1775
        %v1863 = vunpack.c.h.b16 %v1775
        %v1864 = vunpack.c.l.b16 %v1776
        %v1865 = vpack.c.b16 %v1820, %v1817
        %v1866 = vpack.c.b16 %v1821, %v1818
        %v1867 = vpack.c.b16 %v1822, %v1819
        %v1868 = vpack.c.b16 %v1826, %v1823
        %v1869 = vpack.c.b16 %v1827, %v1824
        %v1870 = vpack.c.b16 %v1828, %v1825
        %v1871 = vpack.c.b16 %v1832, %v1829
        %v1872 = vpack.c.b16 %v1833, %v1830
        %v1873 = vpack.c.b16 %v1834, %v1831
        %v1874 = vpack.c.b16 %v1838, %v1835
        %v1875 = vpack.c.b16 %v1839, %v1836
        %v1876 = vpack.c.b16 %v1840, %v1837
        %v1877 = vpack.c.b16 %v1844, %v1841
        %v1878 = vpack.c.b16 %v1845, %v1842
        %v1879 = vpack.c.b16 %v1846, %v1843
        %v1880 = vpack.c.b16 %v1850, %v1847
        %v1881 = vpack.c.b16 %v1851, %v1848
        %v1882 = vpack.c.b16 %v1852, %v1849
        %v1883 = vpack.c.b16 %v1856, %v1853
        %v1884 = vpack.c.b16 %v1857, %v1854
        %v1885 = vpack.c.b16 %v1858, %v1855
        %v1886 = vpack.c.b16 %v1862, %v1859
        %v1887 = vpack.c.b16 %v1863, %v1860
        %v1888 = vpack.c.b16 %v1864, %v1861
        %1913 = vmatpush.bf16.msra.mxu0 %v1886
        %1914 = vmatpush.bf16.msra.mxu0 %v1883
        %1915 = vmatpush.bf16.msra.mxu0 %v1880
        %1916 = vmatpush.bf16.msra.mxu0 %v1877
        %1917 = vmatpush.bf16.msra.mxu0 %v1874
        %1918 = vmatpush.bf16.msra.mxu0 %v1871
        %1919 = vmatpush.bf16.msra.mxu0 %v1868
        %1920 = vmatpush.bf16.msra.mxu0 %v1865
        %1921 = vmatmul.bf16.gmra.mxu0 %v1729
        %v1922 = vpop.f32.mrf.mxu0
        %v1923 = vadd.f32 %v1779, %v1922
        %v1924 = vpop.f32.mrf.mxu0
        %v1925 = vadd.f32 %v1779, %v1924
        %1926 = vmatmul.bf16.gmra.mxu0 %v1730
        %v1927 = vpop.f32.mrf.mxu0
        %v1928 = vadd.f32 %v1779, %v1927
        %v1929 = vpop.f32.mrf.mxu0
        %v1930 = vadd.f32 %v1779, %v1929
        %1931 = vmatmul.bf16.gmra.mxu0 %v1731
        %v1932 = vpop.f32.mrf.mxu0
        %v1933 = vadd.f32 %v1779, %v1932
        %v1934 = vpop.f32.mrf.mxu0
        %v1935 = vadd.f32 %v1779, %v1934
        %1936 = vmatmul.bf16.gmra.mxu0 %v1732
        %v1937 = vpop.f32.mrf.mxu0
        %v1938 = vadd.f32 %v1779, %v1937
        %v1939 = vpop.f32.mrf.mxu0
        %v1940 = vadd.f32 %v1779, %v1939
        %1941 = vmatmul.bf16.gmra.mxu0 %v1733
        %v1942 = vpop.f32.mrf.mxu0
        %v1943 = vadd.f32 %v1779, %v1942
        %v1944 = vpop.f32.mrf.mxu0
        %v1945 = vadd.f32 %v1779, %v1944
        %1946 = vmatmul.bf16.gmra.mxu0 %v1734
        %v1947 = vpop.f32.mrf.mxu0
        %v1948 = vadd.f32 %v1779, %v1947
        %v1949 = vpop.f32.mrf.mxu0
        %v1950 = vadd.f32 %v1779, %v1949
        %1951 = vmatmul.bf16.gmra.mxu0 %v1735
        %v1952 = vpop.f32.mrf.mxu0
        %v1953 = vadd.f32 %v1779, %v1952
        %v1954 = vpop.f32.mrf.mxu0
        %v1955 = vadd.f32 %v1779, %v1954
        %1956 = vmatmul.bf16.gmra.mxu0 %v1736
        %v1957 = vpop.f32.mrf.mxu0
        %v1958 = vadd.f32 %v1779, %v1957
        %v1959 = vpop.f32.mrf.mxu0
        %v1960 = vadd.f32 %v1779, %v1959
        %1961 = vmatmul.bf16.gmra.mxu0 %v1737
        %v1962 = vpop.f32.mrf.mxu0
        %v1963 = vadd.f32 %v1779, %v1962
        %v1964 = vpop.f32.mrf.mxu0
        %v1965 = vadd.f32 %v1779, %v1964
        %1966 = vmatmul.bf16.gmra.mxu0 %v1738
        %v1967 = vpop.f32.mrf.mxu0
        %v1968 = vadd.f32 %v1779, %v1967
        %v1969 = vpop.f32.mrf.mxu0
        %v1970 = vadd.f32 %v1779, %v1969
        %1971 = vmatmul.bf16.gmra.mxu0 %v1739
        %v1972 = vpop.f32.mrf.mxu0
        %v1973 = vadd.f32 %v1779, %v1972
        %v1974 = vpop.f32.mrf.mxu0
        %v1975 = vadd.f32 %v1779, %v1974
        %1976 = vmatmul.bf16.gmra.mxu0 %v1740
        %v1977 = vpop.f32.mrf.mxu0
        %v1978 = vadd.f32 %v1779, %v1977
        %v1979 = vpop.f32.mrf.mxu0
        %v1980 = vadd.f32 %v1779, %v1979
        %1981 = vmatmul.bf16.gmra.mxu0 %v1741
        %v1982 = vpop.f32.mrf.mxu0
        %v1983 = vadd.f32 %v1779, %v1982
        %v1984 = vpop.f32.mrf.mxu0
        %v1985 = vadd.f32 %v1779, %v1984
        %1986 = vmatmul.bf16.gmra.mxu0 %v1742
        %v1987 = vpop.f32.mrf.mxu0
        %v1988 = vadd.f32 %v1779, %v1987
        %v1989 = vpop.f32.mrf.mxu0
        %v1990 = vadd.f32 %v1779, %v1989
        %1991 = vmatmul.bf16.gmra.mxu0 %v1743
        %v1992 = vpop.f32.mrf.mxu0
        %v1993 = vadd.f32 %v1779, %v1992
        %v1994 = vpop.f32.mrf.mxu0
        %v1995 = vadd.f32 %v1779, %v1994
        %1996 = vmatmul.bf16.gmra.mxu0 %v1744
        %v1997 = vpop.f32.mrf.mxu0
        %v1998 = vadd.f32 %v1779, %v1997
        %v1999 = vpop.f32.mrf.mxu0
        %v2000 = vadd.f32 %v1779, %v1999
        %2001 = vdwg.mxu0
        %2002 = vmatpush.bf16.msra.mxu0 %v1887
        %2003 = vmatpush.bf16.msra.mxu0 %v1884
        %2004 = vmatpush.bf16.msra.mxu0 %v1881
        %2005 = vmatpush.bf16.msra.mxu0 %v1878
        %2006 = vmatpush.bf16.msra.mxu0 %v1875
        %2007 = vmatpush.bf16.msra.mxu0 %v1872
        %2008 = vmatpush.bf16.msra.mxu0 %v1869
        %2009 = vmatpush.bf16.msra.mxu0 %v1866
        %2010 = vmatmul.bf16.gmra.mxu0 %v1729
        %v2011 = vpop.f32.mrf.mxu0
        %v2012 = vadd.f32 %v1780, %v2011
        %v2013 = vpop.f32.mrf.mxu0
        %v2014 = vadd.f32 %v1780, %v2013
        %2015 = vmatmul.bf16.gmra.mxu0 %v1730
        %v2016 = vpop.f32.mrf.mxu0
        %v2017 = vadd.f32 %v1780, %v2016
        %v2018 = vpop.f32.mrf.mxu0
        %v2019 = vadd.f32 %v1780, %v2018
        %2020 = vmatmul.bf16.gmra.mxu0 %v1731
        %v2021 = vpop.f32.mrf.mxu0
        %v2022 = vadd.f32 %v1780, %v2021
        %v2023 = vpop.f32.mrf.mxu0
        %v2024 = vadd.f32 %v1780, %v2023
        %2025 = vmatmul.bf16.gmra.mxu0 %v1732
        %v2026 = vpop.f32.mrf.mxu0
        %v2027 = vadd.f32 %v1780, %v2026
        %v2028 = vpop.f32.mrf.mxu0
        %v2029 = vadd.f32 %v1780, %v2028
        %2030 = vmatmul.bf16.gmra.mxu0 %v1733
        %v2031 = vpop.f32.mrf.mxu0
        %v2032 = vadd.f32 %v1780, %v2031
        %v2033 = vpop.f32.mrf.mxu0
        %v2034 = vadd.f32 %v1780, %v2033
        %2035 = vmatmul.bf16.gmra.mxu0 %v1734
        %v2036 = vpop.f32.mrf.mxu0
        %v2037 = vadd.f32 %v1780, %v2036
        %v2038 = vpop.f32.mrf.mxu0
        %v2039 = vadd.f32 %v1780, %v2038
        %2040 = vmatmul.bf16.gmra.mxu0 %v1735
        %v2041 = vpop.f32.mrf.mxu0
        %v2042 = vadd.f32 %v1780, %v2041
        %v2043 = vpop.f32.mrf.mxu0
        %v2044 = vadd.f32 %v1780, %v2043
        %2045 = vmatmul.bf16.gmra.mxu0 %v1736
        %v2046 = vpop.f32.mrf.mxu0
        %v2047 = vadd.f32 %v1780, %v2046
        %v2048 = vpop.f32.mrf.mxu0
        %v2049 = vadd.f32 %v1780, %v2048
        %2050 = vmatmul.bf16.gmra.mxu0 %v1737
        %v2051 = vpop.f32.mrf.mxu0
        %v2052 = vadd.f32 %v1780, %v2051
        %v2053 = vpop.f32.mrf.mxu0
        %v2054 = vadd.f32 %v1780, %v2053
        %2055 = vmatmul.bf16.gmra.mxu0 %v1738
        %v2056 = vpop.f32.mrf.mxu0
        %v2057 = vadd.f32 %v1780, %v2056
        %v2058 = vpop.f32.mrf.mxu0
        %v2059 = vadd.f32 %v1780, %v2058
        %2060 = vmatmul.bf16.gmra.mxu0 %v1739
        %v2061 = vpop.f32.mrf.mxu0
        %v2062 = vadd.f32 %v1780, %v2061
        %v2063 = vpop.f32.mrf.mxu0
        %v2064 = vadd.f32 %v1780, %v2063
        %2065 = vmatmul.bf16.gmra.mxu0 %v1740
        %v2066 = vpop.f32.mrf.mxu0
        %v2067 = vadd.f32 %v1780, %v2066
        %v2068 = vpop.f32.mrf.mxu0
        %v2069 = vadd.f32 %v1780, %v2068
        %2070 = vmatmul.bf16.gmra.mxu0 %v1741
        %v2071 = vpop.f32.mrf.mxu0
        %v2072 = vadd.f32 %v1780, %v2071
        %v2073 = vpop.f32.mrf.mxu0
        %v2074 = vadd.f32 %v1780, %v2073
        %2075 = vmatmul.bf16.gmra.mxu0 %v1742
        %v2076 = vpop.f32.mrf.mxu0
        %v2077 = vadd.f32 %v1780, %v2076
        %v2078 = vpop.f32.mrf.mxu0
        %v2079 = vadd.f32 %v1780, %v2078
        %2080 = vmatmul.bf16.gmra.mxu0 %v1743
        %v2081 = vpop.f32.mrf.mxu0
        %v2082 = vadd.f32 %v1780, %v2081
        %v2083 = vpop.f32.mrf.mxu0
        %v2084 = vadd.f32 %v1780, %v2083
        %2085 = vmatmul.bf16.gmra.mxu0 %v1744
        %v2086 = vpop.f32.mrf.mxu0
        %v2087 = vadd.f32 %v1780, %v2086
        %v2088 = vpop.f32.mrf.mxu0
        %v2089 = vadd.f32 %v1780, %v2088
        %2090 = vdwg.mxu0
        %2091 = vmatpush.bf16.msra.mxu0 %v1888
        %2092 = vmatpush.bf16.msra.mxu0 %v1885
        %2093 = vmatpush.bf16.msra.mxu0 %v1882
        %2094 = vmatpush.bf16.msra.mxu0 %v1879
        %2095 = vmatpush.bf16.msra.mxu0 %v1876
        %2096 = vmatpush.bf16.msra.mxu0 %v1873
        %2097 = vmatpush.bf16.msra.mxu0 %v1870
        %2098 = vmatpush.bf16.msra.mxu0 %v1867
        %2099 = vmatmul.bf16.gmra.mxu0 %v1729
        %v2100 = vpop.f32.mrf.mxu0
        %v2101 = vadd.f32 %v1781, %v2100
        %v2102 = vpop.f32.mrf.mxu0
        %v2103 = vadd.f32 %v1781, %v2102
        %2104 = vmatmul.bf16.gmra.mxu0 %v1730
        %v2105 = vpop.f32.mrf.mxu0
        %v2106 = vadd.f32 %v1781, %v2105
        %v2107 = vpop.f32.mrf.mxu0
        %v2108 = vadd.f32 %v1781, %v2107
        %2109 = vmatmul.bf16.gmra.mxu0 %v1731
        %v2110 = vpop.f32.mrf.mxu0
        %v2111 = vadd.f32 %v1781, %v2110
        %v2112 = vpop.f32.mrf.mxu0
        %v2113 = vadd.f32 %v1781, %v2112
        %2114 = vmatmul.bf16.gmra.mxu0 %v1732
        %v2115 = vpop.f32.mrf.mxu0
        %v2116 = vadd.f32 %v1781, %v2115
        %v2117 = vpop.f32.mrf.mxu0
        %v2118 = vadd.f32 %v1781, %v2117
        %2119 = vmatmul.bf16.gmra.mxu0 %v1733
        %v2120 = vpop.f32.mrf.mxu0
        %v2121 = vadd.f32 %v1781, %v2120
        %v2122 = vpop.f32.mrf.mxu0
        %v2123 = vadd.f32 %v1781, %v2122
        %2124 = vmatmul.bf16.gmra.mxu0 %v1734
        %v2125 = vpop.f32.mrf.mxu0
        %v2126 = vadd.f32 %v1781, %v2125
        %v2127 = vpop.f32.mrf.mxu0
        %v2128 = vadd.f32 %v1781, %v2127
        %2129 = vmatmul.bf16.gmra.mxu0 %v1735
        %v2130 = vpop.f32.mrf.mxu0
        %v2131 = vadd.f32 %v1781, %v2130
        %v2132 = vpop.f32.mrf.mxu0
        %v2133 = vadd.f32 %v1781, %v2132
        %2134 = vmatmul.bf16.gmra.mxu0 %v1736
        %v2135 = vpop.f32.mrf.mxu0
        %v2136 = vadd.f32 %v1781, %v2135
        %v2137 = vpop.f32.mrf.mxu0
        %v2138 = vadd.f32 %v1781, %v2137
        %2139 = vmatmul.bf16.gmra.mxu0 %v1737
        %v2140 = vpop.f32.mrf.mxu0
        %v2141 = vadd.f32 %v1781, %v2140
        %v2142 = vpop.f32.mrf.mxu0
        %v2143 = vadd.f32 %v1781, %v2142
        %2144 = vmatmul.bf16.gmra.mxu0 %v1738
        %v2145 = vpop.f32.mrf.mxu0
        %v2146 = vadd.f32 %v1781, %v2145
        %v2147 = vpop.f32.mrf.mxu0
        %v2148 = vadd.f32 %v1781, %v2147
        %2149 = vmatmul.bf16.gmra.mxu0 %v1739
        %v2150 = vpop.f32.mrf.mxu0
        %v2151 = vadd.f32 %v1781, %v2150
        %v2152 = vpop.f32.mrf.mxu0
        %v2153 = vadd.f32 %v1781, %v2152
        %2154 = vmatmul.bf16.gmra.mxu0 %v1740
        %v2155 = vpop.f32.mrf.mxu0
        %v2156 = vadd.f32 %v1781, %v2155
        %v2157 = vpop.f32.mrf.mxu0
        %v2158 = vadd.f32 %v1781, %v2157
        %2159 = vmatmul.bf16.gmra.mxu0 %v1741
        %v2160 = vpop.f32.mrf.mxu0
        %v2161 = vadd.f32 %v1781, %v2160
        %v2162 = vpop.f32.mrf.mxu0
        %v2163 = vadd.f32 %v1781, %v2162
        %2164 = vmatmul.bf16.gmra.mxu0 %v1742
        %v2165 = vpop.f32.mrf.mxu0
        %v2166 = vadd.f32 %v1781, %v2165
        %v2167 = vpop.f32.mrf.mxu0
        %v2168 = vadd.f32 %v1781, %v2167
        %2169 = vmatmul.bf16.gmra.mxu0 %v1743
        %v2170 = vpop.f32.mrf.mxu0
        %v2171 = vadd.f32 %v1781, %v2170
        %v2172 = vpop.f32.mrf.mxu0
        %v2173 = vadd.f32 %v1781, %v2172
        %2174 = vmatmul.bf16.gmra.mxu0 %v1744
        %v2175 = vpop.f32.mrf.mxu0
        %v2176 = vadd.f32 %v1781, %v2175
        %v2177 = vpop.f32.mrf.mxu0
        %v2178 = vadd.f32 %v1781, %v2177
        %2179 = vdwg.mxu0
        %v2180 = vpack.c.bf16 %v1923, %v1923
        %v2181 = vpack.c.bf16 %v1925, %v1925
        %v2182 = vpack.c.bf16 %v1928, %v1928
        %v2183 = vpack.c.bf16 %v1930, %v1930
        %v2184 = vpack.c.bf16 %v1933, %v1933
        %v2185 = vpack.c.bf16 %v1935, %v1935
        %v2186 = vpack.c.bf16 %v1938, %v1938
        %v2187 = vpack.c.bf16 %v1940, %v1940
        %v2188 = vpack.c.bf16 %v1943, %v1943
        %v2189 = vpack.c.bf16 %v1945, %v1945
        %v2190 = vpack.c.bf16 %v1948, %v1948
        %v2191 = vpack.c.bf16 %v1950, %v1950
        %v2192 = vpack.c.bf16 %v1953, %v1953
        %v2193 = vpack.c.bf16 %v1955, %v1955
        %v2194 = vpack.c.bf16 %v1958, %v1958
        %v2195 = vpack.c.bf16 %v1960, %v1960
        %v2196 = vpack.c.bf16 %v1963, %v1963
        %v2197 = vpack.c.bf16 %v1965, %v1965
        %v2198 = vpack.c.bf16 %v1968, %v1968
        %v2199 = vpack.c.bf16 %v1970, %v1970
        %v2200 = vpack.c.bf16 %v1973, %v1973
        %v2201 = vpack.c.bf16 %v1975, %v1975
        %v2202 = vpack.c.bf16 %v1978, %v1978
        %v2203 = vpack.c.bf16 %v1980, %v1980
        %v2204 = vpack.c.bf16 %v1983, %v1983
        %v2205 = vpack.c.bf16 %v1985, %v1985
        %v2206 = vpack.c.bf16 %v1988, %v1988
        %v2207 = vpack.c.bf16 %v1990, %v1990
        %v2208 = vpack.c.bf16 %v1993, %v1993
        %v2209 = vpack.c.bf16 %v1995, %v1995
        %v2210 = vpack.c.bf16 %v1998, %v1998
        %v2211 = vpack.c.bf16 %v2000, %v2000
        %v2212 = vpack.c.bf16 %v2012, %v2012
        %v2213 = vpack.c.bf16 %v2014, %v2014
        %v2214 = vpack.c.bf16 %v2017, %v2017
        %v2215 = vpack.c.bf16 %v2019, %v2019
        %v2216 = vpack.c.bf16 %v2022, %v2022
        %v2217 = vpack.c.bf16 %v2024, %v2024
        %v2218 = vpack.c.bf16 %v2027, %v2027
        %v2219 = vpack.c.bf16 %v2029, %v2029
        %v2220 = vpack.c.bf16 %v2032, %v2032
        %v2221 = vpack.c.bf16 %v2034, %v2034
        %v2222 = vpack.c.bf16 %v2037, %v2037
        %v2223 = vpack.c.bf16 %v2039, %v2039
        %v2224 = vpack.c.bf16 %v2042, %v2042
        %v2225 = vpack.c.bf16 %v2044, %v2044
        %v2226 = vpack.c.bf16 %v2047, %v2047
        %v2227 = vpack.c.bf16 %v2049, %v2049
        %v2228 = vpack.c.bf16 %v2052, %v2052
        %v2229 = vpack.c.bf16 %v2054, %v2054
        %v2230 = vpack.c.bf16 %v2057, %v2057
        %v2231 = vpack.c.bf16 %v2059, %v2059
        %v2232 = vpack.c.bf16 %v2062, %v2062
        %v2233 = vpack.c.bf16 %v2064, %v2064
        %v2234 = vpack.c.bf16 %v2067, %v2067
        %v2235 = vpack.c.bf16 %v2069, %v2069
        %v2236 = vpack.c.bf16 %v2072, %v2072
        %v2237 = vpack.c.bf16 %v2074, %v2074
        %v2238 = vpack.c.bf16 %v2077, %v2077
        %v2239 = vpack.c.bf16 %v2079, %v2079
        %v2240 = vpack.c.bf16 %v2082, %v2082
        %v2241 = vpack.c.bf16 %v2084, %v2084
        %v2242 = vpack.c.bf16 %v2087, %v2087
        %v2243 = vpack.c.bf16 %v2089, %v2089
        %v2244 = vpack.c.bf16 %v2101, %v2101
        %v2245 = vpack.c.bf16 %v2103, %v2103
        %v2246 = vpack.c.bf16 %v2106, %v2106
        %v2247 = vpack.c.bf16 %v2108, %v2108
        %v2248 = vpack.c.bf16 %v2111, %v2111
        %v2249 = vpack.c.bf16 %v2113, %v2113
        %v2250 = vpack.c.bf16 %v2116, %v2116
        %v2251 = vpack.c.bf16 %v2118, %v2118
        %v2252 = vpack.c.bf16 %v2121, %v2121
        %v2253 = vpack.c.bf16 %v2123, %v2123
        %v2254 = vpack.c.bf16 %v2126, %v2126
        %v2255 = vpack.c.bf16 %v2128, %v2128
        %v2256 = vpack.c.bf16 %v2131, %v2131
        %v2257 = vpack.c.bf16 %v2133, %v2133
        %v2258 = vpack.c.bf16 %v2136, %v2136
        %v2259 = vpack.c.bf16 %v2138, %v2138
        %v2260 = vpack.c.bf16 %v2141, %v2141
        %v2261 = vpack.c.bf16 %v2143, %v2143
        %v2262 = vpack.c.bf16 %v2146, %v2146
        %v2263 = vpack.c.bf16 %v2148, %v2148
        %v2264 = vpack.c.bf16 %v2151, %v2151
        %v2265 = vpack.c.bf16 %v2153, %v2153
        %v2266 = vpack.c.bf16 %v2156, %v2156
        %v2267 = vpack.c.bf16 %v2158, %v2158
        %v2268 = vpack.c.bf16 %v2161, %v2161
        %v2269 = vpack.c.bf16 %v2163, %v2163
        %v2270 = vpack.c.bf16 %v2166, %v2166
        %v2271 = vpack.c.bf16 %v2168, %v2168
        %v2272 = vpack.c.bf16 %v2171, %v2171
        %v2273 = vpack.c.bf16 %v2173, %v2173
        %v2274 = vpack.c.bf16 %v2176, %v2176
        %v2275 = vpack.c.bf16 %v2178, %v2178
        %v2292 = vunpack.c.l.b16 %v2180
        %v2293 = vunpack.c.l.b16 %v2181
        %v2294 = vunpack.c.l.b16 %v2182
        %v2295 = vunpack.c.l.b16 %v2183
        %v2296 = vunpack.c.l.b16 %v2184
        %v2297 = vunpack.c.l.b16 %v2185
        %v2298 = vunpack.c.l.b16 %v2186
        %v2299 = vunpack.c.l.b16 %v2187
        %v2300 = vunpack.c.l.b16 %v2188
        %v2301 = vunpack.c.l.b16 %v2189
        %v2302 = vunpack.c.l.b16 %v2190
        %v2303 = vunpack.c.l.b16 %v2191
        %v2304 = vunpack.c.l.b16 %v2192
        %v2305 = vunpack.c.l.b16 %v2193
        %v2306 = vunpack.c.l.b16 %v2194
        %v2307 = vunpack.c.l.b16 %v2195
        %v2308 = vpack.c.b16 %v2293, %v2292
        %v2309 = vpack.c.b16 %v2295, %v2294
        %v2310 = vpack.c.b16 %v2297, %v2296
        %v2311 = vpack.c.b16 %v2299, %v2298
        %v2312 = vpack.c.b16 %v2301, %v2300
        %v2313 = vpack.c.b16 %v2303, %v2302
        %v2314 = vpack.c.b16 %v2305, %v2304
        %v2315 = vpack.c.b16 %v2307, %v2306
        %v2332 = vunpack.c.l.b16 %v2212
        %v2333 = vunpack.c.l.b16 %v2213
        %v2334 = vunpack.c.l.b16 %v2214
        %v2335 = vunpack.c.l.b16 %v2215
        %v2336 = vunpack.c.l.b16 %v2216
        %v2337 = vunpack.c.l.b16 %v2217
        %v2338 = vunpack.c.l.b16 %v2218
        %v2339 = vunpack.c.l.b16 %v2219
        %v2340 = vunpack.c.l.b16 %v2220
        %v2341 = vunpack.c.l.b16 %v2221
        %v2342 = vunpack.c.l.b16 %v2222
        %v2343 = vunpack.c.l.b16 %v2223
        %v2344 = vunpack.c.l.b16 %v2224
        %v2345 = vunpack.c.l.b16 %v2225
        %v2346 = vunpack.c.l.b16 %v2226
        %v2347 = vunpack.c.l.b16 %v2227
        %v2348 = vpack.c.b16 %v2333, %v2332
        %v2349 = vpack.c.b16 %v2335, %v2334
        %v2350 = vpack.c.b16 %v2337, %v2336
        %v2351 = vpack.c.b16 %v2339, %v2338
        %v2352 = vpack.c.b16 %v2341, %v2340
        %v2353 = vpack.c.b16 %v2343, %v2342
        %v2354 = vpack.c.b16 %v2345, %v2344
        %v2355 = vpack.c.b16 %v2347, %v2346
        %vm2356 = vcmask 261120
        %v2358 = vsel %vm2356, %v2308, 0
        %v2361 = vsel %vm2356, %v2309, 0
        %v2364 = vsel %vm2356, %v2310, 0
        %v2367 = vsel %vm2356, %v2311, 0
        %v2370 = vsel %vm2356, %v2312, 0
        %v2373 = vsel %vm2356, %v2313, 0
        %v2376 = vsel %vm2356, %v2314, 0
        %v2379 = vsel %vm2356, %v2315, 0
        %v2382 = vsel %vm2356, %v2348, 0
        %v2385 = vsel %vm2356, %v2349, 0
        %v2388 = vsel %vm2356, %v2350, 0
        %v2391 = vsel %vm2356, %v2351, 0
        %v2394 = vsel %vm2356, %v2352, 0
        %v2397 = vsel %vm2356, %v2353, 0
        %v2400 = vsel %vm2356, %v2354, 0
        %v2403 = vsel %vm2356, %v2355, 0
        %2405 = vmatpush.bf16.xpose.msra.mxu0 %v2403
        %2406 = vmatpush.bf16.xpose.msra.mxu0 %v2400
        %2407 = vmatpush.bf16.xpose.msra.mxu0 %v2397
        %2408 = vmatpush.bf16.xpose.msra.mxu0 %v2394
        %2409 = vmatpush.bf16.xpose.msra.mxu0 %v2391
        %2410 = vmatpush.bf16.xpose.msra.mxu0 %v2388
        %2411 = vmatpush.bf16.xpose.msra.mxu0 %v2385
        %2412 = vmatpush.bf16.xpose.msra.mxu0 %v2382
        %2413 = vmatmul.bf16.gmra.mxu0 %v2358
        %v2414 = vpop.f32.mrf.mxu0
        %v2415 = vadd.f32 0.0, %v2414
        %v2416 = vpop.f32.mrf.mxu0
        %v2417 = vadd.f32 0.0, %v2416
        %2418 = vmatmul.bf16.gmra.mxu0 %v2361
        %v2419 = vpop.f32.mrf.mxu0
        %v2420 = vadd.f32 0.0, %v2419
        %v2421 = vpop.f32.mrf.mxu0
        %v2422 = vadd.f32 0.0, %v2421
        %2423 = vmatmul.bf16.gmra.mxu0 %v2364
        %v2424 = vpop.f32.mrf.mxu0
        %v2425 = vadd.f32 0.0, %v2424
        %v2426 = vpop.f32.mrf.mxu0
        %v2427 = vadd.f32 0.0, %v2426
        %2428 = vmatmul.bf16.gmra.mxu0 %v2367
        %v2429 = vpop.f32.mrf.mxu0
        %v2430 = vadd.f32 0.0, %v2429
        %v2431 = vpop.f32.mrf.mxu0
        %v2432 = vadd.f32 0.0, %v2431
        %2433 = vmatmul.bf16.gmra.mxu0 %v2370
        %v2434 = vpop.f32.mrf.mxu0
        %v2435 = vadd.f32 0.0, %v2434
        %v2436 = vpop.f32.mrf.mxu0
        %v2437 = vadd.f32 0.0, %v2436
        %2438 = vmatmul.bf16.gmra.mxu0 %v2373
        %v2439 = vpop.f32.mrf.mxu0
        %v2440 = vadd.f32 0.0, %v2439
        %v2441 = vpop.f32.mrf.mxu0
        %v2442 = vadd.f32 0.0, %v2441
        %2443 = vmatmul.bf16.gmra.mxu0 %v2376
        %v2444 = vpop.f32.mrf.mxu0
        %v2445 = vadd.f32 0.0, %v2444
        %v2446 = vpop.f32.mrf.mxu0
        %v2447 = vadd.f32 0.0, %v2446
        %2448 = vmatmul.bf16.gmra.mxu0 %v2379
        %v2449 = vpop.f32.mrf.mxu0
        %v2450 = vadd.f32 0.0, %v2449
        %v2451 = vpop.f32.mrf.mxu0
        %v2452 = vadd.f32 0.0, %v2451
        %2453 = vdwg.mxu0
        %v2470 = vunpack.c.l.b16 %v2196
        %v2471 = vunpack.c.l.b16 %v2197
        %v2472 = vunpack.c.l.b16 %v2198
        %v2473 = vunpack.c.l.b16 %v2199
        %v2474 = vunpack.c.l.b16 %v2200
        %v2475 = vunpack.c.l.b16 %v2201
        %v2476 = vunpack.c.l.b16 %v2202
        %v2477 = vunpack.c.l.b16 %v2203
        %v2478 = vunpack.c.l.b16 %v2204
        %v2479 = vunpack.c.l.b16 %v2205
        %v2480 = vunpack.c.l.b16 %v2206
        %v2481 = vunpack.c.l.b16 %v2207
        %v2482 = vunpack.c.l.b16 %v2208
        %v2483 = vunpack.c.l.b16 %v2209
        %v2484 = vunpack.c.l.b16 %v2210
        %v2485 = vunpack.c.l.b16 %v2211
        %v2486 = vpack.c.b16 %v2471, %v2470
        %v2487 = vpack.c.b16 %v2473, %v2472
        %v2488 = vpack.c.b16 %v2475, %v2474
        %v2489 = vpack.c.b16 %v2477, %v2476
        %v2490 = vpack.c.b16 %v2479, %v2478
        %v2491 = vpack.c.b16 %v2481, %v2480
        %v2492 = vpack.c.b16 %v2483, %v2482
        %v2493 = vpack.c.b16 %v2485, %v2484
        %v2510 = vunpack.c.l.b16 %v2228
        %v2511 = vunpack.c.l.b16 %v2229
        %v2512 = vunpack.c.l.b16 %v2230
        %v2513 = vunpack.c.l.b16 %v2231
        %v2514 = vunpack.c.l.b16 %v2232
        %v2515 = vunpack.c.l.b16 %v2233
        %v2516 = vunpack.c.l.b16 %v2234
        %v2517 = vunpack.c.l.b16 %v2235
        %v2518 = vunpack.c.l.b16 %v2236
        %v2519 = vunpack.c.l.b16 %v2237
        %v2520 = vunpack.c.l.b16 %v2238
        %v2521 = vunpack.c.l.b16 %v2239
        %v2522 = vunpack.c.l.b16 %v2240
        %v2523 = vunpack.c.l.b16 %v2241
        %v2524 = vunpack.c.l.b16 %v2242
        %v2525 = vunpack.c.l.b16 %v2243
        %v2526 = vpack.c.b16 %v2511, %v2510
        %v2527 = vpack.c.b16 %v2513, %v2512
        %v2528 = vpack.c.b16 %v2515, %v2514
        %v2529 = vpack.c.b16 %v2517, %v2516
        %v2530 = vpack.c.b16 %v2519, %v2518
        %v2531 = vpack.c.b16 %v2521, %v2520
        %v2532 = vpack.c.b16 %v2523, %v2522
        %v2533 = vpack.c.b16 %v2525, %v2524
        %v2535 = vsel %vm2356, %v2486, 0
        %v2538 = vsel %vm2356, %v2487, 0
        %v2541 = vsel %vm2356, %v2488, 0
        %v2544 = vsel %vm2356, %v2489, 0
        %v2547 = vsel %vm2356, %v2490, 0
        %v2550 = vsel %vm2356, %v2491, 0
        %v2553 = vsel %vm2356, %v2492, 0
        %v2556 = vsel %vm2356, %v2493, 0
        %v2559 = vsel %vm2356, %v2526, 0
        %v2562 = vsel %vm2356, %v2527, 0
        %v2565 = vsel %vm2356, %v2528, 0
        %v2568 = vsel %vm2356, %v2529, 0
        %v2571 = vsel %vm2356, %v2530, 0
        %v2574 = vsel %vm2356, %v2531, 0
        %v2577 = vsel %vm2356, %v2532, 0
        %v2580 = vsel %vm2356, %v2533, 0
        %2582 = vmatpush.bf16.xpose.msra.mxu0 %v2580
        %2583 = vmatpush.bf16.xpose.msra.mxu0 %v2577
        %2584 = vmatpush.bf16.xpose.msra.mxu0 %v2574
        %2585 = vmatpush.bf16.xpose.msra.mxu0 %v2571
        %2586 = vmatpush.bf16.xpose.msra.mxu0 %v2568
        %2587 = vmatpush.bf16.xpose.msra.mxu0 %v2565
        %2588 = vmatpush.bf16.xpose.msra.mxu0 %v2562
        %2589 = vmatpush.bf16.xpose.msra.mxu0 %v2559
        %2590 = vmatmul.bf16.gmra.mxu0 %v2535
        %v2591 = vpop.f32.mrf.mxu0
        %v2592 = vadd.f32 0.0, %v2591
        %v2593 = vpop.f32.mrf.mxu0
        %v2594 = vadd.f32 0.0, %v2593
        %2595 = vmatmul.bf16.gmra.mxu0 %v2538
        %v2596 = vpop.f32.mrf.mxu0
        %v2597 = vadd.f32 0.0, %v2596
        %v2598 = vpop.f32.mrf.mxu0
        %v2599 = vadd.f32 0.0, %v2598
        %2600 = vmatmul.bf16.gmra.mxu0 %v2541
        %v2601 = vpop.f32.mrf.mxu0
        %v2602 = vadd.f32 0.0, %v2601
        %v2603 = vpop.f32.mrf.mxu0
        %v2604 = vadd.f32 0.0, %v2603
        %2605 = vmatmul.bf16.gmra.mxu0 %v2544
        %v2606 = vpop.f32.mrf.mxu0
        %v2607 = vadd.f32 0.0, %v2606
        %v2608 = vpop.f32.mrf.mxu0
        %v2609 = vadd.f32 0.0, %v2608
        %2610 = vmatmul.bf16.gmra.mxu0 %v2547
        %v2611 = vpop.f32.mrf.mxu0
        %v2612 = vadd.f32 0.0, %v2611
        %v2613 = vpop.f32.mrf.mxu0
        %v2614 = vadd.f32 0.0, %v2613
        %2615 = vmatmul.bf16.gmra.mxu0 %v2550
        %v2616 = vpop.f32.mrf.mxu0
        %v2617 = vadd.f32 0.0, %v2616
        %v2618 = vpop.f32.mrf.mxu0
        %v2619 = vadd.f32 0.0, %v2618
        %2620 = vmatmul.bf16.gmra.mxu0 %v2553
        %v2621 = vpop.f32.mrf.mxu0
        %v2622 = vadd.f32 0.0, %v2621
        %v2623 = vpop.f32.mrf.mxu0
        %v2624 = vadd.f32 0.0, %v2623
        %2625 = vmatmul.bf16.gmra.mxu0 %v2556
        %v2626 = vpop.f32.mrf.mxu0
        %v2627 = vadd.f32 0.0, %v2626
        %v2628 = vpop.f32.mrf.mxu0
        %v2629 = vadd.f32 0.0, %v2628
        %2630 = vdwg.mxu0
        %v2631 = vmul.f32 %v2415, 0.17677669
        %v2632 = vmul.f32 %v2417, 0.17677669
        %v2633 = vmul.f32 %v2420, 0.17677669
        %v2634 = vmul.f32 %v2422, 0.17677669
        %v2635 = vmul.f32 %v2425, 0.17677669
        %v2636 = vmul.f32 %v2427, 0.17677669
        %v2637 = vmul.f32 %v2430, 0.17677669
        %v2638 = vmul.f32 %v2432, 0.17677669
        %v2639 = vmul.f32 %v2435, 0.17677669
        %v2640 = vmul.f32 %v2437, 0.17677669
        %v2641 = vmul.f32 %v2440, 0.17677669
        %v2642 = vmul.f32 %v2442, 0.17677669
        %v2643 = vmul.f32 %v2445, 0.17677669
        %v2644 = vmul.f32 %v2447, 0.17677669
        %v2645 = vmul.f32 %v2450, 0.17677669
        %v2646 = vmul.f32 %v2452, 0.17677669
        %v2647 = vmul.f32 %v2592, 0.17677669
        %v2648 = vmul.f32 %v2594, 0.17677669
        %v2649 = vmul.f32 %v2597, 0.17677669
        %v2650 = vmul.f32 %v2599, 0.17677669
        %v2651 = vmul.f32 %v2602, 0.17677669
        %v2652 = vmul.f32 %v2604, 0.17677669
        %v2653 = vmul.f32 %v2607, 0.17677669
        %v2654 = vmul.f32 %v2609, 0.17677669
        %v2655 = vmul.f32 %v2612, 0.17677669
        %v2656 = vmul.f32 %v2614, 0.17677669
        %v2657 = vmul.f32 %v2617, 0.17677669
        %v2658 = vmul.f32 %v2619, 0.17677669
        %v2659 = vmul.f32 %v2622, 0.17677669
        %v2660 = vmul.f32 %v2624, 0.17677669
        %v2661 = vmul.f32 %v2627, 0.17677669
        %v2662 = vmul.f32 %v2629, 0.17677669
        %2663 = vmax.xlane.f32.xlu0 %v2631
        %v2664 = vpop.xlane.xlu0 %2663
        %2665 = vmax.xlane.f32.xlu0 %v2632
        %v2666 = vpop.xlane.xlu0 %2665
        %2667 = vmax.xlane.f32.xlu0 %v2633
        %v2668 = vpop.xlane.xlu0 %2667
        %2669 = vmax.xlane.f32.xlu0 %v2634
        %v2670 = vpop.xlane.xlu0 %2669
        %2671 = vmax.xlane.f32.xlu0 %v2635
        %v2672 = vpop.xlane.xlu0 %2671
        %2673 = vmax.xlane.f32.xlu0 %v2636
        %v2674 = vpop.xlane.xlu0 %2673
        %2675 = vmax.xlane.f32.xlu0 %v2637
        %v2676 = vpop.xlane.xlu0 %2675
        %2677 = vmax.xlane.f32.xlu0 %v2638
        %v2678 = vpop.xlane.xlu0 %2677
        %2679 = vmax.xlane.f32.xlu0 %v2639
        %v2680 = vpop.xlane.xlu0 %2679
        %2681 = vmax.xlane.f32.xlu0 %v2640
        %v2682 = vpop.xlane.xlu0 %2681
        %2683 = vmax.xlane.f32.xlu0 %v2641
        %v2684 = vpop.xlane.xlu0 %2683
        %2685 = vmax.xlane.f32.xlu0 %v2642
        %v2686 = vpop.xlane.xlu0 %2685
        %2687 = vmax.xlane.f32.xlu0 %v2643
        %v2688 = vpop.xlane.xlu0 %2687
        %2689 = vmax.xlane.f32.xlu0 %v2644
        %v2690 = vpop.xlane.xlu0 %2689
        %2691 = vmax.xlane.f32.xlu0 %v2645
        %v2692 = vpop.xlane.xlu0 %2691
        %2693 = vmax.xlane.f32.xlu0 %v2646
        %v2694 = vpop.xlane.xlu0 %2693
        %2695 = vmax.xlane.f32.xlu0 %v2647
        %v2696 = vpop.xlane.xlu0 %2695
        %2697 = vmax.xlane.f32.xlu0 %v2648
        %v2698 = vpop.xlane.xlu0 %2697
        %2699 = vmax.xlane.f32.xlu0 %v2649
        %v2700 = vpop.xlane.xlu0 %2699
        %2701 = vmax.xlane.f32.xlu0 %v2650
        %v2702 = vpop.xlane.xlu0 %2701
        %2703 = vmax.xlane.f32.xlu0 %v2651
        %v2704 = vpop.xlane.xlu0 %2703
        %2705 = vmax.xlane.f32.xlu0 %v2652
        %v2706 = vpop.xlane.xlu0 %2705
        %2707 = vmax.xlane.f32.xlu0 %v2653
        %v2708 = vpop.xlane.xlu0 %2707
        %2709 = vmax.xlane.f32.xlu0 %v2654
        %v2710 = vpop.xlane.xlu0 %2709
        %2711 = vmax.xlane.f32.xlu0 %v2655
        %v2712 = vpop.xlane.xlu0 %2711
        %2713 = vmax.xlane.f32.xlu0 %v2656
        %v2714 = vpop.xlane.xlu0 %2713
        %2715 = vmax.xlane.f32.xlu0 %v2657
        %v2716 = vpop.xlane.xlu0 %2715
        %2717 = vmax.xlane.f32.xlu0 %v2658
        %v2718 = vpop.xlane.xlu0 %2717
        %2719 = vmax.xlane.f32.xlu0 %v2659
        %v2720 = vpop.xlane.xlu0 %2719
        %2721 = vmax.xlane.f32.xlu0 %v2660
        %v2722 = vpop.xlane.xlu0 %2721
        %2723 = vmax.xlane.f32.xlu0 %v2661
        %v2724 = vpop.xlane.xlu0 %2723
        %2725 = vmax.xlane.f32.xlu0 %v2662
        %v2726 = vpop.xlane.xlu0 %2725
        %v2727 = vsub.f32 %v2631, %v2664
        %v2728 = vsub.f32 %v2632, %v2666
        %v2729 = vsub.f32 %v2633, %v2668
        %v2730 = vsub.f32 %v2634, %v2670
        %v2731 = vsub.f32 %v2635, %v2672
        %v2732 = vsub.f32 %v2636, %v2674
        %v2733 = vsub.f32 %v2637, %v2676
        %v2734 = vsub.f32 %v2638, %v2678
        %v2735 = vsub.f32 %v2639, %v2680
        %v2736 = vsub.f32 %v2640, %v2682
        %v2737 = vsub.f32 %v2641, %v2684
        %v2738 = vsub.f32 %v2642, %v2686
        %v2739 = vsub.f32 %v2643, %v2688
        %v2740 = vsub.f32 %v2644, %v2690
        %v2741 = vsub.f32 %v2645, %v2692
        %v2742 = vsub.f32 %v2646, %v2694
        %v2743 = vsub.f32 %v2647, %v2696
        %v2744 = vsub.f32 %v2648, %v2698
        %v2745 = vsub.f32 %v2649, %v2700
        %v2746 = vsub.f32 %v2650, %v2702
        %v2747 = vsub.f32 %v2651, %v2704
        %v2748 = vsub.f32 %v2652, %v2706
        %v2749 = vsub.f32 %v2653, %v2708
        %v2750 = vsub.f32 %v2654, %v2710
        %v2751 = vsub.f32 %v2655, %v2712
        %v2752 = vsub.f32 %v2656, %v2714
        %v2753 = vsub.f32 %v2657, %v2716
        %v2754 = vsub.f32 %v2658, %v2718
        %v2755 = vsub.f32 %v2659, %v2720
        %v2756 = vsub.f32 %v2660, %v2722
        %v2757 = vsub.f32 %v2661, %v2724
        %v2758 = vsub.f32 %v2662, %v2726
        %v2759 = vmul.f32 %v2727, 1.442695
        %v2760 = vpow.pop %v2759
        %v2761 = vmul.f32 %v2728, 1.442695
        %v2762 = vpow.pop %v2761
        %v2763 = vmul.f32 %v2729, 1.442695
        %v2764 = vpow.pop %v2763
        %v2765 = vmul.f32 %v2730, 1.442695
        %v2766 = vpow.pop %v2765
        %v2767 = vmul.f32 %v2731, 1.442695
        %v2768 = vpow.pop %v2767
        %v2769 = vmul.f32 %v2732, 1.442695
        %v2770 = vpow.pop %v2769
        %v2771 = vmul.f32 %v2733, 1.442695
        %v2772 = vpow.pop %v2771
        %v2773 = vmul.f32 %v2734, 1.442695
        %v2774 = vpow.pop %v2773
        %v2775 = vmul.f32 %v2735, 1.442695
        %v2776 = vpow.pop %v2775
        %v2777 = vmul.f32 %v2736, 1.442695
        %v2778 = vpow.pop %v2777
        %v2779 = vmul.f32 %v2737, 1.442695
        %v2780 = vpow.pop %v2779
        %v2781 = vmul.f32 %v2738, 1.442695
        %v2782 = vpow.pop %v2781
        %v2783 = vmul.f32 %v2739, 1.442695
        %v2784 = vpow.pop %v2783
        %v2785 = vmul.f32 %v2740, 1.442695
        %v2786 = vpow.pop %v2785
        %v2787 = vmul.f32 %v2741, 1.442695
        %v2788 = vpow.pop %v2787
        %v2789 = vmul.f32 %v2742, 1.442695
        %v2790 = vpow.pop %v2789
        %v2791 = vmul.f32 %v2743, 1.442695
        %v2792 = vpow.pop %v2791
        %v2793 = vmul.f32 %v2744, 1.442695
        %v2794 = vpow.pop %v2793
        %v2795 = vmul.f32 %v2745, 1.442695
        %v2796 = vpow.pop %v2795
        %v2797 = vmul.f32 %v2746, 1.442695
        %v2798 = vpow.pop %v2797
        %v2799 = vmul.f32 %v2747, 1.442695
        %v2800 = vpow.pop %v2799
        %v2801 = vmul.f32 %v2748, 1.442695
        %v2802 = vpow.pop %v2801
        %v2803 = vmul.f32 %v2749, 1.442695
        %v2804 = vpow.pop %v2803
        %v2805 = vmul.f32 %v2750, 1.442695
        %v2806 = vpow.pop %v2805
        %v2807 = vmul.f32 %v2751, 1.442695
        %v2808 = vpow.pop %v2807
        %v2809 = vmul.f32 %v2752, 1.442695
        %v2810 = vpow.pop %v2809
        %v2811 = vmul.f32 %v2753, 1.442695
        %v2812 = vpow.pop %v2811
        %v2813 = vmul.f32 %v2754, 1.442695
        %v2814 = vpow.pop %v2813
        %v2815 = vmul.f32 %v2755, 1.442695
        %v2816 = vpow.pop %v2815
        %v2817 = vmul.f32 %v2756, 1.442695
        %v2818 = vpow.pop %v2817
        %v2819 = vmul.f32 %v2757, 1.442695
        %v2820 = vpow.pop %v2819
        %v2821 = vmul.f32 %v2758, 1.442695
        %v2822 = vpow.pop %v2821
        %2823 = vadd.xlane.f32.xlu0 %v2760
        %v2824 = vpop.xlane.xlu0 %2823
        %2825 = vadd.xlane.f32.xlu0 %v2762
        %v2826 = vpop.xlane.xlu0 %2825
        %2827 = vadd.xlane.f32.xlu0 %v2764
        %v2828 = vpop.xlane.xlu0 %2827
        %2829 = vadd.xlane.f32.xlu0 %v2766
        %v2830 = vpop.xlane.xlu0 %2829
        %2831 = vadd.xlane.f32.xlu0 %v2768
        %v2832 = vpop.xlane.xlu0 %2831
        %2833 = vadd.xlane.f32.xlu0 %v2770
        %v2834 = vpop.xlane.xlu0 %2833
        %2835 = vadd.xlane.f32.xlu0 %v2772
        %v2836 = vpop.xlane.xlu0 %2835
        %2837 = vadd.xlane.f32.xlu0 %v2774
        %v2838 = vpop.xlane.xlu0 %2837
        %2839 = vadd.xlane.f32.xlu0 %v2776
        %v2840 = vpop.xlane.xlu0 %2839
        %2841 = vadd.xlane.f32.xlu0 %v2778
        %v2842 = vpop.xlane.xlu0 %2841
        %2843 = vadd.xlane.f32.xlu0 %v2780
        %v2844 = vpop.xlane.xlu0 %2843
        %2845 = vadd.xlane.f32.xlu0 %v2782
        %v2846 = vpop.xlane.xlu0 %2845
        %2847 = vadd.xlane.f32.xlu0 %v2784
        %v2848 = vpop.xlane.xlu0 %2847
        %2849 = vadd.xlane.f32.xlu0 %v2786
        %v2850 = vpop.xlane.xlu0 %2849
        %2851 = vadd.xlane.f32.xlu0 %v2788
        %v2852 = vpop.xlane.xlu0 %2851
        %2853 = vadd.xlane.f32.xlu0 %v2790
        %v2854 = vpop.xlane.xlu0 %2853
        %2855 = vadd.xlane.f32.xlu0 %v2792
        %v2856 = vpop.xlane.xlu0 %2855
        %2857 = vadd.xlane.f32.xlu0 %v2794
        %v2858 = vpop.xlane.xlu0 %2857
        %2859 = vadd.xlane.f32.xlu0 %v2796
        %v2860 = vpop.xlane.xlu0 %2859
        %2861 = vadd.xlane.f32.xlu0 %v2798
        %v2862 = vpop.xlane.xlu0 %2861
        %2863 = vadd.xlane.f32.xlu0 %v2800
        %v2864 = vpop.xlane.xlu0 %2863
        %2865 = vadd.xlane.f32.xlu0 %v2802
        %v2866 = vpop.xlane.xlu0 %2865
        %2867 = vadd.xlane.f32.xlu0 %v2804
        %v2868 = vpop.xlane.xlu0 %2867
        %2869 = vadd.xlane.f32.xlu0 %v2806
        %v2870 = vpop.xlane.xlu0 %2869
        %2871 = vadd.xlane.f32.xlu0 %v2808
        %v2872 = vpop.xlane.xlu0 %2871
        %2873 = vadd.xlane.f32.xlu0 %v2810
        %v2874 = vpop.xlane.xlu0 %2873
        %2875 = vadd.xlane.f32.xlu0 %v2812
        %v2876 = vpop.xlane.xlu0 %2875
        %2877 = vadd.xlane.f32.xlu0 %v2814
        %v2878 = vpop.xlane.xlu0 %2877
        %2879 = vadd.xlane.f32.xlu0 %v2816
        %v2880 = vpop.xlane.xlu0 %2879
        %2881 = vadd.xlane.f32.xlu0 %v2818
        %v2882 = vpop.xlane.xlu0 %2881
        %2883 = vadd.xlane.f32.xlu0 %v2820
        %v2884 = vpop.xlane.xlu0 %2883
        %2885 = vadd.xlane.f32.xlu0 %v2822
        %v2886 = vpop.xlane.xlu0 %2885
        %v2887 = vrcp.pop %v2824
        %v2888 = vmul.f32 %v2824, %v2887
        %v2889 = vsub.f32 1.0, %v2888
        %v2890 = vmul.f32 %v2887, %v2889
        %v2891 = vadd.f32 %v2887, %v2890
        %vm2892 = vweird.f32 %v2824
        %vm2893 = vweird.f32 %v2887
        %vm2894 = vmor %vm2892, %vm2893
        %v2895 = vsel %vm2894, %v2887, %v2891
        %v2896 = vand.u32 2147483647, %v2824
        %vm2897 = vcmp.eq.f32.partialorder %v2896, 8.507059e+37
        %v2898 = vand.u32 %v2824, 2147483648
        %v2899 = vor.u32 1.1754944e-38, %v2898
        %v2900 = vsel %vm2897, %v2899, %v2895
        %v2901 = vmul.f32 1.0, %v2900
        %v2902 = vrcp.pop %v2826
        %v2903 = vmul.f32 %v2826, %v2902
        %v2904 = vsub.f32 1.0, %v2903
        %v2905 = vmul.f32 %v2902, %v2904
        %v2906 = vadd.f32 %v2902, %v2905
        %vm2907 = vweird.f32 %v2826
        %vm2908 = vweird.f32 %v2902
        %vm2909 = vmor %vm2907, %vm2908
        %v2910 = vsel %vm2909, %v2902, %v2906
        %v2911 = vand.u32 2147483647, %v2826
        %vm2912 = vcmp.eq.f32.partialorder %v2911, 8.507059e+37
        %v2913 = vand.u32 %v2826, 2147483648
        %v2914 = vor.u32 1.1754944e-38, %v2913
        %v2915 = vsel %vm2912, %v2914, %v2910
        %v2916 = vmul.f32 1.0, %v2915
        %v2917 = vrcp.pop %v2828
        %v2918 = vmul.f32 %v2828, %v2917
        %v2919 = vsub.f32 1.0, %v2918
        %v2920 = vmul.f32 %v2917, %v2919
        %v2921 = vadd.f32 %v2917, %v2920
        %vm2922 = vweird.f32 %v2828
        %vm2923 = vweird.f32 %v2917
        %vm2924 = vmor %vm2922, %vm2923
        %v2925 = vsel %vm2924, %v2917, %v2921
        %v2926 = vand.u32 2147483647, %v2828
        %vm2927 = vcmp.eq.f32.partialorder %v2926, 8.507059e+37
        %v2928 = vand.u32 %v2828, 2147483648
        %v2929 = vor.u32 1.1754944e-38, %v2928
        %v2930 = vsel %vm2927, %v2929, %v2925
        %v2931 = vmul.f32 1.0, %v2930
        %v2932 = vrcp.pop %v2830
        %v2933 = vmul.f32 %v2830, %v2932
        %v2934 = vsub.f32 1.0, %v2933
        %v2935 = vmul.f32 %v2932, %v2934
        %v2936 = vadd.f32 %v2932, %v2935
        %vm2937 = vweird.f32 %v2830
        %vm2938 = vweird.f32 %v2932
        %vm2939 = vmor %vm2937, %vm2938
        %v2940 = vsel %vm2939, %v2932, %v2936
        %v2941 = vand.u32 2147483647, %v2830
        %vm2942 = vcmp.eq.f32.partialorder %v2941, 8.507059e+37
        %v2943 = vand.u32 %v2830, 2147483648
        %v2944 = vor.u32 1.1754944e-38, %v2943
        %v2945 = vsel %vm2942, %v2944, %v2940
        %v2946 = vmul.f32 1.0, %v2945
        %v2947 = vrcp.pop %v2832
        %v2948 = vmul.f32 %v2832, %v2947
        %v2949 = vsub.f32 1.0, %v2948
        %v2950 = vmul.f32 %v2947, %v2949
        %v2951 = vadd.f32 %v2947, %v2950
        %vm2952 = vweird.f32 %v2832
        %vm2953 = vweird.f32 %v2947
        %vm2954 = vmor %vm2952, %vm2953
        %v2955 = vsel %vm2954, %v2947, %v2951
        %v2956 = vand.u32 2147483647, %v2832
        %vm2957 = vcmp.eq.f32.partialorder %v2956, 8.507059e+37
        %v2958 = vand.u32 %v2832, 2147483648
        %v2959 = vor.u32 1.1754944e-38, %v2958
        %v2960 = vsel %vm2957, %v2959, %v2955
        %v2961 = vmul.f32 1.0, %v2960
        %v2962 = vrcp.pop %v2834
        %v2963 = vmul.f32 %v2834, %v2962
        %v2964 = vsub.f32 1.0, %v2963
        %v2965 = vmul.f32 %v2962, %v2964
        %v2966 = vadd.f32 %v2962, %v2965
        %vm2967 = vweird.f32 %v2834
        %vm2968 = vweird.f32 %v2962
        %vm2969 = vmor %vm2967, %vm2968
        %v2970 = vsel %vm2969, %v2962, %v2966
        %v2971 = vand.u32 2147483647, %v2834
        %vm2972 = vcmp.eq.f32.partialorder %v2971, 8.507059e+37
        %v2973 = vand.u32 %v2834, 2147483648
        %v2974 = vor.u32 1.1754944e-38, %v2973
        %v2975 = vsel %vm2972, %v2974, %v2970
        %v2976 = vmul.f32 1.0, %v2975
        %v2977 = vrcp.pop %v2836
        %v2978 = vmul.f32 %v2836, %v2977
        %v2979 = vsub.f32 1.0, %v2978
        %v2980 = vmul.f32 %v2977, %v2979
        %v2981 = vadd.f32 %v2977, %v2980
        %vm2982 = vweird.f32 %v2836
        %vm2983 = vweird.f32 %v2977
        %vm2984 = vmor %vm2982, %vm2983
        %v2985 = vsel %vm2984, %v2977, %v2981
        %v2986 = vand.u32 2147483647, %v2836
        %vm2987 = vcmp.eq.f32.partialorder %v2986, 8.507059e+37
        %v2988 = vand.u32 %v2836, 2147483648
        %v2989 = vor.u32 1.1754944e-38, %v2988
        %v2990 = vsel %vm2987, %v2989, %v2985
        %v2991 = vmul.f32 1.0, %v2990
        %v2992 = vrcp.pop %v2838
        %v2993 = vmul.f32 %v2838, %v2992
        %v2994 = vsub.f32 1.0, %v2993
        %v2995 = vmul.f32 %v2992, %v2994
        %v2996 = vadd.f32 %v2992, %v2995
        %vm2997 = vweird.f32 %v2838
        %vm2998 = vweird.f32 %v2992
        %vm2999 = vmor %vm2997, %vm2998
        %v3000 = vsel %vm2999, %v2992, %v2996
        %v3001 = vand.u32 2147483647, %v2838
        %vm3002 = vcmp.eq.f32.partialorder %v3001, 8.507059e+37
        %v3003 = vand.u32 %v2838, 2147483648
        %v3004 = vor.u32 1.1754944e-38, %v3003
        %v3005 = vsel %vm3002, %v3004, %v3000
        %v3006 = vmul.f32 1.0, %v3005
        %v3007 = vrcp.pop %v2840
        %v3008 = vmul.f32 %v2840, %v3007
        %v3009 = vsub.f32 1.0, %v3008
        %v3010 = vmul.f32 %v3007, %v3009
        %v3011 = vadd.f32 %v3007, %v3010
        %vm3012 = vweird.f32 %v2840
        %vm3013 = vweird.f32 %v3007
        %vm3014 = vmor %vm3012, %vm3013
        %v3015 = vsel %vm3014, %v3007, %v3011
        %v3016 = vand.u32 2147483647, %v2840
        %vm3017 = vcmp.eq.f32.partialorder %v3016, 8.507059e+37
        %v3018 = vand.u32 %v2840, 2147483648
        %v3019 = vor.u32 1.1754944e-38, %v3018
        %v3020 = vsel %vm3017, %v3019, %v3015
        %v3021 = vmul.f32 1.0, %v3020
        %v3022 = vrcp.pop %v2842
        %v3023 = vmul.f32 %v2842, %v3022
        %v3024 = vsub.f32 1.0, %v3023
        %v3025 = vmul.f32 %v3022, %v3024
        %v3026 = vadd.f32 %v3022, %v3025
        %vm3027 = vweird.f32 %v2842
        %vm3028 = vweird.f32 %v3022
        %vm3029 = vmor %vm3027, %vm3028
        %v3030 = vsel %vm3029, %v3022, %v3026
        %v3031 = vand.u32 2147483647, %v2842
        %vm3032 = vcmp.eq.f32.partialorder %v3031, 8.507059e+37
        %v3033 = vand.u32 %v2842, 2147483648
        %v3034 = vor.u32 1.1754944e-38, %v3033
        %v3035 = vsel %vm3032, %v3034, %v3030
        %v3036 = vmul.f32 1.0, %v3035
        %v3037 = vrcp.pop %v2844
        %v3038 = vmul.f32 %v2844, %v3037
        %v3039 = vsub.f32 1.0, %v3038
        %v3040 = vmul.f32 %v3037, %v3039
        %v3041 = vadd.f32 %v3037, %v3040
        %vm3042 = vweird.f32 %v2844
        %vm3043 = vweird.f32 %v3037
        %vm3044 = vmor %vm3042, %vm3043
        %v3045 = vsel %vm3044, %v3037, %v3041
        %v3046 = vand.u32 2147483647, %v2844
        %vm3047 = vcmp.eq.f32.partialorder %v3046, 8.507059e+37
        %v3048 = vand.u32 %v2844, 2147483648
        %v3049 = vor.u32 1.1754944e-38, %v3048
        %v3050 = vsel %vm3047, %v3049, %v3045
        %v3051 = vmul.f32 1.0, %v3050
        %v3052 = vrcp.pop %v2846
        %v3053 = vmul.f32 %v2846, %v3052
        %v3054 = vsub.f32 1.0, %v3053
        %v3055 = vmul.f32 %v3052, %v3054
        %v3056 = vadd.f32 %v3052, %v3055
        %vm3057 = vweird.f32 %v2846
        %vm3058 = vweird.f32 %v3052
        %vm3059 = vmor %vm3057, %vm3058
        %v3060 = vsel %vm3059, %v3052, %v3056
        %v3061 = vand.u32 2147483647, %v2846
        %vm3062 = vcmp.eq.f32.partialorder %v3061, 8.507059e+37
        %v3063 = vand.u32 %v2846, 2147483648
        %v3064 = vor.u32 1.1754944e-38, %v3063
        %v3065 = vsel %vm3062, %v3064, %v3060
        %v3066 = vmul.f32 1.0, %v3065
        %v3067 = vrcp.pop %v2848
        %v3068 = vmul.f32 %v2848, %v3067
        %v3069 = vsub.f32 1.0, %v3068
        %v3070 = vmul.f32 %v3067, %v3069
        %v3071 = vadd.f32 %v3067, %v3070
        %vm3072 = vweird.f32 %v2848
        %vm3073 = vweird.f32 %v3067
        %vm3074 = vmor %vm3072, %vm3073
        %v3075 = vsel %vm3074, %v3067, %v3071
        %v3076 = vand.u32 2147483647, %v2848
        %vm3077 = vcmp.eq.f32.partialorder %v3076, 8.507059e+37
        %v3078 = vand.u32 %v2848, 2147483648
        %v3079 = vor.u32 1.1754944e-38, %v3078
        %v3080 = vsel %vm3077, %v3079, %v3075
        %v3081 = vmul.f32 1.0, %v3080
        %v3082 = vrcp.pop %v2850
        %v3083 = vmul.f32 %v2850, %v3082
        %v3084 = vsub.f32 1.0, %v3083
        %v3085 = vmul.f32 %v3082, %v3084
        %v3086 = vadd.f32 %v3082, %v3085
        %vm3087 = vweird.f32 %v2850
        %vm3088 = vweird.f32 %v3082
        %vm3089 = vmor %vm3087, %vm3088
        %v3090 = vsel %vm3089, %v3082, %v3086
        %v3091 = vand.u32 2147483647, %v2850
        %vm3092 = vcmp.eq.f32.partialorder %v3091, 8.507059e+37
        %v3093 = vand.u32 %v2850, 2147483648
        %v3094 = vor.u32 1.1754944e-38, %v3093
        %v3095 = vsel %vm3092, %v3094, %v3090
        %v3096 = vmul.f32 1.0, %v3095
        %v3097 = vrcp.pop %v2852
        %v3098 = vmul.f32 %v2852, %v3097
        %v3099 = vsub.f32 1.0, %v3098
        %v3100 = vmul.f32 %v3097, %v3099
        %v3101 = vadd.f32 %v3097, %v3100
        %vm3102 = vweird.f32 %v2852
        %vm3103 = vweird.f32 %v3097
        %vm3104 = vmor %vm3102, %vm3103
        %v3105 = vsel %vm3104, %v3097, %v3101
        %v3106 = vand.u32 2147483647, %v2852
        %vm3107 = vcmp.eq.f32.partialorder %v3106, 8.507059e+37
        %v3108 = vand.u32 %v2852, 2147483648
        %v3109 = vor.u32 1.1754944e-38, %v3108
        %v3110 = vsel %vm3107, %v3109, %v3105
        %v3111 = vmul.f32 1.0, %v3110
        %v3112 = vrcp.pop %v2854
        %v3113 = vmul.f32 %v2854, %v3112
        %v3114 = vsub.f32 1.0, %v3113
        %v3115 = vmul.f32 %v3112, %v3114
        %v3116 = vadd.f32 %v3112, %v3115
        %vm3117 = vweird.f32 %v2854
        %vm3118 = vweird.f32 %v3112
        %vm3119 = vmor %vm3117, %vm3118
        %v3120 = vsel %vm3119, %v3112, %v3116
        %v3121 = vand.u32 2147483647, %v2854
        %vm3122 = vcmp.eq.f32.partialorder %v3121, 8.507059e+37
        %v3123 = vand.u32 %v2854, 2147483648
        %v3124 = vor.u32 1.1754944e-38, %v3123
        %v3125 = vsel %vm3122, %v3124, %v3120
        %v3126 = vmul.f32 1.0, %v3125
        %v3127 = vrcp.pop %v2856
        %v3128 = vmul.f32 %v2856, %v3127
        %v3129 = vsub.f32 1.0, %v3128
        %v3130 = vmul.f32 %v3127, %v3129
        %v3131 = vadd.f32 %v3127, %v3130
        %vm3132 = vweird.f32 %v2856
        %vm3133 = vweird.f32 %v3127
        %vm3134 = vmor %vm3132, %vm3133
        %v3135 = vsel %vm3134, %v3127, %v3131
        %v3136 = vand.u32 2147483647, %v2856
        %vm3137 = vcmp.eq.f32.partialorder %v3136, 8.507059e+37
        %v3138 = vand.u32 %v2856, 2147483648
        %v3139 = vor.u32 1.1754944e-38, %v3138
        %v3140 = vsel %vm3137, %v3139, %v3135
        %v3141 = vmul.f32 1.0, %v3140
        %v3142 = vrcp.pop %v2858
        %v3143 = vmul.f32 %v2858, %v3142
        %v3144 = vsub.f32 1.0, %v3143
        %v3145 = vmul.f32 %v3142, %v3144
        %v3146 = vadd.f32 %v3142, %v3145
        %vm3147 = vweird.f32 %v2858
        %vm3148 = vweird.f32 %v3142
        %vm3149 = vmor %vm3147, %vm3148
        %v3150 = vsel %vm3149, %v3142, %v3146
        %v3151 = vand.u32 2147483647, %v2858
        %vm3152 = vcmp.eq.f32.partialorder %v3151, 8.507059e+37
        %v3153 = vand.u32 %v2858, 2147483648
        %v3154 = vor.u32 1.1754944e-38, %v3153
        %v3155 = vsel %vm3152, %v3154, %v3150
        %v3156 = vmul.f32 1.0, %v3155
        %v3157 = vrcp.pop %v2860
        %v3158 = vmul.f32 %v2860, %v3157
        %v3159 = vsub.f32 1.0, %v3158
        %v3160 = vmul.f32 %v3157, %v3159
        %v3161 = vadd.f32 %v3157, %v3160
        %vm3162 = vweird.f32 %v2860
        %vm3163 = vweird.f32 %v3157
        %vm3164 = vmor %vm3162, %vm3163
        %v3165 = vsel %vm3164, %v3157, %v3161
        %v3166 = vand.u32 2147483647, %v2860
        %vm3167 = vcmp.eq.f32.partialorder %v3166, 8.507059e+37
        %v3168 = vand.u32 %v2860, 2147483648
        %v3169 = vor.u32 1.1754944e-38, %v3168
        %v3170 = vsel %vm3167, %v3169, %v3165
        %v3171 = vmul.f32 1.0, %v3170
        %v3172 = vrcp.pop %v2862
        %v3173 = vmul.f32 %v2862, %v3172
        %v3174 = vsub.f32 1.0, %v3173
        %v3175 = vmul.f32 %v3172, %v3174
        %v3176 = vadd.f32 %v3172, %v3175
        %vm3177 = vweird.f32 %v2862
        %vm3178 = vweird.f32 %v3172
        %vm3179 = vmor %vm3177, %vm3178
        %v3180 = vsel %vm3179, %v3172, %v3176
        %v3181 = vand.u32 2147483647, %v2862
        %vm3182 = vcmp.eq.f32.partialorder %v3181, 8.507059e+37
        %v3183 = vand.u32 %v2862, 2147483648
        %v3184 = vor.u32 1.1754944e-38, %v3183
        %v3185 = vsel %vm3182, %v3184, %v3180
        %v3186 = vmul.f32 1.0, %v3185
        %v3187 = vrcp.pop %v2864
        %v3188 = vmul.f32 %v2864, %v3187
        %v3189 = vsub.f32 1.0, %v3188
        %v3190 = vmul.f32 %v3187, %v3189
        %v3191 = vadd.f32 %v3187, %v3190
        %vm3192 = vweird.f32 %v2864
        %vm3193 = vweird.f32 %v3187
        %vm3194 = vmor %vm3192, %vm3193
        %v3195 = vsel %vm3194, %v3187, %v3191
        %v3196 = vand.u32 2147483647, %v2864
        %vm3197 = vcmp.eq.f32.partialorder %v3196, 8.507059e+37
        %v3198 = vand.u32 %v2864, 2147483648
        %v3199 = vor.u32 1.1754944e-38, %v3198
        %v3200 = vsel %vm3197, %v3199, %v3195
        %v3201 = vmul.f32 1.0, %v3200
        %v3202 = vrcp.pop %v2866
        %v3203 = vmul.f32 %v2866, %v3202
        %v3204 = vsub.f32 1.0, %v3203
        %v3205 = vmul.f32 %v3202, %v3204
        %v3206 = vadd.f32 %v3202, %v3205
        %vm3207 = vweird.f32 %v2866
        %vm3208 = vweird.f32 %v3202
        %vm3209 = vmor %vm3207, %vm3208
        %v3210 = vsel %vm3209, %v3202, %v3206
        %v3211 = vand.u32 2147483647, %v2866
        %vm3212 = vcmp.eq.f32.partialorder %v3211, 8.507059e+37
        %v3213 = vand.u32 %v2866, 2147483648
        %v3214 = vor.u32 1.1754944e-38, %v3213
        %v3215 = vsel %vm3212, %v3214, %v3210
        %v3216 = vmul.f32 1.0, %v3215
        %v3217 = vrcp.pop %v2868
        %v3218 = vmul.f32 %v2868, %v3217
        %v3219 = vsub.f32 1.0, %v3218
        %v3220 = vmul.f32 %v3217, %v3219
        %v3221 = vadd.f32 %v3217, %v3220
        %vm3222 = vweird.f32 %v2868
        %vm3223 = vweird.f32 %v3217
        %vm3224 = vmor %vm3222, %vm3223
        %v3225 = vsel %vm3224, %v3217, %v3221
        %v3226 = vand.u32 2147483647, %v2868
        %vm3227 = vcmp.eq.f32.partialorder %v3226, 8.507059e+37
        %v3228 = vand.u32 %v2868, 2147483648
        %v3229 = vor.u32 1.1754944e-38, %v3228
        %v3230 = vsel %vm3227, %v3229, %v3225
        %v3231 = vmul.f32 1.0, %v3230
        %v3232 = vrcp.pop %v2870
        %v3233 = vmul.f32 %v2870, %v3232
        %v3234 = vsub.f32 1.0, %v3233
        %v3235 = vmul.f32 %v3232, %v3234
        %v3236 = vadd.f32 %v3232, %v3235
        %vm3237 = vweird.f32 %v2870
        %vm3238 = vweird.f32 %v3232
        %vm3239 = vmor %vm3237, %vm3238
        %v3240 = vsel %vm3239, %v3232, %v3236
        %v3241 = vand.u32 2147483647, %v2870
        %vm3242 = vcmp.eq.f32.partialorder %v3241, 8.507059e+37
        %v3243 = vand.u32 %v2870, 2147483648
        %v3244 = vor.u32 1.1754944e-38, %v3243
        %v3245 = vsel %vm3242, %v3244, %v3240
        %v3246 = vmul.f32 1.0, %v3245
        %v3247 = vrcp.pop %v2872
        %v3248 = vmul.f32 %v2872, %v3247
        %v3249 = vsub.f32 1.0, %v3248
        %v3250 = vmul.f32 %v3247, %v3249
        %v3251 = vadd.f32 %v3247, %v3250
        %vm3252 = vweird.f32 %v2872
        %vm3253 = vweird.f32 %v3247
        %vm3254 = vmor %vm3252, %vm3253
        %v3255 = vsel %vm3254, %v3247, %v3251
        %v3256 = vand.u32 2147483647, %v2872
        %vm3257 = vcmp.eq.f32.partialorder %v3256, 8.507059e+37
        %v3258 = vand.u32 %v2872, 2147483648
        %v3259 = vor.u32 1.1754944e-38, %v3258
        %v3260 = vsel %vm3257, %v3259, %v3255
        %v3261 = vmul.f32 1.0, %v3260
        %v3262 = vrcp.pop %v2874
        %v3263 = vmul.f32 %v2874, %v3262
        %v3264 = vsub.f32 1.0, %v3263
        %v3265 = vmul.f32 %v3262, %v3264
        %v3266 = vadd.f32 %v3262, %v3265
        %vm3267 = vweird.f32 %v2874
        %vm3268 = vweird.f32 %v3262
        %vm3269 = vmor %vm3267, %vm3268
        %v3270 = vsel %vm3269, %v3262, %v3266
        %v3271 = vand.u32 2147483647, %v2874
        %vm3272 = vcmp.eq.f32.partialorder %v3271, 8.507059e+37
        %v3273 = vand.u32 %v2874, 2147483648
        %v3274 = vor.u32 1.1754944e-38, %v3273
        %v3275 = vsel %vm3272, %v3274, %v3270
        %v3276 = vmul.f32 1.0, %v3275
        %v3277 = vrcp.pop %v2876
        %v3278 = vmul.f32 %v2876, %v3277
        %v3279 = vsub.f32 1.0, %v3278
        %v3280 = vmul.f32 %v3277, %v3279
        %v3281 = vadd.f32 %v3277, %v3280
        %vm3282 = vweird.f32 %v2876
        %vm3283 = vweird.f32 %v3277
        %vm3284 = vmor %vm3282, %vm3283
        %v3285 = vsel %vm3284, %v3277, %v3281
        %v3286 = vand.u32 2147483647, %v2876
        %vm3287 = vcmp.eq.f32.partialorder %v3286, 8.507059e+37
        %v3288 = vand.u32 %v2876, 2147483648
        %v3289 = vor.u32 1.1754944e-38, %v3288
        %v3290 = vsel %vm3287, %v3289, %v3285
        %v3291 = vmul.f32 1.0, %v3290
        %v3292 = vrcp.pop %v2878
        %v3293 = vmul.f32 %v2878, %v3292
        %v3294 = vsub.f32 1.0, %v3293
        %v3295 = vmul.f32 %v3292, %v3294
        %v3296 = vadd.f32 %v3292, %v3295
        %vm3297 = vweird.f32 %v2878
        %vm3298 = vweird.f32 %v3292
        %vm3299 = vmor %vm3297, %vm3298
        %v3300 = vsel %vm3299, %v3292, %v3296
        %v3301 = vand.u32 2147483647, %v2878
        %vm3302 = vcmp.eq.f32.partialorder %v3301, 8.507059e+37
        %v3303 = vand.u32 %v2878, 2147483648
        %v3304 = vor.u32 1.1754944e-38, %v3303
        %v3305 = vsel %vm3302, %v3304, %v3300
        %v3306 = vmul.f32 1.0, %v3305
        %v3307 = vrcp.pop %v2880
        %v3308 = vmul.f32 %v2880, %v3307
        %v3309 = vsub.f32 1.0, %v3308
        %v3310 = vmul.f32 %v3307, %v3309
        %v3311 = vadd.f32 %v3307, %v3310
        %vm3312 = vweird.f32 %v2880
        %vm3313 = vweird.f32 %v3307
        %vm3314 = vmor %vm3312, %vm3313
        %v3315 = vsel %vm3314, %v3307, %v3311
        %v3316 = vand.u32 2147483647, %v2880
        %vm3317 = vcmp.eq.f32.partialorder %v3316, 8.507059e+37
        %v3318 = vand.u32 %v2880, 2147483648
        %v3319 = vor.u32 1.1754944e-38, %v3318
        %v3320 = vsel %vm3317, %v3319, %v3315
        %v3321 = vmul.f32 1.0, %v3320
        %v3322 = vrcp.pop %v2882
        %v3323 = vmul.f32 %v2882, %v3322
        %v3324 = vsub.f32 1.0, %v3323
        %v3325 = vmul.f32 %v3322, %v3324
        %v3326 = vadd.f32 %v3322, %v3325
        %vm3327 = vweird.f32 %v2882
        %vm3328 = vweird.f32 %v3322
        %vm3329 = vmor %vm3327, %vm3328
        %v3330 = vsel %vm3329, %v3322, %v3326
        %v3331 = vand.u32 2147483647, %v2882
        %vm3332 = vcmp.eq.f32.partialorder %v3331, 8.507059e+37
        %v3333 = vand.u32 %v2882, 2147483648
        %v3334 = vor.u32 1.1754944e-38, %v3333
        %v3335 = vsel %vm3332, %v3334, %v3330
        %v3336 = vmul.f32 1.0, %v3335
        %v3337 = vrcp.pop %v2884
        %v3338 = vmul.f32 %v2884, %v3337
        %v3339 = vsub.f32 1.0, %v3338
        %v3340 = vmul.f32 %v3337, %v3339
        %v3341 = vadd.f32 %v3337, %v3340
        %vm3342 = vweird.f32 %v2884
        %vm3343 = vweird.f32 %v3337
        %vm3344 = vmor %vm3342, %vm3343
        %v3345 = vsel %vm3344, %v3337, %v3341
        %v3346 = vand.u32 2147483647, %v2884
        %vm3347 = vcmp.eq.f32.partialorder %v3346, 8.507059e+37
        %v3348 = vand.u32 %v2884, 2147483648
        %v3349 = vor.u32 1.1754944e-38, %v3348
        %v3350 = vsel %vm3347, %v3349, %v3345
        %v3351 = vmul.f32 1.0, %v3350
        %v3352 = vrcp.pop %v2886
        %v3353 = vmul.f32 %v2886, %v3352
        %v3354 = vsub.f32 1.0, %v3353
        %v3355 = vmul.f32 %v3352, %v3354
        %v3356 = vadd.f32 %v3352, %v3355
        %vm3357 = vweird.f32 %v2886
        %vm3358 = vweird.f32 %v3352
        %vm3359 = vmor %vm3357, %vm3358
        %v3360 = vsel %vm3359, %v3352, %v3356
        %v3361 = vand.u32 2147483647, %v2886
        %vm3362 = vcmp.eq.f32.partialorder %v3361, 8.507059e+37
        %v3363 = vand.u32 %v2886, 2147483648
        %v3364 = vor.u32 1.1754944e-38, %v3363
        %v3365 = vsel %vm3362, %v3364, %v3360
        %v3366 = vmul.f32 1.0, %v3365
        %v3367 = vmul.f32 %v2760, %v2901
        %v3368 = vmul.f32 %v2762, %v2916
        %v3369 = vmul.f32 %v2764, %v2931
        %v3370 = vmul.f32 %v2766, %v2946
        %v3371 = vmul.f32 %v2768, %v2961
        %v3372 = vmul.f32 %v2770, %v2976
        %v3373 = vmul.f32 %v2772, %v2991
        %v3374 = vmul.f32 %v2774, %v3006
        %v3375 = vmul.f32 %v2776, %v3021
        %v3376 = vmul.f32 %v2778, %v3036
        %v3377 = vmul.f32 %v2780, %v3051
        %v3378 = vmul.f32 %v2782, %v3066
        %v3379 = vmul.f32 %v2784, %v3081
        %v3380 = vmul.f32 %v2786, %v3096
        %v3381 = vmul.f32 %v2788, %v3111
        %v3382 = vmul.f32 %v2790, %v3126
        %v3383 = vmul.f32 %v2792, %v3141
        %v3384 = vmul.f32 %v2794, %v3156
        %v3385 = vmul.f32 %v2796, %v3171
        %v3386 = vmul.f32 %v2798, %v3186
        %v3387 = vmul.f32 %v2800, %v3201
        %v3388 = vmul.f32 %v2802, %v3216
        %v3389 = vmul.f32 %v2804, %v3231
        %v3390 = vmul.f32 %v2806, %v3246
        %v3391 = vmul.f32 %v2808, %v3261
        %v3392 = vmul.f32 %v2810, %v3276
        %v3393 = vmul.f32 %v2812, %v3291
        %v3394 = vmul.f32 %v2814, %v3306
        %v3395 = vmul.f32 %v2816, %v3321
        %v3396 = vmul.f32 %v2818, %v3336
        %v3397 = vmul.f32 %v2820, %v3351
        %v3398 = vmul.f32 %v2822, %v3366
        %v3399 = vpack.c.bf16 %v3367, %v3367
        %v3400 = vpack.c.bf16 %v3368, %v3368
        %v3401 = vpack.c.bf16 %v3369, %v3369
        %v3402 = vpack.c.bf16 %v3370, %v3370
        %v3403 = vpack.c.bf16 %v3371, %v3371
        %v3404 = vpack.c.bf16 %v3372, %v3372
        %v3405 = vpack.c.bf16 %v3373, %v3373
        %v3406 = vpack.c.bf16 %v3374, %v3374
        %v3407 = vpack.c.bf16 %v3375, %v3375
        %v3408 = vpack.c.bf16 %v3376, %v3376
        %v3409 = vpack.c.bf16 %v3377, %v3377
        %v3410 = vpack.c.bf16 %v3378, %v3378
        %v3411 = vpack.c.bf16 %v3379, %v3379
        %v3412 = vpack.c.bf16 %v3380, %v3380
        %v3413 = vpack.c.bf16 %v3381, %v3381
        %v3414 = vpack.c.bf16 %v3382, %v3382
        %v3415 = vpack.c.bf16 %v3383, %v3383
        %v3416 = vpack.c.bf16 %v3384, %v3384
        %v3417 = vpack.c.bf16 %v3385, %v3385
        %v3418 = vpack.c.bf16 %v3386, %v3386
        %v3419 = vpack.c.bf16 %v3387, %v3387
        %v3420 = vpack.c.bf16 %v3388, %v3388
        %v3421 = vpack.c.bf16 %v3389, %v3389
        %v3422 = vpack.c.bf16 %v3390, %v3390
        %v3423 = vpack.c.bf16 %v3391, %v3391
        %v3424 = vpack.c.bf16 %v3392, %v3392
        %v3425 = vpack.c.bf16 %v3393, %v3393
        %v3426 = vpack.c.bf16 %v3394, %v3394
        %v3427 = vpack.c.bf16 %v3395, %v3395
        %v3428 = vpack.c.bf16 %v3396, %v3396
        %v3429 = vpack.c.bf16 %v3397, %v3397
        %v3430 = vpack.c.bf16 %v3398, %v3398
        %v3447 = vunpack.c.l.b16 %v3399
        %v3448 = vunpack.c.l.b16 %v3400
        %v3449 = vunpack.c.l.b16 %v3401
        %v3450 = vunpack.c.l.b16 %v3402
        %v3451 = vunpack.c.l.b16 %v3403
        %v3452 = vunpack.c.l.b16 %v3404
        %v3453 = vunpack.c.l.b16 %v3405
        %v3454 = vunpack.c.l.b16 %v3406
        %v3455 = vunpack.c.l.b16 %v3407
        %v3456 = vunpack.c.l.b16 %v3408
        %v3457 = vunpack.c.l.b16 %v3409
        %v3458 = vunpack.c.l.b16 %v3410
        %v3459 = vunpack.c.l.b16 %v3411
        %v3460 = vunpack.c.l.b16 %v3412
        %v3461 = vunpack.c.l.b16 %v3413
        %v3462 = vunpack.c.l.b16 %v3414
        %v3463 = vpack.c.b16 %v3448, %v3447
        %v3464 = vpack.c.b16 %v3450, %v3449
        %v3465 = vpack.c.b16 %v3452, %v3451
        %v3466 = vpack.c.b16 %v3454, %v3453
        %v3467 = vpack.c.b16 %v3456, %v3455
        %v3468 = vpack.c.b16 %v3458, %v3457
        %v3469 = vpack.c.b16 %v3460, %v3459
        %v3470 = vpack.c.b16 %v3462, %v3461
        %v3495 = vunpack.c.l.b16 %v2244
        %v3496 = vunpack.c.l.b16 %v2245
        %v3497 = vunpack.c.l.b16 %v2246
        %v3498 = vunpack.c.l.b16 %v2247
        %v3499 = vunpack.c.l.b16 %v2248
        %v3500 = vunpack.c.l.b16 %v2249
        %v3501 = vunpack.c.l.b16 %v2250
        %v3502 = vunpack.c.l.b16 %v2251
        %v3503 = vunpack.c.l.b16 %v2252
        %v3504 = vunpack.c.l.b16 %v2253
        %v3505 = vunpack.c.l.b16 %v2254
        %v3506 = vunpack.c.l.b16 %v2255
        %v3507 = vunpack.c.l.b16 %v2256
        %v3508 = vunpack.c.l.b16 %v2257
        %v3509 = vunpack.c.l.b16 %v2258
        %v3510 = vunpack.c.l.b16 %v2259
        %v3511 = vpack.c.b16 %v3496, %v3495
        %v3512 = vpack.c.b16 %v3498, %v3497
        %v3513 = vpack.c.b16 %v3500, %v3499
        %v3514 = vpack.c.b16 %v3502, %v3501
        %v3515 = vpack.c.b16 %v3504, %v3503
        %v3516 = vpack.c.b16 %v3506, %v3505
        %v3517 = vpack.c.b16 %v3508, %v3507
        %v3518 = vpack.c.b16 %v3510, %v3509
        %3527 = vmatpush.bf16.msra.mxu0 %v3518
        %3528 = vmatpush.bf16.msra.mxu0 %v3517
        %3529 = vmatpush.bf16.msra.mxu0 %v3516
        %3530 = vmatpush.bf16.msra.mxu0 %v3515
        %3531 = vmatpush.bf16.msra.mxu0 %v3514
        %3532 = vmatpush.bf16.msra.mxu0 %v3513
        %3533 = vmatpush.bf16.msra.mxu0 %v3512
        %3534 = vmatpush.bf16.msra.mxu0 %v3511
        %3535 = vmatmul.bf16.gmra.mxu0 %v3463
        %v3536 = vpop.f32.mrf.mxu0
        %v3537 = vadd.f32 0.0, %v3536
        %v3538 = vpop.f32.mrf.mxu0
        %v3539 = vadd.f32 0.0, %v3538
        %3540 = vmatmul.bf16.gmra.mxu0 %v3464
        %v3541 = vpop.f32.mrf.mxu0
        %v3542 = vadd.f32 0.0, %v3541
        %v3543 = vpop.f32.mrf.mxu0
        %v3544 = vadd.f32 0.0, %v3543
        %3545 = vmatmul.bf16.gmra.mxu0 %v3465
        %v3546 = vpop.f32.mrf.mxu0
        %v3547 = vadd.f32 0.0, %v3546
        %v3548 = vpop.f32.mrf.mxu0
        %v3549 = vadd.f32 0.0, %v3548
        %3550 = vmatmul.bf16.gmra.mxu0 %v3466
        %v3551 = vpop.f32.mrf.mxu0
        %v3552 = vadd.f32 0.0, %v3551
        %v3553 = vpop.f32.mrf.mxu0
        %v3554 = vadd.f32 0.0, %v3553
        %3555 = vmatmul.bf16.gmra.mxu0 %v3467
        %v3556 = vpop.f32.mrf.mxu0
        %v3557 = vadd.f32 0.0, %v3556
        %v3558 = vpop.f32.mrf.mxu0
        %v3559 = vadd.f32 0.0, %v3558
        %3560 = vmatmul.bf16.gmra.mxu0 %v3468
        %v3561 = vpop.f32.mrf.mxu0
        %v3562 = vadd.f32 0.0, %v3561
        %v3563 = vpop.f32.mrf.mxu0
        %v3564 = vadd.f32 0.0, %v3563
        %3565 = vmatmul.bf16.gmra.mxu0 %v3469
        %v3566 = vpop.f32.mrf.mxu0
        %v3567 = vadd.f32 0.0, %v3566
        %v3568 = vpop.f32.mrf.mxu0
        %v3569 = vadd.f32 0.0, %v3568
        %3570 = vmatmul.bf16.gmra.mxu0 %v3470
        %v3571 = vpop.f32.mrf.mxu0
        %v3572 = vadd.f32 0.0, %v3571
        %v3573 = vpop.f32.mrf.mxu0
        %v3574 = vadd.f32 0.0, %v3573
        %3575 = vdwg.mxu0
        %v3592 = vunpack.c.l.b16 %v3415
        %v3593 = vunpack.c.l.b16 %v3416
        %v3594 = vunpack.c.l.b16 %v3417
        %v3595 = vunpack.c.l.b16 %v3418
        %v3596 = vunpack.c.l.b16 %v3419
        %v3597 = vunpack.c.l.b16 %v3420
        %v3598 = vunpack.c.l.b16 %v3421
        %v3599 = vunpack.c.l.b16 %v3422
        %v3600 = vunpack.c.l.b16 %v3423
        %v3601 = vunpack.c.l.b16 %v3424
        %v3602 = vunpack.c.l.b16 %v3425
        %v3603 = vunpack.c.l.b16 %v3426
        %v3604 = vunpack.c.l.b16 %v3427
        %v3605 = vunpack.c.l.b16 %v3428
        %v3606 = vunpack.c.l.b16 %v3429
        %v3607 = vunpack.c.l.b16 %v3430
        %v3608 = vpack.c.b16 %v3593, %v3592
        %v3609 = vpack.c.b16 %v3595, %v3594
        %v3610 = vpack.c.b16 %v3597, %v3596
        %v3611 = vpack.c.b16 %v3599, %v3598
        %v3612 = vpack.c.b16 %v3601, %v3600
        %v3613 = vpack.c.b16 %v3603, %v3602
        %v3614 = vpack.c.b16 %v3605, %v3604
        %v3615 = vpack.c.b16 %v3607, %v3606
        %v3640 = vunpack.c.l.b16 %v2260
        %v3641 = vunpack.c.l.b16 %v2261
        %v3642 = vunpack.c.l.b16 %v2262
        %v3643 = vunpack.c.l.b16 %v2263
        %v3644 = vunpack.c.l.b16 %v2264
        %v3645 = vunpack.c.l.b16 %v2265
        %v3646 = vunpack.c.l.b16 %v2266
        %v3647 = vunpack.c.l.b16 %v2267
        %v3648 = vunpack.c.l.b16 %v2268
        %v3649 = vunpack.c.l.b16 %v2269
        %v3650 = vunpack.c.l.b16 %v2270
        %v3651 = vunpack.c.l.b16 %v2271
        %v3652 = vunpack.c.l.b16 %v2272
        %v3653 = vunpack.c.l.b16 %v2273
        %v3654 = vunpack.c.l.b16 %v2274
        %v3655 = vunpack.c.l.b16 %v2275
        %v3656 = vpack.c.b16 %v3641, %v3640
        %v3657 = vpack.c.b16 %v3643, %v3642
        %v3658 = vpack.c.b16 %v3645, %v3644
        %v3659 = vpack.c.b16 %v3647, %v3646
        %v3660 = vpack.c.b16 %v3649, %v3648
        %v3661 = vpack.c.b16 %v3651, %v3650
        %v3662 = vpack.c.b16 %v3653, %v3652
        %v3663 = vpack.c.b16 %v3655, %v3654
        %3672 = vmatpush.bf16.msra.mxu0 %v3663
        %3673 = vmatpush.bf16.msra.mxu0 %v3662
        %3674 = vmatpush.bf16.msra.mxu0 %v3661
        %3675 = vmatpush.bf16.msra.mxu0 %v3660
        %3676 = vmatpush.bf16.msra.mxu0 %v3659
        %3677 = vmatpush.bf16.msra.mxu0 %v3658
        %3678 = vmatpush.bf16.msra.mxu0 %v3657
        %3679 = vmatpush.bf16.msra.mxu0 %v3656
        %3680 = vmatmul.bf16.gmra.mxu0 %v3608
        %v3681 = vpop.f32.mrf.mxu0
        %v3682 = vadd.f32 0.0, %v3681
        %v3683 = vpop.f32.mrf.mxu0
        %v3684 = vadd.f32 0.0, %v3683
        %3685 = vmatmul.bf16.gmra.mxu0 %v3609
        %v3686 = vpop.f32.mrf.mxu0
        %v3687 = vadd.f32 0.0, %v3686
        %v3688 = vpop.f32.mrf.mxu0
        %v3689 = vadd.f32 0.0, %v3688
        %3690 = vmatmul.bf16.gmra.mxu0 %v3610
        %v3691 = vpop.f32.mrf.mxu0
        %v3692 = vadd.f32 0.0, %v3691
        %v3693 = vpop.f32.mrf.mxu0
        %v3694 = vadd.f32 0.0, %v3693
        %3695 = vmatmul.bf16.gmra.mxu0 %v3611
        %v3696 = vpop.f32.mrf.mxu0
        %v3697 = vadd.f32 0.0, %v3696
        %v3698 = vpop.f32.mrf.mxu0
        %v3699 = vadd.f32 0.0, %v3698
        %3700 = vmatmul.bf16.gmra.mxu0 %v3612
        %v3701 = vpop.f32.mrf.mxu0
        %v3702 = vadd.f32 0.0, %v3701
        %v3703 = vpop.f32.mrf.mxu0
        %v3704 = vadd.f32 0.0, %v3703
        %3705 = vmatmul.bf16.gmra.mxu0 %v3613
        %v3706 = vpop.f32.mrf.mxu0
        %v3707 = vadd.f32 0.0, %v3706
        %v3708 = vpop.f32.mrf.mxu0
        %v3709 = vadd.f32 0.0, %v3708
        %3710 = vmatmul.bf16.gmra.mxu0 %v3614
        %v3711 = vpop.f32.mrf.mxu0
        %v3712 = vadd.f32 0.0, %v3711
        %v3713 = vpop.f32.mrf.mxu0
        %v3714 = vadd.f32 0.0, %v3713
        %3715 = vmatmul.bf16.gmra.mxu0 %v3615
        %v3716 = vpop.f32.mrf.mxu0
        %v3717 = vadd.f32 0.0, %v3716
        %v3718 = vpop.f32.mrf.mxu0
        %v3719 = vadd.f32 0.0, %v3718
        %3720 = vdwg.mxu0
        %3721 = vrot.lane.b32.xlu0 %v2308, 96
        %v3722 = vpop.permute.xlu0 %3721
        %3723 = vrot.lane.b32.xlu0 %v2309, 96
        %v3724 = vpop.permute.xlu0 %3723
        %3725 = vrot.lane.b32.xlu0 %v2310, 96
        %v3726 = vpop.permute.xlu0 %3725
        %3727 = vrot.lane.b32.xlu0 %v2311, 96
        %v3728 = vpop.permute.xlu0 %3727
        %3729 = vrot.lane.b32.xlu0 %v2312, 96
        %v3730 = vpop.permute.xlu0 %3729
        %3731 = vrot.lane.b32.xlu0 %v2313, 96
        %v3732 = vpop.permute.xlu0 %3731
        %3733 = vrot.lane.b32.xlu0 %v2314, 96
        %v3734 = vpop.permute.xlu0 %3733
        %3735 = vrot.lane.b32.xlu0 %v2315, 96
        %v3736 = vpop.permute.xlu0 %3735
        %3737 = vrot.lane.b32.xlu0 %v2348, 96
        %v3738 = vpop.permute.xlu0 %3737
        %3739 = vrot.lane.b32.xlu0 %v2349, 96
        %v3740 = vpop.permute.xlu0 %3739
        %3741 = vrot.lane.b32.xlu0 %v2350, 96
        %v3742 = vpop.permute.xlu0 %3741
        %3743 = vrot.lane.b32.xlu0 %v2351, 96
        %v3744 = vpop.permute.xlu0 %3743
        %3745 = vrot.lane.b32.xlu0 %v2352, 96
        %v3746 = vpop.permute.xlu0 %3745
        %3747 = vrot.lane.b32.xlu0 %v2353, 96
        %v3748 = vpop.permute.xlu0 %3747
        %3749 = vrot.lane.b32.xlu0 %v2354, 96
        %v3750 = vpop.permute.xlu0 %3749
        %3751 = vrot.lane.b32.xlu0 %v2355, 96
        %v3752 = vpop.permute.xlu0 %3751
        %v3754 = vsel %vm2356, %v3722, 0
        %v3757 = vsel %vm2356, %v3724, 0
        %v3760 = vsel %vm2356, %v3726, 0
        %v3763 = vsel %vm2356, %v3728, 0
        %v3766 = vsel %vm2356, %v3730, 0
        %v3769 = vsel %vm2356, %v3732, 0
        %v3772 = vsel %vm2356, %v3734, 0
        %v3775 = vsel %vm2356, %v3736, 0
        %v3778 = vsel %vm2356, %v3738, 0
        %v3781 = vsel %vm2356, %v3740, 0
        %v3784 = vsel %vm2356, %v3742, 0
        %v3787 = vsel %vm2356, %v3744, 0
        %v3790 = vsel %vm2356, %v3746, 0
        %v3793 = vsel %vm2356, %v3748, 0
        %v3796 = vsel %vm2356, %v3750, 0
        %v3799 = vsel %vm2356, %v3752, 0
        %3801 = vmatpush.bf16.xpose.msra.mxu0 %v3799
        %3802 = vmatpush.bf16.xpose.msra.mxu0 %v3796
        %3803 = vmatpush.bf16.xpose.msra.mxu0 %v3793
        %3804 = vmatpush.bf16.xpose.msra.mxu0 %v3790
        %3805 = vmatpush.bf16.xpose.msra.mxu0 %v3787
        %3806 = vmatpush.bf16.xpose.msra.mxu0 %v3784
        %3807 = vmatpush.bf16.xpose.msra.mxu0 %v3781
        %3808 = vmatpush.bf16.xpose.msra.mxu0 %v3778
        %3809 = vmatmul.bf16.gmra.mxu0 %v3754
        %v3810 = vpop.f32.mrf.mxu0
        %v3811 = vadd.f32 0.0, %v3810
        %v3812 = vpop.f32.mrf.mxu0
        %v3813 = vadd.f32 0.0, %v3812
        %3814 = vmatmul.bf16.gmra.mxu0 %v3757
        %v3815 = vpop.f32.mrf.mxu0
        %v3816 = vadd.f32 0.0, %v3815
        %v3817 = vpop.f32.mrf.mxu0
        %v3818 = vadd.f32 0.0, %v3817
        %3819 = vmatmul.bf16.gmra.mxu0 %v3760
        %v3820 = vpop.f32.mrf.mxu0
        %v3821 = vadd.f32 0.0, %v3820
        %v3822 = vpop.f32.mrf.mxu0
        %v3823 = vadd.f32 0.0, %v3822
        %3824 = vmatmul.bf16.gmra.mxu0 %v3763
        %v3825 = vpop.f32.mrf.mxu0
        %v3826 = vadd.f32 0.0, %v3825
        %v3827 = vpop.f32.mrf.mxu0
        %v3828 = vadd.f32 0.0, %v3827
        %3829 = vmatmul.bf16.gmra.mxu0 %v3766
        %v3830 = vpop.f32.mrf.mxu0
        %v3831 = vadd.f32 0.0, %v3830
        %v3832 = vpop.f32.mrf.mxu0
        %v3833 = vadd.f32 0.0, %v3832
        %3834 = vmatmul.bf16.gmra.mxu0 %v3769
        %v3835 = vpop.f32.mrf.mxu0
        %v3836 = vadd.f32 0.0, %v3835
        %v3837 = vpop.f32.mrf.mxu0
        %v3838 = vadd.f32 0.0, %v3837
        %3839 = vmatmul.bf16.gmra.mxu0 %v3772
        %v3840 = vpop.f32.mrf.mxu0
        %v3841 = vadd.f32 0.0, %v3840
        %v3842 = vpop.f32.mrf.mxu0
        %v3843 = vadd.f32 0.0, %v3842
        %3844 = vmatmul.bf16.gmra.mxu0 %v3775
        %v3845 = vpop.f32.mrf.mxu0
        %v3846 = vadd.f32 0.0, %v3845
        %v3847 = vpop.f32.mrf.mxu0
        %v3848 = vadd.f32 0.0, %v3847
        %3849 = vdwg.mxu0
        %3850 = vrot.lane.b32.xlu0 %v2486, 96
        %v3851 = vpop.permute.xlu0 %3850
        %3852 = vrot.lane.b32.xlu0 %v2487, 96
        %v3853 = vpop.permute.xlu0 %3852
        %3854 = vrot.lane.b32.xlu0 %v2488, 96
        %v3855 = vpop.permute.xlu0 %3854
        %3856 = vrot.lane.b32.xlu0 %v2489, 96
        %v3857 = vpop.permute.xlu0 %3856
        %3858 = vrot.lane.b32.xlu0 %v2490, 96
        %v3859 = vpop.permute.xlu0 %3858
        %3860 = vrot.lane.b32.xlu0 %v2491, 96
        %v3861 = vpop.permute.xlu0 %3860
        %3862 = vrot.lane.b32.xlu0 %v2492, 96
        %v3863 = vpop.permute.xlu0 %3862
        %3864 = vrot.lane.b32.xlu0 %v2493, 96
        %v3865 = vpop.permute.xlu0 %3864
        %3866 = vrot.lane.b32.xlu0 %v2526, 96
        %v3867 = vpop.permute.xlu0 %3866
        %3868 = vrot.lane.b32.xlu0 %v2527, 96
        %v3869 = vpop.permute.xlu0 %3868
        %3870 = vrot.lane.b32.xlu0 %v2528, 96
        %v3871 = vpop.permute.xlu0 %3870
        %3872 = vrot.lane.b32.xlu0 %v2529, 96
        %v3873 = vpop.permute.xlu0 %3872
        %3874 = vrot.lane.b32.xlu0 %v2530, 96
        %v3875 = vpop.permute.xlu0 %3874
        %3876 = vrot.lane.b32.xlu0 %v2531, 96
        %v3877 = vpop.permute.xlu0 %3876
        %3878 = vrot.lane.b32.xlu0 %v2532, 96
        %v3879 = vpop.permute.xlu0 %3878
        %3880 = vrot.lane.b32.xlu0 %v2533, 96
        %v3881 = vpop.permute.xlu0 %3880
        %v3883 = vsel %vm2356, %v3851, 0
        %v3886 = vsel %vm2356, %v3853, 0
        %v3889 = vsel %vm2356, %v3855, 0
        %v3892 = vsel %vm2356, %v3857, 0
        %v3895 = vsel %vm2356, %v3859, 0
        %v3898 = vsel %vm2356, %v3861, 0
        %v3901 = vsel %vm2356, %v3863, 0
        %v3904 = vsel %vm2356, %v3865, 0
        %v3907 = vsel %vm2356, %v3867, 0
        %v3910 = vsel %vm2356, %v3869, 0
        %v3913 = vsel %vm2356, %v3871, 0
        %v3916 = vsel %vm2356, %v3873, 0
        %v3919 = vsel %vm2356, %v3875, 0
        %v3922 = vsel %vm2356, %v3877, 0
        %v3925 = vsel %vm2356, %v3879, 0
        %v3928 = vsel %vm2356, %v3881, 0
        %3930 = vmatpush.bf16.xpose.msra.mxu0 %v3928
        %3931 = vmatpush.bf16.xpose.msra.mxu0 %v3925
        %3932 = vmatpush.bf16.xpose.msra.mxu0 %v3922
        %3933 = vmatpush.bf16.xpose.msra.mxu0 %v3919
        %3934 = vmatpush.bf16.xpose.msra.mxu0 %v3916
        %3935 = vmatpush.bf16.xpose.msra.mxu0 %v3913
        %3936 = vmatpush.bf16.xpose.msra.mxu0 %v3910
        %3937 = vmatpush.bf16.xpose.msra.mxu0 %v3907
        %3938 = vmatmul.bf16.gmra.mxu0 %v3883
        %v3939 = vpop.f32.mrf.mxu0
        %v3940 = vadd.f32 0.0, %v3939
        %v3941 = vpop.f32.mrf.mxu0
        %v3942 = vadd.f32 0.0, %v3941
        %3943 = vmatmul.bf16.gmra.mxu0 %v3886
        %v3944 = vpop.f32.mrf.mxu0
        %v3945 = vadd.f32 0.0, %v3944
        %v3946 = vpop.f32.mrf.mxu0
        %v3947 = vadd.f32 0.0, %v3946
        %3948 = vmatmul.bf16.gmra.mxu0 %v3889
        %v3949 = vpop.f32.mrf.mxu0
        %v3950 = vadd.f32 0.0, %v3949
        %v3951 = vpop.f32.mrf.mxu0
        %v3952 = vadd.f32 0.0, %v3951
        %3953 = vmatmul.bf16.gmra.mxu0 %v3892
        %v3954 = vpop.f32.mrf.mxu0
        %v3955 = vadd.f32 0.0, %v3954
        %v3956 = vpop.f32.mrf.mxu0
        %v3957 = vadd.f32 0.0, %v3956
        %3958 = vmatmul.bf16.gmra.mxu0 %v3895
        %v3959 = vpop.f32.mrf.mxu0
        %v3960 = vadd.f32 0.0, %v3959
        %v3961 = vpop.f32.mrf.mxu0
        %v3962 = vadd.f32 0.0, %v3961
        %3963 = vmatmul.bf16.gmra.mxu0 %v3898
        %v3964 = vpop.f32.mrf.mxu0
        %v3965 = vadd.f32 0.0, %v3964
        %v3966 = vpop.f32.mrf.mxu0
        %v3967 = vadd.f32 0.0, %v3966
        %3968 = vmatmul.bf16.gmra.mxu0 %v3901
        %v3969 = vpop.f32.mrf.mxu0
        %v3970 = vadd.f32 0.0, %v3969
        %v3971 = vpop.f32.mrf.mxu0
        %v3972 = vadd.f32 0.0, %v3971
        %3973 = vmatmul.bf16.gmra.mxu0 %v3904
        %v3974 = vpop.f32.mrf.mxu0
        %v3975 = vadd.f32 0.0, %v3974
        %v3976 = vpop.f32.mrf.mxu0
        %v3977 = vadd.f32 0.0, %v3976
        %3978 = vdwg.mxu0
        %v3979 = vmul.f32 %v3811, 0.17677669
        %v3980 = vmul.f32 %v3813, 0.17677669
        %v3981 = vmul.f32 %v3816, 0.17677669
        %v3982 = vmul.f32 %v3818, 0.17677669
        %v3983 = vmul.f32 %v3821, 0.17677669
        %v3984 = vmul.f32 %v3823, 0.17677669
        %v3985 = vmul.f32 %v3826, 0.17677669
        %v3986 = vmul.f32 %v3828, 0.17677669
        %v3987 = vmul.f32 %v3831, 0.17677669
        %v3988 = vmul.f32 %v3833, 0.17677669
        %v3989 = vmul.f32 %v3836, 0.17677669
        %v3990 = vmul.f32 %v3838, 0.17677669
        %v3991 = vmul.f32 %v3841, 0.17677669
        %v3992 = vmul.f32 %v3843, 0.17677669
        %v3993 = vmul.f32 %v3846, 0.17677669
        %v3994 = vmul.f32 %v3848, 0.17677669
        %v3995 = vmul.f32 %v3940, 0.17677669
        %v3996 = vmul.f32 %v3942, 0.17677669
        %v3997 = vmul.f32 %v3945, 0.17677669
        %v3998 = vmul.f32 %v3947, 0.17677669
        %v3999 = vmul.f32 %v3950, 0.17677669
        %v4000 = vmul.f32 %v3952, 0.17677669
        %v4001 = vmul.f32 %v3955, 0.17677669
        %v4002 = vmul.f32 %v3957, 0.17677669
        %v4003 = vmul.f32 %v3960, 0.17677669
        %v4004 = vmul.f32 %v3962, 0.17677669
        %v4005 = vmul.f32 %v3965, 0.17677669
        %v4006 = vmul.f32 %v3967, 0.17677669
        %v4007 = vmul.f32 %v3970, 0.17677669
        %v4008 = vmul.f32 %v3972, 0.17677669
        %v4009 = vmul.f32 %v3975, 0.17677669
        %v4010 = vmul.f32 %v3977, 0.17677669
        %4011 = vmax.xlane.f32.xlu0 %v3979
        %v4012 = vpop.xlane.xlu0 %4011
        %4013 = vmax.xlane.f32.xlu0 %v3980
        %v4014 = vpop.xlane.xlu0 %4013
        %4015 = vmax.xlane.f32.xlu0 %v3981
        %v4016 = vpop.xlane.xlu0 %4015
        %4017 = vmax.xlane.f32.xlu0 %v3982
        %v4018 = vpop.xlane.xlu0 %4017
        %4019 = vmax.xlane.f32.xlu0 %v3983
        %v4020 = vpop.xlane.xlu0 %4019
        %4021 = vmax.xlane.f32.xlu0 %v3984
        %v4022 = vpop.xlane.xlu0 %4021
        %4023 = vmax.xlane.f32.xlu0 %v3985
        %v4024 = vpop.xlane.xlu0 %4023
        %4025 = vmax.xlane.f32.xlu0 %v3986
        %v4026 = vpop.xlane.xlu0 %4025
        %4027 = vmax.xlane.f32.xlu0 %v3987
        %v4028 = vpop.xlane.xlu0 %4027
        %4029 = vmax.xlane.f32.xlu0 %v3988
        %v4030 = vpop.xlane.xlu0 %4029
        %4031 = vmax.xlane.f32.xlu0 %v3989
        %v4032 = vpop.xlane.xlu0 %4031
        %4033 = vmax.xlane.f32.xlu0 %v3990
        %v4034 = vpop.xlane.xlu0 %4033
        %4035 = vmax.xlane.f32.xlu0 %v3991
        %v4036 = vpop.xlane.xlu0 %4035
        %4037 = vmax.xlane.f32.xlu0 %v3992
        %v4038 = vpop.xlane.xlu0 %4037
        %4039 = vmax.xlane.f32.xlu0 %v3993
        %v4040 = vpop.xlane.xlu0 %4039
        %4041 = vmax.xlane.f32.xlu0 %v3994
        %v4042 = vpop.xlane.xlu0 %4041
        %4043 = vmax.xlane.f32.xlu0 %v3995
        %v4044 = vpop.xlane.xlu0 %4043
        %4045 = vmax.xlane.f32.xlu0 %v3996
        %v4046 = vpop.xlane.xlu0 %4045
        %4047 = vmax.xlane.f32.xlu0 %v3997
        %v4048 = vpop.xlane.xlu0 %4047
        %4049 = vmax.xlane.f32.xlu0 %v3998
        %v4050 = vpop.xlane.xlu0 %4049
        %4051 = vmax.xlane.f32.xlu0 %v3999
        %v4052 = vpop.xlane.xlu0 %4051
        %4053 = vmax.xlane.f32.xlu0 %v4000
        %v4054 = vpop.xlane.xlu0 %4053
        %4055 = vmax.xlane.f32.xlu0 %v4001
        %v4056 = vpop.xlane.xlu0 %4055
        %4057 = vmax.xlane.f32.xlu0 %v4002
        %v4058 = vpop.xlane.xlu0 %4057
        %4059 = vmax.xlane.f32.xlu0 %v4003
        %v4060 = vpop.xlane.xlu0 %4059
        %4061 = vmax.xlane.f32.xlu0 %v4004
        %v4062 = vpop.xlane.xlu0 %4061
        %4063 = vmax.xlane.f32.xlu0 %v4005
        %v4064 = vpop.xlane.xlu0 %4063
        %4065 = vmax.xlane.f32.xlu0 %v4006
        %v4066 = vpop.xlane.xlu0 %4065
        %4067 = vmax.xlane.f32.xlu0 %v4007
        %v4068 = vpop.xlane.xlu0 %4067
        %4069 = vmax.xlane.f32.xlu0 %v4008
        %v4070 = vpop.xlane.xlu0 %4069
        %4071 = vmax.xlane.f32.xlu0 %v4009
        %v4072 = vpop.xlane.xlu0 %4071
        %4073 = vmax.xlane.f32.xlu0 %v4010
        %v4074 = vpop.xlane.xlu0 %4073
        %v4075 = vsub.f32 %v3979, %v4012
        %v4076 = vsub.f32 %v3980, %v4014
        %v4077 = vsub.f32 %v3981, %v4016
        %v4078 = vsub.f32 %v3982, %v4018
        %v4079 = vsub.f32 %v3983, %v4020
        %v4080 = vsub.f32 %v3984, %v4022
        %v4081 = vsub.f32 %v3985, %v4024
        %v4082 = vsub.f32 %v3986, %v4026
        %v4083 = vsub.f32 %v3987, %v4028
        %v4084 = vsub.f32 %v3988, %v4030
        %v4085 = vsub.f32 %v3989, %v4032
        %v4086 = vsub.f32 %v3990, %v4034
        %v4087 = vsub.f32 %v3991, %v4036
        %v4088 = vsub.f32 %v3992, %v4038
        %v4089 = vsub.f32 %v3993, %v4040
        %v4090 = vsub.f32 %v3994, %v4042
        %v4091 = vsub.f32 %v3995, %v4044
        %v4092 = vsub.f32 %v3996, %v4046
        %v4093 = vsub.f32 %v3997, %v4048
        %v4094 = vsub.f32 %v3998, %v4050
        %v4095 = vsub.f32 %v3999, %v4052
        %v4096 = vsub.f32 %v4000, %v4054
        %v4097 = vsub.f32 %v4001, %v4056
        %v4098 = vsub.f32 %v4002, %v4058
        %v4099 = vsub.f32 %v4003, %v4060
        %v4100 = vsub.f32 %v4004, %v4062
        %v4101 = vsub.f32 %v4005, %v4064
        %v4102 = vsub.f32 %v4006, %v4066
        %v4103 = vsub.f32 %v4007, %v4068
        %v4104 = vsub.f32 %v4008, %v4070
        %v4105 = vsub.f32 %v4009, %v4072
        %v4106 = vsub.f32 %v4010, %v4074
        %v4107 = vmul.f32 %v4075, 1.442695
        %v4108 = vpow.pop %v4107
        %v4109 = vmul.f32 %v4076, 1.442695
        %v4110 = vpow.pop %v4109
        %v4111 = vmul.f32 %v4077, 1.442695
        %v4112 = vpow.pop %v4111
        %v4113 = vmul.f32 %v4078, 1.442695
        %v4114 = vpow.pop %v4113
        %v4115 = vmul.f32 %v4079, 1.442695
        %v4116 = vpow.pop %v4115
        %v4117 = vmul.f32 %v4080, 1.442695
        %v4118 = vpow.pop %v4117
        %v4119 = vmul.f32 %v4081, 1.442695
        %v4120 = vpow.pop %v4119
        %v4121 = vmul.f32 %v4082, 1.442695
        %v4122 = vpow.pop %v4121
        %v4123 = vmul.f32 %v4083, 1.442695
        %v4124 = vpow.pop %v4123
        %v4125 = vmul.f32 %v4084, 1.442695
        %v4126 = vpow.pop %v4125
        %v4127 = vmul.f32 %v4085, 1.442695
        %v4128 = vpow.pop %v4127
        %v4129 = vmul.f32 %v4086, 1.442695
        %v4130 = vpow.pop %v4129
        %v4131 = vmul.f32 %v4087, 1.442695
        %v4132 = vpow.pop %v4131
        %v4133 = vmul.f32 %v4088, 1.442695
        %v4134 = vpow.pop %v4133
        %v4135 = vmul.f32 %v4089, 1.442695
        %v4136 = vpow.pop %v4135
        %v4137 = vmul.f32 %v4090, 1.442695
        %v4138 = vpow.pop %v4137
        %v4139 = vmul.f32 %v4091, 1.442695
        %v4140 = vpow.pop %v4139
        %v4141 = vmul.f32 %v4092, 1.442695
        %v4142 = vpow.pop %v4141
        %v4143 = vmul.f32 %v4093, 1.442695
        %v4144 = vpow.pop %v4143
        %v4145 = vmul.f32 %v4094, 1.442695
        %v4146 = vpow.pop %v4145
        %v4147 = vmul.f32 %v4095, 1.442695
        %v4148 = vpow.pop %v4147
        %v4149 = vmul.f32 %v4096, 1.442695
        %v4150 = vpow.pop %v4149
        %v4151 = vmul.f32 %v4097, 1.442695
        %v4152 = vpow.pop %v4151
        %v4153 = vmul.f32 %v4098, 1.442695
        %v4154 = vpow.pop %v4153
        %v4155 = vmul.f32 %v4099, 1.442695
        %v4156 = vpow.pop %v4155
        %v4157 = vmul.f32 %v4100, 1.442695
        %v4158 = vpow.pop %v4157
        %v4159 = vmul.f32 %v4101, 1.442695
        %v4160 = vpow.pop %v4159
        %v4161 = vmul.f32 %v4102, 1.442695
        %v4162 = vpow.pop %v4161
        %v4163 = vmul.f32 %v4103, 1.442695
        %v4164 = vpow.pop %v4163
        %v4165 = vmul.f32 %v4104, 1.442695
        %v4166 = vpow.pop %v4165
        %v4167 = vmul.f32 %v4105, 1.442695
        %v4168 = vpow.pop %v4167
        %v4169 = vmul.f32 %v4106, 1.442695
        %v4170 = vpow.pop %v4169
        %4171 = vadd.xlane.f32.xlu0 %v4108
        %v4172 = vpop.xlane.xlu0 %4171
        %4173 = vadd.xlane.f32.xlu0 %v4110
        %v4174 = vpop.xlane.xlu0 %4173
        %4175 = vadd.xlane.f32.xlu0 %v4112
        %v4176 = vpop.xlane.xlu0 %4175
        %4177 = vadd.xlane.f32.xlu0 %v4114
        %v4178 = vpop.xlane.xlu0 %4177
        %4179 = vadd.xlane.f32.xlu0 %v4116
        %v4180 = vpop.xlane.xlu0 %4179
        %4181 = vadd.xlane.f32.xlu0 %v4118
        %v4182 = vpop.xlane.xlu0 %4181
        %4183 = vadd.xlane.f32.xlu0 %v4120
        %v4184 = vpop.xlane.xlu0 %4183
        %4185 = vadd.xlane.f32.xlu0 %v4122
        %v4186 = vpop.xlane.xlu0 %4185
        %4187 = vadd.xlane.f32.xlu0 %v4124
        %v4188 = vpop.xlane.xlu0 %4187
        %4189 = vadd.xlane.f32.xlu0 %v4126
        %v4190 = vpop.xlane.xlu0 %4189
        %4191 = vadd.xlane.f32.xlu0 %v4128
        %v4192 = vpop.xlane.xlu0 %4191
        %4193 = vadd.xlane.f32.xlu0 %v4130
        %v4194 = vpop.xlane.xlu0 %4193
        %4195 = vadd.xlane.f32.xlu0 %v4132
        %v4196 = vpop.xlane.xlu0 %4195
        %4197 = vadd.xlane.f32.xlu0 %v4134
        %v4198 = vpop.xlane.xlu0 %4197
        %4199 = vadd.xlane.f32.xlu0 %v4136
        %v4200 = vpop.xlane.xlu0 %4199
        %4201 = vadd.xlane.f32.xlu0 %v4138
        %v4202 = vpop.xlane.xlu0 %4201
        %4203 = vadd.xlane.f32.xlu0 %v4140
        %v4204 = vpop.xlane.xlu0 %4203
        %4205 = vadd.xlane.f32.xlu0 %v4142
        %v4206 = vpop.xlane.xlu0 %4205
        %4207 = vadd.xlane.f32.xlu0 %v4144
        %v4208 = vpop.xlane.xlu0 %4207
        %4209 = vadd.xlane.f32.xlu0 %v4146
        %v4210 = vpop.xlane.xlu0 %4209
        %4211 = vadd.xlane.f32.xlu0 %v4148
        %v4212 = vpop.xlane.xlu0 %4211
        %4213 = vadd.xlane.f32.xlu0 %v4150
        %v4214 = vpop.xlane.xlu0 %4213
        %4215 = vadd.xlane.f32.xlu0 %v4152
        %v4216 = vpop.xlane.xlu0 %4215
        %4217 = vadd.xlane.f32.xlu0 %v4154
        %v4218 = vpop.xlane.xlu0 %4217
        %4219 = vadd.xlane.f32.xlu0 %v4156
        %v4220 = vpop.xlane.xlu0 %4219
        %4221 = vadd.xlane.f32.xlu0 %v4158
        %v4222 = vpop.xlane.xlu0 %4221
        %4223 = vadd.xlane.f32.xlu0 %v4160
        %v4224 = vpop.xlane.xlu0 %4223
        %4225 = vadd.xlane.f32.xlu0 %v4162
        %v4226 = vpop.xlane.xlu0 %4225
        %4227 = vadd.xlane.f32.xlu0 %v4164
        %v4228 = vpop.xlane.xlu0 %4227
        %4229 = vadd.xlane.f32.xlu0 %v4166
        %v4230 = vpop.xlane.xlu0 %4229
        %4231 = vadd.xlane.f32.xlu0 %v4168
        %v4232 = vpop.xlane.xlu0 %4231
        %4233 = vadd.xlane.f32.xlu0 %v4170
        %v4234 = vpop.xlane.xlu0 %4233
        %v4235 = vrcp.pop %v4172
        %v4236 = vmul.f32 %v4172, %v4235
        %v4237 = vsub.f32 1.0, %v4236
        %v4238 = vmul.f32 %v4235, %v4237
        %v4239 = vadd.f32 %v4235, %v4238
        %vm4240 = vweird.f32 %v4172
        %vm4241 = vweird.f32 %v4235
        %vm4242 = vmor %vm4240, %vm4241
        %v4243 = vsel %vm4242, %v4235, %v4239
        %v4244 = vand.u32 2147483647, %v4172
        %vm4245 = vcmp.eq.f32.partialorder %v4244, 8.507059e+37
        %v4246 = vand.u32 %v4172, 2147483648
        %v4247 = vor.u32 1.1754944e-38, %v4246
        %v4248 = vsel %vm4245, %v4247, %v4243
        %v4249 = vmul.f32 1.0, %v4248
        %v4250 = vrcp.pop %v4174
        %v4251 = vmul.f32 %v4174, %v4250
        %v4252 = vsub.f32 1.0, %v4251
        %v4253 = vmul.f32 %v4250, %v4252
        %v4254 = vadd.f32 %v4250, %v4253
        %vm4255 = vweird.f32 %v4174
        %vm4256 = vweird.f32 %v4250
        %vm4257 = vmor %vm4255, %vm4256
        %v4258 = vsel %vm4257, %v4250, %v4254
        %v4259 = vand.u32 2147483647, %v4174
        %vm4260 = vcmp.eq.f32.partialorder %v4259, 8.507059e+37
        %v4261 = vand.u32 %v4174, 2147483648
        %v4262 = vor.u32 1.1754944e-38, %v4261
        %v4263 = vsel %vm4260, %v4262, %v4258
        %v4264 = vmul.f32 1.0, %v4263
        %v4265 = vrcp.pop %v4176
        %v4266 = vmul.f32 %v4176, %v4265
        %v4267 = vsub.f32 1.0, %v4266
        %v4268 = vmul.f32 %v4265, %v4267
        %v4269 = vadd.f32 %v4265, %v4268
        %vm4270 = vweird.f32 %v4176
        %vm4271 = vweird.f32 %v4265
        %vm4272 = vmor %vm4270, %vm4271
        %v4273 = vsel %vm4272, %v4265, %v4269
        %v4274 = vand.u32 2147483647, %v4176
        %vm4275 = vcmp.eq.f32.partialorder %v4274, 8.507059e+37
        %v4276 = vand.u32 %v4176, 2147483648
        %v4277 = vor.u32 1.1754944e-38, %v4276
        %v4278 = vsel %vm4275, %v4277, %v4273
        %v4279 = vmul.f32 1.0, %v4278
        %v4280 = vrcp.pop %v4178
        %v4281 = vmul.f32 %v4178, %v4280
        %v4282 = vsub.f32 1.0, %v4281
        %v4283 = vmul.f32 %v4280, %v4282
        %v4284 = vadd.f32 %v4280, %v4283
        %vm4285 = vweird.f32 %v4178
        %vm4286 = vweird.f32 %v4280
        %vm4287 = vmor %vm4285, %vm4286
        %v4288 = vsel %vm4287, %v4280, %v4284
        %v4289 = vand.u32 2147483647, %v4178
        %vm4290 = vcmp.eq.f32.partialorder %v4289, 8.507059e+37
        %v4291 = vand.u32 %v4178, 2147483648
        %v4292 = vor.u32 1.1754944e-38, %v4291
        %v4293 = vsel %vm4290, %v4292, %v4288
        %v4294 = vmul.f32 1.0, %v4293
        %v4295 = vrcp.pop %v4180
        %v4296 = vmul.f32 %v4180, %v4295
        %v4297 = vsub.f32 1.0, %v4296
        %v4298 = vmul.f32 %v4295, %v4297
        %v4299 = vadd.f32 %v4295, %v4298
        %vm4300 = vweird.f32 %v4180
        %vm4301 = vweird.f32 %v4295
        %vm4302 = vmor %vm4300, %vm4301
        %v4303 = vsel %vm4302, %v4295, %v4299
        %v4304 = vand.u32 2147483647, %v4180
        %vm4305 = vcmp.eq.f32.partialorder %v4304, 8.507059e+37
        %v4306 = vand.u32 %v4180, 2147483648
        %v4307 = vor.u32 1.1754944e-38, %v4306
        %v4308 = vsel %vm4305, %v4307, %v4303
        %v4309 = vmul.f32 1.0, %v4308
        %v4310 = vrcp.pop %v4182
        %v4311 = vmul.f32 %v4182, %v4310
        %v4312 = vsub.f32 1.0, %v4311
        %v4313 = vmul.f32 %v4310, %v4312
        %v4314 = vadd.f32 %v4310, %v4313
        %vm4315 = vweird.f32 %v4182
        %vm4316 = vweird.f32 %v4310
        %vm4317 = vmor %vm4315, %vm4316
        %v4318 = vsel %vm4317, %v4310, %v4314
        %v4319 = vand.u32 2147483647, %v4182
        %vm4320 = vcmp.eq.f32.partialorder %v4319, 8.507059e+37
        %v4321 = vand.u32 %v4182, 2147483648
        %v4322 = vor.u32 1.1754944e-38, %v4321
        %v4323 = vsel %vm4320, %v4322, %v4318
        %v4324 = vmul.f32 1.0, %v4323
        %v4325 = vrcp.pop %v4184
        %v4326 = vmul.f32 %v4184, %v4325
        %v4327 = vsub.f32 1.0, %v4326
        %v4328 = vmul.f32 %v4325, %v4327
        %v4329 = vadd.f32 %v4325, %v4328
        %vm4330 = vweird.f32 %v4184
        %vm4331 = vweird.f32 %v4325
        %vm4332 = vmor %vm4330, %vm4331
        %v4333 = vsel %vm4332, %v4325, %v4329
        %v4334 = vand.u32 2147483647, %v4184
        %vm4335 = vcmp.eq.f32.partialorder %v4334, 8.507059e+37
        %v4336 = vand.u32 %v4184, 2147483648
        %v4337 = vor.u32 1.1754944e-38, %v4336
        %v4338 = vsel %vm4335, %v4337, %v4333
        %v4339 = vmul.f32 1.0, %v4338
        %v4340 = vrcp.pop %v4186
        %v4341 = vmul.f32 %v4186, %v4340
        %v4342 = vsub.f32 1.0, %v4341
        %v4343 = vmul.f32 %v4340, %v4342
        %v4344 = vadd.f32 %v4340, %v4343
        %vm4345 = vweird.f32 %v4186
        %vm4346 = vweird.f32 %v4340
        %vm4347 = vmor %vm4345, %vm4346
        %v4348 = vsel %vm4347, %v4340, %v4344
        %v4349 = vand.u32 2147483647, %v4186
        %vm4350 = vcmp.eq.f32.partialorder %v4349, 8.507059e+37
        %v4351 = vand.u32 %v4186, 2147483648
        %v4352 = vor.u32 1.1754944e-38, %v4351
        %v4353 = vsel %vm4350, %v4352, %v4348
        %v4354 = vmul.f32 1.0, %v4353
        %v4355 = vrcp.pop %v4188
        %v4356 = vmul.f32 %v4188, %v4355
        %v4357 = vsub.f32 1.0, %v4356
        %v4358 = vmul.f32 %v4355, %v4357
        %v4359 = vadd.f32 %v4355, %v4358
        %vm4360 = vweird.f32 %v4188
        %vm4361 = vweird.f32 %v4355
        %vm4362 = vmor %vm4360, %vm4361
        %v4363 = vsel %vm4362, %v4355, %v4359
        %v4364 = vand.u32 2147483647, %v4188
        %vm4365 = vcmp.eq.f32.partialorder %v4364, 8.507059e+37
        %v4366 = vand.u32 %v4188, 2147483648
        %v4367 = vor.u32 1.1754944e-38, %v4366
        %v4368 = vsel %vm4365, %v4367, %v4363
        %v4369 = vmul.f32 1.0, %v4368
        %v4370 = vrcp.pop %v4190
        %v4371 = vmul.f32 %v4190, %v4370
        %v4372 = vsub.f32 1.0, %v4371
        %v4373 = vmul.f32 %v4370, %v4372
        %v4374 = vadd.f32 %v4370, %v4373
        %vm4375 = vweird.f32 %v4190
        %vm4376 = vweird.f32 %v4370
        %vm4377 = vmor %vm4375, %vm4376
        %v4378 = vsel %vm4377, %v4370, %v4374
        %v4379 = vand.u32 2147483647, %v4190
        %vm4380 = vcmp.eq.f32.partialorder %v4379, 8.507059e+37
        %v4381 = vand.u32 %v4190, 2147483648
        %v4382 = vor.u32 1.1754944e-38, %v4381
        %v4383 = vsel %vm4380, %v4382, %v4378
        %v4384 = vmul.f32 1.0, %v4383
        %v4385 = vrcp.pop %v4192
        %v4386 = vmul.f32 %v4192, %v4385
        %v4387 = vsub.f32 1.0, %v4386
        %v4388 = vmul.f32 %v4385, %v4387
        %v4389 = vadd.f32 %v4385, %v4388
        %vm4390 = vweird.f32 %v4192
        %vm4391 = vweird.f32 %v4385
        %vm4392 = vmor %vm4390, %vm4391
        %v4393 = vsel %vm4392, %v4385, %v4389
        %v4394 = vand.u32 2147483647, %v4192
        %vm4395 = vcmp.eq.f32.partialorder %v4394, 8.507059e+37
        %v4396 = vand.u32 %v4192, 2147483648
        %v4397 = vor.u32 1.1754944e-38, %v4396
        %v4398 = vsel %vm4395, %v4397, %v4393
        %v4399 = vmul.f32 1.0, %v4398
        %v4400 = vrcp.pop %v4194
        %v4401 = vmul.f32 %v4194, %v4400
        %v4402 = vsub.f32 1.0, %v4401
        %v4403 = vmul.f32 %v4400, %v4402
        %v4404 = vadd.f32 %v4400, %v4403
        %vm4405 = vweird.f32 %v4194
        %vm4406 = vweird.f32 %v4400
        %vm4407 = vmor %vm4405, %vm4406
        %v4408 = vsel %vm4407, %v4400, %v4404
        %v4409 = vand.u32 2147483647, %v4194
        %vm4410 = vcmp.eq.f32.partialorder %v4409, 8.507059e+37
        %v4411 = vand.u32 %v4194, 2147483648
        %v4412 = vor.u32 1.1754944e-38, %v4411
        %v4413 = vsel %vm4410, %v4412, %v4408
        %v4414 = vmul.f32 1.0, %v4413
        %v4415 = vrcp.pop %v4196
        %v4416 = vmul.f32 %v4196, %v4415
        %v4417 = vsub.f32 1.0, %v4416
        %v4418 = vmul.f32 %v4415, %v4417
        %v4419 = vadd.f32 %v4415, %v4418
        %vm4420 = vweird.f32 %v4196
        %vm4421 = vweird.f32 %v4415
        %vm4422 = vmor %vm4420, %vm4421
        %v4423 = vsel %vm4422, %v4415, %v4419
        %v4424 = vand.u32 2147483647, %v4196
        %vm4425 = vcmp.eq.f32.partialorder %v4424, 8.507059e+37
        %v4426 = vand.u32 %v4196, 2147483648
        %v4427 = vor.u32 1.1754944e-38, %v4426
        %v4428 = vsel %vm4425, %v4427, %v4423
        %v4429 = vmul.f32 1.0, %v4428
        %v4430 = vrcp.pop %v4198
        %v4431 = vmul.f32 %v4198, %v4430
        %v4432 = vsub.f32 1.0, %v4431
        %v4433 = vmul.f32 %v4430, %v4432
        %v4434 = vadd.f32 %v4430, %v4433
        %vm4435 = vweird.f32 %v4198
        %vm4436 = vweird.f32 %v4430
        %vm4437 = vmor %vm4435, %vm4436
        %v4438 = vsel %vm4437, %v4430, %v4434
        %v4439 = vand.u32 2147483647, %v4198
        %vm4440 = vcmp.eq.f32.partialorder %v4439, 8.507059e+37
        %v4441 = vand.u32 %v4198, 2147483648
        %v4442 = vor.u32 1.1754944e-38, %v4441
        %v4443 = vsel %vm4440, %v4442, %v4438
        %v4444 = vmul.f32 1.0, %v4443
        %v4445 = vrcp.pop %v4200
        %v4446 = vmul.f32 %v4200, %v4445
        %v4447 = vsub.f32 1.0, %v4446
        %v4448 = vmul.f32 %v4445, %v4447
        %v4449 = vadd.f32 %v4445, %v4448
        %vm4450 = vweird.f32 %v4200
        %vm4451 = vweird.f32 %v4445
        %vm4452 = vmor %vm4450, %vm4451
        %v4453 = vsel %vm4452, %v4445, %v4449
        %v4454 = vand.u32 2147483647, %v4200
        %vm4455 = vcmp.eq.f32.partialorder %v4454, 8.507059e+37
        %v4456 = vand.u32 %v4200, 2147483648
        %v4457 = vor.u32 1.1754944e-38, %v4456
        %v4458 = vsel %vm4455, %v4457, %v4453
        %v4459 = vmul.f32 1.0, %v4458
        %v4460 = vrcp.pop %v4202
        %v4461 = vmul.f32 %v4202, %v4460
        %v4462 = vsub.f32 1.0, %v4461
        %v4463 = vmul.f32 %v4460, %v4462
        %v4464 = vadd.f32 %v4460, %v4463
        %vm4465 = vweird.f32 %v4202
        %vm4466 = vweird.f32 %v4460
        %vm4467 = vmor %vm4465, %vm4466
        %v4468 = vsel %vm4467, %v4460, %v4464
        %v4469 = vand.u32 2147483647, %v4202
        %vm4470 = vcmp.eq.f32.partialorder %v4469, 8.507059e+37
        %v4471 = vand.u32 %v4202, 2147483648
        %v4472 = vor.u32 1.1754944e-38, %v4471
        %v4473 = vsel %vm4470, %v4472, %v4468
        %v4474 = vmul.f32 1.0, %v4473
        %v4475 = vrcp.pop %v4204
        %v4476 = vmul.f32 %v4204, %v4475
        %v4477 = vsub.f32 1.0, %v4476
        %v4478 = vmul.f32 %v4475, %v4477
        %v4479 = vadd.f32 %v4475, %v4478
        %vm4480 = vweird.f32 %v4204
        %vm4481 = vweird.f32 %v4475
        %vm4482 = vmor %vm4480, %vm4481
        %v4483 = vsel %vm4482, %v4475, %v4479
        %v4484 = vand.u32 2147483647, %v4204
        %vm4485 = vcmp.eq.f32.partialorder %v4484, 8.507059e+37
        %v4486 = vand.u32 %v4204, 2147483648
        %v4487 = vor.u32 1.1754944e-38, %v4486
        %v4488 = vsel %vm4485, %v4487, %v4483
        %v4489 = vmul.f32 1.0, %v4488
        %v4490 = vrcp.pop %v4206
        %v4491 = vmul.f32 %v4206, %v4490
        %v4492 = vsub.f32 1.0, %v4491
        %v4493 = vmul.f32 %v4490, %v4492
        %v4494 = vadd.f32 %v4490, %v4493
        %vm4495 = vweird.f32 %v4206
        %vm4496 = vweird.f32 %v4490
        %vm4497 = vmor %vm4495, %vm4496
        %v4498 = vsel %vm4497, %v4490, %v4494
        %v4499 = vand.u32 2147483647, %v4206
        %vm4500 = vcmp.eq.f32.partialorder %v4499, 8.507059e+37
        %v4501 = vand.u32 %v4206, 2147483648
        %v4502 = vor.u32 1.1754944e-38, %v4501
        %v4503 = vsel %vm4500, %v4502, %v4498
        %v4504 = vmul.f32 1.0, %v4503
        %v4505 = vrcp.pop %v4208
        %v4506 = vmul.f32 %v4208, %v4505
        %v4507 = vsub.f32 1.0, %v4506
        %v4508 = vmul.f32 %v4505, %v4507
        %v4509 = vadd.f32 %v4505, %v4508
        %vm4510 = vweird.f32 %v4208
        %vm4511 = vweird.f32 %v4505
        %vm4512 = vmor %vm4510, %vm4511
        %v4513 = vsel %vm4512, %v4505, %v4509
        %v4514 = vand.u32 2147483647, %v4208
        %vm4515 = vcmp.eq.f32.partialorder %v4514, 8.507059e+37
        %v4516 = vand.u32 %v4208, 2147483648
        %v4517 = vor.u32 1.1754944e-38, %v4516
        %v4518 = vsel %vm4515, %v4517, %v4513
        %v4519 = vmul.f32 1.0, %v4518
        %v4520 = vrcp.pop %v4210
        %v4521 = vmul.f32 %v4210, %v4520
        %v4522 = vsub.f32 1.0, %v4521
        %v4523 = vmul.f32 %v4520, %v4522
        %v4524 = vadd.f32 %v4520, %v4523
        %vm4525 = vweird.f32 %v4210
        %vm4526 = vweird.f32 %v4520
        %vm4527 = vmor %vm4525, %vm4526
        %v4528 = vsel %vm4527, %v4520, %v4524
        %v4529 = vand.u32 2147483647, %v4210
        %vm4530 = vcmp.eq.f32.partialorder %v4529, 8.507059e+37
        %v4531 = vand.u32 %v4210, 2147483648
        %v4532 = vor.u32 1.1754944e-38, %v4531
        %v4533 = vsel %vm4530, %v4532, %v4528
        %v4534 = vmul.f32 1.0, %v4533
        %v4535 = vrcp.pop %v4212
        %v4536 = vmul.f32 %v4212, %v4535
        %v4537 = vsub.f32 1.0, %v4536
        %v4538 = vmul.f32 %v4535, %v4537
        %v4539 = vadd.f32 %v4535, %v4538
        %vm4540 = vweird.f32 %v4212
        %vm4541 = vweird.f32 %v4535
        %vm4542 = vmor %vm4540, %vm4541
        %v4543 = vsel %vm4542, %v4535, %v4539
        %v4544 = vand.u32 2147483647, %v4212
        %vm4545 = vcmp.eq.f32.partialorder %v4544, 8.507059e+37
        %v4546 = vand.u32 %v4212, 2147483648
        %v4547 = vor.u32 1.1754944e-38, %v4546
        %v4548 = vsel %vm4545, %v4547, %v4543
        %v4549 = vmul.f32 1.0, %v4548
        %v4550 = vrcp.pop %v4214
        %v4551 = vmul.f32 %v4214, %v4550
        %v4552 = vsub.f32 1.0, %v4551
        %v4553 = vmul.f32 %v4550, %v4552
        %v4554 = vadd.f32 %v4550, %v4553
        %vm4555 = vweird.f32 %v4214
        %vm4556 = vweird.f32 %v4550
        %vm4557 = vmor %vm4555, %vm4556
        %v4558 = vsel %vm4557, %v4550, %v4554
        %v4559 = vand.u32 2147483647, %v4214
        %vm4560 = vcmp.eq.f32.partialorder %v4559, 8.507059e+37
        %v4561 = vand.u32 %v4214, 2147483648
        %v4562 = vor.u32 1.1754944e-38, %v4561
        %v4563 = vsel %vm4560, %v4562, %v4558
        %v4564 = vmul.f32 1.0, %v4563
        %v4565 = vrcp.pop %v4216
        %v4566 = vmul.f32 %v4216, %v4565
        %v4567 = vsub.f32 1.0, %v4566
        %v4568 = vmul.f32 %v4565, %v4567
        %v4569 = vadd.f32 %v4565, %v4568
        %vm4570 = vweird.f32 %v4216
        %vm4571 = vweird.f32 %v4565
        %vm4572 = vmor %vm4570, %vm4571
        %v4573 = vsel %vm4572, %v4565, %v4569
        %v4574 = vand.u32 2147483647, %v4216
        %vm4575 = vcmp.eq.f32.partialorder %v4574, 8.507059e+37
        %v4576 = vand.u32 %v4216, 2147483648
        %v4577 = vor.u32 1.1754944e-38, %v4576
        %v4578 = vsel %vm4575, %v4577, %v4573
        %v4579 = vmul.f32 1.0, %v4578
        %v4580 = vrcp.pop %v4218
        %v4581 = vmul.f32 %v4218, %v4580
        %v4582 = vsub.f32 1.0, %v4581
        %v4583 = vmul.f32 %v4580, %v4582
        %v4584 = vadd.f32 %v4580, %v4583
        %vm4585 = vweird.f32 %v4218
        %vm4586 = vweird.f32 %v4580
        %vm4587 = vmor %vm4585, %vm4586
        %v4588 = vsel %vm4587, %v4580, %v4584
        %v4589 = vand.u32 2147483647, %v4218
        %vm4590 = vcmp.eq.f32.partialorder %v4589, 8.507059e+37
        %v4591 = vand.u32 %v4218, 2147483648
        %v4592 = vor.u32 1.1754944e-38, %v4591
        %v4593 = vsel %vm4590, %v4592, %v4588
        %v4594 = vmul.f32 1.0, %v4593
        %v4595 = vrcp.pop %v4220
        %v4596 = vmul.f32 %v4220, %v4595
        %v4597 = vsub.f32 1.0, %v4596
        %v4598 = vmul.f32 %v4595, %v4597
        %v4599 = vadd.f32 %v4595, %v4598
        %vm4600 = vweird.f32 %v4220
        %vm4601 = vweird.f32 %v4595
        %vm4602 = vmor %vm4600, %vm4601
        %v4603 = vsel %vm4602, %v4595, %v4599
        %v4604 = vand.u32 2147483647, %v4220
        %vm4605 = vcmp.eq.f32.partialorder %v4604, 8.507059e+37
        %v4606 = vand.u32 %v4220, 2147483648
        %v4607 = vor.u32 1.1754944e-38, %v4606
        %v4608 = vsel %vm4605, %v4607, %v4603
        %v4609 = vmul.f32 1.0, %v4608
        %v4610 = vrcp.pop %v4222
        %v4611 = vmul.f32 %v4222, %v4610
        %v4612 = vsub.f32 1.0, %v4611
        %v4613 = vmul.f32 %v4610, %v4612
        %v4614 = vadd.f32 %v4610, %v4613
        %vm4615 = vweird.f32 %v4222
        %vm4616 = vweird.f32 %v4610
        %vm4617 = vmor %vm4615, %vm4616
        %v4618 = vsel %vm4617, %v4610, %v4614
        %v4619 = vand.u32 2147483647, %v4222
        %vm4620 = vcmp.eq.f32.partialorder %v4619, 8.507059e+37
        %v4621 = vand.u32 %v4222, 2147483648
        %v4622 = vor.u32 1.1754944e-38, %v4621
        %v4623 = vsel %vm4620, %v4622, %v4618
        %v4624 = vmul.f32 1.0, %v4623
        %v4625 = vrcp.pop %v4224
        %v4626 = vmul.f32 %v4224, %v4625
        %v4627 = vsub.f32 1.0, %v4626
        %v4628 = vmul.f32 %v4625, %v4627
        %v4629 = vadd.f32 %v4625, %v4628
        %vm4630 = vweird.f32 %v4224
        %vm4631 = vweird.f32 %v4625
        %vm4632 = vmor %vm4630, %vm4631
        %v4633 = vsel %vm4632, %v4625, %v4629
        %v4634 = vand.u32 2147483647, %v4224
        %vm4635 = vcmp.eq.f32.partialorder %v4634, 8.507059e+37
        %v4636 = vand.u32 %v4224, 2147483648
        %v4637 = vor.u32 1.1754944e-38, %v4636
        %v4638 = vsel %vm4635, %v4637, %v4633
        %v4639 = vmul.f32 1.0, %v4638
        %v4640 = vrcp.pop %v4226
        %v4641 = vmul.f32 %v4226, %v4640
        %v4642 = vsub.f32 1.0, %v4641
        %v4643 = vmul.f32 %v4640, %v4642
        %v4644 = vadd.f32 %v4640, %v4643
        %vm4645 = vweird.f32 %v4226
        %vm4646 = vweird.f32 %v4640
        %vm4647 = vmor %vm4645, %vm4646
        %v4648 = vsel %vm4647, %v4640, %v4644
        %v4649 = vand.u32 2147483647, %v4226
        %vm4650 = vcmp.eq.f32.partialorder %v4649, 8.507059e+37
        %v4651 = vand.u32 %v4226, 2147483648
        %v4652 = vor.u32 1.1754944e-38, %v4651
        %v4653 = vsel %vm4650, %v4652, %v4648
        %v4654 = vmul.f32 1.0, %v4653
        %v4655 = vrcp.pop %v4228
        %v4656 = vmul.f32 %v4228, %v4655
        %v4657 = vsub.f32 1.0, %v4656
        %v4658 = vmul.f32 %v4655, %v4657
        %v4659 = vadd.f32 %v4655, %v4658
        %vm4660 = vweird.f32 %v4228
        %vm4661 = vweird.f32 %v4655
        %vm4662 = vmor %vm4660, %vm4661
        %v4663 = vsel %vm4662, %v4655, %v4659
        %v4664 = vand.u32 2147483647, %v4228
        %vm4665 = vcmp.eq.f32.partialorder %v4664, 8.507059e+37
        %v4666 = vand.u32 %v4228, 2147483648
        %v4667 = vor.u32 1.1754944e-38, %v4666
        %v4668 = vsel %vm4665, %v4667, %v4663
        %v4669 = vmul.f32 1.0, %v4668
        %v4670 = vrcp.pop %v4230
        %v4671 = vmul.f32 %v4230, %v4670
        %v4672 = vsub.f32 1.0, %v4671
        %v4673 = vmul.f32 %v4670, %v4672
        %v4674 = vadd.f32 %v4670, %v4673
        %vm4675 = vweird.f32 %v4230
        %vm4676 = vweird.f32 %v4670
        %vm4677 = vmor %vm4675, %vm4676
        %v4678 = vsel %vm4677, %v4670, %v4674
        %v4679 = vand.u32 2147483647, %v4230
        %vm4680 = vcmp.eq.f32.partialorder %v4679, 8.507059e+37
        %v4681 = vand.u32 %v4230, 2147483648
        %v4682 = vor.u32 1.1754944e-38, %v4681
        %v4683 = vsel %vm4680, %v4682, %v4678
        %v4684 = vmul.f32 1.0, %v4683
        %v4685 = vrcp.pop %v4232
        %v4686 = vmul.f32 %v4232, %v4685
        %v4687 = vsub.f32 1.0, %v4686
        %v4688 = vmul.f32 %v4685, %v4687
        %v4689 = vadd.f32 %v4685, %v4688
        %vm4690 = vweird.f32 %v4232
        %vm4691 = vweird.f32 %v4685
        %vm4692 = vmor %vm4690, %vm4691
        %v4693 = vsel %vm4692, %v4685, %v4689
        %v4694 = vand.u32 2147483647, %v4232
        %vm4695 = vcmp.eq.f32.partialorder %v4694, 8.507059e+37
        %v4696 = vand.u32 %v4232, 2147483648
        %v4697 = vor.u32 1.1754944e-38, %v4696
        %v4698 = vsel %vm4695, %v4697, %v4693
        %v4699 = vmul.f32 1.0, %v4698
        %v4700 = vrcp.pop %v4234
        %v4701 = vmul.f32 %v4234, %v4700
        %v4702 = vsub.f32 1.0, %v4701
        %v4703 = vmul.f32 %v4700, %v4702
        %v4704 = vadd.f32 %v4700, %v4703
        %vm4705 = vweird.f32 %v4234
        %vm4706 = vweird.f32 %v4700
        %vm4707 = vmor %vm4705, %vm4706
        %v4708 = vsel %vm4707, %v4700, %v4704
        %v4709 = vand.u32 2147483647, %v4234
        %vm4710 = vcmp.eq.f32.partialorder %v4709, 8.507059e+37
        %v4711 = vand.u32 %v4234, 2147483648
        %v4712 = vor.u32 1.1754944e-38, %v4711
        %v4713 = vsel %vm4710, %v4712, %v4708
        %v4714 = vmul.f32 1.0, %v4713
        %v4715 = vmul.f32 %v4108, %v4249
        %v4716 = vmul.f32 %v4110, %v4264
        %v4717 = vmul.f32 %v4112, %v4279
        %v4718 = vmul.f32 %v4114, %v4294
        %v4719 = vmul.f32 %v4116, %v4309
        %v4720 = vmul.f32 %v4118, %v4324
        %v4721 = vmul.f32 %v4120, %v4339
        %v4722 = vmul.f32 %v4122, %v4354
        %v4723 = vmul.f32 %v4124, %v4369
        %v4724 = vmul.f32 %v4126, %v4384
        %v4725 = vmul.f32 %v4128, %v4399
        %v4726 = vmul.f32 %v4130, %v4414
        %v4727 = vmul.f32 %v4132, %v4429
        %v4728 = vmul.f32 %v4134, %v4444
        %v4729 = vmul.f32 %v4136, %v4459
        %v4730 = vmul.f32 %v4138, %v4474
        %v4731 = vmul.f32 %v4140, %v4489
        %v4732 = vmul.f32 %v4142, %v4504
        %v4733 = vmul.f32 %v4144, %v4519
        %v4734 = vmul.f32 %v4146, %v4534
        %v4735 = vmul.f32 %v4148, %v4549
        %v4736 = vmul.f32 %v4150, %v4564
        %v4737 = vmul.f32 %v4152, %v4579
        %v4738 = vmul.f32 %v4154, %v4594
        %v4739 = vmul.f32 %v4156, %v4609
        %v4740 = vmul.f32 %v4158, %v4624
        %v4741 = vmul.f32 %v4160, %v4639
        %v4742 = vmul.f32 %v4162, %v4654
        %v4743 = vmul.f32 %v4164, %v4669
        %v4744 = vmul.f32 %v4166, %v4684
        %v4745 = vmul.f32 %v4168, %v4699
        %v4746 = vmul.f32 %v4170, %v4714
        %v4747 = vpack.c.bf16 %v4715, %v4715
        %v4748 = vpack.c.bf16 %v4716, %v4716
        %v4749 = vpack.c.bf16 %v4717, %v4717
        %v4750 = vpack.c.bf16 %v4718, %v4718
        %v4751 = vpack.c.bf16 %v4719, %v4719
        %v4752 = vpack.c.bf16 %v4720, %v4720
        %v4753 = vpack.c.bf16 %v4721, %v4721
        %v4754 = vpack.c.bf16 %v4722, %v4722
        %v4755 = vpack.c.bf16 %v4723, %v4723
        %v4756 = vpack.c.bf16 %v4724, %v4724
        %v4757 = vpack.c.bf16 %v4725, %v4725
        %v4758 = vpack.c.bf16 %v4726, %v4726
        %v4759 = vpack.c.bf16 %v4727, %v4727
        %v4760 = vpack.c.bf16 %v4728, %v4728
        %v4761 = vpack.c.bf16 %v4729, %v4729
        %v4762 = vpack.c.bf16 %v4730, %v4730
        %v4763 = vpack.c.bf16 %v4731, %v4731
        %v4764 = vpack.c.bf16 %v4732, %v4732
        %v4765 = vpack.c.bf16 %v4733, %v4733
        %v4766 = vpack.c.bf16 %v4734, %v4734
        %v4767 = vpack.c.bf16 %v4735, %v4735
        %v4768 = vpack.c.bf16 %v4736, %v4736
        %v4769 = vpack.c.bf16 %v4737, %v4737
        %v4770 = vpack.c.bf16 %v4738, %v4738
        %v4771 = vpack.c.bf16 %v4739, %v4739
        %v4772 = vpack.c.bf16 %v4740, %v4740
        %v4773 = vpack.c.bf16 %v4741, %v4741
        %v4774 = vpack.c.bf16 %v4742, %v4742
        %v4775 = vpack.c.bf16 %v4743, %v4743
        %v4776 = vpack.c.bf16 %v4744, %v4744
        %v4777 = vpack.c.bf16 %v4745, %v4745
        %v4778 = vpack.c.bf16 %v4746, %v4746
        %v4795 = vunpack.c.l.b16 %v4747
        %v4796 = vunpack.c.l.b16 %v4748
        %v4797 = vunpack.c.l.b16 %v4749
        %v4798 = vunpack.c.l.b16 %v4750
        %v4799 = vunpack.c.l.b16 %v4751
        %v4800 = vunpack.c.l.b16 %v4752
        %v4801 = vunpack.c.l.b16 %v4753
        %v4802 = vunpack.c.l.b16 %v4754
        %v4803 = vunpack.c.l.b16 %v4755
        %v4804 = vunpack.c.l.b16 %v4756
        %v4805 = vunpack.c.l.b16 %v4757
        %v4806 = vunpack.c.l.b16 %v4758
        %v4807 = vunpack.c.l.b16 %v4759
        %v4808 = vunpack.c.l.b16 %v4760
        %v4809 = vunpack.c.l.b16 %v4761
        %v4810 = vunpack.c.l.b16 %v4762
        %v4811 = vpack.c.b16 %v4796, %v4795
        %v4812 = vpack.c.b16 %v4798, %v4797
        %v4813 = vpack.c.b16 %v4800, %v4799
        %v4814 = vpack.c.b16 %v4802, %v4801
        %v4815 = vpack.c.b16 %v4804, %v4803
        %v4816 = vpack.c.b16 %v4806, %v4805
        %v4817 = vpack.c.b16 %v4808, %v4807
        %v4818 = vpack.c.b16 %v4810, %v4809
        %4827 = vrot.lane.b32.xlu0 %v3511, 96
        %v4828 = vpop.permute.xlu0 %4827
        %4829 = vrot.lane.b32.xlu0 %v3512, 96
        %v4830 = vpop.permute.xlu0 %4829
        %4831 = vrot.lane.b32.xlu0 %v3513, 96
        %v4832 = vpop.permute.xlu0 %4831
        %4833 = vrot.lane.b32.xlu0 %v3514, 96
        %v4834 = vpop.permute.xlu0 %4833
        %4835 = vrot.lane.b32.xlu0 %v3515, 96
        %v4836 = vpop.permute.xlu0 %4835
        %4837 = vrot.lane.b32.xlu0 %v3516, 96
        %v4838 = vpop.permute.xlu0 %4837
        %4839 = vrot.lane.b32.xlu0 %v3517, 96
        %v4840 = vpop.permute.xlu0 %4839
        %4841 = vrot.lane.b32.xlu0 %v3518, 96
        %v4842 = vpop.permute.xlu0 %4841
        %4851 = vmatpush.bf16.msra.mxu0 %v4842
        %4852 = vmatpush.bf16.msra.mxu0 %v4840
        %4853 = vmatpush.bf16.msra.mxu0 %v4838
        %4854 = vmatpush.bf16.msra.mxu0 %v4836
        %4855 = vmatpush.bf16.msra.mxu0 %v4834
        %4856 = vmatpush.bf16.msra.mxu0 %v4832
        %4857 = vmatpush.bf16.msra.mxu0 %v4830
        %4858 = vmatpush.bf16.msra.mxu0 %v4828
        %4859 = vmatmul.bf16.gmra.mxu0 %v4811
        %v4860 = vpop.f32.mrf.mxu0
        %v4861 = vadd.f32 0.0, %v4860
        %v4862 = vpop.f32.mrf.mxu0
        %v4863 = vadd.f32 0.0, %v4862
        %4864 = vmatmul.bf16.gmra.mxu0 %v4812
        %v4865 = vpop.f32.mrf.mxu0
        %v4866 = vadd.f32 0.0, %v4865
        %v4867 = vpop.f32.mrf.mxu0
        %v4868 = vadd.f32 0.0, %v4867
        %4869 = vmatmul.bf16.gmra.mxu0 %v4813
        %v4870 = vpop.f32.mrf.mxu0
        %v4871 = vadd.f32 0.0, %v4870
        %v4872 = vpop.f32.mrf.mxu0
        %v4873 = vadd.f32 0.0, %v4872
        %4874 = vmatmul.bf16.gmra.mxu0 %v4814
        %v4875 = vpop.f32.mrf.mxu0
        %v4876 = vadd.f32 0.0, %v4875
        %v4877 = vpop.f32.mrf.mxu0
        %v4878 = vadd.f32 0.0, %v4877
        %4879 = vmatmul.bf16.gmra.mxu0 %v4815
        %v4880 = vpop.f32.mrf.mxu0
        %v4881 = vadd.f32 0.0, %v4880
        %v4882 = vpop.f32.mrf.mxu0
        %v4883 = vadd.f32 0.0, %v4882
        %4884 = vmatmul.bf16.gmra.mxu0 %v4816
        %v4885 = vpop.f32.mrf.mxu0
        %v4886 = vadd.f32 0.0, %v4885
        %v4887 = vpop.f32.mrf.mxu0
        %v4888 = vadd.f32 0.0, %v4887
        %4889 = vmatmul.bf16.gmra.mxu0 %v4817
        %v4890 = vpop.f32.mrf.mxu0
        %v4891 = vadd.f32 0.0, %v4890
        %v4892 = vpop.f32.mrf.mxu0
        %v4893 = vadd.f32 0.0, %v4892
        %4894 = vmatmul.bf16.gmra.mxu0 %v4818
        %v4895 = vpop.f32.mrf.mxu0
        %v4896 = vadd.f32 0.0, %v4895
        %v4897 = vpop.f32.mrf.mxu0
        %v4898 = vadd.f32 0.0, %v4897
        %4899 = vdwg.mxu0
        %v4916 = vunpack.c.l.b16 %v4763
        %v4917 = vunpack.c.l.b16 %v4764
        %v4918 = vunpack.c.l.b16 %v4765
        %v4919 = vunpack.c.l.b16 %v4766
        %v4920 = vunpack.c.l.b16 %v4767
        %v4921 = vunpack.c.l.b16 %v4768
        %v4922 = vunpack.c.l.b16 %v4769
        %v4923 = vunpack.c.l.b16 %v4770
        %v4924 = vunpack.c.l.b16 %v4771
        %v4925 = vunpack.c.l.b16 %v4772
        %v4926 = vunpack.c.l.b16 %v4773
        %v4927 = vunpack.c.l.b16 %v4774
        %v4928 = vunpack.c.l.b16 %v4775
        %v4929 = vunpack.c.l.b16 %v4776
        %v4930 = vunpack.c.l.b16 %v4777
        %v4931 = vunpack.c.l.b16 %v4778
        %v4932 = vpack.c.b16 %v4917, %v4916
        %v4933 = vpack.c.b16 %v4919, %v4918
        %v4934 = vpack.c.b16 %v4921, %v4920
        %v4935 = vpack.c.b16 %v4923, %v4922
        %v4936 = vpack.c.b16 %v4925, %v4924
        %v4937 = vpack.c.b16 %v4927, %v4926
        %v4938 = vpack.c.b16 %v4929, %v4928
        %v4939 = vpack.c.b16 %v4931, %v4930
        %4948 = vrot.lane.b32.xlu0 %v3656, 96
        %v4949 = vpop.permute.xlu0 %4948
        %4950 = vrot.lane.b32.xlu0 %v3657, 96
        %v4951 = vpop.permute.xlu0 %4950
        %4952 = vrot.lane.b32.xlu0 %v3658, 96
        %v4953 = vpop.permute.xlu0 %4952
        %4954 = vrot.lane.b32.xlu0 %v3659, 96
        %v4955 = vpop.permute.xlu0 %4954
        %4956 = vrot.lane.b32.xlu0 %v3660, 96
        %v4957 = vpop.permute.xlu0 %4956
        %4958 = vrot.lane.b32.xlu0 %v3661, 96
        %v4959 = vpop.permute.xlu0 %4958
        %4960 = vrot.lane.b32.xlu0 %v3662, 96
        %v4961 = vpop.permute.xlu0 %4960
        %4962 = vrot.lane.b32.xlu0 %v3663, 96
        %v4963 = vpop.permute.xlu0 %4962
        %4972 = vmatpush.bf16.msra.mxu0 %v4963
        %4973 = vmatpush.bf16.msra.mxu0 %v4961
        %4974 = vmatpush.bf16.msra.mxu0 %v4959
        %4975 = vmatpush.bf16.msra.mxu0 %v4957
        %4976 = vmatpush.bf16.msra.mxu0 %v4955
        %4977 = vmatpush.bf16.msra.mxu0 %v4953
        %4978 = vmatpush.bf16.msra.mxu0 %v4951
        %4979 = vmatpush.bf16.msra.mxu0 %v4949
        %4980 = vmatmul.bf16.gmra.mxu0 %v4932
        %v4981 = vpop.f32.mrf.mxu0
        %v4982 = vadd.f32 0.0, %v4981
        %v4983 = vpop.f32.mrf.mxu0
        %v4984 = vadd.f32 0.0, %v4983
        %4985 = vmatmul.bf16.gmra.mxu0 %v4933
        %v4986 = vpop.f32.mrf.mxu0
        %v4987 = vadd.f32 0.0, %v4986
        %v4988 = vpop.f32.mrf.mxu0
        %v4989 = vadd.f32 0.0, %v4988
        %4990 = vmatmul.bf16.gmra.mxu0 %v4934
        %v4991 = vpop.f32.mrf.mxu0
        %v4992 = vadd.f32 0.0, %v4991
        %v4993 = vpop.f32.mrf.mxu0
        %v4994 = vadd.f32 0.0, %v4993
        %4995 = vmatmul.bf16.gmra.mxu0 %v4935
        %v4996 = vpop.f32.mrf.mxu0
        %v4997 = vadd.f32 0.0, %v4996
        %v4998 = vpop.f32.mrf.mxu0
        %v4999 = vadd.f32 0.0, %v4998
        %5000 = vmatmul.bf16.gmra.mxu0 %v4936
        %v5001 = vpop.f32.mrf.mxu0
        %v5002 = vadd.f32 0.0, %v5001
        %v5003 = vpop.f32.mrf.mxu0
        %v5004 = vadd.f32 0.0, %v5003
        %5005 = vmatmul.bf16.gmra.mxu0 %v4937
        %v5006 = vpop.f32.mrf.mxu0
        %v5007 = vadd.f32 0.0, %v5006
        %v5008 = vpop.f32.mrf.mxu0
        %v5009 = vadd.f32 0.0, %v5008
        %5010 = vmatmul.bf16.gmra.mxu0 %v4938
        %v5011 = vpop.f32.mrf.mxu0
        %v5012 = vadd.f32 0.0, %v5011
        %v5013 = vpop.f32.mrf.mxu0
        %v5014 = vadd.f32 0.0, %v5013
        %5015 = vmatmul.bf16.gmra.mxu0 %v4939
        %v5016 = vpop.f32.mrf.mxu0
        %v5017 = vadd.f32 0.0, %v5016
        %v5018 = vpop.f32.mrf.mxu0
        %v5019 = vadd.f32 0.0, %v5018
        %5020 = vdwg.mxu0
        %5021 = vrot.lane.b32.xlu0 %v2308, 64
        %v5022 = vpop.permute.xlu0 %5021
        %5023 = vrot.lane.b32.xlu0 %v2309, 64
        %v5024 = vpop.permute.xlu0 %5023
        %5025 = vrot.lane.b32.xlu0 %v2310, 64
        %v5026 = vpop.permute.xlu0 %5025
        %5027 = vrot.lane.b32.xlu0 %v2311, 64
        %v5028 = vpop.permute.xlu0 %5027
        %5029 = vrot.lane.b32.xlu0 %v2312, 64
        %v5030 = vpop.permute.xlu0 %5029
        %5031 = vrot.lane.b32.xlu0 %v2313, 64
        %v5032 = vpop.permute.xlu0 %5031
        %5033 = vrot.lane.b32.xlu0 %v2314, 64
        %v5034 = vpop.permute.xlu0 %5033
        %5035 = vrot.lane.b32.xlu0 %v2315, 64
        %v5036 = vpop.permute.xlu0 %5035
        %5037 = vrot.lane.b32.xlu0 %v2348, 64
        %v5038 = vpop.permute.xlu0 %5037
        %5039 = vrot.lane.b32.xlu0 %v2349, 64
        %v5040 = vpop.permute.xlu0 %5039
        %5041 = vrot.lane.b32.xlu0 %v2350, 64
        %v5042 = vpop.permute.xlu0 %5041
        %5043 = vrot.lane.b32.xlu0 %v2351, 64
        %v5044 = vpop.permute.xlu0 %5043
        %5045 = vrot.lane.b32.xlu0 %v2352, 64
        %v5046 = vpop.permute.xlu0 %5045
        %5047 = vrot.lane.b32.xlu0 %v2353, 64
        %v5048 = vpop.permute.xlu0 %5047
        %5049 = vrot.lane.b32.xlu0 %v2354, 64
        %v5050 = vpop.permute.xlu0 %5049
        %5051 = vrot.lane.b32.xlu0 %v2355, 64
        %v5052 = vpop.permute.xlu0 %5051
        %v5054 = vsel %vm2356, %v5022, 0
        %v5057 = vsel %vm2356, %v5024, 0
        %v5060 = vsel %vm2356, %v5026, 0
        %v5063 = vsel %vm2356, %v5028, 0
        %v5066 = vsel %vm2356, %v5030, 0
        %v5069 = vsel %vm2356, %v5032, 0
        %v5072 = vsel %vm2356, %v5034, 0
        %v5075 = vsel %vm2356, %v5036, 0
        %v5078 = vsel %vm2356, %v5038, 0
        %v5081 = vsel %vm2356, %v5040, 0
        %v5084 = vsel %vm2356, %v5042, 0
        %v5087 = vsel %vm2356, %v5044, 0
        %v5090 = vsel %vm2356, %v5046, 0
        %v5093 = vsel %vm2356, %v5048, 0
        %v5096 = vsel %vm2356, %v5050, 0
        %v5099 = vsel %vm2356, %v5052, 0
        %5101 = vmatpush.bf16.xpose.msra.mxu0 %v5099
        %5102 = vmatpush.bf16.xpose.msra.mxu0 %v5096
        %5103 = vmatpush.bf16.xpose.msra.mxu0 %v5093
        %5104 = vmatpush.bf16.xpose.msra.mxu0 %v5090
        %5105 = vmatpush.bf16.xpose.msra.mxu0 %v5087
        %5106 = vmatpush.bf16.xpose.msra.mxu0 %v5084
        %5107 = vmatpush.bf16.xpose.msra.mxu0 %v5081
        %5108 = vmatpush.bf16.xpose.msra.mxu0 %v5078
        %5109 = vmatmul.bf16.gmra.mxu0 %v5054
        %v5110 = vpop.f32.mrf.mxu0
        %v5111 = vadd.f32 0.0, %v5110
        %v5112 = vpop.f32.mrf.mxu0
        %v5113 = vadd.f32 0.0, %v5112
        %5114 = vmatmul.bf16.gmra.mxu0 %v5057
        %v5115 = vpop.f32.mrf.mxu0
        %v5116 = vadd.f32 0.0, %v5115
        %v5117 = vpop.f32.mrf.mxu0
        %v5118 = vadd.f32 0.0, %v5117
        %5119 = vmatmul.bf16.gmra.mxu0 %v5060
        %v5120 = vpop.f32.mrf.mxu0
        %v5121 = vadd.f32 0.0, %v5120
        %v5122 = vpop.f32.mrf.mxu0
        %v5123 = vadd.f32 0.0, %v5122
        %5124 = vmatmul.bf16.gmra.mxu0 %v5063
        %v5125 = vpop.f32.mrf.mxu0
        %v5126 = vadd.f32 0.0, %v5125
        %v5127 = vpop.f32.mrf.mxu0
        %v5128 = vadd.f32 0.0, %v5127
        %5129 = vmatmul.bf16.gmra.mxu0 %v5066
        %v5130 = vpop.f32.mrf.mxu0
        %v5131 = vadd.f32 0.0, %v5130
        %v5132 = vpop.f32.mrf.mxu0
        %v5133 = vadd.f32 0.0, %v5132
        %5134 = vmatmul.bf16.gmra.mxu0 %v5069
        %v5135 = vpop.f32.mrf.mxu0
        %v5136 = vadd.f32 0.0, %v5135
        %v5137 = vpop.f32.mrf.mxu0
        %v5138 = vadd.f32 0.0, %v5137
        %5139 = vmatmul.bf16.gmra.mxu0 %v5072
        %v5140 = vpop.f32.mrf.mxu0
        %v5141 = vadd.f32 0.0, %v5140
        %v5142 = vpop.f32.mrf.mxu0
        %v5143 = vadd.f32 0.0, %v5142
        %5144 = vmatmul.bf16.gmra.mxu0 %v5075
        %v5145 = vpop.f32.mrf.mxu0
        %v5146 = vadd.f32 0.0, %v5145
        %v5147 = vpop.f32.mrf.mxu0
        %v5148 = vadd.f32 0.0, %v5147
        %5149 = vdwg.mxu0
        %5150 = vrot.lane.b32.xlu0 %v2486, 64
        %v5151 = vpop.permute.xlu0 %5150
        %5152 = vrot.lane.b32.xlu0 %v2487, 64
        %v5153 = vpop.permute.xlu0 %5152
        %5154 = vrot.lane.b32.xlu0 %v2488, 64
        %v5155 = vpop.permute.xlu0 %5154
        %5156 = vrot.lane.b32.xlu0 %v2489, 64
        %v5157 = vpop.permute.xlu0 %5156
        %5158 = vrot.lane.b32.xlu0 %v2490, 64
        %v5159 = vpop.permute.xlu0 %5158
        %5160 = vrot.lane.b32.xlu0 %v2491, 64
        %v5161 = vpop.permute.xlu0 %5160
        %5162 = vrot.lane.b32.xlu0 %v2492, 64
        %v5163 = vpop.permute.xlu0 %5162
        %5164 = vrot.lane.b32.xlu0 %v2493, 64
        %v5165 = vpop.permute.xlu0 %5164
        %5166 = vrot.lane.b32.xlu0 %v2526, 64
        %v5167 = vpop.permute.xlu0 %5166
        %5168 = vrot.lane.b32.xlu0 %v2527, 64
        %v5169 = vpop.permute.xlu0 %5168
        %5170 = vrot.lane.b32.xlu0 %v2528, 64
        %v5171 = vpop.permute.xlu0 %5170
        %5172 = vrot.lane.b32.xlu0 %v2529, 64
        %v5173 = vpop.permute.xlu0 %5172
        %5174 = vrot.lane.b32.xlu0 %v2530, 64
        %v5175 = vpop.permute.xlu0 %5174
        %5176 = vrot.lane.b32.xlu0 %v2531, 64
        %v5177 = vpop.permute.xlu0 %5176
        %5178 = vrot.lane.b32.xlu0 %v2532, 64
        %v5179 = vpop.permute.xlu0 %5178
        %5180 = vrot.lane.b32.xlu0 %v2533, 64
        %v5181 = vpop.permute.xlu0 %5180
        %v5183 = vsel %vm2356, %v5151, 0
        %v5186 = vsel %vm2356, %v5153, 0
        %v5189 = vsel %vm2356, %v5155, 0
        %v5192 = vsel %vm2356, %v5157, 0
        %v5195 = vsel %vm2356, %v5159, 0
        %v5198 = vsel %vm2356, %v5161, 0
        %v5201 = vsel %vm2356, %v5163, 0
        %v5204 = vsel %vm2356, %v5165, 0
        %v5207 = vsel %vm2356, %v5167, 0
        %v5210 = vsel %vm2356, %v5169, 0
        %v5213 = vsel %vm2356, %v5171, 0
        %v5216 = vsel %vm2356, %v5173, 0
        %v5219 = vsel %vm2356, %v5175, 0
        %v5222 = vsel %vm2356, %v5177, 0
        %v5225 = vsel %vm2356, %v5179, 0
        %v5228 = vsel %vm2356, %v5181, 0
        %5230 = vmatpush.bf16.xpose.msra.mxu0 %v5228
        %5231 = vmatpush.bf16.xpose.msra.mxu0 %v5225
        %5232 = vmatpush.bf16.xpose.msra.mxu0 %v5222
        %5233 = vmatpush.bf16.xpose.msra.mxu0 %v5219
        %5234 = vmatpush.bf16.xpose.msra.mxu0 %v5216
        %5235 = vmatpush.bf16.xpose.msra.mxu0 %v5213
        %5236 = vmatpush.bf16.xpose.msra.mxu0 %v5210
        %5237 = vmatpush.bf16.xpose.msra.mxu0 %v5207
        %5238 = vmatmul.bf16.gmra.mxu0 %v5183
        %v5239 = vpop.f32.mrf.mxu0
        %v5240 = vadd.f32 0.0, %v5239
        %v5241 = vpop.f32.mrf.mxu0
        %v5242 = vadd.f32 0.0, %v5241
        %5243 = vmatmul.bf16.gmra.mxu0 %v5186
        %v5244 = vpop.f32.mrf.mxu0
        %v5245 = vadd.f32 0.0, %v5244
        %v5246 = vpop.f32.mrf.mxu0
        %v5247 = vadd.f32 0.0, %v5246
        %5248 = vmatmul.bf16.gmra.mxu0 %v5189
        %v5249 = vpop.f32.mrf.mxu0
        %v5250 = vadd.f32 0.0, %v5249
        %v5251 = vpop.f32.mrf.mxu0
        %v5252 = vadd.f32 0.0, %v5251
        %5253 = vmatmul.bf16.gmra.mxu0 %v5192
        %v5254 = vpop.f32.mrf.mxu0
        %v5255 = vadd.f32 0.0, %v5254
        %v5256 = vpop.f32.mrf.mxu0
        %v5257 = vadd.f32 0.0, %v5256
        %5258 = vmatmul.bf16.gmra.mxu0 %v5195
        %v5259 = vpop.f32.mrf.mxu0
        %v5260 = vadd.f32 0.0, %v5259
        %v5261 = vpop.f32.mrf.mxu0
        %v5262 = vadd.f32 0.0, %v5261
        %5263 = vmatmul.bf16.gmra.mxu0 %v5198
        %v5264 = vpop.f32.mrf.mxu0
        %v5265 = vadd.f32 0.0, %v5264
        %v5266 = vpop.f32.mrf.mxu0
        %v5267 = vadd.f32 0.0, %v5266
        %5268 = vmatmul.bf16.gmra.mxu0 %v5201
        %v5269 = vpop.f32.mrf.mxu0
        %v5270 = vadd.f32 0.0, %v5269
        %v5271 = vpop.f32.mrf.mxu0
        %v5272 = vadd.f32 0.0, %v5271
        %5273 = vmatmul.bf16.gmra.mxu0 %v5204
        %v5274 = vpop.f32.mrf.mxu0
        %v5275 = vadd.f32 0.0, %v5274
        %v5276 = vpop.f32.mrf.mxu0
        %v5277 = vadd.f32 0.0, %v5276
        %5278 = vdwg.mxu0
        %v5279 = vmul.f32 %v5111, 0.17677669
        %v5280 = vmul.f32 %v5113, 0.17677669
        %v5281 = vmul.f32 %v5116, 0.17677669
        %v5282 = vmul.f32 %v5118, 0.17677669
        %v5283 = vmul.f32 %v5121, 0.17677669
        %v5284 = vmul.f32 %v5123, 0.17677669
        %v5285 = vmul.f32 %v5126, 0.17677669
        %v5286 = vmul.f32 %v5128, 0.17677669
        %v5287 = vmul.f32 %v5131, 0.17677669
        %v5288 = vmul.f32 %v5133, 0.17677669
        %v5289 = vmul.f32 %v5136, 0.17677669
        %v5290 = vmul.f32 %v5138, 0.17677669
        %v5291 = vmul.f32 %v5141, 0.17677669
        %v5292 = vmul.f32 %v5143, 0.17677669
        %v5293 = vmul.f32 %v5146, 0.17677669
        %v5294 = vmul.f32 %v5148, 0.17677669
        %v5295 = vmul.f32 %v5240, 0.17677669
        %v5296 = vmul.f32 %v5242, 0.17677669
        %v5297 = vmul.f32 %v5245, 0.17677669
        %v5298 = vmul.f32 %v5247, 0.17677669
        %v5299 = vmul.f32 %v5250, 0.17677669
        %v5300 = vmul.f32 %v5252, 0.17677669
        %v5301 = vmul.f32 %v5255, 0.17677669
        %v5302 = vmul.f32 %v5257, 0.17677669
        %v5303 = vmul.f32 %v5260, 0.17677669
        %v5304 = vmul.f32 %v5262, 0.17677669
        %v5305 = vmul.f32 %v5265, 0.17677669
        %v5306 = vmul.f32 %v5267, 0.17677669
        %v5307 = vmul.f32 %v5270, 0.17677669
        %v5308 = vmul.f32 %v5272, 0.17677669
        %v5309 = vmul.f32 %v5275, 0.17677669
        %v5310 = vmul.f32 %v5277, 0.17677669
        %5311 = vmax.xlane.f32.xlu0 %v5279
        %v5312 = vpop.xlane.xlu0 %5311
        %5313 = vmax.xlane.f32.xlu0 %v5280
        %v5314 = vpop.xlane.xlu0 %5313
        %5315 = vmax.xlane.f32.xlu0 %v5281
        %v5316 = vpop.xlane.xlu0 %5315
        %5317 = vmax.xlane.f32.xlu0 %v5282
        %v5318 = vpop.xlane.xlu0 %5317
        %5319 = vmax.xlane.f32.xlu0 %v5283
        %v5320 = vpop.xlane.xlu0 %5319
        %5321 = vmax.xlane.f32.xlu0 %v5284
        %v5322 = vpop.xlane.xlu0 %5321
        %5323 = vmax.xlane.f32.xlu0 %v5285
        %v5324 = vpop.xlane.xlu0 %5323
        %5325 = vmax.xlane.f32.xlu0 %v5286
        %v5326 = vpop.xlane.xlu0 %5325
        %5327 = vmax.xlane.f32.xlu0 %v5287
        %v5328 = vpop.xlane.xlu0 %5327
        %5329 = vmax.xlane.f32.xlu0 %v5288
        %v5330 = vpop.xlane.xlu0 %5329
        %5331 = vmax.xlane.f32.xlu0 %v5289
        %v5332 = vpop.xlane.xlu0 %5331
        %5333 = vmax.xlane.f32.xlu0 %v5290
        %v5334 = vpop.xlane.xlu0 %5333
        %5335 = vmax.xlane.f32.xlu0 %v5291
        %v5336 = vpop.xlane.xlu0 %5335
        %5337 = vmax.xlane.f32.xlu0 %v5292
        %v5338 = vpop.xlane.xlu0 %5337
        %5339 = vmax.xlane.f32.xlu0 %v5293
        %v5340 = vpop.xlane.xlu0 %5339
        %5341 = vmax.xlane.f32.xlu0 %v5294
        %v5342 = vpop.xlane.xlu0 %5341
        %5343 = vmax.xlane.f32.xlu0 %v5295
        %v5344 = vpop.xlane.xlu0 %5343
        %5345 = vmax.xlane.f32.xlu0 %v5296
        %v5346 = vpop.xlane.xlu0 %5345
        %5347 = vmax.xlane.f32.xlu0 %v5297
        %v5348 = vpop.xlane.xlu0 %5347
        %5349 = vmax.xlane.f32.xlu0 %v5298
        %v5350 = vpop.xlane.xlu0 %5349
        %5351 = vmax.xlane.f32.xlu0 %v5299
        %v5352 = vpop.xlane.xlu0 %5351
        %5353 = vmax.xlane.f32.xlu0 %v5300
        %v5354 = vpop.xlane.xlu0 %5353
        %5355 = vmax.xlane.f32.xlu0 %v5301
        %v5356 = vpop.xlane.xlu0 %5355
        %5357 = vmax.xlane.f32.xlu0 %v5302
        %v5358 = vpop.xlane.xlu0 %5357
        %5359 = vmax.xlane.f32.xlu0 %v5303
        %v5360 = vpop.xlane.xlu0 %5359
        %5361 = vmax.xlane.f32.xlu0 %v5304
        %v5362 = vpop.xlane.xlu0 %5361
        %5363 = vmax.xlane.f32.xlu0 %v5305
        %v5364 = vpop.xlane.xlu0 %5363
        %5365 = vmax.xlane.f32.xlu0 %v5306
        %v5366 = vpop.xlane.xlu0 %5365
        %5367 = vmax.xlane.f32.xlu0 %v5307
        %v5368 = vpop.xlane.xlu0 %5367
        %5369 = vmax.xlane.f32.xlu0 %v5308
        %v5370 = vpop.xlane.xlu0 %5369
        %5371 = vmax.xlane.f32.xlu0 %v5309
        %v5372 = vpop.xlane.xlu0 %5371
        %5373 = vmax.xlane.f32.xlu0 %v5310
        %v5374 = vpop.xlane.xlu0 %5373
        %v5375 = vsub.f32 %v5279, %v5312
        %v5376 = vsub.f32 %v5280, %v5314
        %v5377 = vsub.f32 %v5281, %v5316
        %v5378 = vsub.f32 %v5282, %v5318
        %v5379 = vsub.f32 %v5283, %v5320
        %v5380 = vsub.f32 %v5284, %v5322
        %v5381 = vsub.f32 %v5285, %v5324
        %v5382 = vsub.f32 %v5286, %v5326
        %v5383 = vsub.f32 %v5287, %v5328
        %v5384 = vsub.f32 %v5288, %v5330
        %v5385 = vsub.f32 %v5289, %v5332
        %v5386 = vsub.f32 %v5290, %v5334
        %v5387 = vsub.f32 %v5291, %v5336
        %v5388 = vsub.f32 %v5292, %v5338
        %v5389 = vsub.f32 %v5293, %v5340
        %v5390 = vsub.f32 %v5294, %v5342
        %v5391 = vsub.f32 %v5295, %v5344
        %v5392 = vsub.f32 %v5296, %v5346
        %v5393 = vsub.f32 %v5297, %v5348
        %v5394 = vsub.f32 %v5298, %v5350
        %v5395 = vsub.f32 %v5299, %v5352
        %v5396 = vsub.f32 %v5300, %v5354
        %v5397 = vsub.f32 %v5301, %v5356
        %v5398 = vsub.f32 %v5302, %v5358
        %v5399 = vsub.f32 %v5303, %v5360
        %v5400 = vsub.f32 %v5304, %v5362
        %v5401 = vsub.f32 %v5305, %v5364
        %v5402 = vsub.f32 %v5306, %v5366
        %v5403 = vsub.f32 %v5307, %v5368
        %v5404 = vsub.f32 %v5308, %v5370
        %v5405 = vsub.f32 %v5309, %v5372
        %v5406 = vsub.f32 %v5310, %v5374
        %v5407 = vmul.f32 %v5375, 1.442695
        %v5408 = vpow.pop %v5407
        %v5409 = vmul.f32 %v5376, 1.442695
        %v5410 = vpow.pop %v5409
        %v5411 = vmul.f32 %v5377, 1.442695
        %v5412 = vpow.pop %v5411
        %v5413 = vmul.f32 %v5378, 1.442695
        %v5414 = vpow.pop %v5413
        %v5415 = vmul.f32 %v5379, 1.442695
        %v5416 = vpow.pop %v5415
        %v5417 = vmul.f32 %v5380, 1.442695
        %v5418 = vpow.pop %v5417
        %v5419 = vmul.f32 %v5381, 1.442695
        %v5420 = vpow.pop %v5419
        %v5421 = vmul.f32 %v5382, 1.442695
        %v5422 = vpow.pop %v5421
        %v5423 = vmul.f32 %v5383, 1.442695
        %v5424 = vpow.pop %v5423
        %v5425 = vmul.f32 %v5384, 1.442695
        %v5426 = vpow.pop %v5425
        %v5427 = vmul.f32 %v5385, 1.442695
        %v5428 = vpow.pop %v5427
        %v5429 = vmul.f32 %v5386, 1.442695
        %v5430 = vpow.pop %v5429
        %v5431 = vmul.f32 %v5387, 1.442695
        %v5432 = vpow.pop %v5431
        %v5433 = vmul.f32 %v5388, 1.442695
        %v5434 = vpow.pop %v5433
        %v5435 = vmul.f32 %v5389, 1.442695
        %v5436 = vpow.pop %v5435
        %v5437 = vmul.f32 %v5390, 1.442695
        %v5438 = vpow.pop %v5437
        %v5439 = vmul.f32 %v5391, 1.442695
        %v5440 = vpow.pop %v5439
        %v5441 = vmul.f32 %v5392, 1.442695
        %v5442 = vpow.pop %v5441
        %v5443 = vmul.f32 %v5393, 1.442695
        %v5444 = vpow.pop %v5443
        %v5445 = vmul.f32 %v5394, 1.442695
        %v5446 = vpow.pop %v5445
        %v5447 = vmul.f32 %v5395, 1.442695
        %v5448 = vpow.pop %v5447
        %v5449 = vmul.f32 %v5396, 1.442695
        %v5450 = vpow.pop %v5449
        %v5451 = vmul.f32 %v5397, 1.442695
        %v5452 = vpow.pop %v5451
        %v5453 = vmul.f32 %v5398, 1.442695
        %v5454 = vpow.pop %v5453
        %v5455 = vmul.f32 %v5399, 1.442695
        %v5456 = vpow.pop %v5455
        %v5457 = vmul.f32 %v5400, 1.442695
        %v5458 = vpow.pop %v5457
        %v5459 = vmul.f32 %v5401, 1.442695
        %v5460 = vpow.pop %v5459
        %v5461 = vmul.f32 %v5402, 1.442695
        %v5462 = vpow.pop %v5461
        %v5463 = vmul.f32 %v5403, 1.442695
        %v5464 = vpow.pop %v5463
        %v5465 = vmul.f32 %v5404, 1.442695
        %v5466 = vpow.pop %v5465
        %v5467 = vmul.f32 %v5405, 1.442695
        %v5468 = vpow.pop %v5467
        %v5469 = vmul.f32 %v5406, 1.442695
        %v5470 = vpow.pop %v5469
        %5471 = vadd.xlane.f32.xlu0 %v5408
        %v5472 = vpop.xlane.xlu0 %5471
        %5473 = vadd.xlane.f32.xlu0 %v5410
        %v5474 = vpop.xlane.xlu0 %5473
        %5475 = vadd.xlane.f32.xlu0 %v5412
        %v5476 = vpop.xlane.xlu0 %5475
        %5477 = vadd.xlane.f32.xlu0 %v5414
        %v5478 = vpop.xlane.xlu0 %5477
        %5479 = vadd.xlane.f32.xlu0 %v5416
        %v5480 = vpop.xlane.xlu0 %5479
        %5481 = vadd.xlane.f32.xlu0 %v5418
        %v5482 = vpop.xlane.xlu0 %5481
        %5483 = vadd.xlane.f32.xlu0 %v5420
        %v5484 = vpop.xlane.xlu0 %5483
        %5485 = vadd.xlane.f32.xlu0 %v5422
        %v5486 = vpop.xlane.xlu0 %5485
        %5487 = vadd.xlane.f32.xlu0 %v5424
        %v5488 = vpop.xlane.xlu0 %5487
        %5489 = vadd.xlane.f32.xlu0 %v5426
        %v5490 = vpop.xlane.xlu0 %5489
        %5491 = vadd.xlane.f32.xlu0 %v5428
        %v5492 = vpop.xlane.xlu0 %5491
        %5493 = vadd.xlane.f32.xlu0 %v5430
        %v5494 = vpop.xlane.xlu0 %5493
        %5495 = vadd.xlane.f32.xlu0 %v5432
        %v5496 = vpop.xlane.xlu0 %5495
        %5497 = vadd.xlane.f32.xlu0 %v5434
        %v5498 = vpop.xlane.xlu0 %5497
        %5499 = vadd.xlane.f32.xlu0 %v5436
        %v5500 = vpop.xlane.xlu0 %5499
        %5501 = vadd.xlane.f32.xlu0 %v5438
        %v5502 = vpop.xlane.xlu0 %5501
        %5503 = vadd.xlane.f32.xlu0 %v5440
        %v5504 = vpop.xlane.xlu0 %5503
        %5505 = vadd.xlane.f32.xlu0 %v5442
        %v5506 = vpop.xlane.xlu0 %5505
        %5507 = vadd.xlane.f32.xlu0 %v5444
        %v5508 = vpop.xlane.xlu0 %5507
        %5509 = vadd.xlane.f32.xlu0 %v5446
        %v5510 = vpop.xlane.xlu0 %5509
        %5511 = vadd.xlane.f32.xlu0 %v5448
        %v5512 = vpop.xlane.xlu0 %5511
        %5513 = vadd.xlane.f32.xlu0 %v5450
        %v5514 = vpop.xlane.xlu0 %5513
        %5515 = vadd.xlane.f32.xlu0 %v5452
        %v5516 = vpop.xlane.xlu0 %5515
        %5517 = vadd.xlane.f32.xlu0 %v5454
        %v5518 = vpop.xlane.xlu0 %5517
        %5519 = vadd.xlane.f32.xlu0 %v5456
        %v5520 = vpop.xlane.xlu0 %5519
        %5521 = vadd.xlane.f32.xlu0 %v5458
        %v5522 = vpop.xlane.xlu0 %5521
        %5523 = vadd.xlane.f32.xlu0 %v5460
        %v5524 = vpop.xlane.xlu0 %5523
        %5525 = vadd.xlane.f32.xlu0 %v5462
        %v5526 = vpop.xlane.xlu0 %5525
        %5527 = vadd.xlane.f32.xlu0 %v5464
        %v5528 = vpop.xlane.xlu0 %5527
        %5529 = vadd.xlane.f32.xlu0 %v5466
        %v5530 = vpop.xlane.xlu0 %5529
        %5531 = vadd.xlane.f32.xlu0 %v5468
        %v5532 = vpop.xlane.xlu0 %5531
        %5533 = vadd.xlane.f32.xlu0 %v5470
        %v5534 = vpop.xlane.xlu0 %5533
        %v5535 = vrcp.pop %v5472
        %v5536 = vmul.f32 %v5472, %v5535
        %v5537 = vsub.f32 1.0, %v5536
        %v5538 = vmul.f32 %v5535, %v5537
        %v5539 = vadd.f32 %v5535, %v5538
        %vm5540 = vweird.f32 %v5472
        %vm5541 = vweird.f32 %v5535
        %vm5542 = vmor %vm5540, %vm5541
        %v5543 = vsel %vm5542, %v5535, %v5539
        %v5544 = vand.u32 2147483647, %v5472
        %vm5545 = vcmp.eq.f32.partialorder %v5544, 8.507059e+37
        %v5546 = vand.u32 %v5472, 2147483648
        %v5547 = vor.u32 1.1754944e-38, %v5546
        %v5548 = vsel %vm5545, %v5547, %v5543
        %v5549 = vmul.f32 1.0, %v5548
        %v5550 = vrcp.pop %v5474
        %v5551 = vmul.f32 %v5474, %v5550
        %v5552 = vsub.f32 1.0, %v5551
        %v5553 = vmul.f32 %v5550, %v5552
        %v5554 = vadd.f32 %v5550, %v5553
        %vm5555 = vweird.f32 %v5474
        %vm5556 = vweird.f32 %v5550
        %vm5557 = vmor %vm5555, %vm5556
        %v5558 = vsel %vm5557, %v5550, %v5554
        %v5559 = vand.u32 2147483647, %v5474
        %vm5560 = vcmp.eq.f32.partialorder %v5559, 8.507059e+37
        %v5561 = vand.u32 %v5474, 2147483648
        %v5562 = vor.u32 1.1754944e-38, %v5561
        %v5563 = vsel %vm5560, %v5562, %v5558
        %v5564 = vmul.f32 1.0, %v5563
        %v5565 = vrcp.pop %v5476
        %v5566 = vmul.f32 %v5476, %v5565
        %v5567 = vsub.f32 1.0, %v5566
        %v5568 = vmul.f32 %v5565, %v5567
        %v5569 = vadd.f32 %v5565, %v5568
        %vm5570 = vweird.f32 %v5476
        %vm5571 = vweird.f32 %v5565
        %vm5572 = vmor %vm5570, %vm5571
        %v5573 = vsel %vm5572, %v5565, %v5569
        %v5574 = vand.u32 2147483647, %v5476
        %vm5575 = vcmp.eq.f32.partialorder %v5574, 8.507059e+37
        %v5576 = vand.u32 %v5476, 2147483648
        %v5577 = vor.u32 1.1754944e-38, %v5576
        %v5578 = vsel %vm5575, %v5577, %v5573
        %v5579 = vmul.f32 1.0, %v5578
        %v5580 = vrcp.pop %v5478
        %v5581 = vmul.f32 %v5478, %v5580
        %v5582 = vsub.f32 1.0, %v5581
        %v5583 = vmul.f32 %v5580, %v5582
        %v5584 = vadd.f32 %v5580, %v5583
        %vm5585 = vweird.f32 %v5478
        %vm5586 = vweird.f32 %v5580
        %vm5587 = vmor %vm5585, %vm5586
        %v5588 = vsel %vm5587, %v5580, %v5584
        %v5589 = vand.u32 2147483647, %v5478
        %vm5590 = vcmp.eq.f32.partialorder %v5589, 8.507059e+37
        %v5591 = vand.u32 %v5478, 2147483648
        %v5592 = vor.u32 1.1754944e-38, %v5591
        %v5593 = vsel %vm5590, %v5592, %v5588
        %v5594 = vmul.f32 1.0, %v5593
        %v5595 = vrcp.pop %v5480
        %v5596 = vmul.f32 %v5480, %v5595
        %v5597 = vsub.f32 1.0, %v5596
        %v5598 = vmul.f32 %v5595, %v5597
        %v5599 = vadd.f32 %v5595, %v5598
        %vm5600 = vweird.f32 %v5480
        %vm5601 = vweird.f32 %v5595
        %vm5602 = vmor %vm5600, %vm5601
        %v5603 = vsel %vm5602, %v5595, %v5599
        %v5604 = vand.u32 2147483647, %v5480
        %vm5605 = vcmp.eq.f32.partialorder %v5604, 8.507059e+37
        %v5606 = vand.u32 %v5480, 2147483648
        %v5607 = vor.u32 1.1754944e-38, %v5606
        %v5608 = vsel %vm5605, %v5607, %v5603
        %v5609 = vmul.f32 1.0, %v5608
        %v5610 = vrcp.pop %v5482
        %v5611 = vmul.f32 %v5482, %v5610
        %v5612 = vsub.f32 1.0, %v5611
        %v5613 = vmul.f32 %v5610, %v5612
        %v5614 = vadd.f32 %v5610, %v5613
        %vm5615 = vweird.f32 %v5482
        %vm5616 = vweird.f32 %v5610
        %vm5617 = vmor %vm5615, %vm5616
        %v5618 = vsel %vm5617, %v5610, %v5614
        %v5619 = vand.u32 2147483647, %v5482
        %vm5620 = vcmp.eq.f32.partialorder %v5619, 8.507059e+37
        %v5621 = vand.u32 %v5482, 2147483648
        %v5622 = vor.u32 1.1754944e-38, %v5621
        %v5623 = vsel %vm5620, %v5622, %v5618
        %v5624 = vmul.f32 1.0, %v5623
        %v5625 = vrcp.pop %v5484
        %v5626 = vmul.f32 %v5484, %v5625
        %v5627 = vsub.f32 1.0, %v5626
        %v5628 = vmul.f32 %v5625, %v5627
        %v5629 = vadd.f32 %v5625, %v5628
        %vm5630 = vweird.f32 %v5484
        %vm5631 = vweird.f32 %v5625
        %vm5632 = vmor %vm5630, %vm5631
        %v5633 = vsel %vm5632, %v5625, %v5629
        %v5634 = vand.u32 2147483647, %v5484
        %vm5635 = vcmp.eq.f32.partialorder %v5634, 8.507059e+37
        %v5636 = vand.u32 %v5484, 2147483648
        %v5637 = vor.u32 1.1754944e-38, %v5636
        %v5638 = vsel %vm5635, %v5637, %v5633
        %v5639 = vmul.f32 1.0, %v5638
        %v5640 = vrcp.pop %v5486
        %v5641 = vmul.f32 %v5486, %v5640
        %v5642 = vsub.f32 1.0, %v5641
        %v5643 = vmul.f32 %v5640, %v5642
        %v5644 = vadd.f32 %v5640, %v5643
        %vm5645 = vweird.f32 %v5486
        %vm5646 = vweird.f32 %v5640
        %vm5647 = vmor %vm5645, %vm5646
        %v5648 = vsel %vm5647, %v5640, %v5644
        %v5649 = vand.u32 2147483647, %v5486
        %vm5650 = vcmp.eq.f32.partialorder %v5649, 8.507059e+37
        %v5651 = vand.u32 %v5486, 2147483648
        %v5652 = vor.u32 1.1754944e-38, %v5651
        %v5653 = vsel %vm5650, %v5652, %v5648
        %v5654 = vmul.f32 1.0, %v5653
        %v5655 = vrcp.pop %v5488
        %v5656 = vmul.f32 %v5488, %v5655
        %v5657 = vsub.f32 1.0, %v5656
        %v5658 = vmul.f32 %v5655, %v5657
        %v5659 = vadd.f32 %v5655, %v5658
        %vm5660 = vweird.f32 %v5488
        %vm5661 = vweird.f32 %v5655
        %vm5662 = vmor %vm5660, %vm5661
        %v5663 = vsel %vm5662, %v5655, %v5659
        %v5664 = vand.u32 2147483647, %v5488
        %vm5665 = vcmp.eq.f32.partialorder %v5664, 8.507059e+37
        %v5666 = vand.u32 %v5488, 2147483648
        %v5667 = vor.u32 1.1754944e-38, %v5666
        %v5668 = vsel %vm5665, %v5667, %v5663
        %v5669 = vmul.f32 1.0, %v5668
        %v5670 = vrcp.pop %v5490
        %v5671 = vmul.f32 %v5490, %v5670
        %v5672 = vsub.f32 1.0, %v5671
        %v5673 = vmul.f32 %v5670, %v5672
        %v5674 = vadd.f32 %v5670, %v5673
        %vm5675 = vweird.f32 %v5490
        %vm5676 = vweird.f32 %v5670
        %vm5677 = vmor %vm5675, %vm5676
        %v5678 = vsel %vm5677, %v5670, %v5674
        %v5679 = vand.u32 2147483647, %v5490
        %vm5680 = vcmp.eq.f32.partialorder %v5679, 8.507059e+37
        %v5681 = vand.u32 %v5490, 2147483648
        %v5682 = vor.u32 1.1754944e-38, %v5681
        %v5683 = vsel %vm5680, %v5682, %v5678
        %v5684 = vmul.f32 1.0, %v5683
        %v5685 = vrcp.pop %v5492
        %v5686 = vmul.f32 %v5492, %v5685
        %v5687 = vsub.f32 1.0, %v5686
        %v5688 = vmul.f32 %v5685, %v5687
        %v5689 = vadd.f32 %v5685, %v5688
        %vm5690 = vweird.f32 %v5492
        %vm5691 = vweird.f32 %v5685
        %vm5692 = vmor %vm5690, %vm5691
        %v5693 = vsel %vm5692, %v5685, %v5689
        %v5694 = vand.u32 2147483647, %v5492
        %vm5695 = vcmp.eq.f32.partialorder %v5694, 8.507059e+37
        %v5696 = vand.u32 %v5492, 2147483648
        %v5697 = vor.u32 1.1754944e-38, %v5696
        %v5698 = vsel %vm5695, %v5697, %v5693
        %v5699 = vmul.f32 1.0, %v5698
        %v5700 = vrcp.pop %v5494
        %v5701 = vmul.f32 %v5494, %v5700
        %v5702 = vsub.f32 1.0, %v5701
        %v5703 = vmul.f32 %v5700, %v5702
        %v5704 = vadd.f32 %v5700, %v5703
        %vm5705 = vweird.f32 %v5494
        %vm5706 = vweird.f32 %v5700
        %vm5707 = vmor %vm5705, %vm5706
        %v5708 = vsel %vm5707, %v5700, %v5704
        %v5709 = vand.u32 2147483647, %v5494
        %vm5710 = vcmp.eq.f32.partialorder %v5709, 8.507059e+37
        %v5711 = vand.u32 %v5494, 2147483648
        %v5712 = vor.u32 1.1754944e-38, %v5711
        %v5713 = vsel %vm5710, %v5712, %v5708
        %v5714 = vmul.f32 1.0, %v5713
        %v5715 = vrcp.pop %v5496
        %v5716 = vmul.f32 %v5496, %v5715
        %v5717 = vsub.f32 1.0, %v5716
        %v5718 = vmul.f32 %v5715, %v5717
        %v5719 = vadd.f32 %v5715, %v5718
        %vm5720 = vweird.f32 %v5496
        %vm5721 = vweird.f32 %v5715
        %vm5722 = vmor %vm5720, %vm5721
        %v5723 = vsel %vm5722, %v5715, %v5719
        %v5724 = vand.u32 2147483647, %v5496
        %vm5725 = vcmp.eq.f32.partialorder %v5724, 8.507059e+37
        %v5726 = vand.u32 %v5496, 2147483648
        %v5727 = vor.u32 1.1754944e-38, %v5726
        %v5728 = vsel %vm5725, %v5727, %v5723
        %v5729 = vmul.f32 1.0, %v5728
        %v5730 = vrcp.pop %v5498
        %v5731 = vmul.f32 %v5498, %v5730
        %v5732 = vsub.f32 1.0, %v5731
        %v5733 = vmul.f32 %v5730, %v5732
        %v5734 = vadd.f32 %v5730, %v5733
        %vm5735 = vweird.f32 %v5498
        %vm5736 = vweird.f32 %v5730
        %vm5737 = vmor %vm5735, %vm5736
        %v5738 = vsel %vm5737, %v5730, %v5734
        %v5739 = vand.u32 2147483647, %v5498
        %vm5740 = vcmp.eq.f32.partialorder %v5739, 8.507059e+37
        %v5741 = vand.u32 %v5498, 2147483648
        %v5742 = vor.u32 1.1754944e-38, %v5741
        %v5743 = vsel %vm5740, %v5742, %v5738
        %v5744 = vmul.f32 1.0, %v5743
        %v5745 = vrcp.pop %v5500
        %v5746 = vmul.f32 %v5500, %v5745
        %v5747 = vsub.f32 1.0, %v5746
        %v5748 = vmul.f32 %v5745, %v5747
        %v5749 = vadd.f32 %v5745, %v5748
        %vm5750 = vweird.f32 %v5500
        %vm5751 = vweird.f32 %v5745
        %vm5752 = vmor %vm5750, %vm5751
        %v5753 = vsel %vm5752, %v5745, %v5749
        %v5754 = vand.u32 2147483647, %v5500
        %vm5755 = vcmp.eq.f32.partialorder %v5754, 8.507059e+37
        %v5756 = vand.u32 %v5500, 2147483648
        %v5757 = vor.u32 1.1754944e-38, %v5756
        %v5758 = vsel %vm5755, %v5757, %v5753
        %v5759 = vmul.f32 1.0, %v5758
        %v5760 = vrcp.pop %v5502
        %v5761 = vmul.f32 %v5502, %v5760
        %v5762 = vsub.f32 1.0, %v5761
        %v5763 = vmul.f32 %v5760, %v5762
        %v5764 = vadd.f32 %v5760, %v5763
        %vm5765 = vweird.f32 %v5502
        %vm5766 = vweird.f32 %v5760
        %vm5767 = vmor %vm5765, %vm5766
        %v5768 = vsel %vm5767, %v5760, %v5764
        %v5769 = vand.u32 2147483647, %v5502
        %vm5770 = vcmp.eq.f32.partialorder %v5769, 8.507059e+37
        %v5771 = vand.u32 %v5502, 2147483648
        %v5772 = vor.u32 1.1754944e-38, %v5771
        %v5773 = vsel %vm5770, %v5772, %v5768
        %v5774 = vmul.f32 1.0, %v5773
        %v5775 = vrcp.pop %v5504
        %v5776 = vmul.f32 %v5504, %v5775
        %v5777 = vsub.f32 1.0, %v5776
        %v5778 = vmul.f32 %v5775, %v5777
        %v5779 = vadd.f32 %v5775, %v5778
        %vm5780 = vweird.f32 %v5504
        %vm5781 = vweird.f32 %v5775
        %vm5782 = vmor %vm5780, %vm5781
        %v5783 = vsel %vm5782, %v5775, %v5779
        %v5784 = vand.u32 2147483647, %v5504
        %vm5785 = vcmp.eq.f32.partialorder %v5784, 8.507059e+37
        %v5786 = vand.u32 %v5504, 2147483648
        %v5787 = vor.u32 1.1754944e-38, %v5786
        %v5788 = vsel %vm5785, %v5787, %v5783
        %v5789 = vmul.f32 1.0, %v5788
        %v5790 = vrcp.pop %v5506
        %v5791 = vmul.f32 %v5506, %v5790
        %v5792 = vsub.f32 1.0, %v5791
        %v5793 = vmul.f32 %v5790, %v5792
        %v5794 = vadd.f32 %v5790, %v5793
        %vm5795 = vweird.f32 %v5506
        %vm5796 = vweird.f32 %v5790
        %vm5797 = vmor %vm5795, %vm5796
        %v5798 = vsel %vm5797, %v5790, %v5794
        %v5799 = vand.u32 2147483647, %v5506
        %vm5800 = vcmp.eq.f32.partialorder %v5799, 8.507059e+37
        %v5801 = vand.u32 %v5506, 2147483648
        %v5802 = vor.u32 1.1754944e-38, %v5801
        %v5803 = vsel %vm5800, %v5802, %v5798
        %v5804 = vmul.f32 1.0, %v5803
        %v5805 = vrcp.pop %v5508
        %v5806 = vmul.f32 %v5508, %v5805
        %v5807 = vsub.f32 1.0, %v5806
        %v5808 = vmul.f32 %v5805, %v5807
        %v5809 = vadd.f32 %v5805, %v5808
        %vm5810 = vweird.f32 %v5508
        %vm5811 = vweird.f32 %v5805
        %vm5812 = vmor %vm5810, %vm5811
        %v5813 = vsel %vm5812, %v5805, %v5809
        %v5814 = vand.u32 2147483647, %v5508
        %vm5815 = vcmp.eq.f32.partialorder %v5814, 8.507059e+37
        %v5816 = vand.u32 %v5508, 2147483648
        %v5817 = vor.u32 1.1754944e-38, %v5816
        %v5818 = vsel %vm5815, %v5817, %v5813
        %v5819 = vmul.f32 1.0, %v5818
        %v5820 = vrcp.pop %v5510
        %v5821 = vmul.f32 %v5510, %v5820
        %v5822 = vsub.f32 1.0, %v5821
        %v5823 = vmul.f32 %v5820, %v5822
        %v5824 = vadd.f32 %v5820, %v5823
        %vm5825 = vweird.f32 %v5510
        %vm5826 = vweird.f32 %v5820
        %vm5827 = vmor %vm5825, %vm5826
        %v5828 = vsel %vm5827, %v5820, %v5824
        %v5829 = vand.u32 2147483647, %v5510
        %vm5830 = vcmp.eq.f32.partialorder %v5829, 8.507059e+37
        %v5831 = vand.u32 %v5510, 2147483648
        %v5832 = vor.u32 1.1754944e-38, %v5831
        %v5833 = vsel %vm5830, %v5832, %v5828
        %v5834 = vmul.f32 1.0, %v5833
        %v5835 = vrcp.pop %v5512
        %v5836 = vmul.f32 %v5512, %v5835
        %v5837 = vsub.f32 1.0, %v5836
        %v5838 = vmul.f32 %v5835, %v5837
        %v5839 = vadd.f32 %v5835, %v5838
        %vm5840 = vweird.f32 %v5512
        %vm5841 = vweird.f32 %v5835
        %vm5842 = vmor %vm5840, %vm5841
        %v5843 = vsel %vm5842, %v5835, %v5839
        %v5844 = vand.u32 2147483647, %v5512
        %vm5845 = vcmp.eq.f32.partialorder %v5844, 8.507059e+37
        %v5846 = vand.u32 %v5512, 2147483648
        %v5847 = vor.u32 1.1754944e-38, %v5846
        %v5848 = vsel %vm5845, %v5847, %v5843
        %v5849 = vmul.f32 1.0, %v5848
        %v5850 = vrcp.pop %v5514
        %v5851 = vmul.f32 %v5514, %v5850
        %v5852 = vsub.f32 1.0, %v5851
        %v5853 = vmul.f32 %v5850, %v5852
        %v5854 = vadd.f32 %v5850, %v5853
        %vm5855 = vweird.f32 %v5514
        %vm5856 = vweird.f32 %v5850
        %vm5857 = vmor %vm5855, %vm5856
        %v5858 = vsel %vm5857, %v5850, %v5854
        %v5859 = vand.u32 2147483647, %v5514
        %vm5860 = vcmp.eq.f32.partialorder %v5859, 8.507059e+37
        %v5861 = vand.u32 %v5514, 2147483648
        %v5862 = vor.u32 1.1754944e-38, %v5861
        %v5863 = vsel %vm5860, %v5862, %v5858
        %v5864 = vmul.f32 1.0, %v5863
        %v5865 = vrcp.pop %v5516
        %v5866 = vmul.f32 %v5516, %v5865
        %v5867 = vsub.f32 1.0, %v5866
        %v5868 = vmul.f32 %v5865, %v5867
        %v5869 = vadd.f32 %v5865, %v5868
        %vm5870 = vweird.f32 %v5516
        %vm5871 = vweird.f32 %v5865
        %vm5872 = vmor %vm5870, %vm5871
        %v5873 = vsel %vm5872, %v5865, %v5869
        %v5874 = vand.u32 2147483647, %v5516
        %vm5875 = vcmp.eq.f32.partialorder %v5874, 8.507059e+37
        %v5876 = vand.u32 %v5516, 2147483648
        %v5877 = vor.u32 1.1754944e-38, %v5876
        %v5878 = vsel %vm5875, %v5877, %v5873
        %v5879 = vmul.f32 1.0, %v5878
        %v5880 = vrcp.pop %v5518
        %v5881 = vmul.f32 %v5518, %v5880
        %v5882 = vsub.f32 1.0, %v5881
        %v5883 = vmul.f32 %v5880, %v5882
        %v5884 = vadd.f32 %v5880, %v5883
        %vm5885 = vweird.f32 %v5518
        %vm5886 = vweird.f32 %v5880
        %vm5887 = vmor %vm5885, %vm5886
        %v5888 = vsel %vm5887, %v5880, %v5884
        %v5889 = vand.u32 2147483647, %v5518
        %vm5890 = vcmp.eq.f32.partialorder %v5889, 8.507059e+37
        %v5891 = vand.u32 %v5518, 2147483648
        %v5892 = vor.u32 1.1754944e-38, %v5891
        %v5893 = vsel %vm5890, %v5892, %v5888
        %v5894 = vmul.f32 1.0, %v5893
        %v5895 = vrcp.pop %v5520
        %v5896 = vmul.f32 %v5520, %v5895
        %v5897 = vsub.f32 1.0, %v5896
        %v5898 = vmul.f32 %v5895, %v5897
        %v5899 = vadd.f32 %v5895, %v5898
        %vm5900 = vweird.f32 %v5520
        %vm5901 = vweird.f32 %v5895
        %vm5902 = vmor %vm5900, %vm5901
        %v5903 = vsel %vm5902, %v5895, %v5899
        %v5904 = vand.u32 2147483647, %v5520
        %vm5905 = vcmp.eq.f32.partialorder %v5904, 8.507059e+37
        %v5906 = vand.u32 %v5520, 2147483648
        %v5907 = vor.u32 1.1754944e-38, %v5906
        %v5908 = vsel %vm5905, %v5907, %v5903
        %v5909 = vmul.f32 1.0, %v5908
        %v5910 = vrcp.pop %v5522
        %v5911 = vmul.f32 %v5522, %v5910
        %v5912 = vsub.f32 1.0, %v5911
        %v5913 = vmul.f32 %v5910, %v5912
        %v5914 = vadd.f32 %v5910, %v5913
        %vm5915 = vweird.f32 %v5522
        %vm5916 = vweird.f32 %v5910
        %vm5917 = vmor %vm5915, %vm5916
        %v5918 = vsel %vm5917, %v5910, %v5914
        %v5919 = vand.u32 2147483647, %v5522
        %vm5920 = vcmp.eq.f32.partialorder %v5919, 8.507059e+37
        %v5921 = vand.u32 %v5522, 2147483648
        %v5922 = vor.u32 1.1754944e-38, %v5921
        %v5923 = vsel %vm5920, %v5922, %v5918
        %v5924 = vmul.f32 1.0, %v5923
        %v5925 = vrcp.pop %v5524
        %v5926 = vmul.f32 %v5524, %v5925
        %v5927 = vsub.f32 1.0, %v5926
        %v5928 = vmul.f32 %v5925, %v5927
        %v5929 = vadd.f32 %v5925, %v5928
        %vm5930 = vweird.f32 %v5524
        %vm5931 = vweird.f32 %v5925
        %vm5932 = vmor %vm5930, %vm5931
        %v5933 = vsel %vm5932, %v5925, %v5929
        %v5934 = vand.u32 2147483647, %v5524
        %vm5935 = vcmp.eq.f32.partialorder %v5934, 8.507059e+37
        %v5936 = vand.u32 %v5524, 2147483648
        %v5937 = vor.u32 1.1754944e-38, %v5936
        %v5938 = vsel %vm5935, %v5937, %v5933
        %v5939 = vmul.f32 1.0, %v5938
        %v5940 = vrcp.pop %v5526
        %v5941 = vmul.f32 %v5526, %v5940
        %v5942 = vsub.f32 1.0, %v5941
        %v5943 = vmul.f32 %v5940, %v5942
        %v5944 = vadd.f32 %v5940, %v5943
        %vm5945 = vweird.f32 %v5526
        %vm5946 = vweird.f32 %v5940
        %vm5947 = vmor %vm5945, %vm5946
        %v5948 = vsel %vm5947, %v5940, %v5944
        %v5949 = vand.u32 2147483647, %v5526
        %vm5950 = vcmp.eq.f32.partialorder %v5949, 8.507059e+37
        %v5951 = vand.u32 %v5526, 2147483648
        %v5952 = vor.u32 1.1754944e-38, %v5951
        %v5953 = vsel %vm5950, %v5952, %v5948
        %v5954 = vmul.f32 1.0, %v5953
        %v5955 = vrcp.pop %v5528
        %v5956 = vmul.f32 %v5528, %v5955
        %v5957 = vsub.f32 1.0, %v5956
        %v5958 = vmul.f32 %v5955, %v5957
        %v5959 = vadd.f32 %v5955, %v5958
        %vm5960 = vweird.f32 %v5528
        %vm5961 = vweird.f32 %v5955
        %vm5962 = vmor %vm5960, %vm5961
        %v5963 = vsel %vm5962, %v5955, %v5959
        %v5964 = vand.u32 2147483647, %v5528
        %vm5965 = vcmp.eq.f32.partialorder %v5964, 8.507059e+37
        %v5966 = vand.u32 %v5528, 2147483648
        %v5967 = vor.u32 1.1754944e-38, %v5966
        %v5968 = vsel %vm5965, %v5967, %v5963
        %v5969 = vmul.f32 1.0, %v5968
        %v5970 = vrcp.pop %v5530
        %v5971 = vmul.f32 %v5530, %v5970
        %v5972 = vsub.f32 1.0, %v5971
        %v5973 = vmul.f32 %v5970, %v5972
        %v5974 = vadd.f32 %v5970, %v5973
        %vm5975 = vweird.f32 %v5530
        %vm5976 = vweird.f32 %v5970
        %vm5977 = vmor %vm5975, %vm5976
        %v5978 = vsel %vm5977, %v5970, %v5974
        %v5979 = vand.u32 2147483647, %v5530
        %vm5980 = vcmp.eq.f32.partialorder %v5979, 8.507059e+37
        %v5981 = vand.u32 %v5530, 2147483648
        %v5982 = vor.u32 1.1754944e-38, %v5981
        %v5983 = vsel %vm5980, %v5982, %v5978
        %v5984 = vmul.f32 1.0, %v5983
        %v5985 = vrcp.pop %v5532
        %v5986 = vmul.f32 %v5532, %v5985
        %v5987 = vsub.f32 1.0, %v5986
        %v5988 = vmul.f32 %v5985, %v5987
        %v5989 = vadd.f32 %v5985, %v5988
        %vm5990 = vweird.f32 %v5532
        %vm5991 = vweird.f32 %v5985
        %vm5992 = vmor %vm5990, %vm5991
        %v5993 = vsel %vm5992, %v5985, %v5989
        %v5994 = vand.u32 2147483647, %v5532
        %vm5995 = vcmp.eq.f32.partialorder %v5994, 8.507059e+37
        %v5996 = vand.u32 %v5532, 2147483648
        %v5997 = vor.u32 1.1754944e-38, %v5996
        %v5998 = vsel %vm5995, %v5997, %v5993
        %v5999 = vmul.f32 1.0, %v5998
        %v6000 = vrcp.pop %v5534
        %v6001 = vmul.f32 %v5534, %v6000
        %v6002 = vsub.f32 1.0, %v6001
        %v6003 = vmul.f32 %v6000, %v6002
        %v6004 = vadd.f32 %v6000, %v6003
        %vm6005 = vweird.f32 %v5534
        %vm6006 = vweird.f32 %v6000
        %vm6007 = vmor %vm6005, %vm6006
        %v6008 = vsel %vm6007, %v6000, %v6004
        %v6009 = vand.u32 2147483647, %v5534
        %vm6010 = vcmp.eq.f32.partialorder %v6009, 8.507059e+37
        %v6011 = vand.u32 %v5534, 2147483648
        %v6012 = vor.u32 1.1754944e-38, %v6011
        %v6013 = vsel %vm6010, %v6012, %v6008
        %v6014 = vmul.f32 1.0, %v6013
        %v6015 = vmul.f32 %v5408, %v5549
        %v6016 = vmul.f32 %v5410, %v5564
        %v6017 = vmul.f32 %v5412, %v5579
        %v6018 = vmul.f32 %v5414, %v5594
        %v6019 = vmul.f32 %v5416, %v5609
        %v6020 = vmul.f32 %v5418, %v5624
        %v6021 = vmul.f32 %v5420, %v5639
        %v6022 = vmul.f32 %v5422, %v5654
        %v6023 = vmul.f32 %v5424, %v5669
        %v6024 = vmul.f32 %v5426, %v5684
        %v6025 = vmul.f32 %v5428, %v5699
        %v6026 = vmul.f32 %v5430, %v5714
        %v6027 = vmul.f32 %v5432, %v5729
        %v6028 = vmul.f32 %v5434, %v5744
        %v6029 = vmul.f32 %v5436, %v5759
        %v6030 = vmul.f32 %v5438, %v5774
        %v6031 = vmul.f32 %v5440, %v5789
        %v6032 = vmul.f32 %v5442, %v5804
        %v6033 = vmul.f32 %v5444, %v5819
        %v6034 = vmul.f32 %v5446, %v5834
        %v6035 = vmul.f32 %v5448, %v5849
        %v6036 = vmul.f32 %v5450, %v5864
        %v6037 = vmul.f32 %v5452, %v5879
        %v6038 = vmul.f32 %v5454, %v5894
        %v6039 = vmul.f32 %v5456, %v5909
        %v6040 = vmul.f32 %v5458, %v5924
        %v6041 = vmul.f32 %v5460, %v5939
        %v6042 = vmul.f32 %v5462, %v5954
        %v6043 = vmul.f32 %v5464, %v5969
        %v6044 = vmul.f32 %v5466, %v5984
        %v6045 = vmul.f32 %v5468, %v5999
        %v6046 = vmul.f32 %v5470, %v6014
        %v6047 = vpack.c.bf16 %v6015, %v6015
        %v6048 = vpack.c.bf16 %v6016, %v6016
        %v6049 = vpack.c.bf16 %v6017, %v6017
        %v6050 = vpack.c.bf16 %v6018, %v6018
        %v6051 = vpack.c.bf16 %v6019, %v6019
        %v6052 = vpack.c.bf16 %v6020, %v6020
        %v6053 = vpack.c.bf16 %v6021, %v6021
        %v6054 = vpack.c.bf16 %v6022, %v6022
        %v6055 = vpack.c.bf16 %v6023, %v6023
        %v6056 = vpack.c.bf16 %v6024, %v6024
        %v6057 = vpack.c.bf16 %v6025, %v6025
        %v6058 = vpack.c.bf16 %v6026, %v6026
        %v6059 = vpack.c.bf16 %v6027, %v6027
        %v6060 = vpack.c.bf16 %v6028, %v6028
        %v6061 = vpack.c.bf16 %v6029, %v6029
        %v6062 = vpack.c.bf16 %v6030, %v6030
        %v6063 = vpack.c.bf16 %v6031, %v6031
        %v6064 = vpack.c.bf16 %v6032, %v6032
        %v6065 = vpack.c.bf16 %v6033, %v6033
        %v6066 = vpack.c.bf16 %v6034, %v6034
        %v6067 = vpack.c.bf16 %v6035, %v6035
        %v6068 = vpack.c.bf16 %v6036, %v6036
        %v6069 = vpack.c.bf16 %v6037, %v6037
        %v6070 = vpack.c.bf16 %v6038, %v6038
        %v6071 = vpack.c.bf16 %v6039, %v6039
        %v6072 = vpack.c.bf16 %v6040, %v6040
        %v6073 = vpack.c.bf16 %v6041, %v6041
        %v6074 = vpack.c.bf16 %v6042, %v6042
        %v6075 = vpack.c.bf16 %v6043, %v6043
        %v6076 = vpack.c.bf16 %v6044, %v6044
        %v6077 = vpack.c.bf16 %v6045, %v6045
        %v6078 = vpack.c.bf16 %v6046, %v6046
        %v6095 = vunpack.c.l.b16 %v6047
        %v6096 = vunpack.c.l.b16 %v6048
        %v6097 = vunpack.c.l.b16 %v6049
        %v6098 = vunpack.c.l.b16 %v6050
        %v6099 = vunpack.c.l.b16 %v6051
        %v6100 = vunpack.c.l.b16 %v6052
        %v6101 = vunpack.c.l.b16 %v6053
        %v6102 = vunpack.c.l.b16 %v6054
        %v6103 = vunpack.c.l.b16 %v6055
        %v6104 = vunpack.c.l.b16 %v6056
        %v6105 = vunpack.c.l.b16 %v6057
        %v6106 = vunpack.c.l.b16 %v6058
        %v6107 = vunpack.c.l.b16 %v6059
        %v6108 = vunpack.c.l.b16 %v6060
        %v6109 = vunpack.c.l.b16 %v6061
        %v6110 = vunpack.c.l.b16 %v6062
        %v6111 = vpack.c.b16 %v6096, %v6095
        %v6112 = vpack.c.b16 %v6098, %v6097
        %v6113 = vpack.c.b16 %v6100, %v6099
        %v6114 = vpack.c.b16 %v6102, %v6101
        %v6115 = vpack.c.b16 %v6104, %v6103
        %v6116 = vpack.c.b16 %v6106, %v6105
        %v6117 = vpack.c.b16 %v6108, %v6107
        %v6118 = vpack.c.b16 %v6110, %v6109
        %6127 = vrot.lane.b32.xlu0 %v3511, 64
        %v6128 = vpop.permute.xlu0 %6127
        %6129 = vrot.lane.b32.xlu0 %v3512, 64
        %v6130 = vpop.permute.xlu0 %6129
        %6131 = vrot.lane.b32.xlu0 %v3513, 64
        %v6132 = vpop.permute.xlu0 %6131
        %6133 = vrot.lane.b32.xlu0 %v3514, 64
        %v6134 = vpop.permute.xlu0 %6133
        %6135 = vrot.lane.b32.xlu0 %v3515, 64
        %v6136 = vpop.permute.xlu0 %6135
        %6137 = vrot.lane.b32.xlu0 %v3516, 64
        %v6138 = vpop.permute.xlu0 %6137
        %6139 = vrot.lane.b32.xlu0 %v3517, 64
        %v6140 = vpop.permute.xlu0 %6139
        %6141 = vrot.lane.b32.xlu0 %v3518, 64
        %v6142 = vpop.permute.xlu0 %6141
        %6151 = vmatpush.bf16.msra.mxu0 %v6142
        %6152 = vmatpush.bf16.msra.mxu0 %v6140
        %6153 = vmatpush.bf16.msra.mxu0 %v6138
        %6154 = vmatpush.bf16.msra.mxu0 %v6136
        %6155 = vmatpush.bf16.msra.mxu0 %v6134
        %6156 = vmatpush.bf16.msra.mxu0 %v6132
        %6157 = vmatpush.bf16.msra.mxu0 %v6130
        %6158 = vmatpush.bf16.msra.mxu0 %v6128
        %6159 = vmatmul.bf16.gmra.mxu0 %v6111
        %v6160 = vpop.f32.mrf.mxu0
        %v6161 = vadd.f32 0.0, %v6160
        %v6162 = vpop.f32.mrf.mxu0
        %v6163 = vadd.f32 0.0, %v6162
        %6164 = vmatmul.bf16.gmra.mxu0 %v6112
        %v6165 = vpop.f32.mrf.mxu0
        %v6166 = vadd.f32 0.0, %v6165
        %v6167 = vpop.f32.mrf.mxu0
        %v6168 = vadd.f32 0.0, %v6167
        %6169 = vmatmul.bf16.gmra.mxu0 %v6113
        %v6170 = vpop.f32.mrf.mxu0
        %v6171 = vadd.f32 0.0, %v6170
        %v6172 = vpop.f32.mrf.mxu0
        %v6173 = vadd.f32 0.0, %v6172
        %6174 = vmatmul.bf16.gmra.mxu0 %v6114
        %v6175 = vpop.f32.mrf.mxu0
        %v6176 = vadd.f32 0.0, %v6175
        %v6177 = vpop.f32.mrf.mxu0
        %v6178 = vadd.f32 0.0, %v6177
        %6179 = vmatmul.bf16.gmra.mxu0 %v6115
        %v6180 = vpop.f32.mrf.mxu0
        %v6181 = vadd.f32 0.0, %v6180
        %v6182 = vpop.f32.mrf.mxu0
        %v6183 = vadd.f32 0.0, %v6182
        %6184 = vmatmul.bf16.gmra.mxu0 %v6116
        %v6185 = vpop.f32.mrf.mxu0
        %v6186 = vadd.f32 0.0, %v6185
        %v6187 = vpop.f32.mrf.mxu0
        %v6188 = vadd.f32 0.0, %v6187
        %6189 = vmatmul.bf16.gmra.mxu0 %v6117
        %v6190 = vpop.f32.mrf.mxu0
        %v6191 = vadd.f32 0.0, %v6190
        %v6192 = vpop.f32.mrf.mxu0
        %v6193 = vadd.f32 0.0, %v6192
        %6194 = vmatmul.bf16.gmra.mxu0 %v6118
        %v6195 = vpop.f32.mrf.mxu0
        %v6196 = vadd.f32 0.0, %v6195
        %v6197 = vpop.f32.mrf.mxu0
        %v6198 = vadd.f32 0.0, %v6197
        %6199 = vdwg.mxu0
        %v6216 = vunpack.c.l.b16 %v6063
        %v6217 = vunpack.c.l.b16 %v6064
        %v6218 = vunpack.c.l.b16 %v6065
        %v6219 = vunpack.c.l.b16 %v6066
        %v6220 = vunpack.c.l.b16 %v6067
        %v6221 = vunpack.c.l.b16 %v6068
        %v6222 = vunpack.c.l.b16 %v6069
        %v6223 = vunpack.c.l.b16 %v6070
        %v6224 = vunpack.c.l.b16 %v6071
        %v6225 = vunpack.c.l.b16 %v6072
        %v6226 = vunpack.c.l.b16 %v6073
        %v6227 = vunpack.c.l.b16 %v6074
        %v6228 = vunpack.c.l.b16 %v6075
        %v6229 = vunpack.c.l.b16 %v6076
        %v6230 = vunpack.c.l.b16 %v6077
        %v6231 = vunpack.c.l.b16 %v6078
        %v6232 = vpack.c.b16 %v6217, %v6216
        %v6233 = vpack.c.b16 %v6219, %v6218
        %v6234 = vpack.c.b16 %v6221, %v6220
        %v6235 = vpack.c.b16 %v6223, %v6222
        %v6236 = vpack.c.b16 %v6225, %v6224
        %v6237 = vpack.c.b16 %v6227, %v6226
        %v6238 = vpack.c.b16 %v6229, %v6228
        %v6239 = vpack.c.b16 %v6231, %v6230
        %6248 = vrot.lane.b32.xlu0 %v3656, 64
        %v6249 = vpop.permute.xlu0 %6248
        %6250 = vrot.lane.b32.xlu0 %v3657, 64
        %v6251 = vpop.permute.xlu0 %6250
        %6252 = vrot.lane.b32.xlu0 %v3658, 64
        %v6253 = vpop.permute.xlu0 %6252
        %6254 = vrot.lane.b32.xlu0 %v3659, 64
        %v6255 = vpop.permute.xlu0 %6254
        %6256 = vrot.lane.b32.xlu0 %v3660, 64
        %v6257 = vpop.permute.xlu0 %6256
        %6258 = vrot.lane.b32.xlu0 %v3661, 64
        %v6259 = vpop.permute.xlu0 %6258
        %6260 = vrot.lane.b32.xlu0 %v3662, 64
        %v6261 = vpop.permute.xlu0 %6260
        %6262 = vrot.lane.b32.xlu0 %v3663, 64
        %v6263 = vpop.permute.xlu0 %6262
        %6272 = vmatpush.bf16.msra.mxu0 %v6263
        %6273 = vmatpush.bf16.msra.mxu0 %v6261
        %6274 = vmatpush.bf16.msra.mxu0 %v6259
        %6275 = vmatpush.bf16.msra.mxu0 %v6257
        %6276 = vmatpush.bf16.msra.mxu0 %v6255
        %6277 = vmatpush.bf16.msra.mxu0 %v6253
        %6278 = vmatpush.bf16.msra.mxu0 %v6251
        %6279 = vmatpush.bf16.msra.mxu0 %v6249
        %6280 = vmatmul.bf16.gmra.mxu0 %v6232
        %v6281 = vpop.f32.mrf.mxu0
        %v6282 = vadd.f32 0.0, %v6281
        %v6283 = vpop.f32.mrf.mxu0
        %v6284 = vadd.f32 0.0, %v6283
        %6285 = vmatmul.bf16.gmra.mxu0 %v6233
        %v6286 = vpop.f32.mrf.mxu0
        %v6287 = vadd.f32 0.0, %v6286
        %v6288 = vpop.f32.mrf.mxu0
        %v6289 = vadd.f32 0.0, %v6288
        %6290 = vmatmul.bf16.gmra.mxu0 %v6234
        %v6291 = vpop.f32.mrf.mxu0
        %v6292 = vadd.f32 0.0, %v6291
        %v6293 = vpop.f32.mrf.mxu0
        %v6294 = vadd.f32 0.0, %v6293
        %6295 = vmatmul.bf16.gmra.mxu0 %v6235
        %v6296 = vpop.f32.mrf.mxu0
        %v6297 = vadd.f32 0.0, %v6296
        %v6298 = vpop.f32.mrf.mxu0
        %v6299 = vadd.f32 0.0, %v6298
        %6300 = vmatmul.bf16.gmra.mxu0 %v6236
        %v6301 = vpop.f32.mrf.mxu0
        %v6302 = vadd.f32 0.0, %v6301
        %v6303 = vpop.f32.mrf.mxu0
        %v6304 = vadd.f32 0.0, %v6303
        %6305 = vmatmul.bf16.gmra.mxu0 %v6237
        %v6306 = vpop.f32.mrf.mxu0
        %v6307 = vadd.f32 0.0, %v6306
        %v6308 = vpop.f32.mrf.mxu0
        %v6309 = vadd.f32 0.0, %v6308
        %6310 = vmatmul.bf16.gmra.mxu0 %v6238
        %v6311 = vpop.f32.mrf.mxu0
        %v6312 = vadd.f32 0.0, %v6311
        %v6313 = vpop.f32.mrf.mxu0
        %v6314 = vadd.f32 0.0, %v6313
        %6315 = vmatmul.bf16.gmra.mxu0 %v6239
        %v6316 = vpop.f32.mrf.mxu0
        %v6317 = vadd.f32 0.0, %v6316
        %v6318 = vpop.f32.mrf.mxu0
        %v6319 = vadd.f32 0.0, %v6318
        %6320 = vdwg.mxu0
        %6321 = vrot.lane.b32.xlu0 %v2308, 32
        %v6322 = vpop.permute.xlu0 %6321
        %6323 = vrot.lane.b32.xlu0 %v2309, 32
        %v6324 = vpop.permute.xlu0 %6323
        %6325 = vrot.lane.b32.xlu0 %v2310, 32
        %v6326 = vpop.permute.xlu0 %6325
        %6327 = vrot.lane.b32.xlu0 %v2311, 32
        %v6328 = vpop.permute.xlu0 %6327
        %6329 = vrot.lane.b32.xlu0 %v2312, 32
        %v6330 = vpop.permute.xlu0 %6329
        %6331 = vrot.lane.b32.xlu0 %v2313, 32
        %v6332 = vpop.permute.xlu0 %6331
        %6333 = vrot.lane.b32.xlu0 %v2314, 32
        %v6334 = vpop.permute.xlu0 %6333
        %6335 = vrot.lane.b32.xlu0 %v2315, 32
        %v6336 = vpop.permute.xlu0 %6335
        %6337 = vrot.lane.b32.xlu0 %v2348, 32
        %v6338 = vpop.permute.xlu0 %6337
        %6339 = vrot.lane.b32.xlu0 %v2349, 32
        %v6340 = vpop.permute.xlu0 %6339
        %6341 = vrot.lane.b32.xlu0 %v2350, 32
        %v6342 = vpop.permute.xlu0 %6341
        %6343 = vrot.lane.b32.xlu0 %v2351, 32
        %v6344 = vpop.permute.xlu0 %6343
        %6345 = vrot.lane.b32.xlu0 %v2352, 32
        %v6346 = vpop.permute.xlu0 %6345
        %6347 = vrot.lane.b32.xlu0 %v2353, 32
        %v6348 = vpop.permute.xlu0 %6347
        %6349 = vrot.lane.b32.xlu0 %v2354, 32
        %v6350 = vpop.permute.xlu0 %6349
        %6351 = vrot.lane.b32.xlu0 %v2355, 32
        %v6352 = vpop.permute.xlu0 %6351
        %v6354 = vsel %vm2356, %v6322, 0
        %v6357 = vsel %vm2356, %v6324, 0
        %v6360 = vsel %vm2356, %v6326, 0
        %v6363 = vsel %vm2356, %v6328, 0
        %v6366 = vsel %vm2356, %v6330, 0
        %v6369 = vsel %vm2356, %v6332, 0
        %v6372 = vsel %vm2356, %v6334, 0
        %v6375 = vsel %vm2356, %v6336, 0
        %v6378 = vsel %vm2356, %v6338, 0
        %v6381 = vsel %vm2356, %v6340, 0
        %v6384 = vsel %vm2356, %v6342, 0
        %v6387 = vsel %vm2356, %v6344, 0
        %v6390 = vsel %vm2356, %v6346, 0
        %v6393 = vsel %vm2356, %v6348, 0
        %v6396 = vsel %vm2356, %v6350, 0
        %v6399 = vsel %vm2356, %v6352, 0
        %6401 = vmatpush.bf16.xpose.msra.mxu0 %v6399
        %6402 = vmatpush.bf16.xpose.msra.mxu0 %v6396
        %6403 = vmatpush.bf16.xpose.msra.mxu0 %v6393
        %6404 = vmatpush.bf16.xpose.msra.mxu0 %v6390
        %6405 = vmatpush.bf16.xpose.msra.mxu0 %v6387
        %6406 = vmatpush.bf16.xpose.msra.mxu0 %v6384
        %6407 = vmatpush.bf16.xpose.msra.mxu0 %v6381
        %6408 = vmatpush.bf16.xpose.msra.mxu0 %v6378
        %6409 = vmatmul.bf16.gmra.mxu0 %v6354
        %v6410 = vpop.f32.mrf.mxu0
        %v6411 = vadd.f32 0.0, %v6410
        %v6412 = vpop.f32.mrf.mxu0
        %v6413 = vadd.f32 0.0, %v6412
        %6414 = vmatmul.bf16.gmra.mxu0 %v6357
        %v6415 = vpop.f32.mrf.mxu0
        %v6416 = vadd.f32 0.0, %v6415
        %v6417 = vpop.f32.mrf.mxu0
        %v6418 = vadd.f32 0.0, %v6417
        %6419 = vmatmul.bf16.gmra.mxu0 %v6360
        %v6420 = vpop.f32.mrf.mxu0
        %v6421 = vadd.f32 0.0, %v6420
        %v6422 = vpop.f32.mrf.mxu0
        %v6423 = vadd.f32 0.0, %v6422
        %6424 = vmatmul.bf16.gmra.mxu0 %v6363
        %v6425 = vpop.f32.mrf.mxu0
        %v6426 = vadd.f32 0.0, %v6425
        %v6427 = vpop.f32.mrf.mxu0
        %v6428 = vadd.f32 0.0, %v6427
        %6429 = vmatmul.bf16.gmra.mxu0 %v6366
        %v6430 = vpop.f32.mrf.mxu0
        %v6431 = vadd.f32 0.0, %v6430
        %v6432 = vpop.f32.mrf.mxu0
        %v6433 = vadd.f32 0.0, %v6432
        %6434 = vmatmul.bf16.gmra.mxu0 %v6369
        %v6435 = vpop.f32.mrf.mxu0
        %v6436 = vadd.f32 0.0, %v6435
        %v6437 = vpop.f32.mrf.mxu0
        %v6438 = vadd.f32 0.0, %v6437
        %6439 = vmatmul.bf16.gmra.mxu0 %v6372
        %v6440 = vpop.f32.mrf.mxu0
        %v6441 = vadd.f32 0.0, %v6440
        %v6442 = vpop.f32.mrf.mxu0
        %v6443 = vadd.f32 0.0, %v6442
        %6444 = vmatmul.bf16.gmra.mxu0 %v6375
        %v6445 = vpop.f32.mrf.mxu0
        %v6446 = vadd.f32 0.0, %v6445
        %v6447 = vpop.f32.mrf.mxu0
        %v6448 = vadd.f32 0.0, %v6447
        %6449 = vdwg.mxu0
        %6450 = vrot.lane.b32.xlu0 %v2486, 32
        %v6451 = vpop.permute.xlu0 %6450
        %6452 = vrot.lane.b32.xlu0 %v2487, 32
        %v6453 = vpop.permute.xlu0 %6452
        %6454 = vrot.lane.b32.xlu0 %v2488, 32
        %v6455 = vpop.permute.xlu0 %6454
        %6456 = vrot.lane.b32.xlu0 %v2489, 32
        %v6457 = vpop.permute.xlu0 %6456
        %6458 = vrot.lane.b32.xlu0 %v2490, 32
        %v6459 = vpop.permute.xlu0 %6458
        %6460 = vrot.lane.b32.xlu0 %v2491, 32
        %v6461 = vpop.permute.xlu0 %6460
        %6462 = vrot.lane.b32.xlu0 %v2492, 32
        %v6463 = vpop.permute.xlu0 %6462
        %6464 = vrot.lane.b32.xlu0 %v2493, 32
        %v6465 = vpop.permute.xlu0 %6464
        %6466 = vrot.lane.b32.xlu0 %v2526, 32
        %v6467 = vpop.permute.xlu0 %6466
        %6468 = vrot.lane.b32.xlu0 %v2527, 32
        %v6469 = vpop.permute.xlu0 %6468
        %6470 = vrot.lane.b32.xlu0 %v2528, 32
        %v6471 = vpop.permute.xlu0 %6470
        %6472 = vrot.lane.b32.xlu0 %v2529, 32
        %v6473 = vpop.permute.xlu0 %6472
        %6474 = vrot.lane.b32.xlu0 %v2530, 32
        %v6475 = vpop.permute.xlu0 %6474
        %6476 = vrot.lane.b32.xlu0 %v2531, 32
        %v6477 = vpop.permute.xlu0 %6476
        %6478 = vrot.lane.b32.xlu0 %v2532, 32
        %v6479 = vpop.permute.xlu0 %6478
        %6480 = vrot.lane.b32.xlu0 %v2533, 32
        %v6481 = vpop.permute.xlu0 %6480
        %v6483 = vsel %vm2356, %v6451, 0
        %v6486 = vsel %vm2356, %v6453, 0
        %v6489 = vsel %vm2356, %v6455, 0
        %v6492 = vsel %vm2356, %v6457, 0
        %v6495 = vsel %vm2356, %v6459, 0
        %v6498 = vsel %vm2356, %v6461, 0
        %v6501 = vsel %vm2356, %v6463, 0
        %v6504 = vsel %vm2356, %v6465, 0
        %v6507 = vsel %vm2356, %v6467, 0
        %v6510 = vsel %vm2356, %v6469, 0
        %v6513 = vsel %vm2356, %v6471, 0
        %v6516 = vsel %vm2356, %v6473, 0
        %v6519 = vsel %vm2356, %v6475, 0
        %v6522 = vsel %vm2356, %v6477, 0
        %v6525 = vsel %vm2356, %v6479, 0
        %v6528 = vsel %vm2356, %v6481, 0
        %6530 = vmatpush.bf16.xpose.msra.mxu0 %v6528
        %6531 = vmatpush.bf16.xpose.msra.mxu0 %v6525
        %6532 = vmatpush.bf16.xpose.msra.mxu0 %v6522
        %6533 = vmatpush.bf16.xpose.msra.mxu0 %v6519
        %6534 = vmatpush.bf16.xpose.msra.mxu0 %v6516
        %6535 = vmatpush.bf16.xpose.msra.mxu0 %v6513
        %6536 = vmatpush.bf16.xpose.msra.mxu0 %v6510
        %6537 = vmatpush.bf16.xpose.msra.mxu0 %v6507
        %6538 = vmatmul.bf16.gmra.mxu0 %v6483
        %v6539 = vpop.f32.mrf.mxu0
        %v6540 = vadd.f32 0.0, %v6539
        %v6541 = vpop.f32.mrf.mxu0
        %v6542 = vadd.f32 0.0, %v6541
        %6543 = vmatmul.bf16.gmra.mxu0 %v6486
        %v6544 = vpop.f32.mrf.mxu0
        %v6545 = vadd.f32 0.0, %v6544
        %v6546 = vpop.f32.mrf.mxu0
        %v6547 = vadd.f32 0.0, %v6546
        %6548 = vmatmul.bf16.gmra.mxu0 %v6489
        %v6549 = vpop.f32.mrf.mxu0
        %v6550 = vadd.f32 0.0, %v6549
        %v6551 = vpop.f32.mrf.mxu0
        %v6552 = vadd.f32 0.0, %v6551
        %6553 = vmatmul.bf16.gmra.mxu0 %v6492
        %v6554 = vpop.f32.mrf.mxu0
        %v6555 = vadd.f32 0.0, %v6554
        %v6556 = vpop.f32.mrf.mxu0
        %v6557 = vadd.f32 0.0, %v6556
        %6558 = vmatmul.bf16.gmra.mxu0 %v6495
        %v6559 = vpop.f32.mrf.mxu0
        %v6560 = vadd.f32 0.0, %v6559
        %v6561 = vpop.f32.mrf.mxu0
        %v6562 = vadd.f32 0.0, %v6561
        %6563 = vmatmul.bf16.gmra.mxu0 %v6498
        %v6564 = vpop.f32.mrf.mxu0
        %v6565 = vadd.f32 0.0, %v6564
        %v6566 = vpop.f32.mrf.mxu0
        %v6567 = vadd.f32 0.0, %v6566
        %6568 = vmatmul.bf16.gmra.mxu0 %v6501
        %v6569 = vpop.f32.mrf.mxu0
        %v6570 = vadd.f32 0.0, %v6569
        %v6571 = vpop.f32.mrf.mxu0
        %v6572 = vadd.f32 0.0, %v6571
        %6573 = vmatmul.bf16.gmra.mxu0 %v6504
        %v6574 = vpop.f32.mrf.mxu0
        %v6575 = vadd.f32 0.0, %v6574
        %v6576 = vpop.f32.mrf.mxu0
        %v6577 = vadd.f32 0.0, %v6576
        %6578 = vdwg.mxu0
        %v6579 = vmul.f32 %v6411, 0.17677669
        %v6580 = vmul.f32 %v6413, 0.17677669
        %v6581 = vmul.f32 %v6416, 0.17677669
        %v6582 = vmul.f32 %v6418, 0.17677669
        %v6583 = vmul.f32 %v6421, 0.17677669
        %v6584 = vmul.f32 %v6423, 0.17677669
        %v6585 = vmul.f32 %v6426, 0.17677669
        %v6586 = vmul.f32 %v6428, 0.17677669
        %v6587 = vmul.f32 %v6431, 0.17677669
        %v6588 = vmul.f32 %v6433, 0.17677669
        %v6589 = vmul.f32 %v6436, 0.17677669
        %v6590 = vmul.f32 %v6438, 0.17677669
        %v6591 = vmul.f32 %v6441, 0.17677669
        %v6592 = vmul.f32 %v6443, 0.17677669
        %v6593 = vmul.f32 %v6446, 0.17677669
        %v6594 = vmul.f32 %v6448, 0.17677669
        %v6595 = vmul.f32 %v6540, 0.17677669
        %v6596 = vmul.f32 %v6542, 0.17677669
        %v6597 = vmul.f32 %v6545, 0.17677669
        %v6598 = vmul.f32 %v6547, 0.17677669
        %v6599 = vmul.f32 %v6550, 0.17677669
        %v6600 = vmul.f32 %v6552, 0.17677669
        %v6601 = vmul.f32 %v6555, 0.17677669
        %v6602 = vmul.f32 %v6557, 0.17677669
        %v6603 = vmul.f32 %v6560, 0.17677669
        %v6604 = vmul.f32 %v6562, 0.17677669
        %v6605 = vmul.f32 %v6565, 0.17677669
        %v6606 = vmul.f32 %v6567, 0.17677669
        %v6607 = vmul.f32 %v6570, 0.17677669
        %v6608 = vmul.f32 %v6572, 0.17677669
        %v6609 = vmul.f32 %v6575, 0.17677669
        %v6610 = vmul.f32 %v6577, 0.17677669
        %6611 = vmax.xlane.f32.xlu0 %v6579
        %v6612 = vpop.xlane.xlu0 %6611
        %6613 = vmax.xlane.f32.xlu0 %v6580
        %v6614 = vpop.xlane.xlu0 %6613
        %6615 = vmax.xlane.f32.xlu0 %v6581
        %v6616 = vpop.xlane.xlu0 %6615
        %6617 = vmax.xlane.f32.xlu0 %v6582
        %v6618 = vpop.xlane.xlu0 %6617
        %6619 = vmax.xlane.f32.xlu0 %v6583
        %v6620 = vpop.xlane.xlu0 %6619
        %6621 = vmax.xlane.f32.xlu0 %v6584
        %v6622 = vpop.xlane.xlu0 %6621
        %6623 = vmax.xlane.f32.xlu0 %v6585
        %v6624 = vpop.xlane.xlu0 %6623
        %6625 = vmax.xlane.f32.xlu0 %v6586
        %v6626 = vpop.xlane.xlu0 %6625
        %6627 = vmax.xlane.f32.xlu0 %v6587
        %v6628 = vpop.xlane.xlu0 %6627
        %6629 = vmax.xlane.f32.xlu0 %v6588
        %v6630 = vpop.xlane.xlu0 %6629
        %6631 = vmax.xlane.f32.xlu0 %v6589
        %v6632 = vpop.xlane.xlu0 %6631
        %6633 = vmax.xlane.f32.xlu0 %v6590
        %v6634 = vpop.xlane.xlu0 %6633
        %6635 = vmax.xlane.f32.xlu0 %v6591
        %v6636 = vpop.xlane.xlu0 %6635
        %6637 = vmax.xlane.f32.xlu0 %v6592
        %v6638 = vpop.xlane.xlu0 %6637
        %6639 = vmax.xlane.f32.xlu0 %v6593
        %v6640 = vpop.xlane.xlu0 %6639
        %6641 = vmax.xlane.f32.xlu0 %v6594
        %v6642 = vpop.xlane.xlu0 %6641
        %6643 = vmax.xlane.f32.xlu0 %v6595
        %v6644 = vpop.xlane.xlu0 %6643
        %6645 = vmax.xlane.f32.xlu0 %v6596
        %v6646 = vpop.xlane.xlu0 %6645
        %6647 = vmax.xlane.f32.xlu0 %v6597
        %v6648 = vpop.xlane.xlu0 %6647
        %6649 = vmax.xlane.f32.xlu0 %v6598
        %v6650 = vpop.xlane.xlu0 %6649
        %6651 = vmax.xlane.f32.xlu0 %v6599
        %v6652 = vpop.xlane.xlu0 %6651
        %6653 = vmax.xlane.f32.xlu0 %v6600
        %v6654 = vpop.xlane.xlu0 %6653
        %6655 = vmax.xlane.f32.xlu0 %v6601
        %v6656 = vpop.xlane.xlu0 %6655
        %6657 = vmax.xlane.f32.xlu0 %v6602
        %v6658 = vpop.xlane.xlu0 %6657
        %6659 = vmax.xlane.f32.xlu0 %v6603
        %v6660 = vpop.xlane.xlu0 %6659
        %6661 = vmax.xlane.f32.xlu0 %v6604
        %v6662 = vpop.xlane.xlu0 %6661
        %6663 = vmax.xlane.f32.xlu0 %v6605
        %v6664 = vpop.xlane.xlu0 %6663
        %6665 = vmax.xlane.f32.xlu0 %v6606
        %v6666 = vpop.xlane.xlu0 %6665
        %6667 = vmax.xlane.f32.xlu0 %v6607
        %v6668 = vpop.xlane.xlu0 %6667
        %6669 = vmax.xlane.f32.xlu0 %v6608
        %v6670 = vpop.xlane.xlu0 %6669
        %6671 = vmax.xlane.f32.xlu0 %v6609
        %v6672 = vpop.xlane.xlu0 %6671
        %6673 = vmax.xlane.f32.xlu0 %v6610
        %v6674 = vpop.xlane.xlu0 %6673
        %v6675 = vsub.f32 %v6579, %v6612
        %v6676 = vsub.f32 %v6580, %v6614
        %v6677 = vsub.f32 %v6581, %v6616
        %v6678 = vsub.f32 %v6582, %v6618
        %v6679 = vsub.f32 %v6583, %v6620
        %v6680 = vsub.f32 %v6584, %v6622
        %v6681 = vsub.f32 %v6585, %v6624
        %v6682 = vsub.f32 %v6586, %v6626
        %v6683 = vsub.f32 %v6587, %v6628
        %v6684 = vsub.f32 %v6588, %v6630
        %v6685 = vsub.f32 %v6589, %v6632
        %v6686 = vsub.f32 %v6590, %v6634
        %v6687 = vsub.f32 %v6591, %v6636
        %v6688 = vsub.f32 %v6592, %v6638
        %v6689 = vsub.f32 %v6593, %v6640
        %v6690 = vsub.f32 %v6594, %v6642
        %v6691 = vsub.f32 %v6595, %v6644
        %v6692 = vsub.f32 %v6596, %v6646
        %v6693 = vsub.f32 %v6597, %v6648
        %v6694 = vsub.f32 %v6598, %v6650
        %v6695 = vsub.f32 %v6599, %v6652
        %v6696 = vsub.f32 %v6600, %v6654
        %v6697 = vsub.f32 %v6601, %v6656
        %v6698 = vsub.f32 %v6602, %v6658
        %v6699 = vsub.f32 %v6603, %v6660
        %v6700 = vsub.f32 %v6604, %v6662
        %v6701 = vsub.f32 %v6605, %v6664
        %v6702 = vsub.f32 %v6606, %v6666
        %v6703 = vsub.f32 %v6607, %v6668
        %v6704 = vsub.f32 %v6608, %v6670
        %v6705 = vsub.f32 %v6609, %v6672
        %v6706 = vsub.f32 %v6610, %v6674
        %v6707 = vmul.f32 %v6675, 1.442695
        %v6708 = vpow.pop %v6707
        %v6709 = vmul.f32 %v6676, 1.442695
        %v6710 = vpow.pop %v6709
        %v6711 = vmul.f32 %v6677, 1.442695
        %v6712 = vpow.pop %v6711
        %v6713 = vmul.f32 %v6678, 1.442695
        %v6714 = vpow.pop %v6713
        %v6715 = vmul.f32 %v6679, 1.442695
        %v6716 = vpow.pop %v6715
        %v6717 = vmul.f32 %v6680, 1.442695
        %v6718 = vpow.pop %v6717
        %v6719 = vmul.f32 %v6681, 1.442695
        %v6720 = vpow.pop %v6719
        %v6721 = vmul.f32 %v6682, 1.442695
        %v6722 = vpow.pop %v6721
        %v6723 = vmul.f32 %v6683, 1.442695
        %v6724 = vpow.pop %v6723
        %v6725 = vmul.f32 %v6684, 1.442695
        %v6726 = vpow.pop %v6725
        %v6727 = vmul.f32 %v6685, 1.442695
        %v6728 = vpow.pop %v6727
        %v6729 = vmul.f32 %v6686, 1.442695
        %v6730 = vpow.pop %v6729
        %v6731 = vmul.f32 %v6687, 1.442695
        %v6732 = vpow.pop %v6731
        %v6733 = vmul.f32 %v6688, 1.442695
        %v6734 = vpow.pop %v6733
        %v6735 = vmul.f32 %v6689, 1.442695
        %v6736 = vpow.pop %v6735
        %v6737 = vmul.f32 %v6690, 1.442695
        %v6738 = vpow.pop %v6737
        %v6739 = vmul.f32 %v6691, 1.442695
        %v6740 = vpow.pop %v6739
        %v6741 = vmul.f32 %v6692, 1.442695
        %v6742 = vpow.pop %v6741
        %v6743 = vmul.f32 %v6693, 1.442695
        %v6744 = vpow.pop %v6743
        %v6745 = vmul.f32 %v6694, 1.442695
        %v6746 = vpow.pop %v6745
        %v6747 = vmul.f32 %v6695, 1.442695
        %v6748 = vpow.pop %v6747
        %v6749 = vmul.f32 %v6696, 1.442695
        %v6750 = vpow.pop %v6749
        %v6751 = vmul.f32 %v6697, 1.442695
        %v6752 = vpow.pop %v6751
        %v6753 = vmul.f32 %v6698, 1.442695
        %v6754 = vpow.pop %v6753
        %v6755 = vmul.f32 %v6699, 1.442695
        %v6756 = vpow.pop %v6755
        %v6757 = vmul.f32 %v6700, 1.442695
        %v6758 = vpow.pop %v6757
        %v6759 = vmul.f32 %v6701, 1.442695
        %v6760 = vpow.pop %v6759
        %v6761 = vmul.f32 %v6702, 1.442695
        %v6762 = vpow.pop %v6761
        %v6763 = vmul.f32 %v6703, 1.442695
        %v6764 = vpow.pop %v6763
        %v6765 = vmul.f32 %v6704, 1.442695
        %v6766 = vpow.pop %v6765
        %v6767 = vmul.f32 %v6705, 1.442695
        %v6768 = vpow.pop %v6767
        %v6769 = vmul.f32 %v6706, 1.442695
        %v6770 = vpow.pop %v6769
        %6771 = vadd.xlane.f32.xlu0 %v6708
        %v6772 = vpop.xlane.xlu0 %6771
        %6773 = vadd.xlane.f32.xlu0 %v6710
        %v6774 = vpop.xlane.xlu0 %6773
        %6775 = vadd.xlane.f32.xlu0 %v6712
        %v6776 = vpop.xlane.xlu0 %6775
        %6777 = vadd.xlane.f32.xlu0 %v6714
        %v6778 = vpop.xlane.xlu0 %6777
        %6779 = vadd.xlane.f32.xlu0 %v6716
        %v6780 = vpop.xlane.xlu0 %6779
        %6781 = vadd.xlane.f32.xlu0 %v6718
        %v6782 = vpop.xlane.xlu0 %6781
        %6783 = vadd.xlane.f32.xlu0 %v6720
        %v6784 = vpop.xlane.xlu0 %6783
        %6785 = vadd.xlane.f32.xlu0 %v6722
        %v6786 = vpop.xlane.xlu0 %6785
        %6787 = vadd.xlane.f32.xlu0 %v6724
        %v6788 = vpop.xlane.xlu0 %6787
        %6789 = vadd.xlane.f32.xlu0 %v6726
        %v6790 = vpop.xlane.xlu0 %6789
        %6791 = vadd.xlane.f32.xlu0 %v6728
        %v6792 = vpop.xlane.xlu0 %6791
        %6793 = vadd.xlane.f32.xlu0 %v6730
        %v6794 = vpop.xlane.xlu0 %6793
        %6795 = vadd.xlane.f32.xlu0 %v6732
        %v6796 = vpop.xlane.xlu0 %6795
        %6797 = vadd.xlane.f32.xlu0 %v6734
        %v6798 = vpop.xlane.xlu0 %6797
        %6799 = vadd.xlane.f32.xlu0 %v6736
        %v6800 = vpop.xlane.xlu0 %6799
        %6801 = vadd.xlane.f32.xlu0 %v6738
        %v6802 = vpop.xlane.xlu0 %6801
        %6803 = vadd.xlane.f32.xlu0 %v6740
        %v6804 = vpop.xlane.xlu0 %6803
        %6805 = vadd.xlane.f32.xlu0 %v6742
        %v6806 = vpop.xlane.xlu0 %6805
        %6807 = vadd.xlane.f32.xlu0 %v6744
        %v6808 = vpop.xlane.xlu0 %6807
        %6809 = vadd.xlane.f32.xlu0 %v6746
        %v6810 = vpop.xlane.xlu0 %6809
        %6811 = vadd.xlane.f32.xlu0 %v6748
        %v6812 = vpop.xlane.xlu0 %6811
        %6813 = vadd.xlane.f32.xlu0 %v6750
        %v6814 = vpop.xlane.xlu0 %6813
        %6815 = vadd.xlane.f32.xlu0 %v6752
        %v6816 = vpop.xlane.xlu0 %6815
        %6817 = vadd.xlane.f32.xlu0 %v6754
        %v6818 = vpop.xlane.xlu0 %6817
        %6819 = vadd.xlane.f32.xlu0 %v6756
        %v6820 = vpop.xlane.xlu0 %6819
        %6821 = vadd.xlane.f32.xlu0 %v6758
        %v6822 = vpop.xlane.xlu0 %6821
        %6823 = vadd.xlane.f32.xlu0 %v6760
        %v6824 = vpop.xlane.xlu0 %6823
        %6825 = vadd.xlane.f32.xlu0 %v6762
        %v6826 = vpop.xlane.xlu0 %6825
        %6827 = vadd.xlane.f32.xlu0 %v6764
        %v6828 = vpop.xlane.xlu0 %6827
        %6829 = vadd.xlane.f32.xlu0 %v6766
        %v6830 = vpop.xlane.xlu0 %6829
        %6831 = vadd.xlane.f32.xlu0 %v6768
        %v6832 = vpop.xlane.xlu0 %6831
        %6833 = vadd.xlane.f32.xlu0 %v6770
        %v6834 = vpop.xlane.xlu0 %6833
        %v6835 = vrcp.pop %v6772
        %v6836 = vmul.f32 %v6772, %v6835
        %v6837 = vsub.f32 1.0, %v6836
        %v6838 = vmul.f32 %v6835, %v6837
        %v6839 = vadd.f32 %v6835, %v6838
        %vm6840 = vweird.f32 %v6772
        %vm6841 = vweird.f32 %v6835
        %vm6842 = vmor %vm6840, %vm6841
        %v6843 = vsel %vm6842, %v6835, %v6839
        %v6844 = vand.u32 2147483647, %v6772
        %vm6845 = vcmp.eq.f32.partialorder %v6844, 8.507059e+37
        %v6846 = vand.u32 %v6772, 2147483648
        %v6847 = vor.u32 1.1754944e-38, %v6846
        %v6848 = vsel %vm6845, %v6847, %v6843
        %v6849 = vmul.f32 1.0, %v6848
        %v6850 = vrcp.pop %v6774
        %v6851 = vmul.f32 %v6774, %v6850
        %v6852 = vsub.f32 1.0, %v6851
        %v6853 = vmul.f32 %v6850, %v6852
        %v6854 = vadd.f32 %v6850, %v6853
        %vm6855 = vweird.f32 %v6774
        %vm6856 = vweird.f32 %v6850
        %vm6857 = vmor %vm6855, %vm6856
        %v6858 = vsel %vm6857, %v6850, %v6854
        %v6859 = vand.u32 2147483647, %v6774
        %vm6860 = vcmp.eq.f32.partialorder %v6859, 8.507059e+37
        %v6861 = vand.u32 %v6774, 2147483648
        %v6862 = vor.u32 1.1754944e-38, %v6861
        %v6863 = vsel %vm6860, %v6862, %v6858
        %v6864 = vmul.f32 1.0, %v6863
        %v6865 = vrcp.pop %v6776
        %v6866 = vmul.f32 %v6776, %v6865
        %v6867 = vsub.f32 1.0, %v6866
        %v6868 = vmul.f32 %v6865, %v6867
        %v6869 = vadd.f32 %v6865, %v6868
        %vm6870 = vweird.f32 %v6776
        %vm6871 = vweird.f32 %v6865
        %vm6872 = vmor %vm6870, %vm6871
        %v6873 = vsel %vm6872, %v6865, %v6869
        %v6874 = vand.u32 2147483647, %v6776
        %vm6875 = vcmp.eq.f32.partialorder %v6874, 8.507059e+37
        %v6876 = vand.u32 %v6776, 2147483648
        %v6877 = vor.u32 1.1754944e-38, %v6876
        %v6878 = vsel %vm6875, %v6877, %v6873
        %v6879 = vmul.f32 1.0, %v6878
        %v6880 = vrcp.pop %v6778
        %v6881 = vmul.f32 %v6778, %v6880
        %v6882 = vsub.f32 1.0, %v6881
        %v6883 = vmul.f32 %v6880, %v6882
        %v6884 = vadd.f32 %v6880, %v6883
        %vm6885 = vweird.f32 %v6778
        %vm6886 = vweird.f32 %v6880
        %vm6887 = vmor %vm6885, %vm6886
        %v6888 = vsel %vm6887, %v6880, %v6884
        %v6889 = vand.u32 2147483647, %v6778
        %vm6890 = vcmp.eq.f32.partialorder %v6889, 8.507059e+37
        %v6891 = vand.u32 %v6778, 2147483648
        %v6892 = vor.u32 1.1754944e-38, %v6891
        %v6893 = vsel %vm6890, %v6892, %v6888
        %v6894 = vmul.f32 1.0, %v6893
        %v6895 = vrcp.pop %v6780
        %v6896 = vmul.f32 %v6780, %v6895
        %v6897 = vsub.f32 1.0, %v6896
        %v6898 = vmul.f32 %v6895, %v6897
        %v6899 = vadd.f32 %v6895, %v6898
        %vm6900 = vweird.f32 %v6780
        %vm6901 = vweird.f32 %v6895
        %vm6902 = vmor %vm6900, %vm6901
        %v6903 = vsel %vm6902, %v6895, %v6899
        %v6904 = vand.u32 2147483647, %v6780
        %vm6905 = vcmp.eq.f32.partialorder %v6904, 8.507059e+37
        %v6906 = vand.u32 %v6780, 2147483648
        %v6907 = vor.u32 1.1754944e-38, %v6906
        %v6908 = vsel %vm6905, %v6907, %v6903
        %v6909 = vmul.f32 1.0, %v6908
        %v6910 = vrcp.pop %v6782
        %v6911 = vmul.f32 %v6782, %v6910
        %v6912 = vsub.f32 1.0, %v6911
        %v6913 = vmul.f32 %v6910, %v6912
        %v6914 = vadd.f32 %v6910, %v6913
        %vm6915 = vweird.f32 %v6782
        %vm6916 = vweird.f32 %v6910
        %vm6917 = vmor %vm6915, %vm6916
        %v6918 = vsel %vm6917, %v6910, %v6914
        %v6919 = vand.u32 2147483647, %v6782
        %vm6920 = vcmp.eq.f32.partialorder %v6919, 8.507059e+37
        %v6921 = vand.u32 %v6782, 2147483648
        %v6922 = vor.u32 1.1754944e-38, %v6921
        %v6923 = vsel %vm6920, %v6922, %v6918
        %v6924 = vmul.f32 1.0, %v6923
        %v6925 = vrcp.pop %v6784
        %v6926 = vmul.f32 %v6784, %v6925
        %v6927 = vsub.f32 1.0, %v6926
        %v6928 = vmul.f32 %v6925, %v6927
        %v6929 = vadd.f32 %v6925, %v6928
        %vm6930 = vweird.f32 %v6784
        %vm6931 = vweird.f32 %v6925
        %vm6932 = vmor %vm6930, %vm6931
        %v6933 = vsel %vm6932, %v6925, %v6929
        %v6934 = vand.u32 2147483647, %v6784
        %vm6935 = vcmp.eq.f32.partialorder %v6934, 8.507059e+37
        %v6936 = vand.u32 %v6784, 2147483648
        %v6937 = vor.u32 1.1754944e-38, %v6936
        %v6938 = vsel %vm6935, %v6937, %v6933
        %v6939 = vmul.f32 1.0, %v6938
        %v6940 = vrcp.pop %v6786
        %v6941 = vmul.f32 %v6786, %v6940
        %v6942 = vsub.f32 1.0, %v6941
        %v6943 = vmul.f32 %v6940, %v6942
        %v6944 = vadd.f32 %v6940, %v6943
        %vm6945 = vweird.f32 %v6786
        %vm6946 = vweird.f32 %v6940
        %vm6947 = vmor %vm6945, %vm6946
        %v6948 = vsel %vm6947, %v6940, %v6944
        %v6949 = vand.u32 2147483647, %v6786
        %vm6950 = vcmp.eq.f32.partialorder %v6949, 8.507059e+37
        %v6951 = vand.u32 %v6786, 2147483648
        %v6952 = vor.u32 1.1754944e-38, %v6951
        %v6953 = vsel %vm6950, %v6952, %v6948
        %v6954 = vmul.f32 1.0, %v6953
        %v6955 = vrcp.pop %v6788
        %v6956 = vmul.f32 %v6788, %v6955
        %v6957 = vsub.f32 1.0, %v6956
        %v6958 = vmul.f32 %v6955, %v6957
        %v6959 = vadd.f32 %v6955, %v6958
        %vm6960 = vweird.f32 %v6788
        %vm6961 = vweird.f32 %v6955
        %vm6962 = vmor %vm6960, %vm6961
        %v6963 = vsel %vm6962, %v6955, %v6959
        %v6964 = vand.u32 2147483647, %v6788
        %vm6965 = vcmp.eq.f32.partialorder %v6964, 8.507059e+37
        %v6966 = vand.u32 %v6788, 2147483648
        %v6967 = vor.u32 1.1754944e-38, %v6966
        %v6968 = vsel %vm6965, %v6967, %v6963
        %v6969 = vmul.f32 1.0, %v6968
        %v6970 = vrcp.pop %v6790
        %v6971 = vmul.f32 %v6790, %v6970
        %v6972 = vsub.f32 1.0, %v6971
        %v6973 = vmul.f32 %v6970, %v6972
        %v6974 = vadd.f32 %v6970, %v6973
        %vm6975 = vweird.f32 %v6790
        %vm6976 = vweird.f32 %v6970
        %vm6977 = vmor %vm6975, %vm6976
        %v6978 = vsel %vm6977, %v6970, %v6974
        %v6979 = vand.u32 2147483647, %v6790
        %vm6980 = vcmp.eq.f32.partialorder %v6979, 8.507059e+37
        %v6981 = vand.u32 %v6790, 2147483648
        %v6982 = vor.u32 1.1754944e-38, %v6981
        %v6983 = vsel %vm6980, %v6982, %v6978
        %v6984 = vmul.f32 1.0, %v6983
        %v6985 = vrcp.pop %v6792
        %v6986 = vmul.f32 %v6792, %v6985
        %v6987 = vsub.f32 1.0, %v6986
        %v6988 = vmul.f32 %v6985, %v6987
        %v6989 = vadd.f32 %v6985, %v6988
        %vm6990 = vweird.f32 %v6792
        %vm6991 = vweird.f32 %v6985
        %vm6992 = vmor %vm6990, %vm6991
        %v6993 = vsel %vm6992, %v6985, %v6989
        %v6994 = vand.u32 2147483647, %v6792
        %vm6995 = vcmp.eq.f32.partialorder %v6994, 8.507059e+37
        %v6996 = vand.u32 %v6792, 2147483648
        %v6997 = vor.u32 1.1754944e-38, %v6996
        %v6998 = vsel %vm6995, %v6997, %v6993
        %v6999 = vmul.f32 1.0, %v6998
        %v7000 = vrcp.pop %v6794
        %v7001 = vmul.f32 %v6794, %v7000
        %v7002 = vsub.f32 1.0, %v7001
        %v7003 = vmul.f32 %v7000, %v7002
        %v7004 = vadd.f32 %v7000, %v7003
        %vm7005 = vweird.f32 %v6794
        %vm7006 = vweird.f32 %v7000
        %vm7007 = vmor %vm7005, %vm7006
        %v7008 = vsel %vm7007, %v7000, %v7004
        %v7009 = vand.u32 2147483647, %v6794
        %vm7010 = vcmp.eq.f32.partialorder %v7009, 8.507059e+37
        %v7011 = vand.u32 %v6794, 2147483648
        %v7012 = vor.u32 1.1754944e-38, %v7011
        %v7013 = vsel %vm7010, %v7012, %v7008
        %v7014 = vmul.f32 1.0, %v7013
        %v7015 = vrcp.pop %v6796
        %v7016 = vmul.f32 %v6796, %v7015
        %v7017 = vsub.f32 1.0, %v7016
        %v7018 = vmul.f32 %v7015, %v7017
        %v7019 = vadd.f32 %v7015, %v7018
        %vm7020 = vweird.f32 %v6796
        %vm7021 = vweird.f32 %v7015
        %vm7022 = vmor %vm7020, %vm7021
        %v7023 = vsel %vm7022, %v7015, %v7019
        %v7024 = vand.u32 2147483647, %v6796
        %vm7025 = vcmp.eq.f32.partialorder %v7024, 8.507059e+37
        %v7026 = vand.u32 %v6796, 2147483648
        %v7027 = vor.u32 1.1754944e-38, %v7026
        %v7028 = vsel %vm7025, %v7027, %v7023
        %v7029 = vmul.f32 1.0, %v7028
        %v7030 = vrcp.pop %v6798
        %v7031 = vmul.f32 %v6798, %v7030
        %v7032 = vsub.f32 1.0, %v7031
        %v7033 = vmul.f32 %v7030, %v7032
        %v7034 = vadd.f32 %v7030, %v7033
        %vm7035 = vweird.f32 %v6798
        %vm7036 = vweird.f32 %v7030
        %vm7037 = vmor %vm7035, %vm7036
        %v7038 = vsel %vm7037, %v7030, %v7034
        %v7039 = vand.u32 2147483647, %v6798
        %vm7040 = vcmp.eq.f32.partialorder %v7039, 8.507059e+37
        %v7041 = vand.u32 %v6798, 2147483648
        %v7042 = vor.u32 1.1754944e-38, %v7041
        %v7043 = vsel %vm7040, %v7042, %v7038
        %v7044 = vmul.f32 1.0, %v7043
        %v7045 = vrcp.pop %v6800
        %v7046 = vmul.f32 %v6800, %v7045
        %v7047 = vsub.f32 1.0, %v7046
        %v7048 = vmul.f32 %v7045, %v7047
        %v7049 = vadd.f32 %v7045, %v7048
        %vm7050 = vweird.f32 %v6800
        %vm7051 = vweird.f32 %v7045
        %vm7052 = vmor %vm7050, %vm7051
        %v7053 = vsel %vm7052, %v7045, %v7049
        %v7054 = vand.u32 2147483647, %v6800
        %vm7055 = vcmp.eq.f32.partialorder %v7054, 8.507059e+37
        %v7056 = vand.u32 %v6800, 2147483648
        %v7057 = vor.u32 1.1754944e-38, %v7056
        %v7058 = vsel %vm7055, %v7057, %v7053
        %v7059 = vmul.f32 1.0, %v7058
        %v7060 = vrcp.pop %v6802
        %v7061 = vmul.f32 %v6802, %v7060
        %v7062 = vsub.f32 1.0, %v7061
        %v7063 = vmul.f32 %v7060, %v7062
        %v7064 = vadd.f32 %v7060, %v7063
        %vm7065 = vweird.f32 %v6802
        %vm7066 = vweird.f32 %v7060
        %vm7067 = vmor %vm7065, %vm7066
        %v7068 = vsel %vm7067, %v7060, %v7064
        %v7069 = vand.u32 2147483647, %v6802
        %vm7070 = vcmp.eq.f32.partialorder %v7069, 8.507059e+37
        %v7071 = vand.u32 %v6802, 2147483648
        %v7072 = vor.u32 1.1754944e-38, %v7071
        %v7073 = vsel %vm7070, %v7072, %v7068
        %v7074 = vmul.f32 1.0, %v7073
        %v7075 = vrcp.pop %v6804
        %v7076 = vmul.f32 %v6804, %v7075
        %v7077 = vsub.f32 1.0, %v7076
        %v7078 = vmul.f32 %v7075, %v7077
        %v7079 = vadd.f32 %v7075, %v7078
        %vm7080 = vweird.f32 %v6804
        %vm7081 = vweird.f32 %v7075
        %vm7082 = vmor %vm7080, %vm7081
        %v7083 = vsel %vm7082, %v7075, %v7079
        %v7084 = vand.u32 2147483647, %v6804
        %vm7085 = vcmp.eq.f32.partialorder %v7084, 8.507059e+37
        %v7086 = vand.u32 %v6804, 2147483648
        %v7087 = vor.u32 1.1754944e-38, %v7086
        %v7088 = vsel %vm7085, %v7087, %v7083
        %v7089 = vmul.f32 1.0, %v7088
        %v7090 = vrcp.pop %v6806
        %v7091 = vmul.f32 %v6806, %v7090
        %v7092 = vsub.f32 1.0, %v7091
        %v7093 = vmul.f32 %v7090, %v7092
        %v7094 = vadd.f32 %v7090, %v7093
        %vm7095 = vweird.f32 %v6806
        %vm7096 = vweird.f32 %v7090
        %vm7097 = vmor %vm7095, %vm7096
        %v7098 = vsel %vm7097, %v7090, %v7094
        %v7099 = vand.u32 2147483647, %v6806
        %vm7100 = vcmp.eq.f32.partialorder %v7099, 8.507059e+37
        %v7101 = vand.u32 %v6806, 2147483648
        %v7102 = vor.u32 1.1754944e-38, %v7101
        %v7103 = vsel %vm7100, %v7102, %v7098
        %v7104 = vmul.f32 1.0, %v7103
        %v7105 = vrcp.pop %v6808
        %v7106 = vmul.f32 %v6808, %v7105
        %v7107 = vsub.f32 1.0, %v7106
        %v7108 = vmul.f32 %v7105, %v7107
        %v7109 = vadd.f32 %v7105, %v7108
        %vm7110 = vweird.f32 %v6808
        %vm7111 = vweird.f32 %v7105
        %vm7112 = vmor %vm7110, %vm7111
        %v7113 = vsel %vm7112, %v7105, %v7109
        %v7114 = vand.u32 2147483647, %v6808
        %vm7115 = vcmp.eq.f32.partialorder %v7114, 8.507059e+37
        %v7116 = vand.u32 %v6808, 2147483648
        %v7117 = vor.u32 1.1754944e-38, %v7116
        %v7118 = vsel %vm7115, %v7117, %v7113
        %v7119 = vmul.f32 1.0, %v7118
        %v7120 = vrcp.pop %v6810
        %v7121 = vmul.f32 %v6810, %v7120
        %v7122 = vsub.f32 1.0, %v7121
        %v7123 = vmul.f32 %v7120, %v7122
        %v7124 = vadd.f32 %v7120, %v7123
        %vm7125 = vweird.f32 %v6810
        %vm7126 = vweird.f32 %v7120
        %vm7127 = vmor %vm7125, %vm7126
        %v7128 = vsel %vm7127, %v7120, %v7124
        %v7129 = vand.u32 2147483647, %v6810
        %vm7130 = vcmp.eq.f32.partialorder %v7129, 8.507059e+37
        %v7131 = vand.u32 %v6810, 2147483648
        %v7132 = vor.u32 1.1754944e-38, %v7131
        %v7133 = vsel %vm7130, %v7132, %v7128
        %v7134 = vmul.f32 1.0, %v7133
        %v7135 = vrcp.pop %v6812
        %v7136 = vmul.f32 %v6812, %v7135
        %v7137 = vsub.f32 1.0, %v7136
        %v7138 = vmul.f32 %v7135, %v7137
        %v7139 = vadd.f32 %v7135, %v7138
        %vm7140 = vweird.f32 %v6812
        %vm7141 = vweird.f32 %v7135
        %vm7142 = vmor %vm7140, %vm7141
        %v7143 = vsel %vm7142, %v7135, %v7139
        %v7144 = vand.u32 2147483647, %v6812
        %vm7145 = vcmp.eq.f32.partialorder %v7144, 8.507059e+37
        %v7146 = vand.u32 %v6812, 2147483648
        %v7147 = vor.u32 1.1754944e-38, %v7146
        %v7148 = vsel %vm7145, %v7147, %v7143
        %v7149 = vmul.f32 1.0, %v7148
        %v7150 = vrcp.pop %v6814
        %v7151 = vmul.f32 %v6814, %v7150
        %v7152 = vsub.f32 1.0, %v7151
        %v7153 = vmul.f32 %v7150, %v7152
        %v7154 = vadd.f32 %v7150, %v7153
        %vm7155 = vweird.f32 %v6814
        %vm7156 = vweird.f32 %v7150
        %vm7157 = vmor %vm7155, %vm7156
        %v7158 = vsel %vm7157, %v7150, %v7154
        %v7159 = vand.u32 2147483647, %v6814
        %vm7160 = vcmp.eq.f32.partialorder %v7159, 8.507059e+37
        %v7161 = vand.u32 %v6814, 2147483648
        %v7162 = vor.u32 1.1754944e-38, %v7161
        %v7163 = vsel %vm7160, %v7162, %v7158
        %v7164 = vmul.f32 1.0, %v7163
        %v7165 = vrcp.pop %v6816
        %v7166 = vmul.f32 %v6816, %v7165
        %v7167 = vsub.f32 1.0, %v7166
        %v7168 = vmul.f32 %v7165, %v7167
        %v7169 = vadd.f32 %v7165, %v7168
        %vm7170 = vweird.f32 %v6816
        %vm7171 = vweird.f32 %v7165
        %vm7172 = vmor %vm7170, %vm7171
        %v7173 = vsel %vm7172, %v7165, %v7169
        %v7174 = vand.u32 2147483647, %v6816
        %vm7175 = vcmp.eq.f32.partialorder %v7174, 8.507059e+37
        %v7176 = vand.u32 %v6816, 2147483648
        %v7177 = vor.u32 1.1754944e-38, %v7176
        %v7178 = vsel %vm7175, %v7177, %v7173
        %v7179 = vmul.f32 1.0, %v7178
        %v7180 = vrcp.pop %v6818
        %v7181 = vmul.f32 %v6818, %v7180
        %v7182 = vsub.f32 1.0, %v7181
        %v7183 = vmul.f32 %v7180, %v7182
        %v7184 = vadd.f32 %v7180, %v7183
        %vm7185 = vweird.f32 %v6818
        %vm7186 = vweird.f32 %v7180
        %vm7187 = vmor %vm7185, %vm7186
        %v7188 = vsel %vm7187, %v7180, %v7184
        %v7189 = vand.u32 2147483647, %v6818
        %vm7190 = vcmp.eq.f32.partialorder %v7189, 8.507059e+37
        %v7191 = vand.u32 %v6818, 2147483648
        %v7192 = vor.u32 1.1754944e-38, %v7191
        %v7193 = vsel %vm7190, %v7192, %v7188
        %v7194 = vmul.f32 1.0, %v7193
        %v7195 = vrcp.pop %v6820
        %v7196 = vmul.f32 %v6820, %v7195
        %v7197 = vsub.f32 1.0, %v7196
        %v7198 = vmul.f32 %v7195, %v7197
        %v7199 = vadd.f32 %v7195, %v7198
        %vm7200 = vweird.f32 %v6820
        %vm7201 = vweird.f32 %v7195
        %vm7202 = vmor %vm7200, %vm7201
        %v7203 = vsel %vm7202, %v7195, %v7199
        %v7204 = vand.u32 2147483647, %v6820
        %vm7205 = vcmp.eq.f32.partialorder %v7204, 8.507059e+37
        %v7206 = vand.u32 %v6820, 2147483648
        %v7207 = vor.u32 1.1754944e-38, %v7206
        %v7208 = vsel %vm7205, %v7207, %v7203
        %v7209 = vmul.f32 1.0, %v7208
        %v7210 = vrcp.pop %v6822
        %v7211 = vmul.f32 %v6822, %v7210
        %v7212 = vsub.f32 1.0, %v7211
        %v7213 = vmul.f32 %v7210, %v7212
        %v7214 = vadd.f32 %v7210, %v7213
        %vm7215 = vweird.f32 %v6822
        %vm7216 = vweird.f32 %v7210
        %vm7217 = vmor %vm7215, %vm7216
        %v7218 = vsel %vm7217, %v7210, %v7214
        %v7219 = vand.u32 2147483647, %v6822
        %vm7220 = vcmp.eq.f32.partialorder %v7219, 8.507059e+37
        %v7221 = vand.u32 %v6822, 2147483648
        %v7222 = vor.u32 1.1754944e-38, %v7221
        %v7223 = vsel %vm7220, %v7222, %v7218
        %v7224 = vmul.f32 1.0, %v7223
        %v7225 = vrcp.pop %v6824
        %v7226 = vmul.f32 %v6824, %v7225
        %v7227 = vsub.f32 1.0, %v7226
        %v7228 = vmul.f32 %v7225, %v7227
        %v7229 = vadd.f32 %v7225, %v7228
        %vm7230 = vweird.f32 %v6824
        %vm7231 = vweird.f32 %v7225
        %vm7232 = vmor %vm7230, %vm7231
        %v7233 = vsel %vm7232, %v7225, %v7229
        %v7234 = vand.u32 2147483647, %v6824
        %vm7235 = vcmp.eq.f32.partialorder %v7234, 8.507059e+37
        %v7236 = vand.u32 %v6824, 2147483648
        %v7237 = vor.u32 1.1754944e-38, %v7236
        %v7238 = vsel %vm7235, %v7237, %v7233
        %v7239 = vmul.f32 1.0, %v7238
        %v7240 = vrcp.pop %v6826
        %v7241 = vmul.f32 %v6826, %v7240
        %v7242 = vsub.f32 1.0, %v7241
        %v7243 = vmul.f32 %v7240, %v7242
        %v7244 = vadd.f32 %v7240, %v7243
        %vm7245 = vweird.f32 %v6826
        %vm7246 = vweird.f32 %v7240
        %vm7247 = vmor %vm7245, %vm7246
        %v7248 = vsel %vm7247, %v7240, %v7244
        %v7249 = vand.u32 2147483647, %v6826
        %vm7250 = vcmp.eq.f32.partialorder %v7249, 8.507059e+37
        %v7251 = vand.u32 %v6826, 2147483648
        %v7252 = vor.u32 1.1754944e-38, %v7251
        %v7253 = vsel %vm7250, %v7252, %v7248
        %v7254 = vmul.f32 1.0, %v7253
        %v7255 = vrcp.pop %v6828
        %v7256 = vmul.f32 %v6828, %v7255
        %v7257 = vsub.f32 1.0, %v7256
        %v7258 = vmul.f32 %v7255, %v7257
        %v7259 = vadd.f32 %v7255, %v7258
        %vm7260 = vweird.f32 %v6828
        %vm7261 = vweird.f32 %v7255
        %vm7262 = vmor %vm7260, %vm7261
        %v7263 = vsel %vm7262, %v7255, %v7259
        %v7264 = vand.u32 2147483647, %v6828
        %vm7265 = vcmp.eq.f32.partialorder %v7264, 8.507059e+37
        %v7266 = vand.u32 %v6828, 2147483648
        %v7267 = vor.u32 1.1754944e-38, %v7266
        %v7268 = vsel %vm7265, %v7267, %v7263
        %v7269 = vmul.f32 1.0, %v7268
        %v7270 = vrcp.pop %v6830
        %v7271 = vmul.f32 %v6830, %v7270
        %v7272 = vsub.f32 1.0, %v7271
        %v7273 = vmul.f32 %v7270, %v7272
        %v7274 = vadd.f32 %v7270, %v7273
        %vm7275 = vweird.f32 %v6830
        %vm7276 = vweird.f32 %v7270
        %vm7277 = vmor %vm7275, %vm7276
        %v7278 = vsel %vm7277, %v7270, %v7274
        %v7279 = vand.u32 2147483647, %v6830
        %vm7280 = vcmp.eq.f32.partialorder %v7279, 8.507059e+37
        %v7281 = vand.u32 %v6830, 2147483648
        %v7282 = vor.u32 1.1754944e-38, %v7281
        %v7283 = vsel %vm7280, %v7282, %v7278
        %v7284 = vmul.f32 1.0, %v7283
        %v7285 = vrcp.pop %v6832
        %v7286 = vmul.f32 %v6832, %v7285
        %v7287 = vsub.f32 1.0, %v7286
        %v7288 = vmul.f32 %v7285, %v7287
        %v7289 = vadd.f32 %v7285, %v7288
        %vm7290 = vweird.f32 %v6832
        %vm7291 = vweird.f32 %v7285
        %vm7292 = vmor %vm7290, %vm7291
        %v7293 = vsel %vm7292, %v7285, %v7289
        %v7294 = vand.u32 2147483647, %v6832
        %vm7295 = vcmp.eq.f32.partialorder %v7294, 8.507059e+37
        %v7296 = vand.u32 %v6832, 2147483648
        %v7297 = vor.u32 1.1754944e-38, %v7296
        %v7298 = vsel %vm7295, %v7297, %v7293
        %v7299 = vmul.f32 1.0, %v7298
        %v7300 = vrcp.pop %v6834
        %v7301 = vmul.f32 %v6834, %v7300
        %v7302 = vsub.f32 1.0, %v7301
        %v7303 = vmul.f32 %v7300, %v7302
        %v7304 = vadd.f32 %v7300, %v7303
        %vm7305 = vweird.f32 %v6834
        %vm7306 = vweird.f32 %v7300
        %vm7307 = vmor %vm7305, %vm7306
        %v7308 = vsel %vm7307, %v7300, %v7304
        %v7309 = vand.u32 2147483647, %v6834
        %vm7310 = vcmp.eq.f32.partialorder %v7309, 8.507059e+37
        %v7311 = vand.u32 %v6834, 2147483648
        %v7312 = vor.u32 1.1754944e-38, %v7311
        %v7313 = vsel %vm7310, %v7312, %v7308
        %v7314 = vmul.f32 1.0, %v7313
        %v7315 = vmul.f32 %v6708, %v6849
        %v7316 = vmul.f32 %v6710, %v6864
        %v7317 = vmul.f32 %v6712, %v6879
        %v7318 = vmul.f32 %v6714, %v6894
        %v7319 = vmul.f32 %v6716, %v6909
        %v7320 = vmul.f32 %v6718, %v6924
        %v7321 = vmul.f32 %v6720, %v6939
        %v7322 = vmul.f32 %v6722, %v6954
        %v7323 = vmul.f32 %v6724, %v6969
        %v7324 = vmul.f32 %v6726, %v6984
        %v7325 = vmul.f32 %v6728, %v6999
        %v7326 = vmul.f32 %v6730, %v7014
        %v7327 = vmul.f32 %v6732, %v7029
        %v7328 = vmul.f32 %v6734, %v7044
        %v7329 = vmul.f32 %v6736, %v7059
        %v7330 = vmul.f32 %v6738, %v7074
        %v7331 = vmul.f32 %v6740, %v7089
        %v7332 = vmul.f32 %v6742, %v7104
        %v7333 = vmul.f32 %v6744, %v7119
        %v7334 = vmul.f32 %v6746, %v7134
        %v7335 = vmul.f32 %v6748, %v7149
        %v7336 = vmul.f32 %v6750, %v7164
        %v7337 = vmul.f32 %v6752, %v7179
        %v7338 = vmul.f32 %v6754, %v7194
        %v7339 = vmul.f32 %v6756, %v7209
        %v7340 = vmul.f32 %v6758, %v7224
        %v7341 = vmul.f32 %v6760, %v7239
        %v7342 = vmul.f32 %v6762, %v7254
        %v7343 = vmul.f32 %v6764, %v7269
        %v7344 = vmul.f32 %v6766, %v7284
        %v7345 = vmul.f32 %v6768, %v7299
        %v7346 = vmul.f32 %v6770, %v7314
        %v7347 = vpack.c.bf16 %v7315, %v7315
        %v7348 = vpack.c.bf16 %v7316, %v7316
        %v7349 = vpack.c.bf16 %v7317, %v7317
        %v7350 = vpack.c.bf16 %v7318, %v7318
        %v7351 = vpack.c.bf16 %v7319, %v7319
        %v7352 = vpack.c.bf16 %v7320, %v7320
        %v7353 = vpack.c.bf16 %v7321, %v7321
        %v7354 = vpack.c.bf16 %v7322, %v7322
        %v7355 = vpack.c.bf16 %v7323, %v7323
        %v7356 = vpack.c.bf16 %v7324, %v7324
        %v7357 = vpack.c.bf16 %v7325, %v7325
        %v7358 = vpack.c.bf16 %v7326, %v7326
        %v7359 = vpack.c.bf16 %v7327, %v7327
        %v7360 = vpack.c.bf16 %v7328, %v7328
        %v7361 = vpack.c.bf16 %v7329, %v7329
        %v7362 = vpack.c.bf16 %v7330, %v7330
        %v7363 = vpack.c.bf16 %v7331, %v7331
        %v7364 = vpack.c.bf16 %v7332, %v7332
        %v7365 = vpack.c.bf16 %v7333, %v7333
        %v7366 = vpack.c.bf16 %v7334, %v7334
        %v7367 = vpack.c.bf16 %v7335, %v7335
        %v7368 = vpack.c.bf16 %v7336, %v7336
        %v7369 = vpack.c.bf16 %v7337, %v7337
        %v7370 = vpack.c.bf16 %v7338, %v7338
        %v7371 = vpack.c.bf16 %v7339, %v7339
        %v7372 = vpack.c.bf16 %v7340, %v7340
        %v7373 = vpack.c.bf16 %v7341, %v7341
        %v7374 = vpack.c.bf16 %v7342, %v7342
        %v7375 = vpack.c.bf16 %v7343, %v7343
        %v7376 = vpack.c.bf16 %v7344, %v7344
        %v7377 = vpack.c.bf16 %v7345, %v7345
        %v7378 = vpack.c.bf16 %v7346, %v7346
        %v7395 = vunpack.c.l.b16 %v7347
        %v7396 = vunpack.c.l.b16 %v7348
        %v7397 = vunpack.c.l.b16 %v7349
        %v7398 = vunpack.c.l.b16 %v7350
        %v7399 = vunpack.c.l.b16 %v7351
        %v7400 = vunpack.c.l.b16 %v7352
        %v7401 = vunpack.c.l.b16 %v7353
        %v7402 = vunpack.c.l.b16 %v7354
        %v7403 = vunpack.c.l.b16 %v7355
        %v7404 = vunpack.c.l.b16 %v7356
        %v7405 = vunpack.c.l.b16 %v7357
        %v7406 = vunpack.c.l.b16 %v7358
        %v7407 = vunpack.c.l.b16 %v7359
        %v7408 = vunpack.c.l.b16 %v7360
        %v7409 = vunpack.c.l.b16 %v7361
        %v7410 = vunpack.c.l.b16 %v7362
        %v7411 = vpack.c.b16 %v7396, %v7395
        %v7412 = vpack.c.b16 %v7398, %v7397
        %v7413 = vpack.c.b16 %v7400, %v7399
        %v7414 = vpack.c.b16 %v7402, %v7401
        %v7415 = vpack.c.b16 %v7404, %v7403
        %v7416 = vpack.c.b16 %v7406, %v7405
        %v7417 = vpack.c.b16 %v7408, %v7407
        %v7418 = vpack.c.b16 %v7410, %v7409
        %7427 = vrot.lane.b32.xlu0 %v3511, 32
        %v7428 = vpop.permute.xlu0 %7427
        %7429 = vrot.lane.b32.xlu0 %v3512, 32
        %v7430 = vpop.permute.xlu0 %7429
        %7431 = vrot.lane.b32.xlu0 %v3513, 32
        %v7432 = vpop.permute.xlu0 %7431
        %7433 = vrot.lane.b32.xlu0 %v3514, 32
        %v7434 = vpop.permute.xlu0 %7433
        %7435 = vrot.lane.b32.xlu0 %v3515, 32
        %v7436 = vpop.permute.xlu0 %7435
        %7437 = vrot.lane.b32.xlu0 %v3516, 32
        %v7438 = vpop.permute.xlu0 %7437
        %7439 = vrot.lane.b32.xlu0 %v3517, 32
        %v7440 = vpop.permute.xlu0 %7439
        %7441 = vrot.lane.b32.xlu0 %v3518, 32
        %v7442 = vpop.permute.xlu0 %7441
        %7451 = vmatpush.bf16.msra.mxu0 %v7442
        %7452 = vmatpush.bf16.msra.mxu0 %v7440
        %7453 = vmatpush.bf16.msra.mxu0 %v7438
        %7454 = vmatpush.bf16.msra.mxu0 %v7436
        %7455 = vmatpush.bf16.msra.mxu0 %v7434
        %7456 = vmatpush.bf16.msra.mxu0 %v7432
        %7457 = vmatpush.bf16.msra.mxu0 %v7430
        %7458 = vmatpush.bf16.msra.mxu0 %v7428
        %7459 = vmatmul.bf16.gmra.mxu0 %v7411
        %v7460 = vpop.f32.mrf.mxu0
        %v7461 = vadd.f32 0.0, %v7460
        %v7462 = vpop.f32.mrf.mxu0
        %v7463 = vadd.f32 0.0, %v7462
        %7464 = vmatmul.bf16.gmra.mxu0 %v7412
        %v7465 = vpop.f32.mrf.mxu0
        %v7466 = vadd.f32 0.0, %v7465
        %v7467 = vpop.f32.mrf.mxu0
        %v7468 = vadd.f32 0.0, %v7467
        %7469 = vmatmul.bf16.gmra.mxu0 %v7413
        %v7470 = vpop.f32.mrf.mxu0
        %v7471 = vadd.f32 0.0, %v7470
        %v7472 = vpop.f32.mrf.mxu0
        %v7473 = vadd.f32 0.0, %v7472
        %7474 = vmatmul.bf16.gmra.mxu0 %v7414
        %v7475 = vpop.f32.mrf.mxu0
        %v7476 = vadd.f32 0.0, %v7475
        %v7477 = vpop.f32.mrf.mxu0
        %v7478 = vadd.f32 0.0, %v7477
        %7479 = vmatmul.bf16.gmra.mxu0 %v7415
        %v7480 = vpop.f32.mrf.mxu0
        %v7481 = vadd.f32 0.0, %v7480
        %v7482 = vpop.f32.mrf.mxu0
        %v7483 = vadd.f32 0.0, %v7482
        %7484 = vmatmul.bf16.gmra.mxu0 %v7416
        %v7485 = vpop.f32.mrf.mxu0
        %v7486 = vadd.f32 0.0, %v7485
        %v7487 = vpop.f32.mrf.mxu0
        %v7488 = vadd.f32 0.0, %v7487
        %7489 = vmatmul.bf16.gmra.mxu0 %v7417
        %v7490 = vpop.f32.mrf.mxu0
        %v7491 = vadd.f32 0.0, %v7490
        %v7492 = vpop.f32.mrf.mxu0
        %v7493 = vadd.f32 0.0, %v7492
        %7494 = vmatmul.bf16.gmra.mxu0 %v7418
        %v7495 = vpop.f32.mrf.mxu0
        %v7496 = vadd.f32 0.0, %v7495
        %v7497 = vpop.f32.mrf.mxu0
        %v7498 = vadd.f32 0.0, %v7497
        %7499 = vdwg.mxu0
        %v7516 = vunpack.c.l.b16 %v7363
        %v7517 = vunpack.c.l.b16 %v7364
        %v7518 = vunpack.c.l.b16 %v7365
        %v7519 = vunpack.c.l.b16 %v7366
        %v7520 = vunpack.c.l.b16 %v7367
        %v7521 = vunpack.c.l.b16 %v7368
        %v7522 = vunpack.c.l.b16 %v7369
        %v7523 = vunpack.c.l.b16 %v7370
        %v7524 = vunpack.c.l.b16 %v7371
        %v7525 = vunpack.c.l.b16 %v7372
        %v7526 = vunpack.c.l.b16 %v7373
        %v7527 = vunpack.c.l.b16 %v7374
        %v7528 = vunpack.c.l.b16 %v7375
        %v7529 = vunpack.c.l.b16 %v7376
        %v7530 = vunpack.c.l.b16 %v7377
        %v7531 = vunpack.c.l.b16 %v7378
        %v7532 = vpack.c.b16 %v7517, %v7516
        %v7533 = vpack.c.b16 %v7519, %v7518
        %v7534 = vpack.c.b16 %v7521, %v7520
        %v7535 = vpack.c.b16 %v7523, %v7522
        %v7536 = vpack.c.b16 %v7525, %v7524
        %v7537 = vpack.c.b16 %v7527, %v7526
        %v7538 = vpack.c.b16 %v7529, %v7528
        %v7539 = vpack.c.b16 %v7531, %v7530
        %7548 = vrot.lane.b32.xlu0 %v3656, 32
        %v7549 = vpop.permute.xlu0 %7548
        %7550 = vrot.lane.b32.xlu0 %v3657, 32
        %v7551 = vpop.permute.xlu0 %7550
        %7552 = vrot.lane.b32.xlu0 %v3658, 32
        %v7553 = vpop.permute.xlu0 %7552
        %7554 = vrot.lane.b32.xlu0 %v3659, 32
        %v7555 = vpop.permute.xlu0 %7554
        %7556 = vrot.lane.b32.xlu0 %v3660, 32
        %v7557 = vpop.permute.xlu0 %7556
        %7558 = vrot.lane.b32.xlu0 %v3661, 32
        %v7559 = vpop.permute.xlu0 %7558
        %7560 = vrot.lane.b32.xlu0 %v3662, 32
        %v7561 = vpop.permute.xlu0 %7560
        %7562 = vrot.lane.b32.xlu0 %v3663, 32
        %v7563 = vpop.permute.xlu0 %7562
        %7572 = vmatpush.bf16.msra.mxu0 %v7563
        %7573 = vmatpush.bf16.msra.mxu0 %v7561
        %7574 = vmatpush.bf16.msra.mxu0 %v7559
        %7575 = vmatpush.bf16.msra.mxu0 %v7557
        %7576 = vmatpush.bf16.msra.mxu0 %v7555
        %7577 = vmatpush.bf16.msra.mxu0 %v7553
        %7578 = vmatpush.bf16.msra.mxu0 %v7551
        %7579 = vmatpush.bf16.msra.mxu0 %v7549
        %7580 = vmatmul.bf16.gmra.mxu0 %v7532
        %v7581 = vpop.f32.mrf.mxu0
        %v7582 = vadd.f32 0.0, %v7581
        %v7583 = vpop.f32.mrf.mxu0
        %v7584 = vadd.f32 0.0, %v7583
        %7585 = vmatmul.bf16.gmra.mxu0 %v7533
        %v7586 = vpop.f32.mrf.mxu0
        %v7587 = vadd.f32 0.0, %v7586
        %v7588 = vpop.f32.mrf.mxu0
        %v7589 = vadd.f32 0.0, %v7588
        %7590 = vmatmul.bf16.gmra.mxu0 %v7534
        %v7591 = vpop.f32.mrf.mxu0
        %v7592 = vadd.f32 0.0, %v7591
        %v7593 = vpop.f32.mrf.mxu0
        %v7594 = vadd.f32 0.0, %v7593
        %7595 = vmatmul.bf16.gmra.mxu0 %v7535
        %v7596 = vpop.f32.mrf.mxu0
        %v7597 = vadd.f32 0.0, %v7596
        %v7598 = vpop.f32.mrf.mxu0
        %v7599 = vadd.f32 0.0, %v7598
        %7600 = vmatmul.bf16.gmra.mxu0 %v7536
        %v7601 = vpop.f32.mrf.mxu0
        %v7602 = vadd.f32 0.0, %v7601
        %v7603 = vpop.f32.mrf.mxu0
        %v7604 = vadd.f32 0.0, %v7603
        %7605 = vmatmul.bf16.gmra.mxu0 %v7537
        %v7606 = vpop.f32.mrf.mxu0
        %v7607 = vadd.f32 0.0, %v7606
        %v7608 = vpop.f32.mrf.mxu0
        %v7609 = vadd.f32 0.0, %v7608
        %7610 = vmatmul.bf16.gmra.mxu0 %v7538
        %v7611 = vpop.f32.mrf.mxu0
        %v7612 = vadd.f32 0.0, %v7611
        %v7613 = vpop.f32.mrf.mxu0
        %v7614 = vadd.f32 0.0, %v7613
        %7615 = vmatmul.bf16.gmra.mxu0 %v7539
        %v7616 = vpop.f32.mrf.mxu0
        %v7617 = vadd.f32 0.0, %v7616
        %v7618 = vpop.f32.mrf.mxu0
        %v7619 = vadd.f32 0.0, %v7618
        %7620 = vdwg.mxu0
        %7653 = vrot.lane.b32.xlu0 %v4861, 32
        %v7654 = vpop.permute.xlu0 %7653
        %7655 = vrot.lane.b32.xlu0 %v4863, 32
        %v7656 = vpop.permute.xlu0 %7655
        %7657 = vrot.lane.b32.xlu0 %v4866, 32
        %v7658 = vpop.permute.xlu0 %7657
        %7659 = vrot.lane.b32.xlu0 %v4868, 32
        %v7660 = vpop.permute.xlu0 %7659
        %7661 = vrot.lane.b32.xlu0 %v4871, 32
        %v7662 = vpop.permute.xlu0 %7661
        %7663 = vrot.lane.b32.xlu0 %v4873, 32
        %v7664 = vpop.permute.xlu0 %7663
        %7665 = vrot.lane.b32.xlu0 %v4876, 32
        %v7666 = vpop.permute.xlu0 %7665
        %7667 = vrot.lane.b32.xlu0 %v4878, 32
        %v7668 = vpop.permute.xlu0 %7667
        %7669 = vrot.lane.b32.xlu0 %v4881, 32
        %v7670 = vpop.permute.xlu0 %7669
        %7671 = vrot.lane.b32.xlu0 %v4883, 32
        %v7672 = vpop.permute.xlu0 %7671
        %7673 = vrot.lane.b32.xlu0 %v4886, 32
        %v7674 = vpop.permute.xlu0 %7673
        %7675 = vrot.lane.b32.xlu0 %v4888, 32
        %v7676 = vpop.permute.xlu0 %7675
        %7677 = vrot.lane.b32.xlu0 %v4891, 32
        %v7678 = vpop.permute.xlu0 %7677
        %7679 = vrot.lane.b32.xlu0 %v4893, 32
        %v7680 = vpop.permute.xlu0 %7679
        %7681 = vrot.lane.b32.xlu0 %v4896, 32
        %v7682 = vpop.permute.xlu0 %7681
        %7683 = vrot.lane.b32.xlu0 %v4898, 32
        %v7684 = vpop.permute.xlu0 %7683
        %7685 = vrot.lane.b32.xlu0 %v4982, 32
        %v7686 = vpop.permute.xlu0 %7685
        %7687 = vrot.lane.b32.xlu0 %v4984, 32
        %v7688 = vpop.permute.xlu0 %7687
        %7689 = vrot.lane.b32.xlu0 %v4987, 32
        %v7690 = vpop.permute.xlu0 %7689
        %7691 = vrot.lane.b32.xlu0 %v4989, 32
        %v7692 = vpop.permute.xlu0 %7691
        %7693 = vrot.lane.b32.xlu0 %v4992, 32
        %v7694 = vpop.permute.xlu0 %7693
        %7695 = vrot.lane.b32.xlu0 %v4994, 32
        %v7696 = vpop.permute.xlu0 %7695
        %7697 = vrot.lane.b32.xlu0 %v4997, 32
        %v7698 = vpop.permute.xlu0 %7697
        %7699 = vrot.lane.b32.xlu0 %v4999, 32
        %v7700 = vpop.permute.xlu0 %7699
        %7701 = vrot.lane.b32.xlu0 %v5002, 32
        %v7702 = vpop.permute.xlu0 %7701
        %7703 = vrot.lane.b32.xlu0 %v5004, 32
        %v7704 = vpop.permute.xlu0 %7703
        %7705 = vrot.lane.b32.xlu0 %v5007, 32
        %v7706 = vpop.permute.xlu0 %7705
        %7707 = vrot.lane.b32.xlu0 %v5009, 32
        %v7708 = vpop.permute.xlu0 %7707
        %7709 = vrot.lane.b32.xlu0 %v5012, 32
        %v7710 = vpop.permute.xlu0 %7709
        %7711 = vrot.lane.b32.xlu0 %v5014, 32
        %v7712 = vpop.permute.xlu0 %7711
        %7713 = vrot.lane.b32.xlu0 %v5017, 32
        %v7714 = vpop.permute.xlu0 %7713
        %7715 = vrot.lane.b32.xlu0 %v5019, 32
        %v7716 = vpop.permute.xlu0 %7715
        %7781 = vrot.lane.b32.xlu0 %v6161, 64
        %v7782 = vpop.permute.xlu0 %7781
        %7783 = vrot.lane.b32.xlu0 %v6163, 64
        %v7784 = vpop.permute.xlu0 %7783
        %7785 = vrot.lane.b32.xlu0 %v6166, 64
        %v7786 = vpop.permute.xlu0 %7785
        %7787 = vrot.lane.b32.xlu0 %v6168, 64
        %v7788 = vpop.permute.xlu0 %7787
        %7789 = vrot.lane.b32.xlu0 %v6171, 64
        %v7790 = vpop.permute.xlu0 %7789
        %7791 = vrot.lane.b32.xlu0 %v6173, 64
        %v7792 = vpop.permute.xlu0 %7791
        %7793 = vrot.lane.b32.xlu0 %v6176, 64
        %v7794 = vpop.permute.xlu0 %7793
        %7795 = vrot.lane.b32.xlu0 %v6178, 64
        %v7796 = vpop.permute.xlu0 %7795
        %7797 = vrot.lane.b32.xlu0 %v6181, 64
        %v7798 = vpop.permute.xlu0 %7797
        %7799 = vrot.lane.b32.xlu0 %v6183, 64
        %v7800 = vpop.permute.xlu0 %7799
        %7801 = vrot.lane.b32.xlu0 %v6186, 64
        %v7802 = vpop.permute.xlu0 %7801
        %7803 = vrot.lane.b32.xlu0 %v6188, 64
        %v7804 = vpop.permute.xlu0 %7803
        %7805 = vrot.lane.b32.xlu0 %v6191, 64
        %v7806 = vpop.permute.xlu0 %7805
        %7807 = vrot.lane.b32.xlu0 %v6193, 64
        %v7808 = vpop.permute.xlu0 %7807
        %7809 = vrot.lane.b32.xlu0 %v6196, 64
        %v7810 = vpop.permute.xlu0 %7809
        %7811 = vrot.lane.b32.xlu0 %v6198, 64
        %v7812 = vpop.permute.xlu0 %7811
        %7813 = vrot.lane.b32.xlu0 %v6282, 64
        %v7814 = vpop.permute.xlu0 %7813
        %7815 = vrot.lane.b32.xlu0 %v6284, 64
        %v7816 = vpop.permute.xlu0 %7815
        %7817 = vrot.lane.b32.xlu0 %v6287, 64
        %v7818 = vpop.permute.xlu0 %7817
        %7819 = vrot.lane.b32.xlu0 %v6289, 64
        %v7820 = vpop.permute.xlu0 %7819
        %7821 = vrot.lane.b32.xlu0 %v6292, 64
        %v7822 = vpop.permute.xlu0 %7821
        %7823 = vrot.lane.b32.xlu0 %v6294, 64
        %v7824 = vpop.permute.xlu0 %7823
        %7825 = vrot.lane.b32.xlu0 %v6297, 64
        %v7826 = vpop.permute.xlu0 %7825
        %7827 = vrot.lane.b32.xlu0 %v6299, 64
        %v7828 = vpop.permute.xlu0 %7827
        %7829 = vrot.lane.b32.xlu0 %v6302, 64
        %v7830 = vpop.permute.xlu0 %7829
        %7831 = vrot.lane.b32.xlu0 %v6304, 64
        %v7832 = vpop.permute.xlu0 %7831
        %7833 = vrot.lane.b32.xlu0 %v6307, 64
        %v7834 = vpop.permute.xlu0 %7833
        %7835 = vrot.lane.b32.xlu0 %v6309, 64
        %v7836 = vpop.permute.xlu0 %7835
        %7837 = vrot.lane.b32.xlu0 %v6312, 64
        %v7838 = vpop.permute.xlu0 %7837
        %7839 = vrot.lane.b32.xlu0 %v6314, 64
        %v7840 = vpop.permute.xlu0 %7839
        %7841 = vrot.lane.b32.xlu0 %v6317, 64
        %v7842 = vpop.permute.xlu0 %7841
        %7843 = vrot.lane.b32.xlu0 %v6319, 64
        %v7844 = vpop.permute.xlu0 %7843
        %7909 = vrot.lane.b32.xlu0 %v7461, 96
        %v7910 = vpop.permute.xlu0 %7909
        %7911 = vrot.lane.b32.xlu0 %v7463, 96
        %v7912 = vpop.permute.xlu0 %7911
        %7913 = vrot.lane.b32.xlu0 %v7466, 96
        %v7914 = vpop.permute.xlu0 %7913
        %7915 = vrot.lane.b32.xlu0 %v7468, 96
        %v7916 = vpop.permute.xlu0 %7915
        %7917 = vrot.lane.b32.xlu0 %v7471, 96
        %v7918 = vpop.permute.xlu0 %7917
        %7919 = vrot.lane.b32.xlu0 %v7473, 96
        %v7920 = vpop.permute.xlu0 %7919
        %7921 = vrot.lane.b32.xlu0 %v7476, 96
        %v7922 = vpop.permute.xlu0 %7921
        %7923 = vrot.lane.b32.xlu0 %v7478, 96
        %v7924 = vpop.permute.xlu0 %7923
        %7925 = vrot.lane.b32.xlu0 %v7481, 96
        %v7926 = vpop.permute.xlu0 %7925
        %7927 = vrot.lane.b32.xlu0 %v7483, 96
        %v7928 = vpop.permute.xlu0 %7927
        %7929 = vrot.lane.b32.xlu0 %v7486, 96
        %v7930 = vpop.permute.xlu0 %7929
        %7931 = vrot.lane.b32.xlu0 %v7488, 96
        %v7932 = vpop.permute.xlu0 %7931
        %7933 = vrot.lane.b32.xlu0 %v7491, 96
        %v7934 = vpop.permute.xlu0 %7933
        %7935 = vrot.lane.b32.xlu0 %v7493, 96
        %v7936 = vpop.permute.xlu0 %7935
        %7937 = vrot.lane.b32.xlu0 %v7496, 96
        %v7938 = vpop.permute.xlu0 %7937
        %7939 = vrot.lane.b32.xlu0 %v7498, 96
        %v7940 = vpop.permute.xlu0 %7939
        %7941 = vrot.lane.b32.xlu0 %v7582, 96
        %v7942 = vpop.permute.xlu0 %7941
        %7943 = vrot.lane.b32.xlu0 %v7584, 96
        %v7944 = vpop.permute.xlu0 %7943
        %7945 = vrot.lane.b32.xlu0 %v7587, 96
        %v7946 = vpop.permute.xlu0 %7945
        %7947 = vrot.lane.b32.xlu0 %v7589, 96
        %v7948 = vpop.permute.xlu0 %7947
        %7949 = vrot.lane.b32.xlu0 %v7592, 96
        %v7950 = vpop.permute.xlu0 %7949
        %7951 = vrot.lane.b32.xlu0 %v7594, 96
        %v7952 = vpop.permute.xlu0 %7951
        %7953 = vrot.lane.b32.xlu0 %v7597, 96
        %v7954 = vpop.permute.xlu0 %7953
        %7955 = vrot.lane.b32.xlu0 %v7599, 96
        %v7956 = vpop.permute.xlu0 %7955
        %7957 = vrot.lane.b32.xlu0 %v7602, 96
        %v7958 = vpop.permute.xlu0 %7957
        %7959 = vrot.lane.b32.xlu0 %v7604, 96
        %v7960 = vpop.permute.xlu0 %7959
        %7961 = vrot.lane.b32.xlu0 %v7607, 96
        %v7962 = vpop.permute.xlu0 %7961
        %7963 = vrot.lane.b32.xlu0 %v7609, 96
        %v7964 = vpop.permute.xlu0 %7963
        %7965 = vrot.lane.b32.xlu0 %v7612, 96
        %v7966 = vpop.permute.xlu0 %7965
        %7967 = vrot.lane.b32.xlu0 %v7614, 96
        %v7968 = vpop.permute.xlu0 %7967
        %7969 = vrot.lane.b32.xlu0 %v7617, 96
        %v7970 = vpop.permute.xlu0 %7969
        %7971 = vrot.lane.b32.xlu0 %v7619, 96
        %v7972 = vpop.permute.xlu0 %7971
        %v8005 = vsel %vm2356, %v3537, %v7654
        %v8006 = vsel %vm2356, %v3539, %v7656
        %v8007 = vsel %vm2356, %v3542, %v7658
        %v8008 = vsel %vm2356, %v3544, %v7660
        %v8009 = vsel %vm2356, %v3547, %v7662
        %v8010 = vsel %vm2356, %v3549, %v7664
        %v8011 = vsel %vm2356, %v3552, %v7666
        %v8012 = vsel %vm2356, %v3554, %v7668
        %v8013 = vsel %vm2356, %v3557, %v7670
        %v8014 = vsel %vm2356, %v3559, %v7672
        %v8015 = vsel %vm2356, %v3562, %v7674
        %v8016 = vsel %vm2356, %v3564, %v7676
        %v8017 = vsel %vm2356, %v3567, %v7678
        %v8018 = vsel %vm2356, %v3569, %v7680
        %v8019 = vsel %vm2356, %v3572, %v7682
        %v8020 = vsel %vm2356, %v3574, %v7684
        %v8021 = vsel %vm2356, %v3682, %v7686
        %v8022 = vsel %vm2356, %v3684, %v7688
        %v8023 = vsel %vm2356, %v3687, %v7690
        %v8024 = vsel %vm2356, %v3689, %v7692
        %v8025 = vsel %vm2356, %v3692, %v7694
        %v8026 = vsel %vm2356, %v3694, %v7696
        %v8027 = vsel %vm2356, %v3697, %v7698
        %v8028 = vsel %vm2356, %v3699, %v7700
        %v8029 = vsel %vm2356, %v3702, %v7702
        %v8030 = vsel %vm2356, %v3704, %v7704
        %v8031 = vsel %vm2356, %v3707, %v7706
        %v8032 = vsel %vm2356, %v3709, %v7708
        %v8033 = vsel %vm2356, %v3712, %v7710
        %v8034 = vsel %vm2356, %v3714, %v7712
        %v8035 = vsel %vm2356, %v3717, %v7714
        %v8036 = vsel %vm2356, %v3719, %v7716
        %vm8037 = vcmask 523264
        %v8038 = vsel %vm8037, %v8005, %v7782
        %v8039 = vsel %vm8037, %v8006, %v7784
        %v8040 = vsel %vm8037, %v8007, %v7786
        %v8041 = vsel %vm8037, %v8008, %v7788
        %v8042 = vsel %vm8037, %v8009, %v7790
        %v8043 = vsel %vm8037, %v8010, %v7792
        %v8044 = vsel %vm8037, %v8011, %v7794
        %v8045 = vsel %vm8037, %v8012, %v7796
        %v8046 = vsel %vm8037, %v8013, %v7798
        %v8047 = vsel %vm8037, %v8014, %v7800
        %v8048 = vsel %vm8037, %v8015, %v7802
        %v8049 = vsel %vm8037, %v8016, %v7804
        %v8050 = vsel %vm8037, %v8017, %v7806
        %v8051 = vsel %vm8037, %v8018, %v7808
        %v8052 = vsel %vm8037, %v8019, %v7810
        %v8053 = vsel %vm8037, %v8020, %v7812
        %v8054 = vsel %vm8037, %v8021, %v7814
        %v8055 = vsel %vm8037, %v8022, %v7816
        %v8056 = vsel %vm8037, %v8023, %v7818
        %v8057 = vsel %vm8037, %v8024, %v7820
        %v8058 = vsel %vm8037, %v8025, %v7822
        %v8059 = vsel %vm8037, %v8026, %v7824
        %v8060 = vsel %vm8037, %v8027, %v7826
        %v8061 = vsel %vm8037, %v8028, %v7828
        %v8062 = vsel %vm8037, %v8029, %v7830
        %v8063 = vsel %vm8037, %v8030, %v7832
        %v8064 = vsel %vm8037, %v8031, %v7834
        %v8065 = vsel %vm8037, %v8032, %v7836
        %v8066 = vsel %vm8037, %v8033, %v7838
        %v8067 = vsel %vm8037, %v8034, %v7840
        %v8068 = vsel %vm8037, %v8035, %v7842
        %v8069 = vsel %vm8037, %v8036, %v7844
        %vm8070 = vcmask 785408
        %v8071 = vsel %vm8070, %v8038, %v7910
        %v8072 = vsel %vm8070, %v8039, %v7912
        %v8073 = vsel %vm8070, %v8040, %v7914
        %v8074 = vsel %vm8070, %v8041, %v7916
        %v8075 = vsel %vm8070, %v8042, %v7918
        %v8076 = vsel %vm8070, %v8043, %v7920
        %v8077 = vsel %vm8070, %v8044, %v7922
        %v8078 = vsel %vm8070, %v8045, %v7924
        %v8079 = vsel %vm8070, %v8046, %v7926
        %v8080 = vsel %vm8070, %v8047, %v7928
        %v8081 = vsel %vm8070, %v8048, %v7930
        %v8082 = vsel %vm8070, %v8049, %v7932
        %v8083 = vsel %vm8070, %v8050, %v7934
        %v8084 = vsel %vm8070, %v8051, %v7936
        %v8085 = vsel %vm8070, %v8052, %v7938
        %v8086 = vsel %vm8070, %v8053, %v7940
        %v8087 = vsel %vm8070, %v8054, %v7942
        %v8088 = vsel %vm8070, %v8055, %v7944
        %v8089 = vsel %vm8070, %v8056, %v7946
        %v8090 = vsel %vm8070, %v8057, %v7948
        %v8091 = vsel %vm8070, %v8058, %v7950
        %v8092 = vsel %vm8070, %v8059, %v7952
        %v8093 = vsel %vm8070, %v8060, %v7954
        %v8094 = vsel %vm8070, %v8061, %v7956
        %v8095 = vsel %vm8070, %v8062, %v7958
        %v8096 = vsel %vm8070, %v8063, %v7960
        %v8097 = vsel %vm8070, %v8064, %v7962
        %v8098 = vsel %vm8070, %v8065, %v7964
        %v8099 = vsel %vm8070, %v8066, %v7966
        %v8100 = vsel %vm8070, %v8067, %v7968
        %v8101 = vsel %vm8070, %v8068, %v7970
        %v8102 = vsel %vm8070, %v8069, %v7972
        %v8103 = vpack.c.bf16 %v8072, %v8071
        %v8104 = vpack.c.bf16 %v8074, %v8073
        %v8105 = vpack.c.bf16 %v8076, %v8075
        %v8106 = vpack.c.bf16 %v8078, %v8077
        %v8107 = vpack.c.bf16 %v8080, %v8079
        %v8108 = vpack.c.bf16 %v8082, %v8081
        %v8109 = vpack.c.bf16 %v8084, %v8083
        %v8110 = vpack.c.bf16 %v8086, %v8085
        %v8111 = vpack.c.bf16 %v8088, %v8087
        %v8112 = vpack.c.bf16 %v8090, %v8089
        %v8113 = vpack.c.bf16 %v8092, %v8091
        %v8114 = vpack.c.bf16 %v8094, %v8093
        %v8115 = vpack.c.bf16 %v8096, %v8095
        %v8116 = vpack.c.bf16 %v8098, %v8097
        %v8117 = vpack.c.bf16 %v8100, %v8099
        %v8118 = vpack.c.bf16 %v8102, %v8101
        %v8119 = vld [vmem:[%s761] sm:$0xf]
        %v8120 = vld [vmem:[%s761 + $0x4] sm:$0xf]
        %v8121 = vld [vmem:[%s761 + $0x8] sm:$0xf]
        %v8122 = vld [vmem:[%s761 + $0xc] sm:$0xf]
        %v8123 = vld [vmem:[%s761 + $0x10] sm:$0xf]
        %v8124 = vld [vmem:[%s761 + $0x14] sm:$0xf]
        %v8125 = vld [vmem:[%s761 + $0x18] sm:$0xf]
        %v8126 = vld [vmem:[%s761 + $0x1c] sm:$0xf]
        %v8127 = vld [vmem:[%s761 + $0x20] sm:$0xf]
        %v8128 = vld [vmem:[%s761 + $0x24] sm:$0xf]
        %v8129 = vld [vmem:[%s761 + $0x28] sm:$0xf]
        %v8130 = vld [vmem:[%s761 + $0x2c] sm:$0xf]
        %v8131 = vld [vmem:[%s761 + $0x30] sm:$0xf]
        %v8132 = vld [vmem:[%s761 + $0x34] sm:$0xf]
        %v8133 = vld [vmem:[%s761 + $0x38] sm:$0xf]
        %v8134 = vld [vmem:[%s761 + $0x3c] sm:$0xf]
        %v8135 = vld [vmem:[%s901] sm:$0x1]
        %v8137 = vperm.slane %v8135, 0
        %v8155 = vunpack.c.l.b16 %v8119
        %v8156 = vunpack.c.l.b16 %v8120
        %v8157 = vunpack.c.l.b16 %v8121
        %v8158 = vunpack.c.l.b16 %v8122
        %v8159 = vunpack.c.l.b16 %v8123
        %v8160 = vunpack.c.l.b16 %v8124
        %v8161 = vunpack.c.l.b16 %v8125
        %v8162 = vunpack.c.l.b16 %v8126
        %v8163 = vunpack.c.l.b16 %v8127
        %v8164 = vunpack.c.l.b16 %v8128
        %v8165 = vunpack.c.l.b16 %v8129
        %v8166 = vunpack.c.l.b16 %v8130
        %v8167 = vunpack.c.l.b16 %v8131
        %v8168 = vunpack.c.l.b16 %v8132
        %v8169 = vunpack.c.l.b16 %v8133
        %v8170 = vunpack.c.l.b16 %v8134
        %v8171 = vpack.c.b16 %v8156, %v8155
        %v8172 = vpack.c.b16 %v8158, %v8157
        %v8173 = vpack.c.b16 %v8160, %v8159
        %v8174 = vpack.c.b16 %v8162, %v8161
        %v8175 = vpack.c.b16 %v8164, %v8163
        %v8176 = vpack.c.b16 %v8166, %v8165
        %v8177 = vpack.c.b16 %v8168, %v8167
        %v8178 = vpack.c.b16 %v8170, %v8169
        %8187 = vmatpush.bf16.msra.mxu0 %v8178
        %8188 = vmatpush.bf16.msra.mxu0 %v8177
        %8189 = vmatpush.bf16.msra.mxu0 %v8176
        %8190 = vmatpush.bf16.msra.mxu0 %v8175
        %8191 = vmatpush.bf16.msra.mxu0 %v8174
        %8192 = vmatpush.bf16.msra.mxu0 %v8173
        %8193 = vmatpush.bf16.msra.mxu0 %v8172
        %8194 = vmatpush.bf16.msra.mxu0 %v8171
        %8195 = vmatmul.bf16.gmra.mxu0 %v8103
        %v8196 = vpop.f32.mrf.mxu0
        %v8197 = vadd.f32 %v8137, %v8196
        %v8198 = vpop.f32.mrf.mxu0
        %v8199 = vadd.f32 %v8137, %v8198
        %8200 = vmatmul.bf16.gmra.mxu0 %v8104
        %v8201 = vpop.f32.mrf.mxu0
        %v8202 = vadd.f32 %v8137, %v8201
        %v8203 = vpop.f32.mrf.mxu0
        %v8204 = vadd.f32 %v8137, %v8203
        %8205 = vmatmul.bf16.gmra.mxu0 %v8105
        %v8206 = vpop.f32.mrf.mxu0
        %v8207 = vadd.f32 %v8137, %v8206
        %v8208 = vpop.f32.mrf.mxu0
        %v8209 = vadd.f32 %v8137, %v8208
        %8210 = vmatmul.bf16.gmra.mxu0 %v8106
        %v8211 = vpop.f32.mrf.mxu0
        %v8212 = vadd.f32 %v8137, %v8211
        %v8213 = vpop.f32.mrf.mxu0
        %v8214 = vadd.f32 %v8137, %v8213
        %8215 = vmatmul.bf16.gmra.mxu0 %v8107
        %v8216 = vpop.f32.mrf.mxu0
        %v8217 = vadd.f32 %v8137, %v8216
        %v8218 = vpop.f32.mrf.mxu0
        %v8219 = vadd.f32 %v8137, %v8218
        %8220 = vmatmul.bf16.gmra.mxu0 %v8108
        %v8221 = vpop.f32.mrf.mxu0
        %v8222 = vadd.f32 %v8137, %v8221
        %v8223 = vpop.f32.mrf.mxu0
        %v8224 = vadd.f32 %v8137, %v8223
        %8225 = vmatmul.bf16.gmra.mxu0 %v8109
        %v8226 = vpop.f32.mrf.mxu0
        %v8227 = vadd.f32 %v8137, %v8226
        %v8228 = vpop.f32.mrf.mxu0
        %v8229 = vadd.f32 %v8137, %v8228
        %8230 = vmatmul.bf16.gmra.mxu0 %v8110
        %v8231 = vpop.f32.mrf.mxu0
        %v8232 = vadd.f32 %v8137, %v8231
        %v8233 = vpop.f32.mrf.mxu0
        %v8234 = vadd.f32 %v8137, %v8233
        %8235 = vmatmul.bf16.gmra.mxu0 %v8111
        %v8236 = vpop.f32.mrf.mxu0
        %v8237 = vadd.f32 %v8137, %v8236
        %v8238 = vpop.f32.mrf.mxu0
        %v8239 = vadd.f32 %v8137, %v8238
        %8240 = vmatmul.bf16.gmra.mxu0 %v8112
        %v8241 = vpop.f32.mrf.mxu0
        %v8242 = vadd.f32 %v8137, %v8241
        %v8243 = vpop.f32.mrf.mxu0
        %v8244 = vadd.f32 %v8137, %v8243
        %8245 = vmatmul.bf16.gmra.mxu0 %v8113
        %v8246 = vpop.f32.mrf.mxu0
        %v8247 = vadd.f32 %v8137, %v8246
        %v8248 = vpop.f32.mrf.mxu0
        %v8249 = vadd.f32 %v8137, %v8248
        %8250 = vmatmul.bf16.gmra.mxu0 %v8114
        %v8251 = vpop.f32.mrf.mxu0
        %v8252 = vadd.f32 %v8137, %v8251
        %v8253 = vpop.f32.mrf.mxu0
        %v8254 = vadd.f32 %v8137, %v8253
        %8255 = vmatmul.bf16.gmra.mxu0 %v8115
        %v8256 = vpop.f32.mrf.mxu0
        %v8257 = vadd.f32 %v8137, %v8256
        %v8258 = vpop.f32.mrf.mxu0
        %v8259 = vadd.f32 %v8137, %v8258
        %8260 = vmatmul.bf16.gmra.mxu0 %v8116
        %v8261 = vpop.f32.mrf.mxu0
        %v8262 = vadd.f32 %v8137, %v8261
        %v8263 = vpop.f32.mrf.mxu0
        %v8264 = vadd.f32 %v8137, %v8263
        %8265 = vmatmul.bf16.gmra.mxu0 %v8117
        %v8266 = vpop.f32.mrf.mxu0
        %v8267 = vadd.f32 %v8137, %v8266
        %v8268 = vpop.f32.mrf.mxu0
        %v8269 = vadd.f32 %v8137, %v8268
        %8270 = vmatmul.bf16.gmra.mxu0 %v8118
        %v8271 = vpop.f32.mrf.mxu0
        %v8272 = vadd.f32 %v8137, %v8271
        %v8273 = vpop.f32.mrf.mxu0
        %v8274 = vadd.f32 %v8137, %v8273
        %8275 = vdwg.mxu0
        %v8276 = vadd.f32 %v978, %v8197
        %v8277 = vadd.f32 %v979, %v8199
        %v8278 = vadd.f32 %v980, %v8202
        %v8279 = vadd.f32 %v981, %v8204
        %v8280 = vadd.f32 %v982, %v8207
        %v8281 = vadd.f32 %v983, %v8209
        %v8282 = vadd.f32 %v984, %v8212
        %v8283 = vadd.f32 %v985, %v8214
        %v8284 = vadd.f32 %v986, %v8217
        %v8285 = vadd.f32 %v987, %v8219
        %v8286 = vadd.f32 %v988, %v8222
        %v8287 = vadd.f32 %v989, %v8224
        %v8288 = vadd.f32 %v990, %v8227
        %v8289 = vadd.f32 %v991, %v8229
        %v8290 = vadd.f32 %v992, %v8232
        %v8291 = vadd.f32 %v993, %v8234
        %v8292 = vadd.f32 %v994, %v8237
        %v8293 = vadd.f32 %v995, %v8239
        %v8294 = vadd.f32 %v996, %v8242
        %v8295 = vadd.f32 %v997, %v8244
        %v8296 = vadd.f32 %v998, %v8247
        %v8297 = vadd.f32 %v999, %v8249
        %v8298 = vadd.f32 %v1000, %v8252
        %v8299 = vadd.f32 %v1001, %v8254
        %v8300 = vadd.f32 %v1002, %v8257
        %v8301 = vadd.f32 %v1003, %v8259
        %v8302 = vadd.f32 %v1004, %v8262
        %v8303 = vadd.f32 %v1005, %v8264
        %v8304 = vadd.f32 %v1006, %v8267
        %v8305 = vadd.f32 %v1007, %v8269
        %v8306 = vadd.f32 %v1008, %v8272
        %v8307 = vadd.f32 %v1009, %v8274
        %v8308 = vld [vmem:[%s770] sm:$0x1]
        %v8309 = vld [vmem:[%s779] sm:$0x1]
        %8310 = vadd.xlane.f32.xlu0 %v8276
        %v8311 = vpop.xlane.xlu0 %8310
        %8312 = vadd.xlane.f32.xlu0 %v8277
        %v8313 = vpop.xlane.xlu0 %8312
        %8314 = vadd.xlane.f32.xlu0 %v8278
        %v8315 = vpop.xlane.xlu0 %8314
        %8316 = vadd.xlane.f32.xlu0 %v8279
        %v8317 = vpop.xlane.xlu0 %8316
        %8318 = vadd.xlane.f32.xlu0 %v8280
        %v8319 = vpop.xlane.xlu0 %8318
        %8320 = vadd.xlane.f32.xlu0 %v8281
        %v8321 = vpop.xlane.xlu0 %8320
        %8322 = vadd.xlane.f32.xlu0 %v8282
        %v8323 = vpop.xlane.xlu0 %8322
        %8324 = vadd.xlane.f32.xlu0 %v8283
        %v8325 = vpop.xlane.xlu0 %8324
        %8326 = vadd.xlane.f32.xlu0 %v8284
        %v8327 = vpop.xlane.xlu0 %8326
        %8328 = vadd.xlane.f32.xlu0 %v8285
        %v8329 = vpop.xlane.xlu0 %8328
        %8330 = vadd.xlane.f32.xlu0 %v8286
        %v8331 = vpop.xlane.xlu0 %8330
        %8332 = vadd.xlane.f32.xlu0 %v8287
        %v8333 = vpop.xlane.xlu0 %8332
        %8334 = vadd.xlane.f32.xlu0 %v8288
        %v8335 = vpop.xlane.xlu0 %8334
        %8336 = vadd.xlane.f32.xlu0 %v8289
        %v8337 = vpop.xlane.xlu0 %8336
        %8338 = vadd.xlane.f32.xlu0 %v8290
        %v8339 = vpop.xlane.xlu0 %8338
        %8340 = vadd.xlane.f32.xlu0 %v8291
        %v8341 = vpop.xlane.xlu0 %8340
        %8342 = vadd.xlane.f32.xlu0 %v8292
        %v8343 = vpop.xlane.xlu0 %8342
        %8344 = vadd.xlane.f32.xlu0 %v8293
        %v8345 = vpop.xlane.xlu0 %8344
        %8346 = vadd.xlane.f32.xlu0 %v8294
        %v8347 = vpop.xlane.xlu0 %8346
        %8348 = vadd.xlane.f32.xlu0 %v8295
        %v8349 = vpop.xlane.xlu0 %8348
        %8350 = vadd.xlane.f32.xlu0 %v8296
        %v8351 = vpop.xlane.xlu0 %8350
        %8352 = vadd.xlane.f32.xlu0 %v8297
        %v8353 = vpop.xlane.xlu0 %8352
        %8354 = vadd.xlane.f32.xlu0 %v8298
        %v8355 = vpop.xlane.xlu0 %8354
        %8356 = vadd.xlane.f32.xlu0 %v8299
        %v8357 = vpop.xlane.xlu0 %8356
        %8358 = vadd.xlane.f32.xlu0 %v8300
        %v8359 = vpop.xlane.xlu0 %8358
        %8360 = vadd.xlane.f32.xlu0 %v8301
        %v8361 = vpop.xlane.xlu0 %8360
        %8362 = vadd.xlane.f32.xlu0 %v8302
        %v8363 = vpop.xlane.xlu0 %8362
        %8364 = vadd.xlane.f32.xlu0 %v8303
        %v8365 = vpop.xlane.xlu0 %8364
        %8366 = vadd.xlane.f32.xlu0 %v8304
        %v8367 = vpop.xlane.xlu0 %8366
        %8368 = vadd.xlane.f32.xlu0 %v8305
        %v8369 = vpop.xlane.xlu0 %8368
        %8370 = vadd.xlane.f32.xlu0 %v8306
        %v8371 = vpop.xlane.xlu0 %8370
        %8372 = vadd.xlane.f32.xlu0 %v8307
        %v8373 = vpop.xlane.xlu0 %8372
        %v8374 = vmul.f32 %v8311, %v1082
        %v8375 = vmul.f32 %v8313, %v1082
        %v8376 = vmul.f32 %v8315, %v1082
        %v8377 = vmul.f32 %v8317, %v1082
        %v8378 = vmul.f32 %v8319, %v1082
        %v8379 = vmul.f32 %v8321, %v1082
        %v8380 = vmul.f32 %v8323, %v1082
        %v8381 = vmul.f32 %v8325, %v1082
        %v8382 = vmul.f32 %v8327, %v1082
        %v8383 = vmul.f32 %v8329, %v1082
        %v8384 = vmul.f32 %v8331, %v1082
        %v8385 = vmul.f32 %v8333, %v1082
        %v8386 = vmul.f32 %v8335, %v1082
        %v8387 = vmul.f32 %v8337, %v1082
        %v8388 = vmul.f32 %v8339, %v1082
        %v8389 = vmul.f32 %v8341, %v1082
        %v8390 = vmul.f32 %v8343, %v1082
        %v8391 = vmul.f32 %v8345, %v1082
        %v8392 = vmul.f32 %v8347, %v1082
        %v8393 = vmul.f32 %v8349, %v1082
        %v8394 = vmul.f32 %v8351, %v1082
        %v8395 = vmul.f32 %v8353, %v1082
        %v8396 = vmul.f32 %v8355, %v1082
        %v8397 = vmul.f32 %v8357, %v1082
        %v8398 = vmul.f32 %v8359, %v1082
        %v8399 = vmul.f32 %v8361, %v1082
        %v8400 = vmul.f32 %v8363, %v1082
        %v8401 = vmul.f32 %v8365, %v1082
        %v8402 = vmul.f32 %v8367, %v1082
        %v8403 = vmul.f32 %v8369, %v1082
        %v8404 = vmul.f32 %v8371, %v1082
        %v8405 = vmul.f32 %v8373, %v1082
        %v8406 = vsub.f32 %v8276, %v8374
        %v8407 = vsub.f32 %v8277, %v8375
        %v8408 = vsub.f32 %v8278, %v8376
        %v8409 = vsub.f32 %v8279, %v8377
        %v8410 = vsub.f32 %v8280, %v8378
        %v8411 = vsub.f32 %v8281, %v8379
        %v8412 = vsub.f32 %v8282, %v8380
        %v8413 = vsub.f32 %v8283, %v8381
        %v8414 = vsub.f32 %v8284, %v8382
        %v8415 = vsub.f32 %v8285, %v8383
        %v8416 = vsub.f32 %v8286, %v8384
        %v8417 = vsub.f32 %v8287, %v8385
        %v8418 = vsub.f32 %v8288, %v8386
        %v8419 = vsub.f32 %v8289, %v8387
        %v8420 = vsub.f32 %v8290, %v8388
        %v8421 = vsub.f32 %v8291, %v8389
        %v8422 = vsub.f32 %v8292, %v8390
        %v8423 = vsub.f32 %v8293, %v8391
        %v8424 = vsub.f32 %v8294, %v8392
        %v8425 = vsub.f32 %v8295, %v8393
        %v8426 = vsub.f32 %v8296, %v8394
        %v8427 = vsub.f32 %v8297, %v8395
        %v8428 = vsub.f32 %v8298, %v8396
        %v8429 = vsub.f32 %v8299, %v8397
        %v8430 = vsub.f32 %v8300, %v8398
        %v8431 = vsub.f32 %v8301, %v8399
        %v8432 = vsub.f32 %v8302, %v8400
        %v8433 = vsub.f32 %v8303, %v8401
        %v8434 = vsub.f32 %v8304, %v8402
        %v8435 = vsub.f32 %v8305, %v8403
        %v8436 = vsub.f32 %v8306, %v8404
        %v8437 = vsub.f32 %v8307, %v8405
        %v8438 = vmul.f32 %v8406, %v8406
        %v8439 = vmul.f32 %v8407, %v8407
        %v8440 = vmul.f32 %v8408, %v8408
        %v8441 = vmul.f32 %v8409, %v8409
        %v8442 = vmul.f32 %v8410, %v8410
        %v8443 = vmul.f32 %v8411, %v8411
        %v8444 = vmul.f32 %v8412, %v8412
        %v8445 = vmul.f32 %v8413, %v8413
        %v8446 = vmul.f32 %v8414, %v8414
        %v8447 = vmul.f32 %v8415, %v8415
        %v8448 = vmul.f32 %v8416, %v8416
        %v8449 = vmul.f32 %v8417, %v8417
        %v8450 = vmul.f32 %v8418, %v8418
        %v8451 = vmul.f32 %v8419, %v8419
        %v8452 = vmul.f32 %v8420, %v8420
        %v8453 = vmul.f32 %v8421, %v8421
        %v8454 = vmul.f32 %v8422, %v8422
        %v8455 = vmul.f32 %v8423, %v8423
        %v8456 = vmul.f32 %v8424, %v8424
        %v8457 = vmul.f32 %v8425, %v8425
        %v8458 = vmul.f32 %v8426, %v8426
        %v8459 = vmul.f32 %v8427, %v8427
        %v8460 = vmul.f32 %v8428, %v8428
        %v8461 = vmul.f32 %v8429, %v8429
        %v8462 = vmul.f32 %v8430, %v8430
        %v8463 = vmul.f32 %v8431, %v8431
        %v8464 = vmul.f32 %v8432, %v8432
        %v8465 = vmul.f32 %v8433, %v8433
        %v8466 = vmul.f32 %v8434, %v8434
        %v8467 = vmul.f32 %v8435, %v8435
        %v8468 = vmul.f32 %v8436, %v8436
        %v8469 = vmul.f32 %v8437, %v8437
        %8470 = vadd.xlane.f32.xlu0 %v8438
        %v8471 = vpop.xlane.xlu0 %8470
        %8472 = vadd.xlane.f32.xlu0 %v8439
        %v8473 = vpop.xlane.xlu0 %8472
        %8474 = vadd.xlane.f32.xlu0 %v8440
        %v8475 = vpop.xlane.xlu0 %8474
        %8476 = vadd.xlane.f32.xlu0 %v8441
        %v8477 = vpop.xlane.xlu0 %8476
        %8478 = vadd.xlane.f32.xlu0 %v8442
        %v8479 = vpop.xlane.xlu0 %8478
        %8480 = vadd.xlane.f32.xlu0 %v8443
        %v8481 = vpop.xlane.xlu0 %8480
        %8482 = vadd.xlane.f32.xlu0 %v8444
        %v8483 = vpop.xlane.xlu0 %8482
        %8484 = vadd.xlane.f32.xlu0 %v8445
        %v8485 = vpop.xlane.xlu0 %8484
        %8486 = vadd.xlane.f32.xlu0 %v8446
        %v8487 = vpop.xlane.xlu0 %8486
        %8488 = vadd.xlane.f32.xlu0 %v8447
        %v8489 = vpop.xlane.xlu0 %8488
        %8490 = vadd.xlane.f32.xlu0 %v8448
        %v8491 = vpop.xlane.xlu0 %8490
        %8492 = vadd.xlane.f32.xlu0 %v8449
        %v8493 = vpop.xlane.xlu0 %8492
        %8494 = vadd.xlane.f32.xlu0 %v8450
        %v8495 = vpop.xlane.xlu0 %8494
        %8496 = vadd.xlane.f32.xlu0 %v8451
        %v8497 = vpop.xlane.xlu0 %8496
        %8498 = vadd.xlane.f32.xlu0 %v8452
        %v8499 = vpop.xlane.xlu0 %8498
        %8500 = vadd.xlane.f32.xlu0 %v8453
        %v8501 = vpop.xlane.xlu0 %8500
        %8502 = vadd.xlane.f32.xlu0 %v8454
        %v8503 = vpop.xlane.xlu0 %8502
        %8504 = vadd.xlane.f32.xlu0 %v8455
        %v8505 = vpop.xlane.xlu0 %8504
        %8506 = vadd.xlane.f32.xlu0 %v8456
        %v8507 = vpop.xlane.xlu0 %8506
        %8508 = vadd.xlane.f32.xlu0 %v8457
        %v8509 = vpop.xlane.xlu0 %8508
        %8510 = vadd.xlane.f32.xlu0 %v8458
        %v8511 = vpop.xlane.xlu0 %8510
        %8512 = vadd.xlane.f32.xlu0 %v8459
        %v8513 = vpop.xlane.xlu0 %8512
        %8514 = vadd.xlane.f32.xlu0 %v8460
        %v8515 = vpop.xlane.xlu0 %8514
        %8516 = vadd.xlane.f32.xlu0 %v8461
        %v8517 = vpop.xlane.xlu0 %8516
        %8518 = vadd.xlane.f32.xlu0 %v8462
        %v8519 = vpop.xlane.xlu0 %8518
        %8520 = vadd.xlane.f32.xlu0 %v8463
        %v8521 = vpop.xlane.xlu0 %8520
        %8522 = vadd.xlane.f32.xlu0 %v8464
        %v8523 = vpop.xlane.xlu0 %8522
        %8524 = vadd.xlane.f32.xlu0 %v8465
        %v8525 = vpop.xlane.xlu0 %8524
        %8526 = vadd.xlane.f32.xlu0 %v8466
        %v8527 = vpop.xlane.xlu0 %8526
        %8528 = vadd.xlane.f32.xlu0 %v8467
        %v8529 = vpop.xlane.xlu0 %8528
        %8530 = vadd.xlane.f32.xlu0 %v8468
        %v8531 = vpop.xlane.xlu0 %8530
        %8532 = vadd.xlane.f32.xlu0 %v8469
        %v8533 = vpop.xlane.xlu0 %8532
        %v8534 = vmul.f32 %v8471, %v1082
        %v8535 = vmul.f32 %v8473, %v1082
        %v8536 = vmul.f32 %v8475, %v1082
        %v8537 = vmul.f32 %v8477, %v1082
        %v8538 = vmul.f32 %v8479, %v1082
        %v8539 = vmul.f32 %v8481, %v1082
        %v8540 = vmul.f32 %v8483, %v1082
        %v8541 = vmul.f32 %v8485, %v1082
        %v8542 = vmul.f32 %v8487, %v1082
        %v8543 = vmul.f32 %v8489, %v1082
        %v8544 = vmul.f32 %v8491, %v1082
        %v8545 = vmul.f32 %v8493, %v1082
        %v8546 = vmul.f32 %v8495, %v1082
        %v8547 = vmul.f32 %v8497, %v1082
        %v8548 = vmul.f32 %v8499, %v1082
        %v8549 = vmul.f32 %v8501, %v1082
        %v8550 = vmul.f32 %v8503, %v1082
        %v8551 = vmul.f32 %v8505, %v1082
        %v8552 = vmul.f32 %v8507, %v1082
        %v8553 = vmul.f32 %v8509, %v1082
        %v8554 = vmul.f32 %v8511, %v1082
        %v8555 = vmul.f32 %v8513, %v1082
        %v8556 = vmul.f32 %v8515, %v1082
        %v8557 = vmul.f32 %v8517, %v1082
        %v8558 = vmul.f32 %v8519, %v1082
        %v8559 = vmul.f32 %v8521, %v1082
        %v8560 = vmul.f32 %v8523, %v1082
        %v8561 = vmul.f32 %v8525, %v1082
        %v8562 = vmul.f32 %v8527, %v1082
        %v8563 = vmul.f32 %v8529, %v1082
        %v8564 = vmul.f32 %v8531, %v1082
        %v8565 = vmul.f32 %v8533, %v1082
        %v8566 = vadd.f32 %v8534, 1e-06
        %v8567 = vadd.f32 %v8535, 1e-06
        %v8568 = vadd.f32 %v8536, 1e-06
        %v8569 = vadd.f32 %v8537, 1e-06
        %v8570 = vadd.f32 %v8538, 1e-06
        %v8571 = vadd.f32 %v8539, 1e-06
        %v8572 = vadd.f32 %v8540, 1e-06
        %v8573 = vadd.f32 %v8541, 1e-06
        %v8574 = vadd.f32 %v8542, 1e-06
        %v8575 = vadd.f32 %v8543, 1e-06
        %v8576 = vadd.f32 %v8544, 1e-06
        %v8577 = vadd.f32 %v8545, 1e-06
        %v8578 = vadd.f32 %v8546, 1e-06
        %v8579 = vadd.f32 %v8547, 1e-06
        %v8580 = vadd.f32 %v8548, 1e-06
        %v8581 = vadd.f32 %v8549, 1e-06
        %v8582 = vadd.f32 %v8550, 1e-06
        %v8583 = vadd.f32 %v8551, 1e-06
        %v8584 = vadd.f32 %v8552, 1e-06
        %v8585 = vadd.f32 %v8553, 1e-06
        %v8586 = vadd.f32 %v8554, 1e-06
        %v8587 = vadd.f32 %v8555, 1e-06
        %v8588 = vadd.f32 %v8556, 1e-06
        %v8589 = vadd.f32 %v8557, 1e-06
        %v8590 = vadd.f32 %v8558, 1e-06
        %v8591 = vadd.f32 %v8559, 1e-06
        %v8592 = vadd.f32 %v8560, 1e-06
        %v8593 = vadd.f32 %v8561, 1e-06
        %v8594 = vadd.f32 %v8562, 1e-06
        %v8595 = vadd.f32 %v8563, 1e-06
        %v8596 = vadd.f32 %v8564, 1e-06
        %v8597 = vadd.f32 %v8565, 1e-06
        %v8598 = vrsqrt.pop %v8566
        %v8599 = vmul.f32 %v8598, %v8566
        %v8600 = vmul.f32 %v8599, %v8598
        %v8601 = vmul.f32 0.5, %v8600
        %v8602 = vsub.f32 1.5, %v8601
        %v8603 = vmul.f32 %v8598, %v8602
        %vm8604 = vweird.f32 %v8566
        %vm8605 = vweird.f32 %v8598
        %vm8606 = vmor %vm8604, %vm8605
        %v8607 = vsel %vm8606, %v8598, %v8603
        %v8608 = vrsqrt.pop %v8567
        %v8609 = vmul.f32 %v8608, %v8567
        %v8610 = vmul.f32 %v8609, %v8608
        %v8611 = vmul.f32 0.5, %v8610
        %v8612 = vsub.f32 1.5, %v8611
        %v8613 = vmul.f32 %v8608, %v8612
        %vm8614 = vweird.f32 %v8567
        %vm8615 = vweird.f32 %v8608
        %vm8616 = vmor %vm8614, %vm8615
        %v8617 = vsel %vm8616, %v8608, %v8613
        %v8618 = vrsqrt.pop %v8568
        %v8619 = vmul.f32 %v8618, %v8568
        %v8620 = vmul.f32 %v8619, %v8618
        %v8621 = vmul.f32 0.5, %v8620
        %v8622 = vsub.f32 1.5, %v8621
        %v8623 = vmul.f32 %v8618, %v8622
        %vm8624 = vweird.f32 %v8568
        %vm8625 = vweird.f32 %v8618
        %vm8626 = vmor %vm8624, %vm8625
        %v8627 = vsel %vm8626, %v8618, %v8623
        %v8628 = vrsqrt.pop %v8569
        %v8629 = vmul.f32 %v8628, %v8569
        %v8630 = vmul.f32 %v8629, %v8628
        %v8631 = vmul.f32 0.5, %v8630
        %v8632 = vsub.f32 1.5, %v8631
        %v8633 = vmul.f32 %v8628, %v8632
        %vm8634 = vweird.f32 %v8569
        %vm8635 = vweird.f32 %v8628
        %vm8636 = vmor %vm8634, %vm8635
        %v8637 = vsel %vm8636, %v8628, %v8633
        %v8638 = vrsqrt.pop %v8570
        %v8639 = vmul.f32 %v8638, %v8570
        %v8640 = vmul.f32 %v8639, %v8638
        %v8641 = vmul.f32 0.5, %v8640
        %v8642 = vsub.f32 1.5, %v8641
        %v8643 = vmul.f32 %v8638, %v8642
        %vm8644 = vweird.f32 %v8570
        %vm8645 = vweird.f32 %v8638
        %vm8646 = vmor %vm8644, %vm8645
        %v8647 = vsel %vm8646, %v8638, %v8643
        %v8648 = vrsqrt.pop %v8571
        %v8649 = vmul.f32 %v8648, %v8571
        %v8650 = vmul.f32 %v8649, %v8648
        %v8651 = vmul.f32 0.5, %v8650
        %v8652 = vsub.f32 1.5, %v8651
        %v8653 = vmul.f32 %v8648, %v8652
        %vm8654 = vweird.f32 %v8571
        %vm8655 = vweird.f32 %v8648
        %vm8656 = vmor %vm8654, %vm8655
        %v8657 = vsel %vm8656, %v8648, %v8653
        %v8658 = vrsqrt.pop %v8572
        %v8659 = vmul.f32 %v8658, %v8572
        %v8660 = vmul.f32 %v8659, %v8658
        %v8661 = vmul.f32 0.5, %v8660
        %v8662 = vsub.f32 1.5, %v8661
        %v8663 = vmul.f32 %v8658, %v8662
        %vm8664 = vweird.f32 %v8572
        %vm8665 = vweird.f32 %v8658
        %vm8666 = vmor %vm8664, %vm8665
        %v8667 = vsel %vm8666, %v8658, %v8663
        %v8668 = vrsqrt.pop %v8573
        %v8669 = vmul.f32 %v8668, %v8573
        %v8670 = vmul.f32 %v8669, %v8668
        %v8671 = vmul.f32 0.5, %v8670
        %v8672 = vsub.f32 1.5, %v8671
        %v8673 = vmul.f32 %v8668, %v8672
        %vm8674 = vweird.f32 %v8573
        %vm8675 = vweird.f32 %v8668
        %vm8676 = vmor %vm8674, %vm8675
        %v8677 = vsel %vm8676, %v8668, %v8673
        %v8678 = vrsqrt.pop %v8574
        %v8679 = vmul.f32 %v8678, %v8574
        %v8680 = vmul.f32 %v8679, %v8678
        %v8681 = vmul.f32 0.5, %v8680
        %v8682 = vsub.f32 1.5, %v8681
        %v8683 = vmul.f32 %v8678, %v8682
        %vm8684 = vweird.f32 %v8574
        %vm8685 = vweird.f32 %v8678
        %vm8686 = vmor %vm8684, %vm8685
        %v8687 = vsel %vm8686, %v8678, %v8683
        %v8688 = vrsqrt.pop %v8575
        %v8689 = vmul.f32 %v8688, %v8575
        %v8690 = vmul.f32 %v8689, %v8688
        %v8691 = vmul.f32 0.5, %v8690
        %v8692 = vsub.f32 1.5, %v8691
        %v8693 = vmul.f32 %v8688, %v8692
        %vm8694 = vweird.f32 %v8575
        %vm8695 = vweird.f32 %v8688
        %vm8696 = vmor %vm8694, %vm8695
        %v8697 = vsel %vm8696, %v8688, %v8693
        %v8698 = vrsqrt.pop %v8576
        %v8699 = vmul.f32 %v8698, %v8576
        %v8700 = vmul.f32 %v8699, %v8698
        %v8701 = vmul.f32 0.5, %v8700
        %v8702 = vsub.f32 1.5, %v8701
        %v8703 = vmul.f32 %v8698, %v8702
        %vm8704 = vweird.f32 %v8576
        %vm8705 = vweird.f32 %v8698
        %vm8706 = vmor %vm8704, %vm8705
        %v8707 = vsel %vm8706, %v8698, %v8703
        %v8708 = vrsqrt.pop %v8577
        %v8709 = vmul.f32 %v8708, %v8577
        %v8710 = vmul.f32 %v8709, %v8708
        %v8711 = vmul.f32 0.5, %v8710
        %v8712 = vsub.f32 1.5, %v8711
        %v8713 = vmul.f32 %v8708, %v8712
        %vm8714 = vweird.f32 %v8577
        %vm8715 = vweird.f32 %v8708
        %vm8716 = vmor %vm8714, %vm8715
        %v8717 = vsel %vm8716, %v8708, %v8713
        %v8718 = vrsqrt.pop %v8578
        %v8719 = vmul.f32 %v8718, %v8578
        %v8720 = vmul.f32 %v8719, %v8718
        %v8721 = vmul.f32 0.5, %v8720
        %v8722 = vsub.f32 1.5, %v8721
        %v8723 = vmul.f32 %v8718, %v8722
        %vm8724 = vweird.f32 %v8578
        %vm8725 = vweird.f32 %v8718
        %vm8726 = vmor %vm8724, %vm8725
        %v8727 = vsel %vm8726, %v8718, %v8723
        %v8728 = vrsqrt.pop %v8579
        %v8729 = vmul.f32 %v8728, %v8579
        %v8730 = vmul.f32 %v8729, %v8728
        %v8731 = vmul.f32 0.5, %v8730
        %v8732 = vsub.f32 1.5, %v8731
        %v8733 = vmul.f32 %v8728, %v8732
        %vm8734 = vweird.f32 %v8579
        %vm8735 = vweird.f32 %v8728
        %vm8736 = vmor %vm8734, %vm8735
        %v8737 = vsel %vm8736, %v8728, %v8733
        %v8738 = vrsqrt.pop %v8580
        %v8739 = vmul.f32 %v8738, %v8580
        %v8740 = vmul.f32 %v8739, %v8738
        %v8741 = vmul.f32 0.5, %v8740
        %v8742 = vsub.f32 1.5, %v8741
        %v8743 = vmul.f32 %v8738, %v8742
        %vm8744 = vweird.f32 %v8580
        %vm8745 = vweird.f32 %v8738
        %vm8746 = vmor %vm8744, %vm8745
        %v8747 = vsel %vm8746, %v8738, %v8743
        %v8748 = vrsqrt.pop %v8581
        %v8749 = vmul.f32 %v8748, %v8581
        %v8750 = vmul.f32 %v8749, %v8748
        %v8751 = vmul.f32 0.5, %v8750
        %v8752 = vsub.f32 1.5, %v8751
        %v8753 = vmul.f32 %v8748, %v8752
        %vm8754 = vweird.f32 %v8581
        %vm8755 = vweird.f32 %v8748
        %vm8756 = vmor %vm8754, %vm8755
        %v8757 = vsel %vm8756, %v8748, %v8753
        %v8758 = vrsqrt.pop %v8582
        %v8759 = vmul.f32 %v8758, %v8582
        %v8760 = vmul.f32 %v8759, %v8758
        %v8761 = vmul.f32 0.5, %v8760
        %v8762 = vsub.f32 1.5, %v8761
        %v8763 = vmul.f32 %v8758, %v8762
        %vm8764 = vweird.f32 %v8582
        %vm8765 = vweird.f32 %v8758
        %vm8766 = vmor %vm8764, %vm8765
        %v8767 = vsel %vm8766, %v8758, %v8763
        %v8768 = vrsqrt.pop %v8583
        %v8769 = vmul.f32 %v8768, %v8583
        %v8770 = vmul.f32 %v8769, %v8768
        %v8771 = vmul.f32 0.5, %v8770
        %v8772 = vsub.f32 1.5, %v8771
        %v8773 = vmul.f32 %v8768, %v8772
        %vm8774 = vweird.f32 %v8583
        %vm8775 = vweird.f32 %v8768
        %vm8776 = vmor %vm8774, %vm8775
        %v8777 = vsel %vm8776, %v8768, %v8773
        %v8778 = vrsqrt.pop %v8584
        %v8779 = vmul.f32 %v8778, %v8584
        %v8780 = vmul.f32 %v8779, %v8778
        %v8781 = vmul.f32 0.5, %v8780
        %v8782 = vsub.f32 1.5, %v8781
        %v8783 = vmul.f32 %v8778, %v8782
        %vm8784 = vweird.f32 %v8584
        %vm8785 = vweird.f32 %v8778
        %vm8786 = vmor %vm8784, %vm8785
        %v8787 = vsel %vm8786, %v8778, %v8783
        %v8788 = vrsqrt.pop %v8585
        %v8789 = vmul.f32 %v8788, %v8585
        %v8790 = vmul.f32 %v8789, %v8788
        %v8791 = vmul.f32 0.5, %v8790
        %v8792 = vsub.f32 1.5, %v8791
        %v8793 = vmul.f32 %v8788, %v8792
        %vm8794 = vweird.f32 %v8585
        %vm8795 = vweird.f32 %v8788
        %vm8796 = vmor %vm8794, %vm8795
        %v8797 = vsel %vm8796, %v8788, %v8793
        %v8798 = vrsqrt.pop %v8586
        %v8799 = vmul.f32 %v8798, %v8586
        %v8800 = vmul.f32 %v8799, %v8798
        %v8801 = vmul.f32 0.5, %v8800
        %v8802 = vsub.f32 1.5, %v8801
        %v8803 = vmul.f32 %v8798, %v8802
        %vm8804 = vweird.f32 %v8586
        %vm8805 = vweird.f32 %v8798
        %vm8806 = vmor %vm8804, %vm8805
        %v8807 = vsel %vm8806, %v8798, %v8803
        %v8808 = vrsqrt.pop %v8587
        %v8809 = vmul.f32 %v8808, %v8587
        %v8810 = vmul.f32 %v8809, %v8808
        %v8811 = vmul.f32 0.5, %v8810
        %v8812 = vsub.f32 1.5, %v8811
        %v8813 = vmul.f32 %v8808, %v8812
        %vm8814 = vweird.f32 %v8587
        %vm8815 = vweird.f32 %v8808
        %vm8816 = vmor %vm8814, %vm8815
        %v8817 = vsel %vm8816, %v8808, %v8813
        %v8818 = vrsqrt.pop %v8588
        %v8819 = vmul.f32 %v8818, %v8588
        %v8820 = vmul.f32 %v8819, %v8818
        %v8821 = vmul.f32 0.5, %v8820
        %v8822 = vsub.f32 1.5, %v8821
        %v8823 = vmul.f32 %v8818, %v8822
        %vm8824 = vweird.f32 %v8588
        %vm8825 = vweird.f32 %v8818
        %vm8826 = vmor %vm8824, %vm8825
        %v8827 = vsel %vm8826, %v8818, %v8823
        %v8828 = vrsqrt.pop %v8589
        %v8829 = vmul.f32 %v8828, %v8589
        %v8830 = vmul.f32 %v8829, %v8828
        %v8831 = vmul.f32 0.5, %v8830
        %v8832 = vsub.f32 1.5, %v8831
        %v8833 = vmul.f32 %v8828, %v8832
        %vm8834 = vweird.f32 %v8589
        %vm8835 = vweird.f32 %v8828
        %vm8836 = vmor %vm8834, %vm8835
        %v8837 = vsel %vm8836, %v8828, %v8833
        %v8838 = vrsqrt.pop %v8590
        %v8839 = vmul.f32 %v8838, %v8590
        %v8840 = vmul.f32 %v8839, %v8838
        %v8841 = vmul.f32 0.5, %v8840
        %v8842 = vsub.f32 1.5, %v8841
        %v8843 = vmul.f32 %v8838, %v8842
        %vm8844 = vweird.f32 %v8590
        %vm8845 = vweird.f32 %v8838
        %vm8846 = vmor %vm8844, %vm8845
        %v8847 = vsel %vm8846, %v8838, %v8843
        %v8848 = vrsqrt.pop %v8591
        %v8849 = vmul.f32 %v8848, %v8591
        %v8850 = vmul.f32 %v8849, %v8848
        %v8851 = vmul.f32 0.5, %v8850
        %v8852 = vsub.f32 1.5, %v8851
        %v8853 = vmul.f32 %v8848, %v8852
        %vm8854 = vweird.f32 %v8591
        %vm8855 = vweird.f32 %v8848
        %vm8856 = vmor %vm8854, %vm8855
        %v8857 = vsel %vm8856, %v8848, %v8853
        %v8858 = vrsqrt.pop %v8592
        %v8859 = vmul.f32 %v8858, %v8592
        %v8860 = vmul.f32 %v8859, %v8858
        %v8861 = vmul.f32 0.5, %v8860
        %v8862 = vsub.f32 1.5, %v8861
        %v8863 = vmul.f32 %v8858, %v8862
        %vm8864 = vweird.f32 %v8592
        %vm8865 = vweird.f32 %v8858
        %vm8866 = vmor %vm8864, %vm8865
        %v8867 = vsel %vm8866, %v8858, %v8863
        %v8868 = vrsqrt.pop %v8593
        %v8869 = vmul.f32 %v8868, %v8593
        %v8870 = vmul.f32 %v8869, %v8868
        %v8871 = vmul.f32 0.5, %v8870
        %v8872 = vsub.f32 1.5, %v8871
        %v8873 = vmul.f32 %v8868, %v8872
        %vm8874 = vweird.f32 %v8593
        %vm8875 = vweird.f32 %v8868
        %vm8876 = vmor %vm8874, %vm8875
        %v8877 = vsel %vm8876, %v8868, %v8873
        %v8878 = vrsqrt.pop %v8594
        %v8879 = vmul.f32 %v8878, %v8594
        %v8880 = vmul.f32 %v8879, %v8878
        %v8881 = vmul.f32 0.5, %v8880
        %v8882 = vsub.f32 1.5, %v8881
        %v8883 = vmul.f32 %v8878, %v8882
        %vm8884 = vweird.f32 %v8594
        %vm8885 = vweird.f32 %v8878
        %vm8886 = vmor %vm8884, %vm8885
        %v8887 = vsel %vm8886, %v8878, %v8883
        %v8888 = vrsqrt.pop %v8595
        %v8889 = vmul.f32 %v8888, %v8595
        %v8890 = vmul.f32 %v8889, %v8888
        %v8891 = vmul.f32 0.5, %v8890
        %v8892 = vsub.f32 1.5, %v8891
        %v8893 = vmul.f32 %v8888, %v8892
        %vm8894 = vweird.f32 %v8595
        %vm8895 = vweird.f32 %v8888
        %vm8896 = vmor %vm8894, %vm8895
        %v8897 = vsel %vm8896, %v8888, %v8893
        %v8898 = vrsqrt.pop %v8596
        %v8899 = vmul.f32 %v8898, %v8596
        %v8900 = vmul.f32 %v8899, %v8898
        %v8901 = vmul.f32 0.5, %v8900
        %v8902 = vsub.f32 1.5, %v8901
        %v8903 = vmul.f32 %v8898, %v8902
        %vm8904 = vweird.f32 %v8596
        %vm8905 = vweird.f32 %v8898
        %vm8906 = vmor %vm8904, %vm8905
        %v8907 = vsel %vm8906, %v8898, %v8903
        %v8908 = vrsqrt.pop %v8597
        %v8909 = vmul.f32 %v8908, %v8597
        %v8910 = vmul.f32 %v8909, %v8908
        %v8911 = vmul.f32 0.5, %v8910
        %v8912 = vsub.f32 1.5, %v8911
        %v8913 = vmul.f32 %v8908, %v8912
        %vm8914 = vweird.f32 %v8597
        %vm8915 = vweird.f32 %v8908
        %vm8916 = vmor %vm8914, %vm8915
        %v8917 = vsel %vm8916, %v8908, %v8913
        %v8918 = vmul.f32 %v8406, %v8607
        %v8919 = vmul.f32 %v8407, %v8617
        %v8920 = vmul.f32 %v8408, %v8627
        %v8921 = vmul.f32 %v8409, %v8637
        %v8922 = vmul.f32 %v8410, %v8647
        %v8923 = vmul.f32 %v8411, %v8657
        %v8924 = vmul.f32 %v8412, %v8667
        %v8925 = vmul.f32 %v8413, %v8677
        %v8926 = vmul.f32 %v8414, %v8687
        %v8927 = vmul.f32 %v8415, %v8697
        %v8928 = vmul.f32 %v8416, %v8707
        %v8929 = vmul.f32 %v8417, %v8717
        %v8930 = vmul.f32 %v8418, %v8727
        %v8931 = vmul.f32 %v8419, %v8737
        %v8932 = vmul.f32 %v8420, %v8747
        %v8933 = vmul.f32 %v8421, %v8757
        %v8934 = vmul.f32 %v8422, %v8767
        %v8935 = vmul.f32 %v8423, %v8777
        %v8936 = vmul.f32 %v8424, %v8787
        %v8937 = vmul.f32 %v8425, %v8797
        %v8938 = vmul.f32 %v8426, %v8807
        %v8939 = vmul.f32 %v8427, %v8817
        %v8940 = vmul.f32 %v8428, %v8827
        %v8941 = vmul.f32 %v8429, %v8837
        %v8942 = vmul.f32 %v8430, %v8847
        %v8943 = vmul.f32 %v8431, %v8857
        %v8944 = vmul.f32 %v8432, %v8867
        %v8945 = vmul.f32 %v8433, %v8877
        %v8946 = vmul.f32 %v8434, %v8887
        %v8947 = vmul.f32 %v8435, %v8897
        %v8948 = vmul.f32 %v8436, %v8907
        %v8949 = vmul.f32 %v8437, %v8917
        %v8951 = vperm.slane %v8308, 0
        %v8953 = vmul.f32 %v8918, %v8951
        %v8954 = vmul.f32 %v8919, %v8951
        %v8955 = vmul.f32 %v8920, %v8951
        %v8956 = vmul.f32 %v8921, %v8951
        %v8957 = vmul.f32 %v8922, %v8951
        %v8958 = vmul.f32 %v8923, %v8951
        %v8959 = vmul.f32 %v8924, %v8951
        %v8960 = vmul.f32 %v8925, %v8951
        %v8961 = vmul.f32 %v8926, %v8951
        %v8962 = vmul.f32 %v8927, %v8951
        %v8963 = vmul.f32 %v8928, %v8951
        %v8964 = vmul.f32 %v8929, %v8951
        %v8965 = vmul.f32 %v8930, %v8951
        %v8966 = vmul.f32 %v8931, %v8951
        %v8967 = vmul.f32 %v8932, %v8951
        %v8968 = vmul.f32 %v8933, %v8951
        %v8969 = vmul.f32 %v8934, %v8951
        %v8970 = vmul.f32 %v8935, %v8951
        %v8971 = vmul.f32 %v8936, %v8951
        %v8972 = vmul.f32 %v8937, %v8951
        %v8973 = vmul.f32 %v8938, %v8951
        %v8974 = vmul.f32 %v8939, %v8951
        %v8975 = vmul.f32 %v8940, %v8951
        %v8976 = vmul.f32 %v8941, %v8951
        %v8977 = vmul.f32 %v8942, %v8951
        %v8978 = vmul.f32 %v8943, %v8951
        %v8979 = vmul.f32 %v8944, %v8951
        %v8980 = vmul.f32 %v8945, %v8951
        %v8981 = vmul.f32 %v8946, %v8951
        %v8982 = vmul.f32 %v8947, %v8951
        %v8983 = vmul.f32 %v8948, %v8951
        %v8984 = vmul.f32 %v8949, %v8951
        %v8986 = vperm.slane %v8309, 0
        %v8988 = vadd.f32 %v8953, %v8986
        %v8989 = vadd.f32 %v8954, %v8986
        %v8990 = vadd.f32 %v8955, %v8986
        %v8991 = vadd.f32 %v8956, %v8986
        %v8992 = vadd.f32 %v8957, %v8986
        %v8993 = vadd.f32 %v8958, %v8986
        %v8994 = vadd.f32 %v8959, %v8986
        %v8995 = vadd.f32 %v8960, %v8986
        %v8996 = vadd.f32 %v8961, %v8986
        %v8997 = vadd.f32 %v8962, %v8986
        %v8998 = vadd.f32 %v8963, %v8986
        %v8999 = vadd.f32 %v8964, %v8986
        %v9000 = vadd.f32 %v8965, %v8986
        %v9001 = vadd.f32 %v8966, %v8986
        %v9002 = vadd.f32 %v8967, %v8986
        %v9003 = vadd.f32 %v8968, %v8986
        %v9004 = vadd.f32 %v8969, %v8986
        %v9005 = vadd.f32 %v8970, %v8986
        %v9006 = vadd.f32 %v8971, %v8986
        %v9007 = vadd.f32 %v8972, %v8986
        %v9008 = vadd.f32 %v8973, %v8986
        %v9009 = vadd.f32 %v8974, %v8986
        %v9010 = vadd.f32 %v8975, %v8986
        %v9011 = vadd.f32 %v8976, %v8986
        %v9012 = vadd.f32 %v8977, %v8986
        %v9013 = vadd.f32 %v8978, %v8986
        %v9014 = vadd.f32 %v8979, %v8986
        %v9015 = vadd.f32 %v8980, %v8986
        %v9016 = vadd.f32 %v8981, %v8986
        %v9017 = vadd.f32 %v8982, %v8986
        %v9018 = vadd.f32 %v8983, %v8986
        %v9019 = vadd.f32 %v8984, %v8986
        %v9020 = vpack.c.bf16 %v8989, %v8988
        %v9021 = vpack.c.bf16 %v8991, %v8990
        %v9022 = vpack.c.bf16 %v8993, %v8992
        %v9023 = vpack.c.bf16 %v8995, %v8994
        %v9024 = vpack.c.bf16 %v8997, %v8996
        %v9025 = vpack.c.bf16 %v8999, %v8998
        %v9026 = vpack.c.bf16 %v9001, %v9000
        %v9027 = vpack.c.bf16 %v9003, %v9002
        %v9028 = vpack.c.bf16 %v9005, %v9004
        %v9029 = vpack.c.bf16 %v9007, %v9006
        %v9030 = vpack.c.bf16 %v9009, %v9008
        %v9031 = vpack.c.bf16 %v9011, %v9010
        %v9032 = vpack.c.bf16 %v9013, %v9012
        %v9033 = vpack.c.bf16 %v9015, %v9014
        %v9034 = vpack.c.bf16 %v9017, %v9016
        %v9035 = vpack.c.bf16 %v9019, %v9018
        %v9036 = vld [vmem:[%s789] sm:$0xff]
        %v9037 = vld [vmem:[%s789 + $0x8] sm:$0xff]
        %v9038 = vld [vmem:[%s789 + $0x10] sm:$0xff]
        %v9039 = vld [vmem:[%s789 + $0x18] sm:$0xff]
        %v9040 = vld [vmem:[%s789 + $0x20] sm:$0xff]
        %v9041 = vld [vmem:[%s789 + $0x28] sm:$0xff]
        %v9042 = vld [vmem:[%s789 + $0x30] sm:$0xff]
        %v9043 = vld [vmem:[%s789 + $0x38] sm:$0xff]
        %v9044 = vld [vmem:[%s789 + $0x40] sm:$0xff]
        %v9045 = vld [vmem:[%s789 + $0x48] sm:$0xff]
        %v9046 = vld [vmem:[%s789 + $0x50] sm:$0xff]
        %v9047 = vld [vmem:[%s789 + $0x58] sm:$0xff]
        %v9048 = vld [vmem:[%s789 + $0x60] sm:$0xff]
        %v9049 = vld [vmem:[%s789 + $0x68] sm:$0xff]
        %v9050 = vld [vmem:[%s789 + $0x70] sm:$0xff]
        %v9051 = vld [vmem:[%s789 + $0x78] sm:$0xff]
        %v9052 = vld [vmem:[%s905] sm:$0x3]
        %v9054 = vperm.slane %v9052, 0
        %v9055 = vperm.slane %v9052, 1
        %v9074 = vunpack.c.l.b16 %v9036
        %v9075 = vunpack.c.h.b16 %v9036
        %v9076 = vunpack.c.l.b16 %v9037
        %v9077 = vunpack.c.h.b16 %v9037
        %v9078 = vunpack.c.l.b16 %v9038
        %v9079 = vunpack.c.h.b16 %v9038
        %v9080 = vunpack.c.l.b16 %v9039
        %v9081 = vunpack.c.h.b16 %v9039
        %v9082 = vunpack.c.l.b16 %v9040
        %v9083 = vunpack.c.h.b16 %v9040
        %v9084 = vunpack.c.l.b16 %v9041
        %v9085 = vunpack.c.h.b16 %v9041
        %v9086 = vunpack.c.l.b16 %v9042
        %v9087 = vunpack.c.h.b16 %v9042
        %v9088 = vunpack.c.l.b16 %v9043
        %v9089 = vunpack.c.h.b16 %v9043
        %v9090 = vunpack.c.l.b16 %v9044
        %v9091 = vunpack.c.h.b16 %v9044
        %v9092 = vunpack.c.l.b16 %v9045
        %v9093 = vunpack.c.h.b16 %v9045
        %v9094 = vunpack.c.l.b16 %v9046
        %v9095 = vunpack.c.h.b16 %v9046
        %v9096 = vunpack.c.l.b16 %v9047
        %v9097 = vunpack.c.h.b16 %v9047
        %v9098 = vunpack.c.l.b16 %v9048
        %v9099 = vunpack.c.h.b16 %v9048
        %v9100 = vunpack.c.l.b16 %v9049
        %v9101 = vunpack.c.h.b16 %v9049
        %v9102 = vunpack.c.l.b16 %v9050
        %v9103 = vunpack.c.h.b16 %v9050
        %v9104 = vunpack.c.l.b16 %v9051
        %v9105 = vunpack.c.h.b16 %v9051
        %v9106 = vpack.c.b16 %v9076, %v9074
        %v9107 = vpack.c.b16 %v9077, %v9075
        %v9108 = vpack.c.b16 %v9080, %v9078
        %v9109 = vpack.c.b16 %v9081, %v9079
        %v9110 = vpack.c.b16 %v9084, %v9082
        %v9111 = vpack.c.b16 %v9085, %v9083
        %v9112 = vpack.c.b16 %v9088, %v9086
        %v9113 = vpack.c.b16 %v9089, %v9087
        %v9114 = vpack.c.b16 %v9092, %v9090
        %v9115 = vpack.c.b16 %v9093, %v9091
        %v9116 = vpack.c.b16 %v9096, %v9094
        %v9117 = vpack.c.b16 %v9097, %v9095
        %v9118 = vpack.c.b16 %v9100, %v9098
        %v9119 = vpack.c.b16 %v9101, %v9099
        %v9120 = vpack.c.b16 %v9104, %v9102
        %v9121 = vpack.c.b16 %v9105, %v9103
        %9138 = vmatpush.bf16.msra.mxu0 %v9120
        %9139 = vmatpush.bf16.msra.mxu0 %v9118
        %9140 = vmatpush.bf16.msra.mxu0 %v9116
        %9141 = vmatpush.bf16.msra.mxu0 %v9114
        %9142 = vmatpush.bf16.msra.mxu0 %v9112
        %9143 = vmatpush.bf16.msra.mxu0 %v9110
        %9144 = vmatpush.bf16.msra.mxu0 %v9108
        %9145 = vmatpush.bf16.msra.mxu0 %v9106
        %9146 = vmatmul.bf16.gmra.mxu0 %v9020
        %v9147 = vpop.f32.mrf.mxu0
        %v9148 = vadd.f32 %v9054, %v9147
        %v9149 = vpop.f32.mrf.mxu0
        %v9150 = vadd.f32 %v9054, %v9149
        %9151 = vmatmul.bf16.gmra.mxu0 %v9021
        %v9152 = vpop.f32.mrf.mxu0
        %v9153 = vadd.f32 %v9054, %v9152
        %v9154 = vpop.f32.mrf.mxu0
        %v9155 = vadd.f32 %v9054, %v9154
        %9156 = vmatmul.bf16.gmra.mxu0 %v9022
        %v9157 = vpop.f32.mrf.mxu0
        %v9158 = vadd.f32 %v9054, %v9157
        %v9159 = vpop.f32.mrf.mxu0
        %v9160 = vadd.f32 %v9054, %v9159
        %9161 = vmatmul.bf16.gmra.mxu0 %v9023
        %v9162 = vpop.f32.mrf.mxu0
        %v9163 = vadd.f32 %v9054, %v9162
        %v9164 = vpop.f32.mrf.mxu0
        %v9165 = vadd.f32 %v9054, %v9164
        %9166 = vmatmul.bf16.gmra.mxu0 %v9024
        %v9167 = vpop.f32.mrf.mxu0
        %v9168 = vadd.f32 %v9054, %v9167
        %v9169 = vpop.f32.mrf.mxu0
        %v9170 = vadd.f32 %v9054, %v9169
        %9171 = vmatmul.bf16.gmra.mxu0 %v9025
        %v9172 = vpop.f32.mrf.mxu0
        %v9173 = vadd.f32 %v9054, %v9172
        %v9174 = vpop.f32.mrf.mxu0
        %v9175 = vadd.f32 %v9054, %v9174
        %9176 = vmatmul.bf16.gmra.mxu0 %v9026
        %v9177 = vpop.f32.mrf.mxu0
        %v9178 = vadd.f32 %v9054, %v9177
        %v9179 = vpop.f32.mrf.mxu0
        %v9180 = vadd.f32 %v9054, %v9179
        %9181 = vmatmul.bf16.gmra.mxu0 %v9027
        %v9182 = vpop.f32.mrf.mxu0
        %v9183 = vadd.f32 %v9054, %v9182
        %v9184 = vpop.f32.mrf.mxu0
        %v9185 = vadd.f32 %v9054, %v9184
        %9186 = vmatmul.bf16.gmra.mxu0 %v9028
        %v9187 = vpop.f32.mrf.mxu0
        %v9188 = vadd.f32 %v9054, %v9187
        %v9189 = vpop.f32.mrf.mxu0
        %v9190 = vadd.f32 %v9054, %v9189
        %9191 = vmatmul.bf16.gmra.mxu0 %v9029
        %v9192 = vpop.f32.mrf.mxu0
        %v9193 = vadd.f32 %v9054, %v9192
        %v9194 = vpop.f32.mrf.mxu0
        %v9195 = vadd.f32 %v9054, %v9194
        %9196 = vmatmul.bf16.gmra.mxu0 %v9030
        %v9197 = vpop.f32.mrf.mxu0
        %v9198 = vadd.f32 %v9054, %v9197
        %v9199 = vpop.f32.mrf.mxu0
        %v9200 = vadd.f32 %v9054, %v9199
        %9201 = vmatmul.bf16.gmra.mxu0 %v9031
        %v9202 = vpop.f32.mrf.mxu0
        %v9203 = vadd.f32 %v9054, %v9202
        %v9204 = vpop.f32.mrf.mxu0
        %v9205 = vadd.f32 %v9054, %v9204
        %9206 = vmatmul.bf16.gmra.mxu0 %v9032
        %v9207 = vpop.f32.mrf.mxu0
        %v9208 = vadd.f32 %v9054, %v9207
        %v9209 = vpop.f32.mrf.mxu0
        %v9210 = vadd.f32 %v9054, %v9209
        %9211 = vmatmul.bf16.gmra.mxu0 %v9033
        %v9212 = vpop.f32.mrf.mxu0
        %v9213 = vadd.f32 %v9054, %v9212
        %v9214 = vpop.f32.mrf.mxu0
        %v9215 = vadd.f32 %v9054, %v9214
        %9216 = vmatmul.bf16.gmra.mxu0 %v9034
        %v9217 = vpop.f32.mrf.mxu0
        %v9218 = vadd.f32 %v9054, %v9217
        %v9219 = vpop.f32.mrf.mxu0
        %v9220 = vadd.f32 %v9054, %v9219
        %9221 = vmatmul.bf16.gmra.mxu0 %v9035
        %v9222 = vpop.f32.mrf.mxu0
        %v9223 = vadd.f32 %v9054, %v9222
        %v9224 = vpop.f32.mrf.mxu0
        %v9225 = vadd.f32 %v9054, %v9224
        %9226 = vdwg.mxu0
        %9227 = vmatpush.bf16.msra.mxu0 %v9121
        %9228 = vmatpush.bf16.msra.mxu0 %v9119
        %9229 = vmatpush.bf16.msra.mxu0 %v9117
        %9230 = vmatpush.bf16.msra.mxu0 %v9115
        %9231 = vmatpush.bf16.msra.mxu0 %v9113
        %9232 = vmatpush.bf16.msra.mxu0 %v9111
        %9233 = vmatpush.bf16.msra.mxu0 %v9109
        %9234 = vmatpush.bf16.msra.mxu0 %v9107
        %9235 = vmatmul.bf16.gmra.mxu0 %v9020
        %v9236 = vpop.f32.mrf.mxu0
        %v9237 = vadd.f32 %v9055, %v9236
        %v9238 = vpop.f32.mrf.mxu0
        %v9239 = vadd.f32 %v9055, %v9238
        %9240 = vmatmul.bf16.gmra.mxu0 %v9021
        %v9241 = vpop.f32.mrf.mxu0
        %v9242 = vadd.f32 %v9055, %v9241
        %v9243 = vpop.f32.mrf.mxu0
        %v9244 = vadd.f32 %v9055, %v9243
        %9245 = vmatmul.bf16.gmra.mxu0 %v9022
        %v9246 = vpop.f32.mrf.mxu0
        %v9247 = vadd.f32 %v9055, %v9246
        %v9248 = vpop.f32.mrf.mxu0
        %v9249 = vadd.f32 %v9055, %v9248
        %9250 = vmatmul.bf16.gmra.mxu0 %v9023
        %v9251 = vpop.f32.mrf.mxu0
        %v9252 = vadd.f32 %v9055, %v9251
        %v9253 = vpop.f32.mrf.mxu0
        %v9254 = vadd.f32 %v9055, %v9253
        %9255 = vmatmul.bf16.gmra.mxu0 %v9024
        %v9256 = vpop.f32.mrf.mxu0
        %v9257 = vadd.f32 %v9055, %v9256
        %v9258 = vpop.f32.mrf.mxu0
        %v9259 = vadd.f32 %v9055, %v9258
        %9260 = vmatmul.bf16.gmra.mxu0 %v9025
        %v9261 = vpop.f32.mrf.mxu0
        %v9262 = vadd.f32 %v9055, %v9261
        %v9263 = vpop.f32.mrf.mxu0
        %v9264 = vadd.f32 %v9055, %v9263
        %9265 = vmatmul.bf16.gmra.mxu0 %v9026
        %v9266 = vpop.f32.mrf.mxu0
        %v9267 = vadd.f32 %v9055, %v9266
        %v9268 = vpop.f32.mrf.mxu0
        %v9269 = vadd.f32 %v9055, %v9268
        %9270 = vmatmul.bf16.gmra.mxu0 %v9027
        %v9271 = vpop.f32.mrf.mxu0
        %v9272 = vadd.f32 %v9055, %v9271
        %v9273 = vpop.f32.mrf.mxu0
        %v9274 = vadd.f32 %v9055, %v9273
        %9275 = vmatmul.bf16.gmra.mxu0 %v9028
        %v9276 = vpop.f32.mrf.mxu0
        %v9277 = vadd.f32 %v9055, %v9276
        %v9278 = vpop.f32.mrf.mxu0
        %v9279 = vadd.f32 %v9055, %v9278
        %9280 = vmatmul.bf16.gmra.mxu0 %v9029
        %v9281 = vpop.f32.mrf.mxu0
        %v9282 = vadd.f32 %v9055, %v9281
        %v9283 = vpop.f32.mrf.mxu0
        %v9284 = vadd.f32 %v9055, %v9283
        %9285 = vmatmul.bf16.gmra.mxu0 %v9030
        %v9286 = vpop.f32.mrf.mxu0
        %v9287 = vadd.f32 %v9055, %v9286
        %v9288 = vpop.f32.mrf.mxu0
        %v9289 = vadd.f32 %v9055, %v9288
        %9290 = vmatmul.bf16.gmra.mxu0 %v9031
        %v9291 = vpop.f32.mrf.mxu0
        %v9292 = vadd.f32 %v9055, %v9291
        %v9293 = vpop.f32.mrf.mxu0
        %v9294 = vadd.f32 %v9055, %v9293
        %9295 = vmatmul.bf16.gmra.mxu0 %v9032
        %v9296 = vpop.f32.mrf.mxu0
        %v9297 = vadd.f32 %v9055, %v9296
        %v9298 = vpop.f32.mrf.mxu0
        %v9299 = vadd.f32 %v9055, %v9298
        %9300 = vmatmul.bf16.gmra.mxu0 %v9033
        %v9301 = vpop.f32.mrf.mxu0
        %v9302 = vadd.f32 %v9055, %v9301
        %v9303 = vpop.f32.mrf.mxu0
        %v9304 = vadd.f32 %v9055, %v9303
        %9305 = vmatmul.bf16.gmra.mxu0 %v9034
        %v9306 = vpop.f32.mrf.mxu0
        %v9307 = vadd.f32 %v9055, %v9306
        %v9308 = vpop.f32.mrf.mxu0
        %v9309 = vadd.f32 %v9055, %v9308
        %9310 = vmatmul.bf16.gmra.mxu0 %v9035
        %v9311 = vpop.f32.mrf.mxu0
        %v9312 = vadd.f32 %v9055, %v9311
        %v9313 = vpop.f32.mrf.mxu0
        %v9314 = vadd.f32 %v9055, %v9313
        %9315 = vdwg.mxu0
        %v9316 = vmul.f32 %v9148, %v9148
        %v9317 = vmul.f32 %v9237, %v9237
        %v9318 = vmul.f32 %v9150, %v9150
        %v9319 = vmul.f32 %v9239, %v9239
        %v9320 = vmul.f32 %v9153, %v9153
        %v9321 = vmul.f32 %v9242, %v9242
        %v9322 = vmul.f32 %v9155, %v9155
        %v9323 = vmul.f32 %v9244, %v9244
        %v9324 = vmul.f32 %v9158, %v9158
        %v9325 = vmul.f32 %v9247, %v9247
        %v9326 = vmul.f32 %v9160, %v9160
        %v9327 = vmul.f32 %v9249, %v9249
        %v9328 = vmul.f32 %v9163, %v9163
        %v9329 = vmul.f32 %v9252, %v9252
        %v9330 = vmul.f32 %v9165, %v9165
        %v9331 = vmul.f32 %v9254, %v9254
        %v9332 = vmul.f32 %v9168, %v9168
        %v9333 = vmul.f32 %v9257, %v9257
        %v9334 = vmul.f32 %v9170, %v9170
        %v9335 = vmul.f32 %v9259, %v9259
        %v9336 = vmul.f32 %v9173, %v9173
        %v9337 = vmul.f32 %v9262, %v9262
        %v9338 = vmul.f32 %v9175, %v9175
        %v9339 = vmul.f32 %v9264, %v9264
        %v9340 = vmul.f32 %v9178, %v9178
        %v9341 = vmul.f32 %v9267, %v9267
        %v9342 = vmul.f32 %v9180, %v9180
        %v9343 = vmul.f32 %v9269, %v9269
        %v9344 = vmul.f32 %v9183, %v9183
        %v9345 = vmul.f32 %v9272, %v9272
        %v9346 = vmul.f32 %v9185, %v9185
        %v9347 = vmul.f32 %v9274, %v9274
        %v9348 = vmul.f32 %v9188, %v9188
        %v9349 = vmul.f32 %v9277, %v9277
        %v9350 = vmul.f32 %v9190, %v9190
        %v9351 = vmul.f32 %v9279, %v9279
        %v9352 = vmul.f32 %v9193, %v9193
        %v9353 = vmul.f32 %v9282, %v9282
        %v9354 = vmul.f32 %v9195, %v9195
        %v9355 = vmul.f32 %v9284, %v9284
        %v9356 = vmul.f32 %v9198, %v9198
        %v9357 = vmul.f32 %v9287, %v9287
        %v9358 = vmul.f32 %v9200, %v9200
        %v9359 = vmul.f32 %v9289, %v9289
        %v9360 = vmul.f32 %v9203, %v9203
        %v9361 = vmul.f32 %v9292, %v9292
        %v9362 = vmul.f32 %v9205, %v9205
        %v9363 = vmul.f32 %v9294, %v9294
        %v9364 = vmul.f32 %v9208, %v9208
        %v9365 = vmul.f32 %v9297, %v9297
        %v9366 = vmul.f32 %v9210, %v9210
        %v9367 = vmul.f32 %v9299, %v9299
        %v9368 = vmul.f32 %v9213, %v9213
        %v9369 = vmul.f32 %v9302, %v9302
        %v9370 = vmul.f32 %v9215, %v9215
        %v9371 = vmul.f32 %v9304, %v9304
        %v9372 = vmul.f32 %v9218, %v9218
        %v9373 = vmul.f32 %v9307, %v9307
        %v9374 = vmul.f32 %v9220, %v9220
        %v9375 = vmul.f32 %v9309, %v9309
        %v9376 = vmul.f32 %v9223, %v9223
        %v9377 = vmul.f32 %v9312, %v9312
        %v9378 = vmul.f32 %v9225, %v9225
        %v9379 = vmul.f32 %v9314, %v9314
        %v9380 = vmul.f32 %v9148, %v9316
        %v9381 = vmul.f32 %v9237, %v9317
        %v9382 = vmul.f32 %v9150, %v9318
        %v9383 = vmul.f32 %v9239, %v9319
        %v9384 = vmul.f32 %v9153, %v9320
        %v9385 = vmul.f32 %v9242, %v9321
        %v9386 = vmul.f32 %v9155, %v9322
        %v9387 = vmul.f32 %v9244, %v9323
        %v9388 = vmul.f32 %v9158, %v9324
        %v9389 = vmul.f32 %v9247, %v9325
        %v9390 = vmul.f32 %v9160, %v9326
        %v9391 = vmul.f32 %v9249, %v9327
        %v9392 = vmul.f32 %v9163, %v9328
        %v9393 = vmul.f32 %v9252, %v9329
        %v9394 = vmul.f32 %v9165, %v9330
        %v9395 = vmul.f32 %v9254, %v9331
        %v9396 = vmul.f32 %v9168, %v9332
        %v9397 = vmul.f32 %v9257, %v9333
        %v9398 = vmul.f32 %v9170, %v9334
        %v9399 = vmul.f32 %v9259, %v9335
        %v9400 = vmul.f32 %v9173, %v9336
        %v9401 = vmul.f32 %v9262, %v9337
        %v9402 = vmul.f32 %v9175, %v9338
        %v9403 = vmul.f32 %v9264, %v9339
        %v9404 = vmul.f32 %v9178, %v9340
        %v9405 = vmul.f32 %v9267, %v9341
        %v9406 = vmul.f32 %v9180, %v9342
        %v9407 = vmul.f32 %v9269, %v9343
        %v9408 = vmul.f32 %v9183, %v9344
        %v9409 = vmul.f32 %v9272, %v9345
        %v9410 = vmul.f32 %v9185, %v9346
        %v9411 = vmul.f32 %v9274, %v9347
        %v9412 = vmul.f32 %v9188, %v9348
        %v9413 = vmul.f32 %v9277, %v9349
        %v9414 = vmul.f32 %v9190, %v9350
        %v9415 = vmul.f32 %v9279, %v9351
        %v9416 = vmul.f32 %v9193, %v9352
        %v9417 = vmul.f32 %v9282, %v9353
        %v9418 = vmul.f32 %v9195, %v9354
        %v9419 = vmul.f32 %v9284, %v9355
        %v9420 = vmul.f32 %v9198, %v9356
        %v9421 = vmul.f32 %v9287, %v9357
        %v9422 = vmul.f32 %v9200, %v9358
        %v9423 = vmul.f32 %v9289, %v9359
        %v9424 = vmul.f32 %v9203, %v9360
        %v9425 = vmul.f32 %v9292, %v9361
        %v9426 = vmul.f32 %v9205, %v9362
        %v9427 = vmul.f32 %v9294, %v9363
        %v9428 = vmul.f32 %v9208, %v9364
        %v9429 = vmul.f32 %v9297, %v9365
        %v9430 = vmul.f32 %v9210, %v9366
        %v9431 = vmul.f32 %v9299, %v9367
        %v9432 = vmul.f32 %v9213, %v9368
        %v9433 = vmul.f32 %v9302, %v9369
        %v9434 = vmul.f32 %v9215, %v9370
        %v9435 = vmul.f32 %v9304, %v9371
        %v9436 = vmul.f32 %v9218, %v9372
        %v9437 = vmul.f32 %v9307, %v9373
        %v9438 = vmul.f32 %v9220, %v9374
        %v9439 = vmul.f32 %v9309, %v9375
        %v9440 = vmul.f32 %v9223, %v9376
        %v9441 = vmul.f32 %v9312, %v9377
        %v9442 = vmul.f32 %v9225, %v9378
        %v9443 = vmul.f32 %v9314, %v9379
        %v9444 = vmul.f32 %v9380, 0.044715
        %v9445 = vmul.f32 %v9381, 0.044715
        %v9446 = vmul.f32 %v9382, 0.044715
        %v9447 = vmul.f32 %v9383, 0.044715
        %v9448 = vmul.f32 %v9384, 0.044715
        %v9449 = vmul.f32 %v9385, 0.044715
        %v9450 = vmul.f32 %v9386, 0.044715
        %v9451 = vmul.f32 %v9387, 0.044715
        %v9452 = vmul.f32 %v9388, 0.044715
        %v9453 = vmul.f32 %v9389, 0.044715
        %v9454 = vmul.f32 %v9390, 0.044715
        %v9455 = vmul.f32 %v9391, 0.044715
        %v9456 = vmul.f32 %v9392, 0.044715
        %v9457 = vmul.f32 %v9393, 0.044715
        %v9458 = vmul.f32 %v9394, 0.044715
        %v9459 = vmul.f32 %v9395, 0.044715
        %v9460 = vmul.f32 %v9396, 0.044715
        %v9461 = vmul.f32 %v9397, 0.044715
        %v9462 = vmul.f32 %v9398, 0.044715
        %v9463 = vmul.f32 %v9399, 0.044715
        %v9464 = vmul.f32 %v9400, 0.044715
        %v9465 = vmul.f32 %v9401, 0.044715
        %v9466 = vmul.f32 %v9402, 0.044715
        %v9467 = vmul.f32 %v9403, 0.044715
        %v9468 = vmul.f32 %v9404, 0.044715
        %v9469 = vmul.f32 %v9405, 0.044715
        %v9470 = vmul.f32 %v9406, 0.044715
        %v9471 = vmul.f32 %v9407, 0.044715
        %v9472 = vmul.f32 %v9408, 0.044715
        %v9473 = vmul.f32 %v9409, 0.044715
        %v9474 = vmul.f32 %v9410, 0.044715
        %v9475 = vmul.f32 %v9411, 0.044715
        %v9476 = vmul.f32 %v9412, 0.044715
        %v9477 = vmul.f32 %v9413, 0.044715
        %v9478 = vmul.f32 %v9414, 0.044715
        %v9479 = vmul.f32 %v9415, 0.044715
        %v9480 = vmul.f32 %v9416, 0.044715
        %v9481 = vmul.f32 %v9417, 0.044715
        %v9482 = vmul.f32 %v9418, 0.044715
        %v9483 = vmul.f32 %v9419, 0.044715
        %v9484 = vmul.f32 %v9420, 0.044715
        %v9485 = vmul.f32 %v9421, 0.044715
        %v9486 = vmul.f32 %v9422, 0.044715
        %v9487 = vmul.f32 %v9423, 0.044715
        %v9488 = vmul.f32 %v9424, 0.044715
        %v9489 = vmul.f32 %v9425, 0.044715
        %v9490 = vmul.f32 %v9426, 0.044715
        %v9491 = vmul.f32 %v9427, 0.044715
        %v9492 = vmul.f32 %v9428, 0.044715
        %v9493 = vmul.f32 %v9429, 0.044715
        %v9494 = vmul.f32 %v9430, 0.044715
        %v9495 = vmul.f32 %v9431, 0.044715
        %v9496 = vmul.f32 %v9432, 0.044715
        %v9497 = vmul.f32 %v9433, 0.044715
        %v9498 = vmul.f32 %v9434, 0.044715
        %v9499 = vmul.f32 %v9435, 0.044715
        %v9500 = vmul.f32 %v9436, 0.044715
        %v9501 = vmul.f32 %v9437, 0.044715
        %v9502 = vmul.f32 %v9438, 0.044715
        %v9503 = vmul.f32 %v9439, 0.044715
        %v9504 = vmul.f32 %v9440, 0.044715
        %v9505 = vmul.f32 %v9441, 0.044715
        %v9506 = vmul.f32 %v9442, 0.044715
        %v9507 = vmul.f32 %v9443, 0.044715
        %v9508 = vadd.f32 %v9148, %v9444
        %v9509 = vadd.f32 %v9237, %v9445
        %v9510 = vadd.f32 %v9150, %v9446
        %v9511 = vadd.f32 %v9239, %v9447
        %v9512 = vadd.f32 %v9153, %v9448
        %v9513 = vadd.f32 %v9242, %v9449
        %v9514 = vadd.f32 %v9155, %v9450
        %v9515 = vadd.f32 %v9244, %v9451
        %v9516 = vadd.f32 %v9158, %v9452
        %v9517 = vadd.f32 %v9247, %v9453
        %v9518 = vadd.f32 %v9160, %v9454
        %v9519 = vadd.f32 %v9249, %v9455
        %v9520 = vadd.f32 %v9163, %v9456
        %v9521 = vadd.f32 %v9252, %v9457
        %v9522 = vadd.f32 %v9165, %v9458
        %v9523 = vadd.f32 %v9254, %v9459
        %v9524 = vadd.f32 %v9168, %v9460
        %v9525 = vadd.f32 %v9257, %v9461
        %v9526 = vadd.f32 %v9170, %v9462
        %v9527 = vadd.f32 %v9259, %v9463
        %v9528 = vadd.f32 %v9173, %v9464
        %v9529 = vadd.f32 %v9262, %v9465
        %v9530 = vadd.f32 %v9175, %v9466
        %v9531 = vadd.f32 %v9264, %v9467
        %v9532 = vadd.f32 %v9178, %v9468
        %v9533 = vadd.f32 %v9267, %v9469
        %v9534 = vadd.f32 %v9180, %v9470
        %v9535 = vadd.f32 %v9269, %v9471
        %v9536 = vadd.f32 %v9183, %v9472
        %v9537 = vadd.f32 %v9272, %v9473
        %v9538 = vadd.f32 %v9185, %v9474
        %v9539 = vadd.f32 %v9274, %v9475
        %v9540 = vadd.f32 %v9188, %v9476
        %v9541 = vadd.f32 %v9277, %v9477
        %v9542 = vadd.f32 %v9190, %v9478
        %v9543 = vadd.f32 %v9279, %v9479
        %v9544 = vadd.f32 %v9193, %v9480
        %v9545 = vadd.f32 %v9282, %v9481
        %v9546 = vadd.f32 %v9195, %v9482
        %v9547 = vadd.f32 %v9284, %v9483
        %v9548 = vadd.f32 %v9198, %v9484
        %v9549 = vadd.f32 %v9287, %v9485
        %v9550 = vadd.f32 %v9200, %v9486
        %v9551 = vadd.f32 %v9289, %v9487
        %v9552 = vadd.f32 %v9203, %v9488
        %v9553 = vadd.f32 %v9292, %v9489
        %v9554 = vadd.f32 %v9205, %v9490
        %v9555 = vadd.f32 %v9294, %v9491
        %v9556 = vadd.f32 %v9208, %v9492
        %v9557 = vadd.f32 %v9297, %v9493
        %v9558 = vadd.f32 %v9210, %v9494
        %v9559 = vadd.f32 %v9299, %v9495
        %v9560 = vadd.f32 %v9213, %v9496
        %v9561 = vadd.f32 %v9302, %v9497
        %v9562 = vadd.f32 %v9215, %v9498
        %v9563 = vadd.f32 %v9304, %v9499
        %v9564 = vadd.f32 %v9218, %v9500
        %v9565 = vadd.f32 %v9307, %v9501
        %v9566 = vadd.f32 %v9220, %v9502
        %v9567 = vadd.f32 %v9309, %v9503
        %v9568 = vadd.f32 %v9223, %v9504
        %v9569 = vadd.f32 %v9312, %v9505
        %v9570 = vadd.f32 %v9225, %v9506
        %v9571 = vadd.f32 %v9314, %v9507
        %v9572 = vmul.f32 %v9508, 0.7978846
        %v9573 = vmul.f32 %v9509, 0.7978846
        %v9574 = vmul.f32 %v9510, 0.7978846
        %v9575 = vmul.f32 %v9511, 0.7978846
        %v9576 = vmul.f32 %v9512, 0.7978846
        %v9577 = vmul.f32 %v9513, 0.7978846
        %v9578 = vmul.f32 %v9514, 0.7978846
        %v9579 = vmul.f32 %v9515, 0.7978846
        %v9580 = vmul.f32 %v9516, 0.7978846
        %v9581 = vmul.f32 %v9517, 0.7978846
        %v9582 = vmul.f32 %v9518, 0.7978846
        %v9583 = vmul.f32 %v9519, 0.7978846
        %v9584 = vmul.f32 %v9520, 0.7978846
        %v9585 = vmul.f32 %v9521, 0.7978846
        %v9586 = vmul.f32 %v9522, 0.7978846
        %v9587 = vmul.f32 %v9523, 0.7978846
        %v9588 = vmul.f32 %v9524, 0.7978846
        %v9589 = vmul.f32 %v9525, 0.7978846
        %v9590 = vmul.f32 %v9526, 0.7978846
        %v9591 = vmul.f32 %v9527, 0.7978846
        %v9592 = vmul.f32 %v9528, 0.7978846
        %v9593 = vmul.f32 %v9529, 0.7978846
        %v9594 = vmul.f32 %v9530, 0.7978846
        %v9595 = vmul.f32 %v9531, 0.7978846
        %v9596 = vmul.f32 %v9532, 0.7978846
        %v9597 = vmul.f32 %v9533, 0.7978846
        %v9598 = vmul.f32 %v9534, 0.7978846
        %v9599 = vmul.f32 %v9535, 0.7978846
        %v9600 = vmul.f32 %v9536, 0.7978846
        %v9601 = vmul.f32 %v9537, 0.7978846
        %v9602 = vmul.f32 %v9538, 0.7978846
        %v9603 = vmul.f32 %v9539, 0.7978846
        %v9604 = vmul.f32 %v9540, 0.7978846
        %v9605 = vmul.f32 %v9541, 0.7978846
        %v9606 = vmul.f32 %v9542, 0.7978846
        %v9607 = vmul.f32 %v9543, 0.7978846
        %v9608 = vmul.f32 %v9544, 0.7978846
        %v9609 = vmul.f32 %v9545, 0.7978846
        %v9610 = vmul.f32 %v9546, 0.7978846
        %v9611 = vmul.f32 %v9547, 0.7978846
        %v9612 = vmul.f32 %v9548, 0.7978846
        %v9613 = vmul.f32 %v9549, 0.7978846
        %v9614 = vmul.f32 %v9550, 0.7978846
        %v9615 = vmul.f32 %v9551, 0.7978846
        %v9616 = vmul.f32 %v9552, 0.7978846
        %v9617 = vmul.f32 %v9553, 0.7978846
        %v9618 = vmul.f32 %v9554, 0.7978846
        %v9619 = vmul.f32 %v9555, 0.7978846
        %v9620 = vmul.f32 %v9556, 0.7978846
        %v9621 = vmul.f32 %v9557, 0.7978846
        %v9622 = vmul.f32 %v9558, 0.7978846
        %v9623 = vmul.f32 %v9559, 0.7978846
        %v9624 = vmul.f32 %v9560, 0.7978846
        %v9625 = vmul.f32 %v9561, 0.7978846
        %v9626 = vmul.f32 %v9562, 0.7978846
        %v9627 = vmul.f32 %v9563, 0.7978846
        %v9628 = vmul.f32 %v9564, 0.7978846
        %v9629 = vmul.f32 %v9565, 0.7978846
        %v9630 = vmul.f32 %v9566, 0.7978846
        %v9631 = vmul.f32 %v9567, 0.7978846
        %v9632 = vmul.f32 %v9568, 0.7978846
        %v9633 = vmul.f32 %v9569, 0.7978846
        %v9634 = vmul.f32 %v9570, 0.7978846
        %v9635 = vmul.f32 %v9571, 0.7978846
        %v9636 = vtanh.pop %v9572
        %v9637 = vtanh.pop %v9573
        %v9638 = vtanh.pop %v9574
        %v9639 = vtanh.pop %v9575
        %v9640 = vtanh.pop %v9576
        %v9641 = vtanh.pop %v9577
        %v9642 = vtanh.pop %v9578
        %v9643 = vtanh.pop %v9579
        %v9644 = vtanh.pop %v9580
        %v9645 = vtanh.pop %v9581
        %v9646 = vtanh.pop %v9582
        %v9647 = vtanh.pop %v9583
        %v9648 = vtanh.pop %v9584
        %v9649 = vtanh.pop %v9585
        %v9650 = vtanh.pop %v9586
        %v9651 = vtanh.pop %v9587
        %v9652 = vtanh.pop %v9588
        %v9653 = vtanh.pop %v9589
        %v9654 = vtanh.pop %v9590
        %v9655 = vtanh.pop %v9591
        %v9656 = vtanh.pop %v9592
        %v9657 = vtanh.pop %v9593
        %v9658 = vtanh.pop %v9594
        %v9659 = vtanh.pop %v9595
        %v9660 = vtanh.pop %v9596
        %v9661 = vtanh.pop %v9597
        %v9662 = vtanh.pop %v9598
        %v9663 = vtanh.pop %v9599
        %v9664 = vtanh.pop %v9600
        %v9665 = vtanh.pop %v9601
        %v9666 = vtanh.pop %v9602
        %v9667 = vtanh.pop %v9603
        %v9668 = vtanh.pop %v9604
        %v9669 = vtanh.pop %v9605
        %v9670 = vtanh.pop %v9606
        %v9671 = vtanh.pop %v9607
        %v9672 = vtanh.pop %v9608
        %v9673 = vtanh.pop %v9609
        %v9674 = vtanh.pop %v9610
        %v9675 = vtanh.pop %v9611
        %v9676 = vtanh.pop %v9612
        %v9677 = vtanh.pop %v9613
        %v9678 = vtanh.pop %v9614
        %v9679 = vtanh.pop %v9615
        %v9680 = vtanh.pop %v9616
        %v9681 = vtanh.pop %v9617
        %v9682 = vtanh.pop %v9618
        %v9683 = vtanh.pop %v9619
        %v9684 = vtanh.pop %v9620
        %v9685 = vtanh.pop %v9621
        %v9686 = vtanh.pop %v9622
        %v9687 = vtanh.pop %v9623
        %v9688 = vtanh.pop %v9624
        %v9689 = vtanh.pop %v9625
        %v9690 = vtanh.pop %v9626
        %v9691 = vtanh.pop %v9627
        %v9692 = vtanh.pop %v9628
        %v9693 = vtanh.pop %v9629
        %v9694 = vtanh.pop %v9630
        %v9695 = vtanh.pop %v9631
        %v9696 = vtanh.pop %v9632
        %v9697 = vtanh.pop %v9633
        %v9698 = vtanh.pop %v9634
        %v9699 = vtanh.pop %v9635
        %v9700 = vadd.f32 %v9636, 1.0
        %v9701 = vadd.f32 %v9637, 1.0
        %v9702 = vadd.f32 %v9638, 1.0
        %v9703 = vadd.f32 %v9639, 1.0
        %v9704 = vadd.f32 %v9640, 1.0
        %v9705 = vadd.f32 %v9641, 1.0
        %v9706 = vadd.f32 %v9642, 1.0
        %v9707 = vadd.f32 %v9643, 1.0
        %v9708 = vadd.f32 %v9644, 1.0
        %v9709 = vadd.f32 %v9645, 1.0
        %v9710 = vadd.f32 %v9646, 1.0
        %v9711 = vadd.f32 %v9647, 1.0
        %v9712 = vadd.f32 %v9648, 1.0
        %v9713 = vadd.f32 %v9649, 1.0
        %v9714 = vadd.f32 %v9650, 1.0
        %v9715 = vadd.f32 %v9651, 1.0
        %v9716 = vadd.f32 %v9652, 1.0
        %v9717 = vadd.f32 %v9653, 1.0
        %v9718 = vadd.f32 %v9654, 1.0
        %v9719 = vadd.f32 %v9655, 1.0
        %v9720 = vadd.f32 %v9656, 1.0
        %v9721 = vadd.f32 %v9657, 1.0
        %v9722 = vadd.f32 %v9658, 1.0
        %v9723 = vadd.f32 %v9659, 1.0
        %v9724 = vadd.f32 %v9660, 1.0
        %v9725 = vadd.f32 %v9661, 1.0
        %v9726 = vadd.f32 %v9662, 1.0
        %v9727 = vadd.f32 %v9663, 1.0
        %v9728 = vadd.f32 %v9664, 1.0
        %v9729 = vadd.f32 %v9665, 1.0
        %v9730 = vadd.f32 %v9666, 1.0
        %v9731 = vadd.f32 %v9667, 1.0
        %v9732 = vadd.f32 %v9668, 1.0
        %v9733 = vadd.f32 %v9669, 1.0
        %v9734 = vadd.f32 %v9670, 1.0
        %v9735 = vadd.f32 %v9671, 1.0
        %v9736 = vadd.f32 %v9672, 1.0
        %v9737 = vadd.f32 %v9673, 1.0
        %v9738 = vadd.f32 %v9674, 1.0
        %v9739 = vadd.f32 %v9675, 1.0
        %v9740 = vadd.f32 %v9676, 1.0
        %v9741 = vadd.f32 %v9677, 1.0
        %v9742 = vadd.f32 %v9678, 1.0
        %v9743 = vadd.f32 %v9679, 1.0
        %v9744 = vadd.f32 %v9680, 1.0
        %v9745 = vadd.f32 %v9681, 1.0
        %v9746 = vadd.f32 %v9682, 1.0
        %v9747 = vadd.f32 %v9683, 1.0
        %v9748 = vadd.f32 %v9684, 1.0
        %v9749 = vadd.f32 %v9685, 1.0
        %v9750 = vadd.f32 %v9686, 1.0
        %v9751 = vadd.f32 %v9687, 1.0
        %v9752 = vadd.f32 %v9688, 1.0
        %v9753 = vadd.f32 %v9689, 1.0
        %v9754 = vadd.f32 %v9690, 1.0
        %v9755 = vadd.f32 %v9691, 1.0
        %v9756 = vadd.f32 %v9692, 1.0
        %v9757 = vadd.f32 %v9693, 1.0
        %v9758 = vadd.f32 %v9694, 1.0
        %v9759 = vadd.f32 %v9695, 1.0
        %v9760 = vadd.f32 %v9696, 1.0
        %v9761 = vadd.f32 %v9697, 1.0
        %v9762 = vadd.f32 %v9698, 1.0
        %v9763 = vadd.f32 %v9699, 1.0
        %v9764 = vmul.f32 %v9700, 0.5
        %v9765 = vmul.f32 %v9701, 0.5
        %v9766 = vmul.f32 %v9702, 0.5
        %v9767 = vmul.f32 %v9703, 0.5
        %v9768 = vmul.f32 %v9704, 0.5
        %v9769 = vmul.f32 %v9705, 0.5
        %v9770 = vmul.f32 %v9706, 0.5
        %v9771 = vmul.f32 %v9707, 0.5
        %v9772 = vmul.f32 %v9708, 0.5
        %v9773 = vmul.f32 %v9709, 0.5
        %v9774 = vmul.f32 %v9710, 0.5
        %v9775 = vmul.f32 %v9711, 0.5
        %v9776 = vmul.f32 %v9712, 0.5
        %v9777 = vmul.f32 %v9713, 0.5
        %v9778 = vmul.f32 %v9714, 0.5
        %v9779 = vmul.f32 %v9715, 0.5
        %v9780 = vmul.f32 %v9716, 0.5
        %v9781 = vmul.f32 %v9717, 0.5
        %v9782 = vmul.f32 %v9718, 0.5
        %v9783 = vmul.f32 %v9719, 0.5
        %v9784 = vmul.f32 %v9720, 0.5
        %v9785 = vmul.f32 %v9721, 0.5
        %v9786 = vmul.f32 %v9722, 0.5
        %v9787 = vmul.f32 %v9723, 0.5
        %v9788 = vmul.f32 %v9724, 0.5
        %v9789 = vmul.f32 %v9725, 0.5
        %v9790 = vmul.f32 %v9726, 0.5
        %v9791 = vmul.f32 %v9727, 0.5
        %v9792 = vmul.f32 %v9728, 0.5
        %v9793 = vmul.f32 %v9729, 0.5
        %v9794 = vmul.f32 %v9730, 0.5
        %v9795 = vmul.f32 %v9731, 0.5
        %v9796 = vmul.f32 %v9732, 0.5
        %v9797 = vmul.f32 %v9733, 0.5
        %v9798 = vmul.f32 %v9734, 0.5
        %v9799 = vmul.f32 %v9735, 0.5
        %v9800 = vmul.f32 %v9736, 0.5
        %v9801 = vmul.f32 %v9737, 0.5
        %v9802 = vmul.f32 %v9738, 0.5
        %v9803 = vmul.f32 %v9739, 0.5
        %v9804 = vmul.f32 %v9740, 0.5
        %v9805 = vmul.f32 %v9741, 0.5
        %v9806 = vmul.f32 %v9742, 0.5
        %v9807 = vmul.f32 %v9743, 0.5
        %v9808 = vmul.f32 %v9744, 0.5
        %v9809 = vmul.f32 %v9745, 0.5
        %v9810 = vmul.f32 %v9746, 0.5
        %v9811 = vmul.f32 %v9747, 0.5
        %v9812 = vmul.f32 %v9748, 0.5
        %v9813 = vmul.f32 %v9749, 0.5
        %v9814 = vmul.f32 %v9750, 0.5
        %v9815 = vmul.f32 %v9751, 0.5
        %v9816 = vmul.f32 %v9752, 0.5
        %v9817 = vmul.f32 %v9753, 0.5
        %v9818 = vmul.f32 %v9754, 0.5
        %v9819 = vmul.f32 %v9755, 0.5
        %v9820 = vmul.f32 %v9756, 0.5
        %v9821 = vmul.f32 %v9757, 0.5
        %v9822 = vmul.f32 %v9758, 0.5
        %v9823 = vmul.f32 %v9759, 0.5
        %v9824 = vmul.f32 %v9760, 0.5
        %v9825 = vmul.f32 %v9761, 0.5
        %v9826 = vmul.f32 %v9762, 0.5
        %v9827 = vmul.f32 %v9763, 0.5
        %v9828 = vmul.f32 %v9148, %v9764
        %v9829 = vmul.f32 %v9237, %v9765
        %v9830 = vmul.f32 %v9150, %v9766
        %v9831 = vmul.f32 %v9239, %v9767
        %v9832 = vmul.f32 %v9153, %v9768
        %v9833 = vmul.f32 %v9242, %v9769
        %v9834 = vmul.f32 %v9155, %v9770
        %v9835 = vmul.f32 %v9244, %v9771
        %v9836 = vmul.f32 %v9158, %v9772
        %v9837 = vmul.f32 %v9247, %v9773
        %v9838 = vmul.f32 %v9160, %v9774
        %v9839 = vmul.f32 %v9249, %v9775
        %v9840 = vmul.f32 %v9163, %v9776
        %v9841 = vmul.f32 %v9252, %v9777
        %v9842 = vmul.f32 %v9165, %v9778
        %v9843 = vmul.f32 %v9254, %v9779
        %v9844 = vmul.f32 %v9168, %v9780
        %v9845 = vmul.f32 %v9257, %v9781
        %v9846 = vmul.f32 %v9170, %v9782
        %v9847 = vmul.f32 %v9259, %v9783
        %v9848 = vmul.f32 %v9173, %v9784
        %v9849 = vmul.f32 %v9262, %v9785
        %v9850 = vmul.f32 %v9175, %v9786
        %v9851 = vmul.f32 %v9264, %v9787
        %v9852 = vmul.f32 %v9178, %v9788
        %v9853 = vmul.f32 %v9267, %v9789
        %v9854 = vmul.f32 %v9180, %v9790
        %v9855 = vmul.f32 %v9269, %v9791
        %v9856 = vmul.f32 %v9183, %v9792
        %v9857 = vmul.f32 %v9272, %v9793
        %v9858 = vmul.f32 %v9185, %v9794
        %v9859 = vmul.f32 %v9274, %v9795
        %v9860 = vmul.f32 %v9188, %v9796
        %v9861 = vmul.f32 %v9277, %v9797
        %v9862 = vmul.f32 %v9190, %v9798
        %v9863 = vmul.f32 %v9279, %v9799
        %v9864 = vmul.f32 %v9193, %v9800
        %v9865 = vmul.f32 %v9282, %v9801
        %v9866 = vmul.f32 %v9195, %v9802
        %v9867 = vmul.f32 %v9284, %v9803
        %v9868 = vmul.f32 %v9198, %v9804
        %v9869 = vmul.f32 %v9287, %v9805
        %v9870 = vmul.f32 %v9200, %v9806
        %v9871 = vmul.f32 %v9289, %v9807
        %v9872 = vmul.f32 %v9203, %v9808
        %v9873 = vmul.f32 %v9292, %v9809
        %v9874 = vmul.f32 %v9205, %v9810
        %v9875 = vmul.f32 %v9294, %v9811
        %v9876 = vmul.f32 %v9208, %v9812
        %v9877 = vmul.f32 %v9297, %v9813
        %v9878 = vmul.f32 %v9210, %v9814
        %v9879 = vmul.f32 %v9299, %v9815
        %v9880 = vmul.f32 %v9213, %v9816
        %v9881 = vmul.f32 %v9302, %v9817
        %v9882 = vmul.f32 %v9215, %v9818
        %v9883 = vmul.f32 %v9304, %v9819
        %v9884 = vmul.f32 %v9218, %v9820
        %v9885 = vmul.f32 %v9307, %v9821
        %v9886 = vmul.f32 %v9220, %v9822
        %v9887 = vmul.f32 %v9309, %v9823
        %v9888 = vmul.f32 %v9223, %v9824
        %v9889 = vmul.f32 %v9312, %v9825
        %v9890 = vmul.f32 %v9225, %v9826
        %v9891 = vmul.f32 %v9314, %v9827
        %v9892 = vpack.c.bf16 %v9830, %v9828
        %v9893 = vpack.c.bf16 %v9831, %v9829
        %v9894 = vpack.c.bf16 %v9834, %v9832
        %v9895 = vpack.c.bf16 %v9835, %v9833
        %v9896 = vpack.c.bf16 %v9838, %v9836
        %v9897 = vpack.c.bf16 %v9839, %v9837
        %v9898 = vpack.c.bf16 %v9842, %v9840
        %v9899 = vpack.c.bf16 %v9843, %v9841
        %v9900 = vpack.c.bf16 %v9846, %v9844
        %v9901 = vpack.c.bf16 %v9847, %v9845
        %v9902 = vpack.c.bf16 %v9850, %v9848
        %v9903 = vpack.c.bf16 %v9851, %v9849
        %v9904 = vpack.c.bf16 %v9854, %v9852
        %v9905 = vpack.c.bf16 %v9855, %v9853
        %v9906 = vpack.c.bf16 %v9858, %v9856
        %v9907 = vpack.c.bf16 %v9859, %v9857
        %v9908 = vpack.c.bf16 %v9862, %v9860
        %v9909 = vpack.c.bf16 %v9863, %v9861
        %v9910 = vpack.c.bf16 %v9866, %v9864
        %v9911 = vpack.c.bf16 %v9867, %v9865
        %v9912 = vpack.c.bf16 %v9870, %v9868
        %v9913 = vpack.c.bf16 %v9871, %v9869
        %v9914 = vpack.c.bf16 %v9874, %v9872
        %v9915 = vpack.c.bf16 %v9875, %v9873
        %v9916 = vpack.c.bf16 %v9878, %v9876
        %v9917 = vpack.c.bf16 %v9879, %v9877
        %v9918 = vpack.c.bf16 %v9882, %v9880
        %v9919 = vpack.c.bf16 %v9883, %v9881
        %v9920 = vpack.c.bf16 %v9886, %v9884
        %v9921 = vpack.c.bf16 %v9887, %v9885
        %v9922 = vpack.c.bf16 %v9890, %v9888
        %v9923 = vpack.c.bf16 %v9891, %v9889
        %v9924 = vld [vmem:[%s799] sm:$0xf]
        %v9925 = vld [vmem:[%s799 + $0x4] sm:$0xf]
        %v9926 = vld [vmem:[%s799 + $0x8] sm:$0xf]
        %v9927 = vld [vmem:[%s799 + $0xc] sm:$0xf]
        %v9928 = vld [vmem:[%s799 + $0x10] sm:$0xf]
        %v9929 = vld [vmem:[%s799 + $0x14] sm:$0xf]
        %v9930 = vld [vmem:[%s799 + $0x18] sm:$0xf]
        %v9931 = vld [vmem:[%s799 + $0x1c] sm:$0xf]
        %v9932 = vld [vmem:[%s799 + $0x20] sm:$0xf]
        %v9933 = vld [vmem:[%s799 + $0x24] sm:$0xf]
        %v9934 = vld [vmem:[%s799 + $0x28] sm:$0xf]
        %v9935 = vld [vmem:[%s799 + $0x2c] sm:$0xf]
        %v9936 = vld [vmem:[%s799 + $0x30] sm:$0xf]
        %v9937 = vld [vmem:[%s799 + $0x34] sm:$0xf]
        %v9938 = vld [vmem:[%s799 + $0x38] sm:$0xf]
        %v9939 = vld [vmem:[%s799 + $0x3c] sm:$0xf]
        %v9940 = vld [vmem:[%s799 + $0x40] sm:$0xf]
        %v9941 = vld [vmem:[%s799 + $0x44] sm:$0xf]
        %v9942 = vld [vmem:[%s799 + $0x48] sm:$0xf]
        %v9943 = vld [vmem:[%s799 + $0x4c] sm:$0xf]
        %v9944 = vld [vmem:[%s799 + $0x50] sm:$0xf]
        %v9945 = vld [vmem:[%s799 + $0x54] sm:$0xf]
        %v9946 = vld [vmem:[%s799 + $0x58] sm:$0xf]
        %v9947 = vld [vmem:[%s799 + $0x5c] sm:$0xf]
        %v9948 = vld [vmem:[%s799 + $0x60] sm:$0xf]
        %v9949 = vld [vmem:[%s799 + $0x64] sm:$0xf]
        %v9950 = vld [vmem:[%s799 + $0x68] sm:$0xf]
        %v9951 = vld [vmem:[%s799 + $0x6c] sm:$0xf]
        %v9952 = vld [vmem:[%s799 + $0x70] sm:$0xf]
        %v9953 = vld [vmem:[%s799 + $0x74] sm:$0xf]
        %v9954 = vld [vmem:[%s799 + $0x78] sm:$0xf]
        %v9955 = vld [vmem:[%s799 + $0x7c] sm:$0xf]
        %v9956 = vld [vmem:[%s908] sm:$0x1]
        %v9958 = vperm.slane %v9956, 0
        %v9992 = vunpack.c.l.b16 %v9924
        %v9993 = vunpack.c.l.b16 %v9925
        %v9994 = vunpack.c.l.b16 %v9926
        %v9995 = vunpack.c.l.b16 %v9927
        %v9996 = vunpack.c.l.b16 %v9928
        %v9997 = vunpack.c.l.b16 %v9929
        %v9998 = vunpack.c.l.b16 %v9930
        %v9999 = vunpack.c.l.b16 %v9931
        %v10000 = vunpack.c.l.b16 %v9932
        %v10001 = vunpack.c.l.b16 %v9933
        %v10002 = vunpack.c.l.b16 %v9934
        %v10003 = vunpack.c.l.b16 %v9935
        %v10004 = vunpack.c.l.b16 %v9936
        %v10005 = vunpack.c.l.b16 %v9937
        %v10006 = vunpack.c.l.b16 %v9938
        %v10007 = vunpack.c.l.b16 %v9939
        %v10008 = vunpack.c.l.b16 %v9940
        %v10009 = vunpack.c.l.b16 %v9941
        %v10010 = vunpack.c.l.b16 %v9942
        %v10011 = vunpack.c.l.b16 %v9943
        %v10012 = vunpack.c.l.b16 %v9944
        %v10013 = vunpack.c.l.b16 %v9945
        %v10014 = vunpack.c.l.b16 %v9946
        %v10015 = vunpack.c.l.b16 %v9947
        %v10016 = vunpack.c.l.b16 %v9948
        %v10017 = vunpack.c.l.b16 %v9949
        %v10018 = vunpack.c.l.b16 %v9950
        %v10019 = vunpack.c.l.b16 %v9951
        %v10020 = vunpack.c.l.b16 %v9952
        %v10021 = vunpack.c.l.b16 %v9953
        %v10022 = vunpack.c.l.b16 %v9954
        %v10023 = vunpack.c.l.b16 %v9955
        %v10024 = vpack.c.b16 %v9993, %v9992
        %v10025 = vpack.c.b16 %v9995, %v9994
        %v10026 = vpack.c.b16 %v9997, %v9996
        %v10027 = vpack.c.b16 %v9999, %v9998
        %v10028 = vpack.c.b16 %v10001, %v10000
        %v10029 = vpack.c.b16 %v10003, %v10002
        %v10030 = vpack.c.b16 %v10005, %v10004
        %v10031 = vpack.c.b16 %v10007, %v10006
        %v10032 = vpack.c.b16 %v10009, %v10008
        %v10033 = vpack.c.b16 %v10011, %v10010
        %v10034 = vpack.c.b16 %v10013, %v10012
        %v10035 = vpack.c.b16 %v10015, %v10014
        %v10036 = vpack.c.b16 %v10017, %v10016
        %v10037 = vpack.c.b16 %v10019, %v10018
        %v10038 = vpack.c.b16 %v10021, %v10020
        %v10039 = vpack.c.b16 %v10023, %v10022
        %10056 = vmatpush.bf16.msra.mxu0 %v10031
        %10057 = vmatpush.bf16.msra.mxu0 %v10030
        %10058 = vmatpush.bf16.msra.mxu0 %v10029
        %10059 = vmatpush.bf16.msra.mxu0 %v10028
        %10060 = vmatpush.bf16.msra.mxu0 %v10027
        %10061 = vmatpush.bf16.msra.mxu0 %v10026
        %10062 = vmatpush.bf16.msra.mxu0 %v10025
        %10063 = vmatpush.bf16.msra.mxu0 %v10024
        %10064 = vmatmul.bf16.gmra.mxu0 %v9892
        %v10065 = vpop.f32.mrf.mxu0
        %v10066 = vadd.f32 %v9958, %v10065
        %v10067 = vpop.f32.mrf.mxu0
        %v10068 = vadd.f32 %v9958, %v10067
        %10069 = vmatmul.bf16.gmra.mxu0 %v9894
        %v10070 = vpop.f32.mrf.mxu0
        %v10071 = vadd.f32 %v9958, %v10070
        %v10072 = vpop.f32.mrf.mxu0
        %v10073 = vadd.f32 %v9958, %v10072
        %10074 = vmatmul.bf16.gmra.mxu0 %v9896
        %v10075 = vpop.f32.mrf.mxu0
        %v10076 = vadd.f32 %v9958, %v10075
        %v10077 = vpop.f32.mrf.mxu0
        %v10078 = vadd.f32 %v9958, %v10077
        %10079 = vmatmul.bf16.gmra.mxu0 %v9898
        %v10080 = vpop.f32.mrf.mxu0
        %v10081 = vadd.f32 %v9958, %v10080
        %v10082 = vpop.f32.mrf.mxu0
        %v10083 = vadd.f32 %v9958, %v10082
        %10084 = vmatmul.bf16.gmra.mxu0 %v9900
        %v10085 = vpop.f32.mrf.mxu0
        %v10086 = vadd.f32 %v9958, %v10085
        %v10087 = vpop.f32.mrf.mxu0
        %v10088 = vadd.f32 %v9958, %v10087
        %10089 = vmatmul.bf16.gmra.mxu0 %v9902
        %v10090 = vpop.f32.mrf.mxu0
        %v10091 = vadd.f32 %v9958, %v10090
        %v10092 = vpop.f32.mrf.mxu0
        %v10093 = vadd.f32 %v9958, %v10092
        %10094 = vmatmul.bf16.gmra.mxu0 %v9904
        %v10095 = vpop.f32.mrf.mxu0
        %v10096 = vadd.f32 %v9958, %v10095
        %v10097 = vpop.f32.mrf.mxu0
        %v10098 = vadd.f32 %v9958, %v10097
        %10099 = vmatmul.bf16.gmra.mxu0 %v9906
        %v10100 = vpop.f32.mrf.mxu0
        %v10101 = vadd.f32 %v9958, %v10100
        %v10102 = vpop.f32.mrf.mxu0
        %v10103 = vadd.f32 %v9958, %v10102
        %10104 = vmatmul.bf16.gmra.mxu0 %v9908
        %v10105 = vpop.f32.mrf.mxu0
        %v10106 = vadd.f32 %v9958, %v10105
        %v10107 = vpop.f32.mrf.mxu0
        %v10108 = vadd.f32 %v9958, %v10107
        %10109 = vmatmul.bf16.gmra.mxu0 %v9910
        %v10110 = vpop.f32.mrf.mxu0
        %v10111 = vadd.f32 %v9958, %v10110
        %v10112 = vpop.f32.mrf.mxu0
        %v10113 = vadd.f32 %v9958, %v10112
        %10114 = vmatmul.bf16.gmra.mxu0 %v9912
        %v10115 = vpop.f32.mrf.mxu0
        %v10116 = vadd.f32 %v9958, %v10115
        %v10117 = vpop.f32.mrf.mxu0
        %v10118 = vadd.f32 %v9958, %v10117
        %10119 = vmatmul.bf16.gmra.mxu0 %v9914
        %v10120 = vpop.f32.mrf.mxu0
        %v10121 = vadd.f32 %v9958, %v10120
        %v10122 = vpop.f32.mrf.mxu0
        %v10123 = vadd.f32 %v9958, %v10122
        %10124 = vmatmul.bf16.gmra.mxu0 %v9916
        %v10125 = vpop.f32.mrf.mxu0
        %v10126 = vadd.f32 %v9958, %v10125
        %v10127 = vpop.f32.mrf.mxu0
        %v10128 = vadd.f32 %v9958, %v10127
        %10129 = vmatmul.bf16.gmra.mxu0 %v9918
        %v10130 = vpop.f32.mrf.mxu0
        %v10131 = vadd.f32 %v9958, %v10130
        %v10132 = vpop.f32.mrf.mxu0
        %v10133 = vadd.f32 %v9958, %v10132
        %10134 = vmatmul.bf16.gmra.mxu0 %v9920
        %v10135 = vpop.f32.mrf.mxu0
        %v10136 = vadd.f32 %v9958, %v10135
        %v10137 = vpop.f32.mrf.mxu0
        %v10138 = vadd.f32 %v9958, %v10137
        %10139 = vmatmul.bf16.gmra.mxu0 %v9922
        %v10140 = vpop.f32.mrf.mxu0
        %v10141 = vadd.f32 %v9958, %v10140
        %v10142 = vpop.f32.mrf.mxu0
        %v10143 = vadd.f32 %v9958, %v10142
        %10144 = vdwg.mxu0
        %10145 = vmatpush.bf16.msra.mxu0 %v10039
        %10146 = vmatpush.bf16.msra.mxu0 %v10038
        %10147 = vmatpush.bf16.msra.mxu0 %v10037
        %10148 = vmatpush.bf16.msra.mxu0 %v10036
        %10149 = vmatpush.bf16.msra.mxu0 %v10035
        %10150 = vmatpush.bf16.msra.mxu0 %v10034
        %10151 = vmatpush.bf16.msra.mxu0 %v10033
        %10152 = vmatpush.bf16.msra.mxu0 %v10032
        %10153 = vmatmul.bf16.gmra.mxu0 %v9893
        %v10154 = vpop.f32.mrf.mxu0
        %v10155 = vadd.f32 %v10066, %v10154
        %v10156 = vpop.f32.mrf.mxu0
        %v10157 = vadd.f32 %v10068, %v10156
        %10158 = vmatmul.bf16.gmra.mxu0 %v9895
        %v10159 = vpop.f32.mrf.mxu0
        %v10160 = vadd.f32 %v10071, %v10159
        %v10161 = vpop.f32.mrf.mxu0
        %v10162 = vadd.f32 %v10073, %v10161
        %10163 = vmatmul.bf16.gmra.mxu0 %v9897
        %v10164 = vpop.f32.mrf.mxu0
        %v10165 = vadd.f32 %v10076, %v10164
        %v10166 = vpop.f32.mrf.mxu0
        %v10167 = vadd.f32 %v10078, %v10166
        %10168 = vmatmul.bf16.gmra.mxu0 %v9899
        %v10169 = vpop.f32.mrf.mxu0
        %v10170 = vadd.f32 %v10081, %v10169
        %v10171 = vpop.f32.mrf.mxu0
        %v10172 = vadd.f32 %v10083, %v10171
        %10173 = vmatmul.bf16.gmra.mxu0 %v9901
        %v10174 = vpop.f32.mrf.mxu0
        %v10175 = vadd.f32 %v10086, %v10174
        %v10176 = vpop.f32.mrf.mxu0
        %v10177 = vadd.f32 %v10088, %v10176
        %10178 = vmatmul.bf16.gmra.mxu0 %v9903
        %v10179 = vpop.f32.mrf.mxu0
        %v10180 = vadd.f32 %v10091, %v10179
        %v10181 = vpop.f32.mrf.mxu0
        %v10182 = vadd.f32 %v10093, %v10181
        %10183 = vmatmul.bf16.gmra.mxu0 %v9905
        %v10184 = vpop.f32.mrf.mxu0
        %v10185 = vadd.f32 %v10096, %v10184
        %v10186 = vpop.f32.mrf.mxu0
        %v10187 = vadd.f32 %v10098, %v10186
        %10188 = vmatmul.bf16.gmra.mxu0 %v9907
        %v10189 = vpop.f32.mrf.mxu0
        %v10190 = vadd.f32 %v10101, %v10189
        %v10191 = vpop.f32.mrf.mxu0
        %v10192 = vadd.f32 %v10103, %v10191
        %10193 = vmatmul.bf16.gmra.mxu0 %v9909
        %v10194 = vpop.f32.mrf.mxu0
        %v10195 = vadd.f32 %v10106, %v10194
        %v10196 = vpop.f32.mrf.mxu0
        %v10197 = vadd.f32 %v10108, %v10196
        %10198 = vmatmul.bf16.gmra.mxu0 %v9911
        %v10199 = vpop.f32.mrf.mxu0
        %v10200 = vadd.f32 %v10111, %v10199
        %v10201 = vpop.f32.mrf.mxu0
        %v10202 = vadd.f32 %v10113, %v10201
        %10203 = vmatmul.bf16.gmra.mxu0 %v9913
        %v10204 = vpop.f32.mrf.mxu0
        %v10205 = vadd.f32 %v10116, %v10204
        %v10206 = vpop.f32.mrf.mxu0
        %v10207 = vadd.f32 %v10118, %v10206
        %10208 = vmatmul.bf16.gmra.mxu0 %v9915
        %v10209 = vpop.f32.mrf.mxu0
        %v10210 = vadd.f32 %v10121, %v10209
        %v10211 = vpop.f32.mrf.mxu0
        %v10212 = vadd.f32 %v10123, %v10211
        %10213 = vmatmul.bf16.gmra.mxu0 %v9917
        %v10214 = vpop.f32.mrf.mxu0
        %v10215 = vadd.f32 %v10126, %v10214
        %v10216 = vpop.f32.mrf.mxu0
        %v10217 = vadd.f32 %v10128, %v10216
        %10218 = vmatmul.bf16.gmra.mxu0 %v9919
        %v10219 = vpop.f32.mrf.mxu0
        %v10220 = vadd.f32 %v10131, %v10219
        %v10221 = vpop.f32.mrf.mxu0
        %v10222 = vadd.f32 %v10133, %v10221
        %10223 = vmatmul.bf16.gmra.mxu0 %v9921
        %v10224 = vpop.f32.mrf.mxu0
        %v10225 = vadd.f32 %v10136, %v10224
        %v10226 = vpop.f32.mrf.mxu0
        %v10227 = vadd.f32 %v10138, %v10226
        %10228 = vmatmul.bf16.gmra.mxu0 %v9923
        %v10229 = vpop.f32.mrf.mxu0
        %v10230 = vadd.f32 %v10141, %v10229
        %v10231 = vpop.f32.mrf.mxu0
        %v10232 = vadd.f32 %v10143, %v10231
        %10233 = vdwg.mxu0
        %v10234 = vadd.f32 %v8276, %v10155
        %v10235 = vadd.f32 %v8277, %v10157
        %v10236 = vadd.f32 %v8278, %v10160
        %v10237 = vadd.f32 %v8279, %v10162
        %v10238 = vadd.f32 %v8280, %v10165
        %v10239 = vadd.f32 %v8281, %v10167
        %v10240 = vadd.f32 %v8282, %v10170
        %v10241 = vadd.f32 %v8283, %v10172
        %v10242 = vadd.f32 %v8284, %v10175
        %v10243 = vadd.f32 %v8285, %v10177
        %v10244 = vadd.f32 %v8286, %v10180
        %v10245 = vadd.f32 %v8287, %v10182
        %v10246 = vadd.f32 %v8288, %v10185
        %v10247 = vadd.f32 %v8289, %v10187
        %v10248 = vadd.f32 %v8290, %v10190
        %v10249 = vadd.f32 %v8291, %v10192
        %v10250 = vadd.f32 %v8292, %v10195
        %v10251 = vadd.f32 %v8293, %v10197
        %v10252 = vadd.f32 %v8294, %v10200
        %v10253 = vadd.f32 %v8295, %v10202
        %v10254 = vadd.f32 %v8296, %v10205
        %v10255 = vadd.f32 %v8297, %v10207
        %v10256 = vadd.f32 %v8298, %v10210
        %v10257 = vadd.f32 %v8299, %v10212
        %v10258 = vadd.f32 %v8300, %v10215
        %v10259 = vadd.f32 %v8301, %v10217
        %v10260 = vadd.f32 %v8302, %v10220
        %v10261 = vadd.f32 %v8303, %v10222
        %v10262 = vadd.f32 %v8304, %v10225
        %v10263 = vadd.f32 %v8305, %v10227
        %v10264 = vadd.f32 %v8306, %v10230
        %v10265 = vadd.f32 %v8307, %v10232
        %10266 = vst [vmem:[#allocation2] sm:$0xff] %v10234
        %10267 = vst [vmem:[#allocation2 + $0x8] sm:$0xff] %v10235
        %10268 = vst [vmem:[#allocation2 + $0x10] sm:$0xff] %v10236
        %10269 = vst [vmem:[#allocation2 + $0x18] sm:$0xff] %v10237
        %10270 = vst [vmem:[#allocation2 + $0x20] sm:$0xff] %v10238
        %10271 = vst [vmem:[#allocation2 + $0x28] sm:$0xff] %v10239
        %10272 = vst [vmem:[#allocation2 + $0x30] sm:$0xff] %v10240
        %10273 = vst [vmem:[#allocation2 + $0x38] sm:$0xff] %v10241
        %10274 = vst [vmem:[#allocation2 + $0x40] sm:$0xff] %v10242
        %10275 = vst [vmem:[#allocation2 + $0x48] sm:$0xff] %v10243
        %10276 = vst [vmem:[#allocation2 + $0x50] sm:$0xff] %v10244
        %10277 = vst [vmem:[#allocation2 + $0x58] sm:$0xff] %v10245
        %10278 = vst [vmem:[#allocation2 + $0x60] sm:$0xff] %v10246
        %10279 = vst [vmem:[#allocation2 + $0x68] sm:$0xff] %v10247
        %10280 = vst [vmem:[#allocation2 + $0x70] sm:$0xff] %v10248
        %10281 = vst [vmem:[#allocation2 + $0x78] sm:$0xff] %v10249
        %10282 = vst [vmem:[#allocation2 + $0x80] sm:$0xff] %v10250
        %10283 = vst [vmem:[#allocation2 + $0x88] sm:$0xff] %v10251
        %10284 = vst [vmem:[#allocation2 + $0x90] sm:$0xff] %v10252
        %10285 = vst [vmem:[#allocation2 + $0x98] sm:$0xff] %v10253
        %10286 = vst [vmem:[#allocation2 + $0xa0] sm:$0xff] %v10254
        %10287 = vst [vmem:[#allocation2 + $0xa8] sm:$0xff] %v10255
        %10288 = vst [vmem:[#allocation2 + $0xb0] sm:$0xff] %v10256
        %10289 = vst [vmem:[#allocation2 + $0xb8] sm:$0xff] %v10257
        %10290 = vst [vmem:[#allocation2 + $0xc0] sm:$0xff] %v10258
        %10291 = vst [vmem:[#allocation2 + $0xc8] sm:$0xff] %v10259
        %10292 = vst [vmem:[#allocation2 + $0xd0] sm:$0xff] %v10260
        %10293 = vst [vmem:[#allocation2 + $0xd8] sm:$0xff] %v10261
        %10294 = vst [vmem:[#allocation2 + $0xe0] sm:$0xff] %v10262
        %10295 = vst [vmem:[#allocation2 + $0xe8] sm:$0xff] %v10263
        %10296 = vst [vmem:[#allocation2 + $0xf0] sm:$0xff] %v10264
        %10297 = vst [vmem:[#allocation2 + $0xf8] sm:$0xff] %v10265
        %p10298 = scmp.eq.s32.totalorder %s52, 1
        // Predicated region
        $region125: #{tpu_custom_call.1} parent=79 // pred_check
          %p10299 = pneg %p10298
        $region126: #{tpu_custom_call.1} parent=79 // pred_check_branch
          %10301 = sbr.rel (%p10299) target = $region128
        $region127: #{tpu_custom_call.1} parent=79 // pred_region
          %v10302 = vld [vmem:[%s13] sm:$0x1]
          %v10303 = vld [vmem:[%s14] sm:$0x1]
          %10304 = vadd.xlane.f32.xlu0 %v10234
          %v10305 = vpop.xlane.xlu0 %10304
          %10306 = vadd.xlane.f32.xlu0 %v10235
          %v10307 = vpop.xlane.xlu0 %10306
          %10308 = vadd.xlane.f32.xlu0 %v10236
          %v10309 = vpop.xlane.xlu0 %10308
          %10310 = vadd.xlane.f32.xlu0 %v10237
          %v10311 = vpop.xlane.xlu0 %10310
          %10312 = vadd.xlane.f32.xlu0 %v10238
          %v10313 = vpop.xlane.xlu0 %10312
          %10314 = vadd.xlane.f32.xlu0 %v10239
          %v10315 = vpop.xlane.xlu0 %10314
          %10316 = vadd.xlane.f32.xlu0 %v10240
          %v10317 = vpop.xlane.xlu0 %10316
          %10318 = vadd.xlane.f32.xlu0 %v10241
          %v10319 = vpop.xlane.xlu0 %10318
          %10320 = vadd.xlane.f32.xlu0 %v10242
          %v10321 = vpop.xlane.xlu0 %10320
          %10322 = vadd.xlane.f32.xlu0 %v10243
          %v10323 = vpop.xlane.xlu0 %10322
          %10324 = vadd.xlane.f32.xlu0 %v10244
          %v10325 = vpop.xlane.xlu0 %10324
          %10326 = vadd.xlane.f32.xlu0 %v10245
          %v10327 = vpop.xlane.xlu0 %10326
          %10328 = vadd.xlane.f32.xlu0 %v10246
          %v10329 = vpop.xlane.xlu0 %10328
          %10330 = vadd.xlane.f32.xlu0 %v10247
          %v10331 = vpop.xlane.xlu0 %10330
          %10332 = vadd.xlane.f32.xlu0 %v10248
          %v10333 = vpop.xlane.xlu0 %10332
          %10334 = vadd.xlane.f32.xlu0 %v10249
          %v10335 = vpop.xlane.xlu0 %10334
          %10336 = vadd.xlane.f32.xlu0 %v10250
          %v10337 = vpop.xlane.xlu0 %10336
          %10338 = vadd.xlane.f32.xlu0 %v10251
          %v10339 = vpop.xlane.xlu0 %10338
          %10340 = vadd.xlane.f32.xlu0 %v10252
          %v10341 = vpop.xlane.xlu0 %10340
          %10342 = vadd.xlane.f32.xlu0 %v10253
          %v10343 = vpop.xlane.xlu0 %10342
          %10344 = vadd.xlane.f32.xlu0 %v10254
          %v10345 = vpop.xlane.xlu0 %10344
          %10346 = vadd.xlane.f32.xlu0 %v10255
          %v10347 = vpop.xlane.xlu0 %10346
          %10348 = vadd.xlane.f32.xlu0 %v10256
          %v10349 = vpop.xlane.xlu0 %10348
          %10350 = vadd.xlane.f32.xlu0 %v10257
          %v10351 = vpop.xlane.xlu0 %10350
          %10352 = vadd.xlane.f32.xlu0 %v10258
          %v10353 = vpop.xlane.xlu0 %10352
          %10354 = vadd.xlane.f32.xlu0 %v10259
          %v10355 = vpop.xlane.xlu0 %10354
          %10356 = vadd.xlane.f32.xlu0 %v10260
          %v10357 = vpop.xlane.xlu0 %10356
          %10358 = vadd.xlane.f32.xlu0 %v10261
          %v10359 = vpop.xlane.xlu0 %10358
          %10360 = vadd.xlane.f32.xlu0 %v10262
          %v10361 = vpop.xlane.xlu0 %10360
          %10362 = vadd.xlane.f32.xlu0 %v10263
          %v10363 = vpop.xlane.xlu0 %10362
          %10364 = vadd.xlane.f32.xlu0 %v10264
          %v10365 = vpop.xlane.xlu0 %10364
          %10366 = vadd.xlane.f32.xlu0 %v10265
          %v10367 = vpop.xlane.xlu0 %10366
          %v10368 = vmul.f32 %v10305, %v1082
          %v10369 = vmul.f32 %v10307, %v1082
          %v10370 = vmul.f32 %v10309, %v1082
          %v10371 = vmul.f32 %v10311, %v1082
          %v10372 = vmul.f32 %v10313, %v1082
          %v10373 = vmul.f32 %v10315, %v1082
          %v10374 = vmul.f32 %v10317, %v1082
          %v10375 = vmul.f32 %v10319, %v1082
          %v10376 = vmul.f32 %v10321, %v1082
          %v10377 = vmul.f32 %v10323, %v1082
          %v10378 = vmul.f32 %v10325, %v1082
          %v10379 = vmul.f32 %v10327, %v1082
          %v10380 = vmul.f32 %v10329, %v1082
          %v10381 = vmul.f32 %v10331, %v1082
          %v10382 = vmul.f32 %v10333, %v1082
          %v10383 = vmul.f32 %v10335, %v1082
          %v10384 = vmul.f32 %v10337, %v1082
          %v10385 = vmul.f32 %v10339, %v1082
          %v10386 = vmul.f32 %v10341, %v1082
          %v10387 = vmul.f32 %v10343, %v1082
          %v10388 = vmul.f32 %v10345, %v1082
          %v10389 = vmul.f32 %v10347, %v1082
          %v10390 = vmul.f32 %v10349, %v1082
          %v10391 = vmul.f32 %v10351, %v1082
          %v10392 = vmul.f32 %v10353, %v1082
          %v10393 = vmul.f32 %v10355, %v1082
          %v10394 = vmul.f32 %v10357, %v1082
          %v10395 = vmul.f32 %v10359, %v1082
          %v10396 = vmul.f32 %v10361, %v1082
          %v10397 = vmul.f32 %v10363, %v1082
          %v10398 = vmul.f32 %v10365, %v1082
          %v10399 = vmul.f32 %v10367, %v1082
          %v10400 = vsub.f32 %v10234, %v10368
          %v10401 = vsub.f32 %v10235, %v10369
          %v10402 = vsub.f32 %v10236, %v10370
          %v10403 = vsub.f32 %v10237, %v10371
          %v10404 = vsub.f32 %v10238, %v10372
          %v10405 = vsub.f32 %v10239, %v10373
          %v10406 = vsub.f32 %v10240, %v10374
          %v10407 = vsub.f32 %v10241, %v10375
          %v10408 = vsub.f32 %v10242, %v10376
          %v10409 = vsub.f32 %v10243, %v10377
          %v10410 = vsub.f32 %v10244, %v10378
          %v10411 = vsub.f32 %v10245, %v10379
          %v10412 = vsub.f32 %v10246, %v10380
          %v10413 = vsub.f32 %v10247, %v10381
          %v10414 = vsub.f32 %v10248, %v10382
          %v10415 = vsub.f32 %v10249, %v10383
          %v10416 = vsub.f32 %v10250, %v10384
          %v10417 = vsub.f32 %v10251, %v10385
          %v10418 = vsub.f32 %v10252, %v10386
          %v10419 = vsub.f32 %v10253, %v10387
          %v10420 = vsub.f32 %v10254, %v10388
          %v10421 = vsub.f32 %v10255, %v10389
          %v10422 = vsub.f32 %v10256, %v10390
          %v10423 = vsub.f32 %v10257, %v10391
          %v10424 = vsub.f32 %v10258, %v10392
          %v10425 = vsub.f32 %v10259, %v10393
          %v10426 = vsub.f32 %v10260, %v10394
          %v10427 = vsub.f32 %v10261, %v10395
          %v10428 = vsub.f32 %v10262, %v10396
          %v10429 = vsub.f32 %v10263, %v10397
          %v10430 = vsub.f32 %v10264, %v10398
          %v10431 = vsub.f32 %v10265, %v10399
          %v10432 = vmul.f32 %v10400, %v10400
          %v10433 = vmul.f32 %v10401, %v10401
          %v10434 = vmul.f32 %v10402, %v10402
          %v10435 = vmul.f32 %v10403, %v10403
          %v10436 = vmul.f32 %v10404, %v10404
          %v10437 = vmul.f32 %v10405, %v10405
          %v10438 = vmul.f32 %v10406, %v10406
          %v10439 = vmul.f32 %v10407, %v10407
          %v10440 = vmul.f32 %v10408, %v10408
          %v10441 = vmul.f32 %v10409, %v10409
          %v10442 = vmul.f32 %v10410, %v10410
          %v10443 = vmul.f32 %v10411, %v10411
          %v10444 = vmul.f32 %v10412, %v10412
          %v10445 = vmul.f32 %v10413, %v10413
          %v10446 = vmul.f32 %v10414, %v10414
          %v10447 = vmul.f32 %v10415, %v10415
          %v10448 = vmul.f32 %v10416, %v10416
          %v10449 = vmul.f32 %v10417, %v10417
          %v10450 = vmul.f32 %v10418, %v10418
          %v10451 = vmul.f32 %v10419, %v10419
          %v10452 = vmul.f32 %v10420, %v10420
          %v10453 = vmul.f32 %v10421, %v10421
          %v10454 = vmul.f32 %v10422, %v10422
          %v10455 = vmul.f32 %v10423, %v10423
          %v10456 = vmul.f32 %v10424, %v10424
          %v10457 = vmul.f32 %v10425, %v10425
          %v10458 = vmul.f32 %v10426, %v10426
          %v10459 = vmul.f32 %v10427, %v10427
          %v10460 = vmul.f32 %v10428, %v10428
          %v10461 = vmul.f32 %v10429, %v10429
          %v10462 = vmul.f32 %v10430, %v10430
          %v10463 = vmul.f32 %v10431, %v10431
          %10464 = vadd.xlane.f32.xlu0 %v10432
          %v10465 = vpop.xlane.xlu0 %10464
          %10466 = vadd.xlane.f32.xlu0 %v10433
          %v10467 = vpop.xlane.xlu0 %10466
          %10468 = vadd.xlane.f32.xlu0 %v10434
          %v10469 = vpop.xlane.xlu0 %10468
          %10470 = vadd.xlane.f32.xlu0 %v10435
          %v10471 = vpop.xlane.xlu0 %10470
          %10472 = vadd.xlane.f32.xlu0 %v10436
          %v10473 = vpop.xlane.xlu0 %10472
          %10474 = vadd.xlane.f32.xlu0 %v10437
          %v10475 = vpop.xlane.xlu0 %10474
          %10476 = vadd.xlane.f32.xlu0 %v10438
          %v10477 = vpop.xlane.xlu0 %10476
          %10478 = vadd.xlane.f32.xlu0 %v10439
          %v10479 = vpop.xlane.xlu0 %10478
          %10480 = vadd.xlane.f32.xlu0 %v10440
          %v10481 = vpop.xlane.xlu0 %10480
          %10482 = vadd.xlane.f32.xlu0 %v10441
          %v10483 = vpop.xlane.xlu0 %10482
          %10484 = vadd.xlane.f32.xlu0 %v10442
          %v10485 = vpop.xlane.xlu0 %10484
          %10486 = vadd.xlane.f32.xlu0 %v10443
          %v10487 = vpop.xlane.xlu0 %10486
          %10488 = vadd.xlane.f32.xlu0 %v10444
          %v10489 = vpop.xlane.xlu0 %10488
          %10490 = vadd.xlane.f32.xlu0 %v10445
          %v10491 = vpop.xlane.xlu0 %10490
          %10492 = vadd.xlane.f32.xlu0 %v10446
          %v10493 = vpop.xlane.xlu0 %10492
          %10494 = vadd.xlane.f32.xlu0 %v10447
          %v10495 = vpop.xlane.xlu0 %10494
          %10496 = vadd.xlane.f32.xlu0 %v10448
          %v10497 = vpop.xlane.xlu0 %10496
          %10498 = vadd.xlane.f32.xlu0 %v10449
          %v10499 = vpop.xlane.xlu0 %10498
          %10500 = vadd.xlane.f32.xlu0 %v10450
          %v10501 = vpop.xlane.xlu0 %10500
          %10502 = vadd.xlane.f32.xlu0 %v10451
          %v10503 = vpop.xlane.xlu0 %10502
          %10504 = vadd.xlane.f32.xlu0 %v10452
          %v10505 = vpop.xlane.xlu0 %10504
          %10506 = vadd.xlane.f32.xlu0 %v10453
          %v10507 = vpop.xlane.xlu0 %10506
          %10508 = vadd.xlane.f32.xlu0 %v10454
          %v10509 = vpop.xlane.xlu0 %10508
          %10510 = vadd.xlane.f32.xlu0 %v10455
          %v10511 = vpop.xlane.xlu0 %10510
          %10512 = vadd.xlane.f32.xlu0 %v10456
          %v10513 = vpop.xlane.xlu0 %10512
          %10514 = vadd.xlane.f32.xlu0 %v10457
          %v10515 = vpop.xlane.xlu0 %10514
          %10516 = vadd.xlane.f32.xlu0 %v10458
          %v10517 = vpop.xlane.xlu0 %10516
          %10518 = vadd.xlane.f32.xlu0 %v10459
          %v10519 = vpop.xlane.xlu0 %10518
          %10520 = vadd.xlane.f32.xlu0 %v10460
          %v10521 = vpop.xlane.xlu0 %10520
          %10522 = vadd.xlane.f32.xlu0 %v10461
          %v10523 = vpop.xlane.xlu0 %10522
          %10524 = vadd.xlane.f32.xlu0 %v10462
          %v10525 = vpop.xlane.xlu0 %10524
          %10526 = vadd.xlane.f32.xlu0 %v10463
          %v10527 = vpop.xlane.xlu0 %10526
          %v10528 = vmul.f32 %v10465, %v1082
          %v10529 = vmul.f32 %v10467, %v1082
          %v10530 = vmul.f32 %v10469, %v1082
          %v10531 = vmul.f32 %v10471, %v1082
          %v10532 = vmul.f32 %v10473, %v1082
          %v10533 = vmul.f32 %v10475, %v1082
          %v10534 = vmul.f32 %v10477, %v1082
          %v10535 = vmul.f32 %v10479, %v1082
          %v10536 = vmul.f32 %v10481, %v1082
          %v10537 = vmul.f32 %v10483, %v1082
          %v10538 = vmul.f32 %v10485, %v1082
          %v10539 = vmul.f32 %v10487, %v1082
          %v10540 = vmul.f32 %v10489, %v1082
          %v10541 = vmul.f32 %v10491, %v1082
          %v10542 = vmul.f32 %v10493, %v1082
          %v10543 = vmul.f32 %v10495, %v1082
          %v10544 = vmul.f32 %v10497, %v1082
          %v10545 = vmul.f32 %v10499, %v1082
          %v10546 = vmul.f32 %v10501, %v1082
          %v10547 = vmul.f32 %v10503, %v1082
          %v10548 = vmul.f32 %v10505, %v1082
          %v10549 = vmul.f32 %v10507, %v1082
          %v10550 = vmul.f32 %v10509, %v1082
          %v10551 = vmul.f32 %v10511, %v1082
          %v10552 = vmul.f32 %v10513, %v1082
          %v10553 = vmul.f32 %v10515, %v1082
          %v10554 = vmul.f32 %v10517, %v1082
          %v10555 = vmul.f32 %v10519, %v1082
          %v10556 = vmul.f32 %v10521, %v1082
          %v10557 = vmul.f32 %v10523, %v1082
          %v10558 = vmul.f32 %v10525, %v1082
          %v10559 = vmul.f32 %v10527, %v1082
          %v10560 = vadd.f32 %v10528, 1e-06
          %v10561 = vadd.f32 %v10529, 1e-06
          %v10562 = vadd.f32 %v10530, 1e-06
          %v10563 = vadd.f32 %v10531, 1e-06
          %v10564 = vadd.f32 %v10532, 1e-06
          %v10565 = vadd.f32 %v10533, 1e-06
          %v10566 = vadd.f32 %v10534, 1e-06
          %v10567 = vadd.f32 %v10535, 1e-06
          %v10568 = vadd.f32 %v10536, 1e-06
          %v10569 = vadd.f32 %v10537, 1e-06
          %v10570 = vadd.f32 %v10538, 1e-06
          %v10571 = vadd.f32 %v10539, 1e-06
          %v10572 = vadd.f32 %v10540, 1e-06
          %v10573 = vadd.f32 %v10541, 1e-06
          %v10574 = vadd.f32 %v10542, 1e-06
          %v10575 = vadd.f32 %v10543, 1e-06
          %v10576 = vadd.f32 %v10544, 1e-06
          %v10577 = vadd.f32 %v10545, 1e-06
          %v10578 = vadd.f32 %v10546, 1e-06
          %v10579 = vadd.f32 %v10547, 1e-06
          %v10580 = vadd.f32 %v10548, 1e-06
          %v10581 = vadd.f32 %v10549, 1e-06
          %v10582 = vadd.f32 %v10550, 1e-06
          %v10583 = vadd.f32 %v10551, 1e-06
          %v10584 = vadd.f32 %v10552, 1e-06
          %v10585 = vadd.f32 %v10553, 1e-06
          %v10586 = vadd.f32 %v10554, 1e-06
          %v10587 = vadd.f32 %v10555, 1e-06
          %v10588 = vadd.f32 %v10556, 1e-06
          %v10589 = vadd.f32 %v10557, 1e-06
          %v10590 = vadd.f32 %v10558, 1e-06
          %v10591 = vadd.f32 %v10559, 1e-06
          %v10592 = vrsqrt.pop %v10560
          %v10593 = vmul.f32 %v10592, %v10560
          %v10594 = vmul.f32 %v10593, %v10592
          %v10595 = vmul.f32 0.5, %v10594
          %v10596 = vsub.f32 1.5, %v10595
          %v10597 = vmul.f32 %v10592, %v10596
          %vm10598 = vweird.f32 %v10560
          %vm10599 = vweird.f32 %v10592
          %vm10600 = vmor %vm10598, %vm10599
          %v10601 = vsel %vm10600, %v10592, %v10597
          %v10602 = vrsqrt.pop %v10561
          %v10603 = vmul.f32 %v10602, %v10561
          %v10604 = vmul.f32 %v10603, %v10602
          %v10605 = vmul.f32 0.5, %v10604
          %v10606 = vsub.f32 1.5, %v10605
          %v10607 = vmul.f32 %v10602, %v10606
          %vm10608 = vweird.f32 %v10561
          %vm10609 = vweird.f32 %v10602
          %vm10610 = vmor %vm10608, %vm10609
          %v10611 = vsel %vm10610, %v10602, %v10607
          %v10612 = vrsqrt.pop %v10562
          %v10613 = vmul.f32 %v10612, %v10562
          %v10614 = vmul.f32 %v10613, %v10612
          %v10615 = vmul.f32 0.5, %v10614
          %v10616 = vsub.f32 1.5, %v10615
          %v10617 = vmul.f32 %v10612, %v10616
          %vm10618 = vweird.f32 %v10562
          %vm10619 = vweird.f32 %v10612
          %vm10620 = vmor %vm10618, %vm10619
          %v10621 = vsel %vm10620, %v10612, %v10617
          %v10622 = vrsqrt.pop %v10563
          %v10623 = vmul.f32 %v10622, %v10563
          %v10624 = vmul.f32 %v10623, %v10622
          %v10625 = vmul.f32 0.5, %v10624
          %v10626 = vsub.f32 1.5, %v10625
          %v10627 = vmul.f32 %v10622, %v10626
          %vm10628 = vweird.f32 %v10563
          %vm10629 = vweird.f32 %v10622
          %vm10630 = vmor %vm10628, %vm10629
          %v10631 = vsel %vm10630, %v10622, %v10627
          %v10632 = vrsqrt.pop %v10564
          %v10633 = vmul.f32 %v10632, %v10564
          %v10634 = vmul.f32 %v10633, %v10632
          %v10635 = vmul.f32 0.5, %v10634
          %v10636 = vsub.f32 1.5, %v10635
          %v10637 = vmul.f32 %v10632, %v10636
          %vm10638 = vweird.f32 %v10564
          %vm10639 = vweird.f32 %v10632
          %vm10640 = vmor %vm10638, %vm10639
          %v10641 = vsel %vm10640, %v10632, %v10637
          %v10642 = vrsqrt.pop %v10565
          %v10643 = vmul.f32 %v10642, %v10565
          %v10644 = vmul.f32 %v10643, %v10642
          %v10645 = vmul.f32 0.5, %v10644
          %v10646 = vsub.f32 1.5, %v10645
          %v10647 = vmul.f32 %v10642, %v10646
          %vm10648 = vweird.f32 %v10565
          %vm10649 = vweird.f32 %v10642
          %vm10650 = vmor %vm10648, %vm10649
          %v10651 = vsel %vm10650, %v10642, %v10647
          %v10652 = vrsqrt.pop %v10566
          %v10653 = vmul.f32 %v10652, %v10566
          %v10654 = vmul.f32 %v10653, %v10652
          %v10655 = vmul.f32 0.5, %v10654
          %v10656 = vsub.f32 1.5, %v10655
          %v10657 = vmul.f32 %v10652, %v10656
          %vm10658 = vweird.f32 %v10566
          %vm10659 = vweird.f32 %v10652
          %vm10660 = vmor %vm10658, %vm10659
          %v10661 = vsel %vm10660, %v10652, %v10657
          %v10662 = vrsqrt.pop %v10567
          %v10663 = vmul.f32 %v10662, %v10567
          %v10664 = vmul.f32 %v10663, %v10662
          %v10665 = vmul.f32 0.5, %v10664
          %v10666 = vsub.f32 1.5, %v10665
          %v10667 = vmul.f32 %v10662, %v10666
          %vm10668 = vweird.f32 %v10567
          %vm10669 = vweird.f32 %v10662
          %vm10670 = vmor %vm10668, %vm10669
          %v10671 = vsel %vm10670, %v10662, %v10667
          %v10672 = vrsqrt.pop %v10568
          %v10673 = vmul.f32 %v10672, %v10568
          %v10674 = vmul.f32 %v10673, %v10672
          %v10675 = vmul.f32 0.5, %v10674
          %v10676 = vsub.f32 1.5, %v10675
          %v10677 = vmul.f32 %v10672, %v10676
          %vm10678 = vweird.f32 %v10568
          %vm10679 = vweird.f32 %v10672
          %vm10680 = vmor %vm10678, %vm10679
          %v10681 = vsel %vm10680, %v10672, %v10677
          %v10682 = vrsqrt.pop %v10569
          %v10683 = vmul.f32 %v10682, %v10569
          %v10684 = vmul.f32 %v10683, %v10682
          %v10685 = vmul.f32 0.5, %v10684
          %v10686 = vsub.f32 1.5, %v10685
          %v10687 = vmul.f32 %v10682, %v10686
          %vm10688 = vweird.f32 %v10569
          %vm10689 = vweird.f32 %v10682
          %vm10690 = vmor %vm10688, %vm10689
          %v10691 = vsel %vm10690, %v10682, %v10687
          %v10692 = vrsqrt.pop %v10570
          %v10693 = vmul.f32 %v10692, %v10570
          %v10694 = vmul.f32 %v10693, %v10692
          %v10695 = vmul.f32 0.5, %v10694
          %v10696 = vsub.f32 1.5, %v10695
          %v10697 = vmul.f32 %v10692, %v10696
          %vm10698 = vweird.f32 %v10570
          %vm10699 = vweird.f32 %v10692
          %vm10700 = vmor %vm10698, %vm10699
          %v10701 = vsel %vm10700, %v10692, %v10697
          %v10702 = vrsqrt.pop %v10571
          %v10703 = vmul.f32 %v10702, %v10571
          %v10704 = vmul.f32 %v10703, %v10702
          %v10705 = vmul.f32 0.5, %v10704
          %v10706 = vsub.f32 1.5, %v10705
          %v10707 = vmul.f32 %v10702, %v10706
          %vm10708 = vweird.f32 %v10571
          %vm10709 = vweird.f32 %v10702
          %vm10710 = vmor %vm10708, %vm10709
          %v10711 = vsel %vm10710, %v10702, %v10707
          %v10712 = vrsqrt.pop %v10572
          %v10713 = vmul.f32 %v10712, %v10572
          %v10714 = vmul.f32 %v10713, %v10712
          %v10715 = vmul.f32 0.5, %v10714
          %v10716 = vsub.f32 1.5, %v10715
          %v10717 = vmul.f32 %v10712, %v10716
          %vm10718 = vweird.f32 %v10572
          %vm10719 = vweird.f32 %v10712
          %vm10720 = vmor %vm10718, %vm10719
          %v10721 = vsel %vm10720, %v10712, %v10717
          %v10722 = vrsqrt.pop %v10573
          %v10723 = vmul.f32 %v10722, %v10573
          %v10724 = vmul.f32 %v10723, %v10722
          %v10725 = vmul.f32 0.5, %v10724
          %v10726 = vsub.f32 1.5, %v10725
          %v10727 = vmul.f32 %v10722, %v10726
          %vm10728 = vweird.f32 %v10573
          %vm10729 = vweird.f32 %v10722
          %vm10730 = vmor %vm10728, %vm10729
          %v10731 = vsel %vm10730, %v10722, %v10727
          %v10732 = vrsqrt.pop %v10574
          %v10733 = vmul.f32 %v10732, %v10574
          %v10734 = vmul.f32 %v10733, %v10732
          %v10735 = vmul.f32 0.5, %v10734
          %v10736 = vsub.f32 1.5, %v10735
          %v10737 = vmul.f32 %v10732, %v10736
          %vm10738 = vweird.f32 %v10574
          %vm10739 = vweird.f32 %v10732
          %vm10740 = vmor %vm10738, %vm10739
          %v10741 = vsel %vm10740, %v10732, %v10737
          %v10742 = vrsqrt.pop %v10575
          %v10743 = vmul.f32 %v10742, %v10575
          %v10744 = vmul.f32 %v10743, %v10742
          %v10745 = vmul.f32 0.5, %v10744
          %v10746 = vsub.f32 1.5, %v10745
          %v10747 = vmul.f32 %v10742, %v10746
          %vm10748 = vweird.f32 %v10575
          %vm10749 = vweird.f32 %v10742
          %vm10750 = vmor %vm10748, %vm10749
          %v10751 = vsel %vm10750, %v10742, %v10747
          %v10752 = vrsqrt.pop %v10576
          %v10753 = vmul.f32 %v10752, %v10576
          %v10754 = vmul.f32 %v10753, %v10752
          %v10755 = vmul.f32 0.5, %v10754
          %v10756 = vsub.f32 1.5, %v10755
          %v10757 = vmul.f32 %v10752, %v10756
          %vm10758 = vweird.f32 %v10576
          %vm10759 = vweird.f32 %v10752
          %vm10760 = vmor %vm10758, %vm10759
          %v10761 = vsel %vm10760, %v10752, %v10757
          %v10762 = vrsqrt.pop %v10577
          %v10763 = vmul.f32 %v10762, %v10577
          %v10764 = vmul.f32 %v10763, %v10762
          %v10765 = vmul.f32 0.5, %v10764
          %v10766 = vsub.f32 1.5, %v10765
          %v10767 = vmul.f32 %v10762, %v10766
          %vm10768 = vweird.f32 %v10577
          %vm10769 = vweird.f32 %v10762
          %vm10770 = vmor %vm10768, %vm10769
          %v10771 = vsel %vm10770, %v10762, %v10767
          %v10772 = vrsqrt.pop %v10578
          %v10773 = vmul.f32 %v10772, %v10578
          %v10774 = vmul.f32 %v10773, %v10772
          %v10775 = vmul.f32 0.5, %v10774
          %v10776 = vsub.f32 1.5, %v10775
          %v10777 = vmul.f32 %v10772, %v10776
          %vm10778 = vweird.f32 %v10578
          %vm10779 = vweird.f32 %v10772
          %vm10780 = vmor %vm10778, %vm10779
          %v10781 = vsel %vm10780, %v10772, %v10777
          %v10782 = vrsqrt.pop %v10579
          %v10783 = vmul.f32 %v10782, %v10579
          %v10784 = vmul.f32 %v10783, %v10782
          %v10785 = vmul.f32 0.5, %v10784
          %v10786 = vsub.f32 1.5, %v10785
          %v10787 = vmul.f32 %v10782, %v10786
          %vm10788 = vweird.f32 %v10579
          %vm10789 = vweird.f32 %v10782
          %vm10790 = vmor %vm10788, %vm10789
          %v10791 = vsel %vm10790, %v10782, %v10787
          %v10792 = vrsqrt.pop %v10580
          %v10793 = vmul.f32 %v10792, %v10580
          %v10794 = vmul.f32 %v10793, %v10792
          %v10795 = vmul.f32 0.5, %v10794
          %v10796 = vsub.f32 1.5, %v10795
          %v10797 = vmul.f32 %v10792, %v10796
          %vm10798 = vweird.f32 %v10580
          %vm10799 = vweird.f32 %v10792
          %vm10800 = vmor %vm10798, %vm10799
          %v10801 = vsel %vm10800, %v10792, %v10797
          %v10802 = vrsqrt.pop %v10581
          %v10803 = vmul.f32 %v10802, %v10581
          %v10804 = vmul.f32 %v10803, %v10802
          %v10805 = vmul.f32 0.5, %v10804
          %v10806 = vsub.f32 1.5, %v10805
          %v10807 = vmul.f32 %v10802, %v10806
          %vm10808 = vweird.f32 %v10581
          %vm10809 = vweird.f32 %v10802
          %vm10810 = vmor %vm10808, %vm10809
          %v10811 = vsel %vm10810, %v10802, %v10807
          %v10812 = vrsqrt.pop %v10582
          %v10813 = vmul.f32 %v10812, %v10582
          %v10814 = vmul.f32 %v10813, %v10812
          %v10815 = vmul.f32 0.5, %v10814
          %v10816 = vsub.f32 1.5, %v10815
          %v10817 = vmul.f32 %v10812, %v10816
          %vm10818 = vweird.f32 %v10582
          %vm10819 = vweird.f32 %v10812
          %vm10820 = vmor %vm10818, %vm10819
          %v10821 = vsel %vm10820, %v10812, %v10817
          %v10822 = vrsqrt.pop %v10583
          %v10823 = vmul.f32 %v10822, %v10583
          %v10824 = vmul.f32 %v10823, %v10822
          %v10825 = vmul.f32 0.5, %v10824
          %v10826 = vsub.f32 1.5, %v10825
          %v10827 = vmul.f32 %v10822, %v10826
          %vm10828 = vweird.f32 %v10583
          %vm10829 = vweird.f32 %v10822
          %vm10830 = vmor %vm10828, %vm10829
          %v10831 = vsel %vm10830, %v10822, %v10827
          %v10832 = vrsqrt.pop %v10584
          %v10833 = vmul.f32 %v10832, %v10584
          %v10834 = vmul.f32 %v10833, %v10832
          %v10835 = vmul.f32 0.5, %v10834
          %v10836 = vsub.f32 1.5, %v10835
          %v10837 = vmul.f32 %v10832, %v10836
          %vm10838 = vweird.f32 %v10584
          %vm10839 = vweird.f32 %v10832
          %vm10840 = vmor %vm10838, %vm10839
          %v10841 = vsel %vm10840, %v10832, %v10837
          %v10842 = vrsqrt.pop %v10585
          %v10843 = vmul.f32 %v10842, %v10585
          %v10844 = vmul.f32 %v10843, %v10842
          %v10845 = vmul.f32 0.5, %v10844
          %v10846 = vsub.f32 1.5, %v10845
          %v10847 = vmul.f32 %v10842, %v10846
          %vm10848 = vweird.f32 %v10585
          %vm10849 = vweird.f32 %v10842
          %vm10850 = vmor %vm10848, %vm10849
          %v10851 = vsel %vm10850, %v10842, %v10847
          %v10852 = vrsqrt.pop %v10586
          %v10853 = vmul.f32 %v10852, %v10586
          %v10854 = vmul.f32 %v10853, %v10852
          %v10855 = vmul.f32 0.5, %v10854
          %v10856 = vsub.f32 1.5, %v10855
          %v10857 = vmul.f32 %v10852, %v10856
          %vm10858 = vweird.f32 %v10586
          %vm10859 = vweird.f32 %v10852
          %vm10860 = vmor %vm10858, %vm10859
          %v10861 = vsel %vm10860, %v10852, %v10857
          %v10862 = vrsqrt.pop %v10587
          %v10863 = vmul.f32 %v10862, %v10587
          %v10864 = vmul.f32 %v10863, %v10862
          %v10865 = vmul.f32 0.5, %v10864
          %v10866 = vsub.f32 1.5, %v10865
          %v10867 = vmul.f32 %v10862, %v10866
          %vm10868 = vweird.f32 %v10587
          %vm10869 = vweird.f32 %v10862
          %vm10870 = vmor %vm10868, %vm10869
          %v10871 = vsel %vm10870, %v10862, %v10867
          %v10872 = vrsqrt.pop %v10588
          %v10873 = vmul.f32 %v10872, %v10588
          %v10874 = vmul.f32 %v10873, %v10872
          %v10875 = vmul.f32 0.5, %v10874
          %v10876 = vsub.f32 1.5, %v10875
          %v10877 = vmul.f32 %v10872, %v10876
          %vm10878 = vweird.f32 %v10588
          %vm10879 = vweird.f32 %v10872
          %vm10880 = vmor %vm10878, %vm10879
          %v10881 = vsel %vm10880, %v10872, %v10877
          %v10882 = vrsqrt.pop %v10589
          %v10883 = vmul.f32 %v10882, %v10589
          %v10884 = vmul.f32 %v10883, %v10882
          %v10885 = vmul.f32 0.5, %v10884
          %v10886 = vsub.f32 1.5, %v10885
          %v10887 = vmul.f32 %v10882, %v10886
          %vm10888 = vweird.f32 %v10589
          %vm10889 = vweird.f32 %v10882
          %vm10890 = vmor %vm10888, %vm10889
          %v10891 = vsel %vm10890, %v10882, %v10887
          %v10892 = vrsqrt.pop %v10590
          %v10893 = vmul.f32 %v10892, %v10590
          %v10894 = vmul.f32 %v10893, %v10892
          %v10895 = vmul.f32 0.5, %v10894
          %v10896 = vsub.f32 1.5, %v10895
          %v10897 = vmul.f32 %v10892, %v10896
          %vm10898 = vweird.f32 %v10590
          %vm10899 = vweird.f32 %v10892
          %vm10900 = vmor %vm10898, %vm10899
          %v10901 = vsel %vm10900, %v10892, %v10897
          %v10902 = vrsqrt.pop %v10591
          %v10903 = vmul.f32 %v10902, %v10591
          %v10904 = vmul.f32 %v10903, %v10902
          %v10905 = vmul.f32 0.5, %v10904
          %v10906 = vsub.f32 1.5, %v10905
          %v10907 = vmul.f32 %v10902, %v10906
          %vm10908 = vweird.f32 %v10591
          %vm10909 = vweird.f32 %v10902
          %vm10910 = vmor %vm10908, %vm10909
          %v10911 = vsel %vm10910, %v10902, %v10907
          %v10912 = vmul.f32 %v10400, %v10601
          %v10913 = vmul.f32 %v10401, %v10611
          %v10914 = vmul.f32 %v10402, %v10621
          %v10915 = vmul.f32 %v10403, %v10631
          %v10916 = vmul.f32 %v10404, %v10641
          %v10917 = vmul.f32 %v10405, %v10651
          %v10918 = vmul.f32 %v10406, %v10661
          %v10919 = vmul.f32 %v10407, %v10671
          %v10920 = vmul.f32 %v10408, %v10681
          %v10921 = vmul.f32 %v10409, %v10691
          %v10922 = vmul.f32 %v10410, %v10701
          %v10923 = vmul.f32 %v10411, %v10711
          %v10924 = vmul.f32 %v10412, %v10721
          %v10925 = vmul.f32 %v10413, %v10731
          %v10926 = vmul.f32 %v10414, %v10741
          %v10927 = vmul.f32 %v10415, %v10751
          %v10928 = vmul.f32 %v10416, %v10761
          %v10929 = vmul.f32 %v10417, %v10771
          %v10930 = vmul.f32 %v10418, %v10781
          %v10931 = vmul.f32 %v10419, %v10791
          %v10932 = vmul.f32 %v10420, %v10801
          %v10933 = vmul.f32 %v10421, %v10811
          %v10934 = vmul.f32 %v10422, %v10821
          %v10935 = vmul.f32 %v10423, %v10831
          %v10936 = vmul.f32 %v10424, %v10841
          %v10937 = vmul.f32 %v10425, %v10851
          %v10938 = vmul.f32 %v10426, %v10861
          %v10939 = vmul.f32 %v10427, %v10871
          %v10940 = vmul.f32 %v10428, %v10881
          %v10941 = vmul.f32 %v10429, %v10891
          %v10942 = vmul.f32 %v10430, %v10901
          %v10943 = vmul.f32 %v10431, %v10911
          %v10945 = vperm.slane %v10302, 0
          %v10947 = vmul.f32 %v10912, %v10945
          %v10948 = vmul.f32 %v10913, %v10945
          %v10949 = vmul.f32 %v10914, %v10945
          %v10950 = vmul.f32 %v10915, %v10945
          %v10951 = vmul.f32 %v10916, %v10945
          %v10952 = vmul.f32 %v10917, %v10945
          %v10953 = vmul.f32 %v10918, %v10945
          %v10954 = vmul.f32 %v10919, %v10945
          %v10955 = vmul.f32 %v10920, %v10945
          %v10956 = vmul.f32 %v10921, %v10945
          %v10957 = vmul.f32 %v10922, %v10945
          %v10958 = vmul.f32 %v10923, %v10945
          %v10959 = vmul.f32 %v10924, %v10945
          %v10960 = vmul.f32 %v10925, %v10945
          %v10961 = vmul.f32 %v10926, %v10945
          %v10962 = vmul.f32 %v10927, %v10945
          %v10963 = vmul.f32 %v10928, %v10945
          %v10964 = vmul.f32 %v10929, %v10945
          %v10965 = vmul.f32 %v10930, %v10945
          %v10966 = vmul.f32 %v10931, %v10945
          %v10967 = vmul.f32 %v10932, %v10945
          %v10968 = vmul.f32 %v10933, %v10945
          %v10969 = vmul.f32 %v10934, %v10945
          %v10970 = vmul.f32 %v10935, %v10945
          %v10971 = vmul.f32 %v10936, %v10945
          %v10972 = vmul.f32 %v10937, %v10945
          %v10973 = vmul.f32 %v10938, %v10945
          %v10974 = vmul.f32 %v10939, %v10945
          %v10975 = vmul.f32 %v10940, %v10945
          %v10976 = vmul.f32 %v10941, %v10945
          %v10977 = vmul.f32 %v10942, %v10945
          %v10978 = vmul.f32 %v10943, %v10945
          %v10980 = vperm.slane %v10303, 0
          %v10982 = vadd.f32 %v10947, %v10980
          %v10983 = vadd.f32 %v10948, %v10980
          %v10984 = vadd.f32 %v10949, %v10980
          %v10985 = vadd.f32 %v10950, %v10980
          %v10986 = vadd.f32 %v10951, %v10980
          %v10987 = vadd.f32 %v10952, %v10980
          %v10988 = vadd.f32 %v10953, %v10980
          %v10989 = vadd.f32 %v10954, %v10980
          %v10990 = vadd.f32 %v10955, %v10980
          %v10991 = vadd.f32 %v10956, %v10980
          %v10992 = vadd.f32 %v10957, %v10980
          %v10993 = vadd.f32 %v10958, %v10980
          %v10994 = vadd.f32 %v10959, %v10980
          %v10995 = vadd.f32 %v10960, %v10980
          %v10996 = vadd.f32 %v10961, %v10980
          %v10997 = vadd.f32 %v10962, %v10980
          %v10998 = vadd.f32 %v10963, %v10980
          %v10999 = vadd.f32 %v10964, %v10980
          %v11000 = vadd.f32 %v10965, %v10980
          %v11001 = vadd.f32 %v10966, %v10980
          %v11002 = vadd.f32 %v10967, %v10980
          %v11003 = vadd.f32 %v10968, %v10980
          %v11004 = vadd.f32 %v10969, %v10980
          %v11005 = vadd.f32 %v10970, %v10980
          %v11006 = vadd.f32 %v10971, %v10980
          %v11007 = vadd.f32 %v10972, %v10980
          %v11008 = vadd.f32 %v10973, %v10980
          %v11009 = vadd.f32 %v10974, %v10980
          %v11010 = vadd.f32 %v10975, %v10980
          %v11011 = vadd.f32 %v10976, %v10980
          %v11012 = vadd.f32 %v10977, %v10980
          %v11013 = vadd.f32 %v10978, %v10980
          %11014 = vst [vmem:[%s897] sm:$0xff] %v10982
          %11015 = vst [vmem:[%s897 + $0x8] sm:$0xff] %v10983
          %11016 = vst [vmem:[%s897 + $0x10] sm:$0xff] %v10984
          %11017 = vst [vmem:[%s897 + $0x18] sm:$0xff] %v10985
          %11018 = vst [vmem:[%s897 + $0x20] sm:$0xff] %v10986
          %11019 = vst [vmem:[%s897 + $0x28] sm:$0xff] %v10987
          %11020 = vst [vmem:[%s897 + $0x30] sm:$0xff] %v10988
          %11021 = vst [vmem:[%s897 + $0x38] sm:$0xff] %v10989
          %11022 = vst [vmem:[%s897 + $0x40] sm:$0xff] %v10990
          %11023 = vst [vmem:[%s897 + $0x48] sm:$0xff] %v10991
          %11024 = vst [vmem:[%s897 + $0x50] sm:$0xff] %v10992
          %11025 = vst [vmem:[%s897 + $0x58] sm:$0xff] %v10993
          %11026 = vst [vmem:[%s897 + $0x60] sm:$0xff] %v10994
          %11027 = vst [vmem:[%s897 + $0x68] sm:$0xff] %v10995
          %11028 = vst [vmem:[%s897 + $0x70] sm:$0xff] %v10996
          %11029 = vst [vmem:[%s897 + $0x78] sm:$0xff] %v10997
          %11030 = vst [vmem:[%s897 + $0x80] sm:$0xff] %v10998
          %11031 = vst [vmem:[%s897 + $0x88] sm:$0xff] %v10999
          %11032 = vst [vmem:[%s897 + $0x90] sm:$0xff] %v11000
          %11033 = vst [vmem:[%s897 + $0x98] sm:$0xff] %v11001
          %11034 = vst [vmem:[%s897 + $0xa0] sm:$0xff] %v11002
          %11035 = vst [vmem:[%s897 + $0xa8] sm:$0xff] %v11003
          %11036 = vst [vmem:[%s897 + $0xb0] sm:$0xff] %v11004
          %11037 = vst [vmem:[%s897 + $0xb8] sm:$0xff] %v11005
          %11038 = vst [vmem:[%s897 + $0xc0] sm:$0xff] %v11006
          %11039 = vst [vmem:[%s897 + $0xc8] sm:$0xff] %v11007
          %11040 = vst [vmem:[%s897 + $0xd0] sm:$0xff] %v11008
          %11041 = vst [vmem:[%s897 + $0xd8] sm:$0xff] %v11009
          %11042 = vst [vmem:[%s897 + $0xe0] sm:$0xff] %v11010
          %11043 = vst [vmem:[%s897 + $0xe8] sm:$0xff] %v11011
          %11044 = vst [vmem:[%s897 + $0xf0] sm:$0xff] %v11012
          %11045 = vst [vmem:[%s897 + $0xf8] sm:$0xff] %v11013
        $region128: #{tpu_custom_call.1} parent=79 // pred_fallthru
          _
        %s11046 = sand.u32 %s447, 1
        %s11047 = scalar_lea.sflag [#allocation5], %s11046
        %s11048 = sand.u32 %s447, 1
        %s11049 = smul.addr %s11048, 256
        %s11050 = scalar_lea.vmem [#allocation20], %s11049
        // Predicated region
        $region129: #{tpu_custom_call.1} parent=79 // pred_check
          %p11051 = pneg %p457
        $region130: #{tpu_custom_call.1} parent=79 // pred_check_branch
          %11053 = sbr.rel (%p11051) target = $region132
        $region131: #{tpu_custom_call.1} parent=79 // pred_region
          %s11054 = smul.u32 2, %s51
          %11056 = vsyncadd %s11047, 0
          %s11057 = smul.addr %s11054, 16
          %s11058 = smul.addr %s11057, 8
          %s11059 = scalar_lea.hbm %s15, %s11058
          %s11060 = sshll.u32 %s11050, 4
          %s11061 = int_to_ptr.vmem [resolvable:$true] %s11060
          %s11062 = sshll.u32 %s11059, 4
          %s11063 = int_to_ptr.hbm [resolvable:$true] %s11062
          %11068 = dma.vmem_to_hbm [thread:$0]  %s11061, 4096, %s11063, %s11047, 128, 128, 8
        $region132: #{tpu_custom_call.1} parent=79 // pred_fallthru
          _
      $region80: #{tpu_custom_call.1} parent=5 // pred_fallthru
        _
      %p11069 = scmp.le.s32.totalorder 2, %s42
      // Predicated region
      $region133: #{tpu_custom_call.1} parent=5 // pred_check
        %p11070 = pneg %p11069
      $region134: #{tpu_custom_call.1} parent=5 // pred_check_branch
        %11072 = sbr.rel (%p11070) target = $region136
      $region135: #{tpu_custom_call.1} parent=5 // pred_region
        %s11073 = ssub.s32 %s42, 2
        // Predicated region
        $region137: #{tpu_custom_call.1} parent=135 // pred_check
          %p11074 = pneg %p463
        $region138: #{tpu_custom_call.1} parent=135 // pred_check_branch
          %11076 = sbr.rel (%p11074) target = $region140
        $region139: #{tpu_custom_call.1} parent=135 // pred_region
          %s11077 = sand.u32 %s448, 1
          %s11078 = scalar_lea.sflag [#allocation5], %s11077
          %s11079 = sand.u32 %s448, 1
          %s11080 = smul.addr %s11079, 256
          %s11081 = scalar_lea.vmem [#allocation20], %s11080
          %11083 = dma.done %s11078, 4096
        $region140: #{tpu_custom_call.1} parent=135 // pred_fallthru
          _
      $region136: #{tpu_custom_call.1} parent=5 // pred_fallthru
        _
    $region6: #{tpu_custom_call.1} parent=1 // loop_footer
      %s46 = sadd.s32 1, %s42
    $region7: #{tpu_custom_call.1} parent=1 // loop_footer_branch
      %41 = sbr.rel target = $region3
    $region8: #{tpu_custom_call.1} parent=1 // loop_exit
      _
    %11084 = vsyncpa [#allocation4], 1
    %s11085 = scalar_lea.sflag [#allocation4], 1
    %11086 = vsyncpa %s11085, 1
    %11087 = vsyncpa [#allocation7], 1
    %s11088 = scalar_lea.sflag [#allocation7], 1
    %11089 = vsyncpa %s11088, 1
    %11090 = vsyncpa [#allocation10], 1
    %s11091 = scalar_lea.sflag [#allocation10], 1
    %11092 = vsyncpa %s11091, 1
    %11093 = vsyncpa [#allocation13], 1
    %s11094 = scalar_lea.sflag [#allocation13], 1
    %11095 = vsyncpa %s11094, 1
    %11096 = vsyncpa [#allocation16], 1
    %s11097 = scalar_lea.sflag [#allocation16], 1
    %11098 = vsyncpa %s11097, 1
    %11099 = vsyncpa [#allocation19], 1
    %s11100 = scalar_lea.sflag [#allocation19], 1
    %11101 = vsyncpa %s11100, 1
    %11102 = vsyncpa [#allocation5], 1
    %s11103 = scalar_lea.sflag [#allocation5], 1
    %11104 = vsyncpa %s11103, 1

</llo_original>
